<compile_context>
chip_gen: v7x
topology: tpu7x:2x2x1
jax: 0.10.0
libtpu: 0.0.40
codegen_flags: <defaults>
</compile_context>

<pallas_src>
import functools

import jax
import jax.numpy as jnp
import numpy as np
from jax.experimental import pallas as pl
from jax.experimental.pallas import tpu as pltpu

BN_EPS = 1e-5
_VMEM_LIMIT = 32 * 1024 * 1024   # explicit scoped-VMEM limit (v5e default: 16 MiB)


def _silu(y):
    # y * sigmoid(y) with sigmoid computed as a single EUP tanh.
    return y * (0.5 * jnp.tanh(0.5 * y) + 0.5)


# --------------------------- fused conv Pallas kernel ------------------------

def _fused_conv_kernel(*refs, mode, OH, OW, C_in,
                       has_prologue, has_mask, has_out_shift, act_out, has_res):
    """One grid step = one image x one Cout tile, all OH*OW output positions.

    mode: "3x3s1"  x block (1, OH+2, OW+2, C_in)    zero-padded input
          "3x3s2"  x block (4, OH+1, OW+1, C_in)    2x2 polyphase of padded input
          "1x1"    x block (1, OH, OW, C_in)        pre-subsampled input
    """
    it = iter(refs)
    x_ref = next(it)
    if has_prologue:
        si_ref = next(it)
        ti_ref = next(it)
    if has_mask:
        m_ref = next(it)
    w_ref = next(it)
    to_ref = next(it) if has_out_shift else None
    r_ref = next(it) if has_res else None
    o_ref = next(it)

    # Load the whole tile once; apply BN + SiLU prologue once (not per tap).
    x = x_ref[...] if mode == "3x3s2" else x_ref[0]
    if has_prologue:
        x = _silu(x.astype(jnp.float32) * si_ref[...] + ti_ref[...])
        if has_mask:
            x = x * m_ref[...]          # restore the zero-padding ring
    x = x.astype(jnp.bfloat16)

    tco = o_ref.shape[-1]

    def tap_dot(a, t):
        return jnp.dot(a.reshape(OH * OW, C_in), w_ref[t],
                       preferred_element_type=jnp.float32)

    if mode == "1x1":
        acc = tap_dot(x, 0)
    else:
        acc = None
        for t, (di, dj) in enumerate([(i, j) for i in range(3)
                                      for j in range(3)]):
            if mode == "3x3s1":
                a = x[di:di + OH, dj:dj + OW, :]
            else:  # "3x3s2": polyphase -> unit-stride window per tap
                ph = (di % 2) * 2 + (dj % 2)
                a = x[ph, di // 2:di // 2 + OH, dj // 2:dj // 2 + OW, :]
            d = tap_dot(a, t)
            acc = d if acc is None else acc + d

    if has_out_shift:                    # BN2 shift (scale folded into weights)
        acc = acc + to_ref[...]
    if act_out:
        acc = _silu(acc)
    if has_res:                          # residual add fused into the epilogue
        acc = acc + r_ref[0].reshape(OH * OW, tco).astype(jnp.float32)
    o_ref[...] = acc.reshape(o_ref.shape).astype(o_ref.dtype)


def _fused_conv(x_in, w_taps, *, mode, OH, OW, C_out,
                in_scale=None, in_shift=None, mask=None,
                out_shift=None, act_out=False,
                residual=None, out_dtype=jnp.bfloat16):
    """out[n,oh,ow,:] = act(sum_t win_t(prologue(x)) @ w[t] + shift) + residual."""
    T, C_in, c_out_w = w_taps.shape
    assert c_out_w == C_out
    if mode == "3x3s2":
        N = x_in.shape[0] // 4                       # (N*4, OH+1, OW+1, C_in)
        x_block = (4,) + tuple(x_in.shape[1:])
    else:
        N = x_in.shape[0]
        x_block = (1,) + tuple(x_in.shape[1:])
    xnd = len(x_block)

    # Cout tiling: keeps weight/output blocks bounded and, with the batch axis,
    # gives >=2 "parallel" grid programs for v7x's two TensorCores.
    tco = C_out if (C_out <= 256 or C_out % 256 != 0) else 256
    grid = (N, C_out // tco)

    has_prologue = in_scale is not None
    has_mask = mask is not None
    has_out_shift = out_shift is not None
    has_res = residual is not None

    inputs = [x_in]
    in_specs = [pl.BlockSpec(x_block, lambda n, j: (n,) + (0,) * (xnd - 1))]
    if has_prologue:
        inputs += [in_scale.reshape(1, C_in).astype(jnp.float32),
                   in_shift.reshape(1, C_in).astype(jnp.float32)]
        in_specs += [pl.BlockSpec((1, C_in), lambda n, j: (0, 0)),
                     pl.BlockSpec((1, C_in), lambda n, j: (0, 0))]
    if has_mask:
        mnd = mask.ndim
        inputs += [mask]
        in_specs += [pl.BlockSpec(tuple(mask.shape), lambda n, j: (0,) * mnd)]
    inputs += [w_taps.astype(jnp.bfloat16)]
    in_specs += [pl.BlockSpec((T, C_in, tco), lambda n, j: (0, 0, j))]
    if has_out_shift:
        inputs += [out_shift.reshape(1, C_out).astype(jnp.float32)]
        in_specs += [pl.BlockSpec((1, tco), lambda n, j: (0, j))]
    if has_res:
        inputs += [residual]
        in_specs += [pl.BlockSpec((1, OH, OW, tco), lambda n, j: (n, 0, 0, j))]

    kernel = functools.partial(
        _fused_conv_kernel, mode=mode, OH=OH, OW=OW, C_in=C_in,
        has_prologue=has_prologue, has_mask=has_mask,
        has_out_shift=has_out_shift, act_out=act_out, has_res=has_res)

    return pl.pallas_call(
        kernel,
        out_shape=jax.ShapeDtypeStruct((N, OH, OW, C_out), out_dtype),
        grid=grid,
        in_specs=in_specs,
        out_specs=pl.BlockSpec((1, OH, OW, tco), lambda n, j: (n, 0, 0, j)),
        compiler_params=pltpu.CompilerParams(
            dimension_semantics=("parallel", "parallel"),
            vmem_limit_bytes=_VMEM_LIMIT),
    )(*inputs)


# ------------------------------ wrapper helpers -------------------------------

def _bn_fold(bn):
    scale = bn["gamma"] / jnp.sqrt(bn["var"] + BN_EPS)
    shift = bn["beta"] - bn["mean"] * scale
    return scale, shift


def _conv_taps(w):
    """PyTorch [Cout, Cin, KH, KW] -> tap-major weights [KH*KW, Cin, Cout] (f32)."""
    cout, cin, kh, kw = w.shape
    return jnp.transpose(w, (2, 3, 1, 0)).reshape(kh * kw, cin, cout)


def _ring_mask(hp, wp):
    m = np.ones((hp, wp, 1), np.float32)
    m[0, :, :] = 0.0
    m[hp - 1, :, :] = 0.0
    m[:, 0, :] = 0.0
    m[:, wp - 1, :] = 0.0
    return m


def _polyphase(x_nhwc):
    """pad-1 + 2x2 polyphase: (N,H,W,C) -> ((N*4, H/2+1, W/2+1, C), phase mask)."""
    N, H, W, C = x_nhwc.shape
    assert H % 2 == 0 and W % 2 == 0
    hp, wp = H + 2, W + 2
    xp = jnp.pad(x_nhwc, ((0, 0), (1, 1), (1, 1), (0, 0)))
    ph = xp.reshape(N, hp // 2, 2, wp // 2, 2, C)
    ph = ph.transpose(0, 2, 4, 1, 3, 5).reshape(N * 4, hp // 2, wp // 2, C)
    m = _ring_mask(hp, wp).reshape(hp // 2, 2, wp // 2, 2, 1)
    m = m.transpose(1, 3, 0, 2, 4).reshape(4, hp // 2, wp // 2, 1)
    return ph, jnp.asarray(m)


# -------------------------------- ResNetBlock ---------------------------------

def resnet_block_apply(p, x_nhwc, down, out_dtype=jnp.bfloat16):
    """BN->SiLU->conv3x3(s)->BN->SiLU->conv3x3  (+ BN->SiLU->conv1x1(s2) skip)."""
    N, H, W, C_in = x_nhwc.shape
    C_out = p["conv1_w"].shape[0]
    stride = 2 if down else 1
    OH, OW = H // stride, W // stride

    s1, t1 = _bn_fold(p["bn1"])
    s2, t2 = _bn_fold(p["bn2"])

    # conv1: BN1+SiLU prologue, 3x3 (stride 1 or 2), BN2 scale folded into the
    # f32 weights before the bf16 cast, BN2 shift + SiLU epilogue, bf16 out.
    w1 = _conv_taps(p["conv1_w"]) * s2[None, None, :]
    if down:
        x_in, mask = _polyphase(x_nhwc)
        mode1 = "3x3s2"
    else:
        x_in = jnp.pad(x_nhwc, ((0, 0), (1, 1), (1, 1), (0, 0)))
        mask = jnp.asarray(_ring_mask(H + 2, W + 2))
        mode1 = "3x3s1"
    h = _fused_conv(x_in, w1, mode=mode1, OH=OH, OW=OW, C_out=C_out,
                    in_scale=s1, in_shift=t1, mask=mask,
                    out_shift=t2, act_out=True, out_dtype=jnp.bfloat16)

    # Residual path.
    if down:
        sds, tds = _bn_fold(p["bn_ds"])
        x_sub = x_nhwc[:, ::2, ::2, :]          # 1x1 stride-2 sampling, no pad
        wds = _conv_taps(p["conv_ds_w"])
        r = _fused_conv(x_sub, wds, mode="1x1", OH=OH, OW=OW, C_out=C_out,
                        in_scale=sds, in_shift=tds, act_out=False,
                        out_dtype=jnp.bfloat16)
    else:
        r = x_nhwc                              # identity skip

    # conv2: 3x3 stride-1 on the zero-padded (already activated) h, with the
    # residual add fused into the epilogue.
    w2 = _conv_taps(p["conv2_w"])
    h_pad = jnp.pad(h, ((0, 0), (1, 1), (1, 1), (0, 0)))
    out = _fused_conv(h_pad, w2, mode="3x3s1", OH=OH, OW=OW, C_out=C_out,
                      residual=r, out_dtype=out_dtype)
    return out


# -------------------------------- parameters ----------------------------------

def _bn_init(key, c):
    k1, k2, k3, k4 = jax.random.split(key, 4)
    return {"gamma": jax.random.uniform(k1, (c,), jnp.float32, 0.5, 1.5),
            "beta": 0.1 * jax.random.normal(k2, (c,), jnp.float32),
            "mean": 0.1 * jax.random.normal(k3, (c,), jnp.float32),
            "var": jax.random.uniform(k4, (c,), jnp.float32, 0.5, 1.5)}


def _conv_init(key, cout, cin, k):
    std = (2.0 / (cin * k * k)) ** 0.5
    return std * jax.random.normal(key, (cout, cin, k, k), jnp.float32)


def init_resnet_block_params(key, depth_in, depth_out=-1):
    down = depth_out != -1
    if not down:
        depth_out = depth_in
    keys = jax.random.split(key, 6)
    p = {"bn1": _bn_init(keys[0], depth_in),
         "conv1_w": _conv_init(keys[1], depth_out, depth_in, 3),
         "bn2": _bn_init(keys[2], depth_out),
         "conv2_w": _conv_init(keys[3], depth_out, depth_out, 3)}
    if down:
        p["bn_ds"] = _bn_init(keys[4], depth_in)
        p["conv_ds_w"] = _conv_init(keys[5], depth_out, depth_in, 1)
    return p, down


# ----------------------------- pure-JAX reference ------------------------------

def _ref_bn(x, bn):
    s = bn["gamma"] / jnp.sqrt(bn["var"] + BN_EPS)
    t = bn["beta"] - bn["mean"] * s
    return x * s + t


def _ref_conv(x, w, stride, pad):
    return jax.lax.conv_general_dilated(
        x, jnp.transpose(w, (2, 3, 1, 0)), (stride, stride),
        [(pad, pad), (pad, pad)], dimension_numbers=("NHWC", "HWIO", "NHWC"))


def ref_resnet_block(p, x_nhwc, down):
    s = 2 if down else 1
    z = _ref_conv(jax.nn.silu(_ref_bn(x_nhwc, p["bn1"])), p["conv1_w"], s, 1)
    z = _ref_conv(jax.nn.silu(_ref_bn(z, p["bn2"])), p["conv2_w"], 1, 1)
    if down:
        r = _ref_conv(jax.nn.silu(_ref_bn(x_nhwc, p["bn_ds"])),
                      p["conv_ds_w"], 2, 0)
    else:
        r = x_nhwc
    return z + r


# ------------------------------------ main -------------------------------------

if __name__ == "__main__":
    key = jax.random.PRNGKey(0)
    kp1, kp2, kx = jax.random.split(key, 3)
    # One downsampling block (8 -> 16 channels, stride 2) followed by one
    # identity-residual block (16 -> 16), covering both code paths.
    p_down, _ = init_resnet_block_params(kp1, 8, 16)
    p_same, _ = init_resnet_block_params(kp2, 16)
    x = jax.random.normal(kx, (2, 8, 16, 16), jnp.float32)      # NCHW

    @jax.jit
    def forward(pd, ps, x_nchw):
        xh = jnp.transpose(x_nchw, (0, 2, 3, 1)).astype(jnp.float32)   # -> NHWC
        y = resnet_block_apply(pd, xh, down=True, out_dtype=jnp.bfloat16)
        y = resnet_block_apply(ps, y, down=False, out_dtype=jnp.float32)
        return jnp.transpose(y, (0, 3, 1, 2))                          # -> NCHW

    out = jax.block_until_ready(forward(p_down, p_same, x))
    assert out.shape == (2, 16, 8, 8), out.shape

    # Verify against an f32 pure-JAX reference (loose tol: bf16 MXU inputs and
    # bf16 inter-block tensors).
    xh = jnp.transpose(x, (0, 2, 3, 1)).astype(jnp.float32)
    ref = ref_resnet_block(p_same, ref_resnet_block(p_down, xh, True), False)
    ref = jnp.transpose(ref, (0, 3, 1, 2))
    np.testing.assert_allclose(np.asarray(out), np.asarray(ref),
                               rtol=0.1, atol=0.1)
    print("KERNEL_OK")
</pallas_src>

<mosaic_0001>
module attributes {stable_mosaic.version = 11 : i64} {
  func.func @_fused_conv_kernel(%arg0: i32, %arg1: i32, %arg2: memref<4x9x9x8xf32, #tpu.memory_space<vmem>>, %arg3: memref<1x8xf32, #tpu.memory_space<vmem>>, %arg4: memref<1x8xf32, #tpu.memory_space<vmem>>, %arg5: memref<4x9x9x1xf32, #tpu.memory_space<vmem>>, %arg6: memref<9x8x16xbf16, #tpu.memory_space<vmem>>, %arg7: memref<1x16xf32, #tpu.memory_space<vmem>>, %arg8: memref<1x8x8x16xbf16, #tpu.memory_space<vmem>>) attributes {dimension_semantics = [#tpu.dimension_semantics<parallel>, #tpu.dimension_semantics<parallel>], iteration_bounds = array<i64: 2, 1>, scalar_prefetch = 0 : i64, scratch_operands = 0 : i64, tpu.core_type = #tpu.core_type<tc>, window_params = [{transform_indices = @transform_0, window_bounds = array<i64: 4, 9, 9, 8>}, {pipeline_mode = #tpu.pipeline_mode<synchronous>, transform_indices = @transform_1, window_bounds = array<i64: 1, 8>}, {pipeline_mode = #tpu.pipeline_mode<synchronous>, transform_indices = @transform_2, window_bounds = array<i64: 1, 8>}, {pipeline_mode = #tpu.pipeline_mode<synchronous>, transform_indices = @transform_3, window_bounds = array<i64: 4, 9, 9, 1>}, {transform_indices = @transform_4, window_bounds = array<i64: 9, 8, 16>}, {transform_indices = @transform_5, window_bounds = array<i64: 1, 16>}, {transform_indices = @transform_6, window_bounds = array<i64: 1, 8, 8, 16>}]} {
    %c0 = arith.constant 0 : index
    %c0_0 = arith.constant 0 : index
    %c0_1 = arith.constant 0 : index
    %c0_2 = arith.constant 0 : index
    %0 = vector.load %arg2[%c0, %c0_0, %c0_1, %c0_2] : memref<4x9x9x8xf32, #tpu.memory_space<vmem>>, vector<4x9x9x8xf32>
    %c0_3 = arith.constant 0 : index
    %c0_4 = arith.constant 0 : index
    %1 = vector.load %arg3[%c0_3, %c0_4] : memref<1x8xf32, #tpu.memory_space<vmem>>, vector<1x8xf32>
    %2 = vector.shape_cast %1 : vector<1x8xf32> to vector<1x1x1x8xf32>
    %3 = vector.broadcast %2 : vector<1x1x1x8xf32> to vector<4x9x9x8xf32>
    %4 = arith.mulf %0, %3 : vector<4x9x9x8xf32>
    %c0_5 = arith.constant 0 : index
    %c0_6 = arith.constant 0 : index
    %5 = vector.load %arg4[%c0_5, %c0_6] : memref<1x8xf32, #tpu.memory_space<vmem>>, vector<1x8xf32>
    %6 = vector.shape_cast %5 : vector<1x8xf32> to vector<1x1x1x8xf32>
    %7 = vector.broadcast %6 : vector<1x1x1x8xf32> to vector<4x9x9x8xf32>
    %8 = arith.addf %4, %7 : vector<4x9x9x8xf32>
    %cst = arith.constant 5.000000e-01 : f32
    %9 = vector.broadcast %cst : f32 to vector<4x9x9x8xf32>
    %10 = arith.mulf %9, %8 : vector<4x9x9x8xf32>
    %11 = math.tanh %10 : vector<4x9x9x8xf32>
    %cst_7 = arith.constant 5.000000e-01 : f32
    %12 = vector.broadcast %cst_7 : f32 to vector<4x9x9x8xf32>
    %13 = arith.mulf %12, %11 : vector<4x9x9x8xf32>
    %cst_8 = arith.constant 5.000000e-01 : f32
    %14 = vector.broadcast %cst_8 : f32 to vector<4x9x9x8xf32>
    %15 = arith.addf %13, %14 : vector<4x9x9x8xf32>
    %16 = arith.mulf %8, %15 : vector<4x9x9x8xf32>
    %c0_9 = arith.constant 0 : index
    %c0_10 = arith.constant 0 : index
    %c0_11 = arith.constant 0 : index
    %c0_12 = arith.constant 0 : index
    %17 = vector.load %arg5[%c0_9, %c0_10, %c0_11, %c0_12] : memref<4x9x9x1xf32, #tpu.memory_space<vmem>>, vector<4x9x9x1xf32>
    %18 = vector.broadcast %17 : vector<4x9x9x1xf32> to vector<4x9x9x8xf32>
    %19 = arith.mulf %16, %18 : vector<4x9x9x8xf32>
    %20 = arith.truncf %19 : vector<4x9x9x8xf32> to vector<4x9x9x8xbf16>
    %21 = vector.extract_strided_slice %20 {offsets = [0, 0, 0, 0], sizes = [1, 8, 8, 8], strides = [1, 1, 1, 1]} : vector<4x9x9x8xbf16> to vector<1x8x8x8xbf16>
    %22 = vector.shape_cast %21 : vector<1x8x8x8xbf16> to vector<8x8x8xbf16>
    %23 = vector.shape_cast %22 : vector<8x8x8xbf16> to vector<64x8xbf16>
    %c0_13 = arith.constant 0 : index
    %c0_14 = arith.constant 0 : index
    %c0_15 = arith.constant 0 : index
    %24 = vector.load %arg6[%c0_13, %c0_14, %c0_15] : memref<9x8x16xbf16, #tpu.memory_space<vmem>>, vector<1x8x16xbf16>
    %25 = vector.shape_cast %24 : vector<1x8x16xbf16> to vector<8x16xbf16>
    %cst_16 = arith.constant dense<0.000000e+00> : vector<64x16xf32>
    %26 = tpu.matmul %23, %25, %cst_16 {dimension_numbers = #tpu.dot_dimension_numbers<[1], [0], [0], [1], [0, 0, 1, 1], [], []>} : vector<64x8xbf16>, vector<8x16xbf16>, vector<64x16xf32> -> vector<64x16xf32>
    %27 = vector.extract_strided_slice %20 {offsets = [1, 0, 0, 0], sizes = [1, 8, 8, 8], strides = [1, 1, 1, 1]} : vector<4x9x9x8xbf16> to vector<1x8x8x8xbf16>
    %28 = vector.shape_cast %27 : vector<1x8x8x8xbf16> to vector<8x8x8xbf16>
    %29 = vector.shape_cast %28 : vector<8x8x8xbf16> to vector<64x8xbf16>
    %c1 = arith.constant 1 : index
    %c0_17 = arith.constant 0 : index
    %c0_18 = arith.constant 0 : index
    %30 = vector.load %arg6[%c1, %c0_17, %c0_18] : memref<9x8x16xbf16, #tpu.memory_space<vmem>>, vector<1x8x16xbf16>
    %31 = vector.shape_cast %30 : vector<1x8x16xbf16> to vector<8x16xbf16>
    %cst_19 = arith.constant dense<0.000000e+00> : vector<64x16xf32>
    %32 = tpu.matmul %29, %31, %cst_19 {dimension_numbers = #tpu.dot_dimension_numbers<[1], [0], [0], [1], [0, 0, 1, 1], [], []>} : vector<64x8xbf16>, vector<8x16xbf16>, vector<64x16xf32> -> vector<64x16xf32>
    %33 = arith.addf %26, %32 : vector<64x16xf32>
    %34 = vector.extract_strided_slice %20 {offsets = [0, 0, 1, 0], sizes = [1, 8, 8, 8], strides = [1, 1, 1, 1]} : vector<4x9x9x8xbf16> to vector<1x8x8x8xbf16>
    %35 = vector.shape_cast %34 : vector<1x8x8x8xbf16> to vector<8x8x8xbf16>
    %36 = vector.shape_cast %35 : vector<8x8x8xbf16> to vector<64x8xbf16>
    %c2 = arith.constant 2 : index
    %c0_20 = arith.constant 0 : index
    %c0_21 = arith.constant 0 : index
    %37 = vector.load %arg6[%c2, %c0_20, %c0_21] : memref<9x8x16xbf16, #tpu.memory_space<vmem>>, vector<1x8x16xbf16>
    %38 = vector.shape_cast %37 : vector<1x8x16xbf16> to vector<8x16xbf16>
    %cst_22 = arith.constant dense<0.000000e+00> : vector<64x16xf32>
    %39 = tpu.matmul %36, %38, %cst_22 {dimension_numbers = #tpu.dot_dimension_numbers<[1], [0], [0], [1], [0, 0, 1, 1], [], []>} : vector<64x8xbf16>, vector<8x16xbf16>, vector<64x16xf32> -> vector<64x16xf32>
    %40 = arith.addf %33, %39 : vector<64x16xf32>
    %41 = vector.extract_strided_slice %20 {offsets = [2, 0, 0, 0], sizes = [1, 8, 8, 8], strides = [1, 1, 1, 1]} : vector<4x9x9x8xbf16> to vector<1x8x8x8xbf16>
    %42 = vector.shape_cast %41 : vector<1x8x8x8xbf16> to vector<8x8x8xbf16>
    %43 = vector.shape_cast %42 : vector<8x8x8xbf16> to vector<64x8xbf16>
    %c3 = arith.constant 3 : index
    %c0_23 = arith.constant 0 : index
    %c0_24 = arith.constant 0 : index
    %44 = vector.load %arg6[%c3, %c0_23, %c0_24] : memref<9x8x16xbf16, #tpu.memory_space<vmem>>, vector<1x8x16xbf16>
    %45 = vector.shape_cast %44 : vector<1x8x16xbf16> to vector<8x16xbf16>
    %cst_25 = arith.constant dense<0.000000e+00> : vector<64x16xf32>
    %46 = tpu.matmul %43, %45, %cst_25 {dimension_numbers = #tpu.dot_dimension_numbers<[1], [0], [0], [1], [0, 0, 1, 1], [], []>} : vector<64x8xbf16>, vector<8x16xbf16>, vector<64x16xf32> -> vector<64x16xf32>
    %47 = arith.addf %40, %46 : vector<64x16xf32>
    %48 = vector.extract_strided_slice %20 {offsets = [3, 0, 0, 0], sizes = [1, 8, 8, 8], strides = [1, 1, 1, 1]} : vector<4x9x9x8xbf16> to vector<1x8x8x8xbf16>
    %49 = vector.shape_cast %48 : vector<1x8x8x8xbf16> to vector<8x8x8xbf16>
    %50 = vector.shape_cast %49 : vector<8x8x8xbf16> to vector<64x8xbf16>
    %c4 = arith.constant 4 : index
    %c0_26 = arith.constant 0 : index
    %c0_27 = arith.constant 0 : index
    %51 = vector.load %arg6[%c4, %c0_26, %c0_27] : memref<9x8x16xbf16, #tpu.memory_space<vmem>>, vector<1x8x16xbf16>
    %52 = vector.shape_cast %51 : vector<1x8x16xbf16> to vector<8x16xbf16>
    %cst_28 = arith.constant dense<0.000000e+00> : vector<64x16xf32>
    %53 = tpu.matmul %50, %52, %cst_28 {dimension_numbers = #tpu.dot_dimension_numbers<[1], [0], [0], [1], [0, 0, 1, 1], [], []>} : vector<64x8xbf16>, vector<8x16xbf16>, vector<64x16xf32> -> vector<64x16xf32>
    %54 = arith.addf %47, %53 : vector<64x16xf32>
    %55 = vector.extract_strided_slice %20 {offsets = [2, 0, 1, 0], sizes = [1, 8, 8, 8], strides = [1, 1, 1, 1]} : vector<4x9x9x8xbf16> to vector<1x8x8x8xbf16>
    %56 = vector.shape_cast %55 : vector<1x8x8x8xbf16> to vector<8x8x8xbf16>
    %57 = vector.shape_cast %56 : vector<8x8x8xbf16> to vector<64x8xbf16>
    %c5 = arith.constant 5 : index
    %c0_29 = arith.constant 0 : index
    %c0_30 = arith.constant 0 : index
    %58 = vector.load %arg6[%c5, %c0_29, %c0_30] : memref<9x8x16xbf16, #tpu.memory_space<vmem>>, vector<1x8x16xbf16>
    %59 = vector.shape_cast %58 : vector<1x8x16xbf16> to vector<8x16xbf16>
    %cst_31 = arith.constant dense<0.000000e+00> : vector<64x16xf32>
    %60 = tpu.matmul %57, %59, %cst_31 {dimension_numbers = #tpu.dot_dimension_numbers<[1], [0], [0], [1], [0, 0, 1, 1], [], []>} : vector<64x8xbf16>, vector<8x16xbf16>, vector<64x16xf32> -> vector<64x16xf32>
    %61 = arith.addf %54, %60 : vector<64x16xf32>
    %62 = vector.extract_strided_slice %20 {offsets = [0, 1, 0, 0], sizes = [1, 8, 8, 8], strides = [1, 1, 1, 1]} : vector<4x9x9x8xbf16> to vector<1x8x8x8xbf16>
    %63 = vector.shape_cast %62 : vector<1x8x8x8xbf16> to vector<8x8x8xbf16>
    %64 = vector.shape_cast %63 : vector<8x8x8xbf16> to vector<64x8xbf16>
    %c6 = arith.constant 6 : index
    %c0_32 = arith.constant 0 : index
    %c0_33 = arith.constant 0 : index
    %65 = vector.load %arg6[%c6, %c0_32, %c0_33] : memref<9x8x16xbf16, #tpu.memory_space<vmem>>, vector<1x8x16xbf16>
    %66 = vector.shape_cast %65 : vector<1x8x16xbf16> to vector<8x16xbf16>
    %cst_34 = arith.constant dense<0.000000e+00> : vector<64x16xf32>
    %67 = tpu.matmul %64, %66, %cst_34 {dimension_numbers = #tpu.dot_dimension_numbers<[1], [0], [0], [1], [0, 0, 1, 1], [], []>} : vector<64x8xbf16>, vector<8x16xbf16>, vector<64x16xf32> -> vector<64x16xf32>
    %68 = arith.addf %61, %67 : vector<64x16xf32>
    %69 = vector.extract_strided_slice %20 {offsets = [1, 1, 0, 0], sizes = [1, 8, 8, 8], strides = [1, 1, 1, 1]} : vector<4x9x9x8xbf16> to vector<1x8x8x8xbf16>
    %70 = vector.shape_cast %69 : vector<1x8x8x8xbf16> to vector<8x8x8xbf16>
    %71 = vector.shape_cast %70 : vector<8x8x8xbf16> to vector<64x8xbf16>
    %c7 = arith.constant 7 : index
    %c0_35 = arith.constant 0 : index
    %c0_36 = arith.constant 0 : index
    %72 = vector.load %arg6[%c7, %c0_35, %c0_36] : memref<9x8x16xbf16, #tpu.memory_space<vmem>>, vector<1x8x16xbf16>
    %73 = vector.shape_cast %72 : vector<1x8x16xbf16> to vector<8x16xbf16>
    %cst_37 = arith.constant dense<0.000000e+00> : vector<64x16xf32>
    %74 = tpu.matmul %71, %73, %cst_37 {dimension_numbers = #tpu.dot_dimension_numbers<[1], [0], [0], [1], [0, 0, 1, 1], [], []>} : vector<64x8xbf16>, vector<8x16xbf16>, vector<64x16xf32> -> vector<64x16xf32>
    %75 = arith.addf %68, %74 : vector<64x16xf32>
    %76 = vector.extract_strided_slice %20 {offsets = [0, 1, 1, 0], sizes = [1, 8, 8, 8], strides = [1, 1, 1, 1]} : vector<4x9x9x8xbf16> to vector<1x8x8x8xbf16>
    %77 = vector.shape_cast %76 : vector<1x8x8x8xbf16> to vector<8x8x8xbf16>
    %78 = vector.shape_cast %77 : vector<8x8x8xbf16> to vector<64x8xbf16>
    %c8 = arith.constant 8 : index
    %c0_38 = arith.constant 0 : index
    %c0_39 = arith.constant 0 : index
    %79 = vector.load %arg6[%c8, %c0_38, %c0_39] : memref<9x8x16xbf16, #tpu.memory_space<vmem>>, vector<1x8x16xbf16>
    %80 = vector.shape_cast %79 : vector<1x8x16xbf16> to vector<8x16xbf16>
    %cst_40 = arith.constant dense<0.000000e+00> : vector<64x16xf32>
    %81 = tpu.matmul %78, %80, %cst_40 {dimension_numbers = #tpu.dot_dimension_numbers<[1], [0], [0], [1], [0, 0, 1, 1], [], []>} : vector<64x8xbf16>, vector<8x16xbf16>, vector<64x16xf32> -> vector<64x16xf32>
    %82 = arith.addf %75, %81 : vector<64x16xf32>
    %c0_41 = arith.constant 0 : index
    %c0_42 = arith.constant 0 : index
    %83 = vector.load %arg7[%c0_41, %c0_42] : memref<1x16xf32, #tpu.memory_space<vmem>>, vector<1x16xf32>
    %84 = vector.broadcast %83 : vector<1x16xf32> to vector<64x16xf32>
    %85 = arith.addf %82, %84 : vector<64x16xf32>
    %cst_43 = arith.constant 5.000000e-01 : f32
    %86 = vector.broadcast %cst_43 : f32 to vector<64x16xf32>
    %87 = arith.mulf %86, %85 : vector<64x16xf32>
    %88 = math.tanh %87 : vector<64x16xf32>
    %cst_44 = arith.constant 5.000000e-01 : f32
    %89 = vector.broadcast %cst_44 : f32 to vector<64x16xf32>
    %90 = arith.mulf %89, %88 : vector<64x16xf32>
    %cst_45 = arith.constant 5.000000e-01 : f32
    %91 = vector.broadcast %cst_45 : f32 to vector<64x16xf32>
    %92 = arith.addf %90, %91 : vector<64x16xf32>
    %93 = arith.mulf %85, %92 : vector<64x16xf32>
    %94 = vector.shape_cast %93 : vector<64x16xf32> to vector<1x8x8x16xf32>
    %95 = arith.truncf %94 : vector<1x8x8x16xf32> to vector<1x8x8x16xbf16>
    %c0_46 = arith.constant 0 : index
    %c0_47 = arith.constant 0 : index
    %c0_48 = arith.constant 0 : index
    %c0_49 = arith.constant 0 : index
    %96 = vector.load %arg8[%c0_46, %c0_47, %c0_48, %c0_49] : memref<1x8x8x16xbf16, #tpu.memory_space<vmem>>, vector<1x8x8x16xbf16>
    tpu.vector_store %arg8[%c0_46, %c0_47, %c0_48, %c0_49], %95 {strides = array<i32>} : memref<1x8x8x16xbf16, #tpu.memory_space<vmem>>, vector<1x8x8x16xbf16>,
    return
  }
  func.func @transform_0(%arg0: i32, %arg1: i32) -> (i32, i32, i32, i32) {
    %c0_i32 = arith.constant 0 : i32
    %c0_i32_0 = arith.constant 0 : i32
    %c0_i32_1 = arith.constant 0 : i32
    %c0_i32_2 = arith.constant 0 : i32
    return %arg0, %c0_i32, %c0_i32_0, %c0_i32_1 : i32, i32, i32, i32
  }
  func.func @transform_1(%arg0: i32, %arg1: i32) -> (i32, i32) {
    %c0_i32 = arith.constant 0 : i32
    %c0_i32_0 = arith.constant 0 : i32
    %c0_i32_1 = arith.constant 0 : i32
    return %c0_i32, %c0_i32_0 : i32, i32
  }
  func.func @transform_2(%arg0: i32, %arg1: i32) -> (i32, i32) {
    %c0_i32 = arith.constant 0 : i32
    %c0_i32_0 = arith.constant 0 : i32
    %c0_i32_1 = arith.constant 0 : i32
    return %c0_i32, %c0_i32_0 : i32, i32
  }
  func.func @transform_3(%arg0: i32, %arg1: i32) -> (i32, i32, i32, i32) {
    %c0_i32 = arith.constant 0 : i32
    %c0_i32_0 = arith.constant 0 : i32
    %c0_i32_1 = arith.constant 0 : i32
    %c0_i32_2 = arith.constant 0 : i32
    %c0_i32_3 = arith.constant 0 : i32
    return %c0_i32, %c0_i32_0, %c0_i32_1, %c0_i32_2 : i32, i32, i32, i32
  }
  func.func @transform_4(%arg0: i32, %arg1: i32) -> (i32, i32, i32) {
    %c0_i32 = arith.constant 0 : i32
    %c0_i32_0 = arith.constant 0 : i32
    %c0_i32_1 = arith.constant 0 : i32
    return %c0_i32, %c0_i32_0, %arg1 : i32, i32, i32
  }
  func.func @transform_5(%arg0: i32, %arg1: i32) -> (i32, i32) {
    %c0_i32 = arith.constant 0 : i32
    %c0_i32_0 = arith.constant 0 : i32
    return %c0_i32, %arg1 : i32, i32
  }
  func.func @transform_6(%arg0: i32, %arg1: i32) -> (i32, i32, i32, i32) {
    %c0_i32 = arith.constant 0 : i32
    %c0_i32_0 = arith.constant 0 : i32
    %c0_i32_1 = arith.constant 0 : i32
    return %arg0, %c0_i32, %c0_i32_0, %arg1 : i32, i32, i32, i32
  }
}

module attributes {stable_mosaic.version = 11 : i64} {
  func.func @_fused_conv_kernel(%arg0: i32, %arg1: i32, %arg2: memref<1x8x8x8xf32, #tpu.memory_space<vmem>>, %arg3: memref<1x8xf32, #tpu.memory_space<vmem>>, %arg4: memref<1x8xf32, #tpu.memory_space<vmem>>, %arg5: memref<1x8x16xbf16, #tpu.memory_space<vmem>>, %arg6: memref<1x8x8x16xbf16, #tpu.memory_space<vmem>>) attributes {dimension_semantics = [#tpu.dimension_semantics<parallel>, #tpu.dimension_semantics<parallel>], iteration_bounds = array<i64: 2, 1>, scalar_prefetch = 0 : i64, scratch_operands = 0 : i64, tpu.core_type = #tpu.core_type<tc>, window_params = [{transform_indices = @transform_0, window_bounds = array<i64: 1, 8, 8, 8>}, {pipeline_mode = #tpu.pipeline_mode<synchronous>, transform_indices = @transform_1, window_bounds = array<i64: 1, 8>}, {pipeline_mode = #tpu.pipeline_mode<synchronous>, transform_indices = @transform_2, window_bounds = array<i64: 1, 8>}, {transform_indices = @transform_3, window_bounds = array<i64: 1, 8, 16>}, {transform_indices = @transform_4, window_bounds = array<i64: 1, 8, 8, 16>}]} {
    %c0 = arith.constant 0 : index
    %c0_0 = arith.constant 0 : index
    %c0_1 = arith.constant 0 : index
    %c0_2 = arith.constant 0 : index
    %0 = vector.load %arg2[%c0, %c0_0, %c0_1, %c0_2] : memref<1x8x8x8xf32, #tpu.memory_space<vmem>>, vector<1x8x8x8xf32>
    %1 = vector.shape_cast %0 : vector<1x8x8x8xf32> to vector<8x8x8xf32>
    %c0_3 = arith.constant 0 : index
    %c0_4 = arith.constant 0 : index
    %2 = vector.load %arg3[%c0_3, %c0_4] : memref<1x8xf32, #tpu.memory_space<vmem>>, vector<1x8xf32>
    %3 = vector.shape_cast %2 : vector<1x8xf32> to vector<1x1x8xf32>
    %4 = vector.broadcast %3 : vector<1x1x8xf32> to vector<8x8x8xf32>
    %5 = arith.mulf %1, %4 : vector<8x8x8xf32>
    %c0_5 = arith.constant 0 : index
    %c0_6 = arith.constant 0 : index
    %6 = vector.load %arg4[%c0_5, %c0_6] : memref<1x8xf32, #tpu.memory_space<vmem>>, vector<1x8xf32>
    %7 = vector.shape_cast %6 : vector<1x8xf32> to vector<1x1x8xf32>
    %8 = vector.broadcast %7 : vector<1x1x8xf32> to vector<8x8x8xf32>
    %9 = arith.addf %5, %8 : vector<8x8x8xf32>
    %cst = arith.constant 5.000000e-01 : f32
    %10 = vector.broadcast %cst : f32 to vector<8x8x8xf32>
    %11 = arith.mulf %10, %9 : vector<8x8x8xf32>
    %12 = math.tanh %11 : vector<8x8x8xf32>
    %cst_7 = arith.constant 5.000000e-01 : f32
    %13 = vector.broadcast %cst_7 : f32 to vector<8x8x8xf32>
    %14 = arith.mulf %13, %12 : vector<8x8x8xf32>
    %cst_8 = arith.constant 5.000000e-01 : f32
    %15 = vector.broadcast %cst_8 : f32 to vector<8x8x8xf32>
    %16 = arith.addf %14, %15 : vector<8x8x8xf32>
    %17 = arith.mulf %9, %16 : vector<8x8x8xf32>
    %18 = arith.truncf %17 : vector<8x8x8xf32> to vector<8x8x8xbf16>
    %19 = vector.shape_cast %18 : vector<8x8x8xbf16> to vector<64x8xbf16>
    %c0_9 = arith.constant 0 : index
    %c0_10 = arith.constant 0 : index
    %c0_11 = arith.constant 0 : index
    %20 = vector.load %arg5[%c0_9, %c0_10, %c0_11] : memref<1x8x16xbf16, #tpu.memory_space<vmem>>, vector<1x8x16xbf16>
    %21 = vector.shape_cast %20 : vector<1x8x16xbf16> to vector<8x16xbf16>
    %cst_12 = arith.constant dense<0.000000e+00> : vector<64x16xf32>
    %22 = tpu.matmul %19, %21, %cst_12 {dimension_numbers = #tpu.dot_dimension_numbers<[1], [0], [0], [1], [0, 0, 1, 1], [], []>} : vector<64x8xbf16>, vector<8x16xbf16>, vector<64x16xf32> -> vector<64x16xf32>
    %23 = vector.shape_cast %22 : vector<64x16xf32> to vector<1x8x8x16xf32>
    %24 = arith.truncf %23 : vector<1x8x8x16xf32> to vector<1x8x8x16xbf16>
    %c0_13 = arith.constant 0 : index
    %c0_14 = arith.constant 0 : index
    %c0_15 = arith.constant 0 : index
    %c0_16 = arith.constant 0 : index
    %25 = vector.load %arg6[%c0_13, %c0_14, %c0_15, %c0_16] : memref<1x8x8x16xbf16, #tpu.memory_space<vmem>>, vector<1x8x8x16xbf16>
    tpu.vector_store %arg6[%c0_13, %c0_14, %c0_15, %c0_16], %24 {strides = array<i32>} : memref<1x8x8x16xbf16, #tpu.memory_space<vmem>>, vector<1x8x8x16xbf16>,
    return
  }
  func.func @transform_0(%arg0: i32, %arg1: i32) -> (i32, i32, i32, i32) {
    %c0_i32 = arith.constant 0 : i32
    %c0_i32_0 = arith.constant 0 : i32
    %c0_i32_1 = arith.constant 0 : i32
    %c0_i32_2 = arith.constant 0 : i32
    return %arg0, %c0_i32, %c0_i32_0, %c0_i32_1 : i32, i32, i32, i32
  }
  func.func @transform_1(%arg0: i32, %arg1: i32) -> (i32, i32) {
    %c0_i32 = arith.constant 0 : i32
    %c0_i32_0 = arith.constant 0 : i32
    %c0_i32_1 = arith.constant 0 : i32
    return %c0_i32, %c0_i32_0 : i32, i32
  }
  func.func @transform_2(%arg0: i32, %arg1: i32) -> (i32, i32) {
    %c0_i32 = arith.constant 0 : i32
    %c0_i32_0 = arith.constant 0 : i32
    %c0_i32_1 = arith.constant 0 : i32
    return %c0_i32, %c0_i32_0 : i32, i32
  }
  func.func @transform_3(%arg0: i32, %arg1: i32) -> (i32, i32, i32) {
    %c0_i32 = arith.constant 0 : i32
    %c0_i32_0 = arith.constant 0 : i32
    %c0_i32_1 = arith.constant 0 : i32
    return %c0_i32, %c0_i32_0, %arg1 : i32, i32, i32
  }
  func.func @transform_4(%arg0: i32, %arg1: i32) -> (i32, i32, i32, i32) {
    %c0_i32 = arith.constant 0 : i32
    %c0_i32_0 = arith.constant 0 : i32
    %c0_i32_1 = arith.constant 0 : i32
    return %arg0, %c0_i32, %c0_i32_0, %arg1 : i32, i32, i32, i32
  }
}

module attributes {stable_mosaic.version = 11 : i64} {
  func.func @_fused_conv_kernel(%arg0: i32, %arg1: i32, %arg2: memref<1x10x10x16xbf16, #tpu.memory_space<vmem>>, %arg3: memref<9x16x16xbf16, #tpu.memory_space<vmem>>, %arg4: memref<1x8x8x16xbf16, #tpu.memory_space<vmem>>, %arg5: memref<1x8x8x16xbf16, #tpu.memory_space<vmem>>) attributes {dimension_semantics = [#tpu.dimension_semantics<parallel>, #tpu.dimension_semantics<parallel>], iteration_bounds = array<i64: 2, 1>, scalar_prefetch = 0 : i64, scratch_operands = 0 : i64, tpu.core_type = #tpu.core_type<tc>, window_params = [{transform_indices = @transform_0, window_bounds = array<i64: 1, 10, 10, 16>}, {transform_indices = @transform_1, window_bounds = array<i64: 9, 16, 16>}, {transform_indices = @transform_2, window_bounds = array<i64: 1, 8, 8, 16>}, {transform_indices = @transform_3, window_bounds = array<i64: 1, 8, 8, 16>}]} {
    %c0 = arith.constant 0 : index
    %c0_0 = arith.constant 0 : index
    %c0_1 = arith.constant 0 : index
    %c0_2 = arith.constant 0 : index
    %0 = vector.load %arg2[%c0, %c0_0, %c0_1, %c0_2] : memref<1x10x10x16xbf16, #tpu.memory_space<vmem>>, vector<1x10x10x16xbf16>
    %1 = vector.shape_cast %0 : vector<1x10x10x16xbf16> to vector<10x10x16xbf16>
    %2 = vector.extract_strided_slice %1 {offsets = [0, 0, 0], sizes = [8, 8, 16], strides = [1, 1, 1]} : vector<10x10x16xbf16> to vector<8x8x16xbf16>
    %3 = vector.shape_cast %2 : vector<8x8x16xbf16> to vector<64x16xbf16>
    %c0_3 = arith.constant 0 : index
    %c0_4 = arith.constant 0 : index
    %c0_5 = arith.constant 0 : index
    %4 = vector.load %arg3[%c0_3, %c0_4, %c0_5] : memref<9x16x16xbf16, #tpu.memory_space<vmem>>, vector<1x16x16xbf16>
    %5 = vector.shape_cast %4 : vector<1x16x16xbf16> to vector<16x16xbf16>
    %cst = arith.constant dense<0.000000e+00> : vector<64x16xf32>
    %6 = tpu.matmul %3, %5, %cst {dimension_numbers = #tpu.dot_dimension_numbers<[1], [0], [0], [1], [0, 0, 1, 1], [], []>} : vector<64x16xbf16>, vector<16x16xbf16>, vector<64x16xf32> -> vector<64x16xf32>
    %7 = vector.extract_strided_slice %1 {offsets = [0, 1, 0], sizes = [8, 8, 16], strides = [1, 1, 1]} : vector<10x10x16xbf16> to vector<8x8x16xbf16>
    %8 = vector.shape_cast %7 : vector<8x8x16xbf16> to vector<64x16xbf16>
    %c1 = arith.constant 1 : index
    %c0_6 = arith.constant 0 : index
    %c0_7 = arith.constant 0 : index
    %9 = vector.load %arg3[%c1, %c0_6, %c0_7] : memref<9x16x16xbf16, #tpu.memory_space<vmem>>, vector<1x16x16xbf16>
    %10 = vector.shape_cast %9 : vector<1x16x16xbf16> to vector<16x16xbf16>
    %cst_8 = arith.constant dense<0.000000e+00> : vector<64x16xf32>
    %11 = tpu.matmul %8, %10, %cst_8 {dimension_numbers = #tpu.dot_dimension_numbers<[1], [0], [0], [1], [0, 0, 1, 1], [], []>} : vector<64x16xbf16>, vector<16x16xbf16>, vector<64x16xf32> -> vector<64x16xf32>
    %12 = arith.addf %6, %11 : vector<64x16xf32>
    %13 = vector.extract_strided_slice %1 {offsets = [0, 2, 0], sizes = [8, 8, 16], strides = [1, 1, 1]} : vector<10x10x16xbf16> to vector<8x8x16xbf16>
    %14 = vector.shape_cast %13 : vector<8x8x16xbf16> to vector<64x16xbf16>
    %c2 = arith.constant 2 : index
    %c0_9 = arith.constant 0 : index
    %c0_10 = arith.constant 0 : index
    %15 = vector.load %arg3[%c2, %c0_9, %c0_10] : memref<9x16x16xbf16, #tpu.memory_space<vmem>>, vector<1x16x16xbf16>
    %16 = vector.shape_cast %15 : vector<1x16x16xbf16> to vector<16x16xbf16>
    %cst_11 = arith.constant dense<0.000000e+00> : vector<64x16xf32>
    %17 = tpu.matmul %14, %16, %cst_11 {dimension_numbers = #tpu.dot_dimension_numbers<[1], [0], [0], [1], [0, 0, 1, 1], [], []>} : vector<64x16xbf16>, vector<16x16xbf16>, vector<64x16xf32> -> vector<64x16xf32>
    %18 = arith.addf %12, %17 : vector<64x16xf32>
    %19 = vector.extract_strided_slice %1 {offsets = [1, 0, 0], sizes = [8, 8, 16], strides = [1, 1, 1]} : vector<10x10x16xbf16> to vector<8x8x16xbf16>
    %20 = vector.shape_cast %19 : vector<8x8x16xbf16> to vector<64x16xbf16>
    %c3 = arith.constant 3 : index
    %c0_12 = arith.constant 0 : index
    %c0_13 = arith.constant 0 : index
    %21 = vector.load %arg3[%c3, %c0_12, %c0_13] : memref<9x16x16xbf16, #tpu.memory_space<vmem>>, vector<1x16x16xbf16>
    %22 = vector.shape_cast %21 : vector<1x16x16xbf16> to vector<16x16xbf16>
    %cst_14 = arith.constant dense<0.000000e+00> : vector<64x16xf32>
    %23 = tpu.matmul %20, %22, %cst_14 {dimension_numbers = #tpu.dot_dimension_numbers<[1], [0], [0], [1], [0, 0, 1, 1], [], []>} : vector<64x16xbf16>, vector<16x16xbf16>, vector<64x16xf32> -> vector<64x16xf32>
    %24 = arith.addf %18, %23 : vector<64x16xf32>
    %25 = vector.extract_strided_slice %1 {offsets = [1, 1, 0], sizes = [8, 8, 16], strides = [1, 1, 1]} : vector<10x10x16xbf16> to vector<8x8x16xbf16>
    %26 = vector.shape_cast %25 : vector<8x8x16xbf16> to vector<64x16xbf16>
    %c4 = arith.constant 4 : index
    %c0_15 = arith.constant 0 : index
    %c0_16 = arith.constant 0 : index
    %27 = vector.load %arg3[%c4, %c0_15, %c0_16] : memref<9x16x16xbf16, #tpu.memory_space<vmem>>, vector<1x16x16xbf16>
    %28 = vector.shape_cast %27 : vector<1x16x16xbf16> to vector<16x16xbf16>
    %cst_17 = arith.constant dense<0.000000e+00> : vector<64x16xf32>
    %29 = tpu.matmul %26, %28, %cst_17 {dimension_numbers = #tpu.dot_dimension_numbers<[1], [0], [0], [1], [0, 0, 1, 1], [], []>} : vector<64x16xbf16>, vector<16x16xbf16>, vector<64x16xf32> -> vector<64x16xf32>
    %30 = arith.addf %24, %29 : vector<64x16xf32>
    %31 = vector.extract_strided_slice %1 {offsets = [1, 2, 0], sizes = [8, 8, 16], strides = [1, 1, 1]} : vector<10x10x16xbf16> to vector<8x8x16xbf16>
    %32 = vector.shape_cast %31 : vector<8x8x16xbf16> to vector<64x16xbf16>
    %c5 = arith.constant 5 : index
    %c0_18 = arith.constant 0 : index
    %c0_19 = arith.constant 0 : index
    %33 = vector.load %arg3[%c5, %c0_18, %c0_19] : memref<9x16x16xbf16, #tpu.memory_space<vmem>>, vector<1x16x16xbf16>
    %34 = vector.shape_cast %33 : vector<1x16x16xbf16> to vector<16x16xbf16>
    %cst_20 = arith.constant dense<0.000000e+00> : vector<64x16xf32>
    %35 = tpu.matmul %32, %34, %cst_20 {dimension_numbers = #tpu.dot_dimension_numbers<[1], [0], [0], [1], [0, 0, 1, 1], [], []>} : vector<64x16xbf16>, vector<16x16xbf16>, vector<64x16xf32> -> vector<64x16xf32>
    %36 = arith.addf %30, %35 : vector<64x16xf32>
    %37 = vector.extract_strided_slice %1 {offsets = [2, 0, 0], sizes = [8, 8, 16], strides = [1, 1, 1]} : vector<10x10x16xbf16> to vector<8x8x16xbf16>
    %38 = vector.shape_cast %37 : vector<8x8x16xbf16> to vector<64x16xbf16>
    %c6 = arith.constant 6 : index
    %c0_21 = arith.constant 0 : index
    %c0_22 = arith.constant 0 : index
    %39 = vector.load %arg3[%c6, %c0_21, %c0_22] : memref<9x16x16xbf16, #tpu.memory_space<vmem>>, vector<1x16x16xbf16>
    %40 = vector.shape_cast %39 : vector<1x16x16xbf16> to vector<16x16xbf16>
    %cst_23 = arith.constant dense<0.000000e+00> : vector<64x16xf32>
    %41 = tpu.matmul %38, %40, %cst_23 {dimension_numbers = #tpu.dot_dimension_numbers<[1], [0], [0], [1], [0, 0, 1, 1], [], []>} : vector<64x16xbf16>, vector<16x16xbf16>, vector<64x16xf32> -> vector<64x16xf32>
    %42 = arith.addf %36, %41 : vector<64x16xf32>
    %43 = vector.extract_strided_slice %1 {offsets = [2, 1, 0], sizes = [8, 8, 16], strides = [1, 1, 1]} : vector<10x10x16xbf16> to vector<8x8x16xbf16>
    %44 = vector.shape_cast %43 : vector<8x8x16xbf16> to vector<64x16xbf16>
    %c7 = arith.constant 7 : index
    %c0_24 = arith.constant 0 : index
    %c0_25 = arith.constant 0 : index
    %45 = vector.load %arg3[%c7, %c0_24, %c0_25] : memref<9x16x16xbf16, #tpu.memory_space<vmem>>, vector<1x16x16xbf16>
    %46 = vector.shape_cast %45 : vector<1x16x16xbf16> to vector<16x16xbf16>
    %cst_26 = arith.constant dense<0.000000e+00> : vector<64x16xf32>
    %47 = tpu.matmul %44, %46, %cst_26 {dimension_numbers = #tpu.dot_dimension_numbers<[1], [0], [0], [1], [0, 0, 1, 1], [], []>} : vector<64x16xbf16>, vector<16x16xbf16>, vector<64x16xf32> -> vector<64x16xf32>
    %48 = arith.addf %42, %47 : vector<64x16xf32>
    %49 = vector.extract_strided_slice %1 {offsets = [2, 2, 0], sizes = [8, 8, 16], strides = [1, 1, 1]} : vector<10x10x16xbf16> to vector<8x8x16xbf16>
    %50 = vector.shape_cast %49 : vector<8x8x16xbf16> to vector<64x16xbf16>
    %c8 = arith.constant 8 : index
    %c0_27 = arith.constant 0 : index
    %c0_28 = arith.constant 0 : index
    %51 = vector.load %arg3[%c8, %c0_27, %c0_28] : memref<9x16x16xbf16, #tpu.memory_space<vmem>>, vector<1x16x16xbf16>
    %52 = vector.shape_cast %51 : vector<1x16x16xbf16> to vector<16x16xbf16>
    %cst_29 = arith.constant dense<0.000000e+00> : vector<64x16xf32>
    %53 = tpu.matmul %50, %52, %cst_29 {dimension_numbers = #tpu.dot_dimension_numbers<[1], [0], [0], [1], [0, 0, 1, 1], [], []>} : vector<64x16xbf16>, vector<16x16xbf16>, vector<64x16xf32> -> vector<64x16xf32>
    %54 = arith.addf %48, %53 : vector<64x16xf32>
    %c0_30 = arith.constant 0 : index
    %c0_31 = arith.constant 0 : index
    %c0_32 = arith.constant 0 : index
    %c0_33 = arith.constant 0 : index
    %55 = vector.load %arg4[%c0_30, %c0_31, %c0_32, %c0_33] : memref<1x8x8x16xbf16, #tpu.memory_space<vmem>>, vector<1x8x8x16xbf16>
    %56 = vector.shape_cast %55 : vector<1x8x8x16xbf16> to vector<8x8x16xbf16>
    %57 = vector.shape_cast %56 : vector<8x8x16xbf16> to vector<64x16xbf16>
    %58 = arith.extf %57 : vector<64x16xbf16> to vector<64x16xf32>
    %59 = arith.addf %54, %58 : vector<64x16xf32>
    %60 = vector.shape_cast %59 : vector<64x16xf32> to vector<1x8x8x16xf32>
    %61 = arith.truncf %60 : vector<1x8x8x16xf32> to vector<1x8x8x16xbf16>
    %c0_34 = arith.constant 0 : index
    %c0_35 = arith.constant 0 : index
    %c0_36 = arith.constant 0 : index
    %c0_37 = arith.constant 0 : index
    %62 = vector.load %arg5[%c0_34, %c0_35, %c0_36, %c0_37] : memref<1x8x8x16xbf16, #tpu.memory_space<vmem>>, vector<1x8x8x16xbf16>
    tpu.vector_store %arg5[%c0_34, %c0_35, %c0_36, %c0_37], %61 {strides = array<i32>} : memref<1x8x8x16xbf16, #tpu.memory_space<vmem>>, vector<1x8x8x16xbf16>,
    return
  }
  func.func @transform_0(%arg0: i32, %arg1: i32) -> (i32, i32, i32, i32) {
    %c0_i32 = arith.constant 0 : i32
    %c0_i32_0 = arith.constant 0 : i32
    %c0_i32_1 = arith.constant 0 : i32
    %c0_i32_2 = arith.constant 0 : i32
    return %arg0, %c0_i32, %c0_i32_0, %c0_i32_1 : i32, i32, i32, i32
  }
  func.func @transform_1(%arg0: i32, %arg1: i32) -> (i32, i32, i32) {
    %c0_i32 = arith.constant 0 : i32
    %c0_i32_0 = arith.constant 0 : i32
    %c0_i32_1 = arith.constant 0 : i32
    return %c0_i32, %c0_i32_0, %arg1 : i32, i32, i32
  }
  func.func @transform_2(%arg0: i32, %arg1: i32) -> (i32, i32, i32, i32) {
    %c0_i32 = arith.constant 0 : i32
    %c0_i32_0 = arith.constant 0 : i32
    %c0_i32_1 = arith.constant 0 : i32
    return %arg0, %c0_i32, %c0_i32_0, %arg1 : i32, i32, i32, i32
  }
  func.func @transform_3(%arg0: i32, %arg1: i32) -> (i32, i32, i32, i32) {
    %c0_i32 = arith.constant 0 : i32
    %c0_i32_0 = arith.constant 0 : i32
    %c0_i32_1 = arith.constant 0 : i32
    return %arg0, %c0_i32, %c0_i32_0, %arg1 : i32, i32, i32, i32
  }
}

module attributes {stable_mosaic.version = 11 : i64} {
  func.func @_fused_conv_kernel(%arg0: i32, %arg1: i32, %arg2: memref<1x10x10x16xbf16, #tpu.memory_space<vmem>>, %arg3: memref<1x16xf32, #tpu.memory_space<vmem>>, %arg4: memref<1x16xf32, #tpu.memory_space<vmem>>, %arg5: memref<10x10x1xf32, #tpu.memory_space<vmem>>, %arg6: memref<9x16x16xbf16, #tpu.memory_space<vmem>>, %arg7: memref<1x16xf32, #tpu.memory_space<vmem>>, %arg8: memref<1x8x8x16xbf16, #tpu.memory_space<vmem>>) attributes {dimension_semantics = [#tpu.dimension_semantics<parallel>, #tpu.dimension_semantics<parallel>], iteration_bounds = array<i64: 2, 1>, scalar_prefetch = 0 : i64, scratch_operands = 0 : i64, tpu.core_type = #tpu.core_type<tc>, window_params = [{transform_indices = @transform_0, window_bounds = array<i64: 1, 10, 10, 16>}, {pipeline_mode = #tpu.pipeline_mode<synchronous>, transform_indices = @transform_1, window_bounds = array<i64: 1, 16>}, {pipeline_mode = #tpu.pipeline_mode<synchronous>, transform_indices = @transform_2, window_bounds = array<i64: 1, 16>}, {pipeline_mode = #tpu.pipeline_mode<synchronous>, transform_indices = @transform_3, window_bounds = array<i64: 10, 10, 1>}, {transform_indices = @transform_4, window_bounds = array<i64: 9, 16, 16>}, {transform_indices = @transform_5, window_bounds = array<i64: 1, 16>}, {transform_indices = @transform_6, window_bounds = array<i64: 1, 8, 8, 16>}]} {
    %c0 = arith.constant 0 : index
    %c0_0 = arith.constant 0 : index
    %c0_1 = arith.constant 0 : index
    %c0_2 = arith.constant 0 : index
    %0 = vector.load %arg2[%c0, %c0_0, %c0_1, %c0_2] : memref<1x10x10x16xbf16, #tpu.memory_space<vmem>>, vector<1x10x10x16xbf16>
    %1 = vector.shape_cast %0 : vector<1x10x10x16xbf16> to vector<10x10x16xbf16>
    %2 = arith.extf %1 : vector<10x10x16xbf16> to vector<10x10x16xf32>
    %c0_3 = arith.constant 0 : index
    %c0_4 = arith.constant 0 : index
    %3 = vector.load %arg3[%c0_3, %c0_4] : memref<1x16xf32, #tpu.memory_space<vmem>>, vector<1x16xf32>
    %4 = vector.shape_cast %3 : vector<1x16xf32> to vector<1x1x16xf32>
    %5 = vector.broadcast %4 : vector<1x1x16xf32> to vector<10x10x16xf32>
    %6 = arith.mulf %2, %5 : vector<10x10x16xf32>
    %c0_5 = arith.constant 0 : index
    %c0_6 = arith.constant 0 : index
    %7 = vector.load %arg4[%c0_5, %c0_6] : memref<1x16xf32, #tpu.memory_space<vmem>>, vector<1x16xf32>
    %8 = vector.shape_cast %7 : vector<1x16xf32> to vector<1x1x16xf32>
    %9 = vector.broadcast %8 : vector<1x1x16xf32> to vector<10x10x16xf32>
    %10 = arith.addf %6, %9 : vector<10x10x16xf32>
    %cst = arith.constant 5.000000e-01 : f32
    %11 = vector.broadcast %cst : f32 to vector<10x10x16xf32>
    %12 = arith.mulf %11, %10 : vector<10x10x16xf32>
    %13 = math.tanh %12 : vector<10x10x16xf32>
    %cst_7 = arith.constant 5.000000e-01 : f32
    %14 = vector.broadcast %cst_7 : f32 to vector<10x10x16xf32>
    %15 = arith.mulf %14, %13 : vector<10x10x16xf32>
    %cst_8 = arith.constant 5.000000e-01 : f32
    %16 = vector.broadcast %cst_8 : f32 to vector<10x10x16xf32>
    %17 = arith.addf %15, %16 : vector<10x10x16xf32>
    %18 = arith.mulf %10, %17 : vector<10x10x16xf32>
    %c0_9 = arith.constant 0 : index
    %c0_10 = arith.constant 0 : index
    %c0_11 = arith.constant 0 : index
    %19 = vector.load %arg5[%c0_9, %c0_10, %c0_11] : memref<10x10x1xf32, #tpu.memory_space<vmem>>, vector<10x10x1xf32>
    %20 = vector.broadcast %19 : vector<10x10x1xf32> to vector<10x10x16xf32>
    %21 = arith.mulf %18, %20 : vector<10x10x16xf32>
    %22 = arith.truncf %21 : vector<10x10x16xf32> to vector<10x10x16xbf16>
    %23 = vector.extract_strided_slice %22 {offsets = [0, 0, 0], sizes = [8, 8, 16], strides = [1, 1, 1]} : vector<10x10x16xbf16> to vector<8x8x16xbf16>
    %24 = vector.shape_cast %23 : vector<8x8x16xbf16> to vector<64x16xbf16>
    %c0_12 = arith.constant 0 : index
    %c0_13 = arith.constant 0 : index
    %c0_14 = arith.constant 0 : index
    %25 = vector.load %arg6[%c0_12, %c0_13, %c0_14] : memref<9x16x16xbf16, #tpu.memory_space<vmem>>, vector<1x16x16xbf16>
    %26 = vector.shape_cast %25 : vector<1x16x16xbf16> to vector<16x16xbf16>
    %cst_15 = arith.constant dense<0.000000e+00> : vector<64x16xf32>
    %27 = tpu.matmul %24, %26, %cst_15 {dimension_numbers = #tpu.dot_dimension_numbers<[1], [0], [0], [1], [0, 0, 1, 1], [], []>} : vector<64x16xbf16>, vector<16x16xbf16>, vector<64x16xf32> -> vector<64x16xf32>
    %28 = vector.extract_strided_slice %22 {offsets = [0, 1, 0], sizes = [8, 8, 16], strides = [1, 1, 1]} : vector<10x10x16xbf16> to vector<8x8x16xbf16>
    %29 = vector.shape_cast %28 : vector<8x8x16xbf16> to vector<64x16xbf16>
    %c1 = arith.constant 1 : index
    %c0_16 = arith.constant 0 : index
    %c0_17 = arith.constant 0 : index
    %30 = vector.load %arg6[%c1, %c0_16, %c0_17] : memref<9x16x16xbf16, #tpu.memory_space<vmem>>, vector<1x16x16xbf16>
    %31 = vector.shape_cast %30 : vector<1x16x16xbf16> to vector<16x16xbf16>
    %cst_18 = arith.constant dense<0.000000e+00> : vector<64x16xf32>
    %32 = tpu.matmul %29, %31, %cst_18 {dimension_numbers = #tpu.dot_dimension_numbers<[1], [0], [0], [1], [0, 0, 1, 1], [], []>} : vector<64x16xbf16>, vector<16x16xbf16>, vector<64x16xf32> -> vector<64x16xf32>
    %33 = arith.addf %27, %32 : vector<64x16xf32>
    %34 = vector.extract_strided_slice %22 {offsets = [0, 2, 0], sizes = [8, 8, 16], strides = [1, 1, 1]} : vector<10x10x16xbf16> to vector<8x8x16xbf16>
    %35 = vector.shape_cast %34 : vector<8x8x16xbf16> to vector<64x16xbf16>
    %c2 = arith.constant 2 : index
    %c0_19 = arith.constant 0 : index
    %c0_20 = arith.constant 0 : index
    %36 = vector.load %arg6[%c2, %c0_19, %c0_20] : memref<9x16x16xbf16, #tpu.memory_space<vmem>>, vector<1x16x16xbf16>
    %37 = vector.shape_cast %36 : vector<1x16x16xbf16> to vector<16x16xbf16>
    %cst_21 = arith.constant dense<0.000000e+00> : vector<64x16xf32>
    %38 = tpu.matmul %35, %37, %cst_21 {dimension_numbers = #tpu.dot_dimension_numbers<[1], [0], [0], [1], [0, 0, 1, 1], [], []>} : vector<64x16xbf16>, vector<16x16xbf16>, vector<64x16xf32> -> vector<64x16xf32>
    %39 = arith.addf %33, %38 : vector<64x16xf32>
    %40 = vector.extract_strided_slice %22 {offsets = [1, 0, 0], sizes = [8, 8, 16], strides = [1, 1, 1]} : vector<10x10x16xbf16> to vector<8x8x16xbf16>
    %41 = vector.shape_cast %40 : vector<8x8x16xbf16> to vector<64x16xbf16>
    %c3 = arith.constant 3 : index
    %c0_22 = arith.constant 0 : index
    %c0_23 = arith.constant 0 : index
    %42 = vector.load %arg6[%c3, %c0_22, %c0_23] : memref<9x16x16xbf16, #tpu.memory_space<vmem>>, vector<1x16x16xbf16>
    %43 = vector.shape_cast %42 : vector<1x16x16xbf16> to vector<16x16xbf16>
    %cst_24 = arith.constant dense<0.000000e+00> : vector<64x16xf32>
    %44 = tpu.matmul %41, %43, %cst_24 {dimension_numbers = #tpu.dot_dimension_numbers<[1], [0], [0], [1], [0, 0, 1, 1], [], []>} : vector<64x16xbf16>, vector<16x16xbf16>, vector<64x16xf32> -> vector<64x16xf32>
    %45 = arith.addf %39, %44 : vector<64x16xf32>
    %46 = vector.extract_strided_slice %22 {offsets = [1, 1, 0], sizes = [8, 8, 16], strides = [1, 1, 1]} : vector<10x10x16xbf16> to vector<8x8x16xbf16>
    %47 = vector.shape_cast %46 : vector<8x8x16xbf16> to vector<64x16xbf16>
    %c4 = arith.constant 4 : index
    %c0_25 = arith.constant 0 : index
    %c0_26 = arith.constant 0 : index
    %48 = vector.load %arg6[%c4, %c0_25, %c0_26] : memref<9x16x16xbf16, #tpu.memory_space<vmem>>, vector<1x16x16xbf16>
    %49 = vector.shape_cast %48 : vector<1x16x16xbf16> to vector<16x16xbf16>
    %cst_27 = arith.constant dense<0.000000e+00> : vector<64x16xf32>
    %50 = tpu.matmul %47, %49, %cst_27 {dimension_numbers = #tpu.dot_dimension_numbers<[1], [0], [0], [1], [0, 0, 1, 1], [], []>} : vector<64x16xbf16>, vector<16x16xbf16>, vector<64x16xf32> -> vector<64x16xf32>
    %51 = arith.addf %45, %50 : vector<64x16xf32>
    %52 = vector.extract_strided_slice %22 {offsets = [1, 2, 0], sizes = [8, 8, 16], strides = [1, 1, 1]} : vector<10x10x16xbf16> to vector<8x8x16xbf16>
    %53 = vector.shape_cast %52 : vector<8x8x16xbf16> to vector<64x16xbf16>
    %c5 = arith.constant 5 : index
    %c0_28 = arith.constant 0 : index
    %c0_29 = arith.constant 0 : index
    %54 = vector.load %arg6[%c5, %c0_28, %c0_29] : memref<9x16x16xbf16, #tpu.memory_space<vmem>>, vector<1x16x16xbf16>
    %55 = vector.shape_cast %54 : vector<1x16x16xbf16> to vector<16x16xbf16>
    %cst_30 = arith.constant dense<0.000000e+00> : vector<64x16xf32>
    %56 = tpu.matmul %53, %55, %cst_30 {dimension_numbers = #tpu.dot_dimension_numbers<[1], [0], [0], [1], [0, 0, 1, 1], [], []>} : vector<64x16xbf16>, vector<16x16xbf16>, vector<64x16xf32> -> vector<64x16xf32>
    %57 = arith.addf %51, %56 : vector<64x16xf32>
    %58 = vector.extract_strided_slice %22 {offsets = [2, 0, 0], sizes = [8, 8, 16], strides = [1, 1, 1]} : vector<10x10x16xbf16> to vector<8x8x16xbf16>
    %59 = vector.shape_cast %58 : vector<8x8x16xbf16> to vector<64x16xbf16>
    %c6 = arith.constant 6 : index
    %c0_31 = arith.constant 0 : index
    %c0_32 = arith.constant 0 : index
    %60 = vector.load %arg6[%c6, %c0_31, %c0_32] : memref<9x16x16xbf16, #tpu.memory_space<vmem>>, vector<1x16x16xbf16>
    %61 = vector.shape_cast %60 : vector<1x16x16xbf16> to vector<16x16xbf16>
    %cst_33 = arith.constant dense<0.000000e+00> : vector<64x16xf32>
    %62 = tpu.matmul %59, %61, %cst_33 {dimension_numbers = #tpu.dot_dimension_numbers<[1], [0], [0], [1], [0, 0, 1, 1], [], []>} : vector<64x16xbf16>, vector<16x16xbf16>, vector<64x16xf32> -> vector<64x16xf32>
    %63 = arith.addf %57, %62 : vector<64x16xf32>
    %64 = vector.extract_strided_slice %22 {offsets = [2, 1, 0], sizes = [8, 8, 16], strides = [1, 1, 1]} : vector<10x10x16xbf16> to vector<8x8x16xbf16>
    %65 = vector.shape_cast %64 : vector<8x8x16xbf16> to vector<64x16xbf16>
    %c7 = arith.constant 7 : index
    %c0_34 = arith.constant 0 : index
    %c0_35 = arith.constant 0 : index
    %66 = vector.load %arg6[%c7, %c0_34, %c0_35] : memref<9x16x16xbf16, #tpu.memory_space<vmem>>, vector<1x16x16xbf16>
    %67 = vector.shape_cast %66 : vector<1x16x16xbf16> to vector<16x16xbf16>
    %cst_36 = arith.constant dense<0.000000e+00> : vector<64x16xf32>
    %68 = tpu.matmul %65, %67, %cst_36 {dimension_numbers = #tpu.dot_dimension_numbers<[1], [0], [0], [1], [0, 0, 1, 1], [], []>} : vector<64x16xbf16>, vector<16x16xbf16>, vector<64x16xf32> -> vector<64x16xf32>
    %69 = arith.addf %63, %68 : vector<64x16xf32>
    %70 = vector.extract_strided_slice %22 {offsets = [2, 2, 0], sizes = [8, 8, 16], strides = [1, 1, 1]} : vector<10x10x16xbf16> to vector<8x8x16xbf16>
    %71 = vector.shape_cast %70 : vector<8x8x16xbf16> to vector<64x16xbf16>
    %c8 = arith.constant 8 : index
    %c0_37 = arith.constant 0 : index
    %c0_38 = arith.constant 0 : index
    %72 = vector.load %arg6[%c8, %c0_37, %c0_38] : memref<9x16x16xbf16, #tpu.memory_space<vmem>>, vector<1x16x16xbf16>
    %73 = vector.shape_cast %72 : vector<1x16x16xbf16> to vector<16x16xbf16>
    %cst_39 = arith.constant dense<0.000000e+00> : vector<64x16xf32>
    %74 = tpu.matmul %71, %73, %cst_39 {dimension_numbers = #tpu.dot_dimension_numbers<[1], [0], [0], [1], [0, 0, 1, 1], [], []>} : vector<64x16xbf16>, vector<16x16xbf16>, vector<64x16xf32> -> vector<64x16xf32>
    %75 = arith.addf %69, %74 : vector<64x16xf32>
    %c0_40 = arith.constant 0 : index
    %c0_41 = arith.constant 0 : index
    %76 = vector.load %arg7[%c0_40, %c0_41] : memref<1x16xf32, #tpu.memory_space<vmem>>, vector<1x16xf32>
    %77 = vector.broadcast %76 : vector<1x16xf32> to vector<64x16xf32>
    %78 = arith.addf %75, %77 : vector<64x16xf32>
    %cst_42 = arith.constant 5.000000e-01 : f32
    %79 = vector.broadcast %cst_42 : f32 to vector<64x16xf32>
    %80 = arith.mulf %79, %78 : vector<64x16xf32>
    %81 = math.tanh %80 : vector<64x16xf32>
    %cst_43 = arith.constant 5.000000e-01 : f32
    %82 = vector.broadcast %cst_43 : f32 to vector<64x16xf32>
    %83 = arith.mulf %82, %81 : vector<64x16xf32>
    %cst_44 = arith.constant 5.000000e-01 : f32
    %84 = vector.broadcast %cst_44 : f32 to vector<64x16xf32>
    %85 = arith.addf %83, %84 : vector<64x16xf32>
    %86 = arith.mulf %78, %85 : vector<64x16xf32>
    %87 = vector.shape_cast %86 : vector<64x16xf32> to vector<1x8x8x16xf32>
    %88 = arith.truncf %87 : vector<1x8x8x16xf32> to vector<1x8x8x16xbf16>
    %c0_45 = arith.constant 0 : index
    %c0_46 = arith.constant 0 : index
    %c0_47 = arith.constant 0 : index
    %c0_48 = arith.constant 0 : index
    %89 = vector.load %arg8[%c0_45, %c0_46, %c0_47, %c0_48] : memref<1x8x8x16xbf16, #tpu.memory_space<vmem>>, vector<1x8x8x16xbf16>
    tpu.vector_store %arg8[%c0_45, %c0_46, %c0_47, %c0_48], %88 {strides = array<i32>} : memref<1x8x8x16xbf16, #tpu.memory_space<vmem>>, vector<1x8x8x16xbf16>,
    return
  }
  func.func @transform_0(%arg0: i32, %arg1: i32) -> (i32, i32, i32, i32) {
    %c0_i32 = arith.constant 0 : i32
    %c0_i32_0 = arith.constant 0 : i32
    %c0_i32_1 = arith.constant 0 : i32
    %c0_i32_2 = arith.constant 0 : i32
    return %arg0, %c0_i32, %c0_i32_0, %c0_i32_1 : i32, i32, i32, i32
  }
  func.func @transform_1(%arg0: i32, %arg1: i32) -> (i32, i32) {
    %c0_i32 = arith.constant 0 : i32
    %c0_i32_0 = arith.constant 0 : i32
    %c0_i32_1 = arith.constant 0 : i32
    return %c0_i32, %c0_i32_0 : i32, i32
  }
  func.func @transform_2(%arg0: i32, %arg1: i32) -> (i32, i32) {
    %c0_i32 = arith.constant 0 : i32
    %c0_i32_0 = arith.constant 0 : i32
    %c0_i32_1 = arith.constant 0 : i32
    return %c0_i32, %c0_i32_0 : i32, i32
  }
  func.func @transform_3(%arg0: i32, %arg1: i32) -> (i32, i32, i32) {
    %c0_i32 = arith.constant 0 : i32
    %c0_i32_0 = arith.constant 0 : i32
    %c0_i32_1 = arith.constant 0 : i32
    %c0_i32_2 = arith.constant 0 : i32
    return %c0_i32, %c0_i32_0, %c0_i32_1 : i32, i32, i32
  }
  func.func @transform_4(%arg0: i32, %arg1: i32) -> (i32, i32, i32) {
    %c0_i32 = arith.constant 0 : i32
    %c0_i32_0 = arith.constant 0 : i32
    %c0_i32_1 = arith.constant 0 : i32
    return %c0_i32, %c0_i32_0, %arg1 : i32, i32, i32
  }
  func.func @transform_5(%arg0: i32, %arg1: i32) -> (i32, i32) {
    %c0_i32 = arith.constant 0 : i32
    %c0_i32_0 = arith.constant 0 : i32
    return %c0_i32, %arg1 : i32, i32
  }
  func.func @transform_6(%arg0: i32, %arg1: i32) -> (i32, i32, i32, i32) {
    %c0_i32 = arith.constant 0 : i32
    %c0_i32_0 = arith.constant 0 : i32
    %c0_i32_1 = arith.constant 0 : i32
    return %arg0, %c0_i32, %c0_i32_0, %arg1 : i32, i32, i32, i32
  }
}

module attributes {stable_mosaic.version = 11 : i64} {
  func.func @_fused_conv_kernel(%arg0: i32, %arg1: i32, %arg2: memref<1x10x10x16xbf16, #tpu.memory_space<vmem>>, %arg3: memref<9x16x16xbf16, #tpu.memory_space<vmem>>, %arg4: memref<1x8x8x16xbf16, #tpu.memory_space<vmem>>, %arg5: memref<1x8x8x16xf32, #tpu.memory_space<vmem>>) attributes {dimension_semantics = [#tpu.dimension_semantics<parallel>, #tpu.dimension_semantics<parallel>], iteration_bounds = array<i64: 2, 1>, scalar_prefetch = 0 : i64, scratch_operands = 0 : i64, tpu.core_type = #tpu.core_type<tc>, window_params = [{transform_indices = @transform_0, window_bounds = array<i64: 1, 10, 10, 16>}, {transform_indices = @transform_1, window_bounds = array<i64: 9, 16, 16>}, {transform_indices = @transform_2, window_bounds = array<i64: 1, 8, 8, 16>}, {transform_indices = @transform_3, window_bounds = array<i64: 1, 8, 8, 16>}]} {
    %c0 = arith.constant 0 : index
    %c0_0 = arith.constant 0 : index
    %c0_1 = arith.constant 0 : index
    %c0_2 = arith.constant 0 : index
    %0 = vector.load %arg2[%c0, %c0_0, %c0_1, %c0_2] : memref<1x10x10x16xbf16, #tpu.memory_space<vmem>>, vector<1x10x10x16xbf16>
    %1 = vector.shape_cast %0 : vector<1x10x10x16xbf16> to vector<10x10x16xbf16>
    %2 = vector.extract_strided_slice %1 {offsets = [0, 0, 0], sizes = [8, 8, 16], strides = [1, 1, 1]} : vector<10x10x16xbf16> to vector<8x8x16xbf16>
    %3 = vector.shape_cast %2 : vector<8x8x16xbf16> to vector<64x16xbf16>
    %c0_3 = arith.constant 0 : index
    %c0_4 = arith.constant 0 : index
    %c0_5 = arith.constant 0 : index
    %4 = vector.load %arg3[%c0_3, %c0_4, %c0_5] : memref<9x16x16xbf16, #tpu.memory_space<vmem>>, vector<1x16x16xbf16>
    %5 = vector.shape_cast %4 : vector<1x16x16xbf16> to vector<16x16xbf16>
    %cst = arith.constant dense<0.000000e+00> : vector<64x16xf32>
    %6 = tpu.matmul %3, %5, %cst {dimension_numbers = #tpu.dot_dimension_numbers<[1], [0], [0], [1], [0, 0, 1, 1], [], []>} : vector<64x16xbf16>, vector<16x16xbf16>, vector<64x16xf32> -> vector<64x16xf32>
    %7 = vector.extract_strided_slice %1 {offsets = [0, 1, 0], sizes = [8, 8, 16], strides = [1, 1, 1]} : vector<10x10x16xbf16> to vector<8x8x16xbf16>
    %8 = vector.shape_cast %7 : vector<8x8x16xbf16> to vector<64x16xbf16>
    %c1 = arith.constant 1 : index
    %c0_6 = arith.constant 0 : index
    %c0_7 = arith.constant 0 : index
    %9 = vector.load %arg3[%c1, %c0_6, %c0_7] : memref<9x16x16xbf16, #tpu.memory_space<vmem>>, vector<1x16x16xbf16>
    %10 = vector.shape_cast %9 : vector<1x16x16xbf16> to vector<16x16xbf16>
    %cst_8 = arith.constant dense<0.000000e+00> : vector<64x16xf32>
    %11 = tpu.matmul %8, %10, %cst_8 {dimension_numbers = #tpu.dot_dimension_numbers<[1], [0], [0], [1], [0, 0, 1, 1], [], []>} : vector<64x16xbf16>, vector<16x16xbf16>, vector<64x16xf32> -> vector<64x16xf32>
    %12 = arith.addf %6, %11 : vector<64x16xf32>
    %13 = vector.extract_strided_slice %1 {offsets = [0, 2, 0], sizes = [8, 8, 16], strides = [1, 1, 1]} : vector<10x10x16xbf16> to vector<8x8x16xbf16>
    %14 = vector.shape_cast %13 : vector<8x8x16xbf16> to vector<64x16xbf16>
    %c2 = arith.constant 2 : index
    %c0_9 = arith.constant 0 : index
    %c0_10 = arith.constant 0 : index
    %15 = vector.load %arg3[%c2, %c0_9, %c0_10] : memref<9x16x16xbf16, #tpu.memory_space<vmem>>, vector<1x16x16xbf16>
    %16 = vector.shape_cast %15 : vector<1x16x16xbf16> to vector<16x16xbf16>
    %cst_11 = arith.constant dense<0.000000e+00> : vector<64x16xf32>
    %17 = tpu.matmul %14, %16, %cst_11 {dimension_numbers = #tpu.dot_dimension_numbers<[1], [0], [0], [1], [0, 0, 1, 1], [], []>} : vector<64x16xbf16>, vector<16x16xbf16>, vector<64x16xf32> -> vector<64x16xf32>
    %18 = arith.addf %12, %17 : vector<64x16xf32>
    %19 = vector.extract_strided_slice %1 {offsets = [1, 0, 0], sizes = [8, 8, 16], strides = [1, 1, 1]} : vector<10x10x16xbf16> to vector<8x8x16xbf16>
    %20 = vector.shape_cast %19 : vector<8x8x16xbf16> to vector<64x16xbf16>
    %c3 = arith.constant 3 : index
    %c0_12 = arith.constant 0 : index
    %c0_13 = arith.constant 0 : index
    %21 = vector.load %arg3[%c3, %c0_12, %c0_13] : memref<9x16x16xbf16, #tpu.memory_space<vmem>>, vector<1x16x16xbf16>
    %22 = vector.shape_cast %21 : vector<1x16x16xbf16> to vector<16x16xbf16>
    %cst_14 = arith.constant dense<0.000000e+00> : vector<64x16xf32>
    %23 = tpu.matmul %20, %22, %cst_14 {dimension_numbers = #tpu.dot_dimension_numbers<[1], [0], [0], [1], [0, 0, 1, 1], [], []>} : vector<64x16xbf16>, vector<16x16xbf16>, vector<64x16xf32> -> vector<64x16xf32>
    %24 = arith.addf %18, %23 : vector<64x16xf32>
    %25 = vector.extract_strided_slice %1 {offsets = [1, 1, 0], sizes = [8, 8, 16], strides = [1, 1, 1]} : vector<10x10x16xbf16> to vector<8x8x16xbf16>
    %26 = vector.shape_cast %25 : vector<8x8x16xbf16> to vector<64x16xbf16>
    %c4 = arith.constant 4 : index
    %c0_15 = arith.constant 0 : index
    %c0_16 = arith.constant 0 : index
    %27 = vector.load %arg3[%c4, %c0_15, %c0_16] : memref<9x16x16xbf16, #tpu.memory_space<vmem>>, vector<1x16x16xbf16>
    %28 = vector.shape_cast %27 : vector<1x16x16xbf16> to vector<16x16xbf16>
    %cst_17 = arith.constant dense<0.000000e+00> : vector<64x16xf32>
    %29 = tpu.matmul %26, %28, %cst_17 {dimension_numbers = #tpu.dot_dimension_numbers<[1], [0], [0], [1], [0, 0, 1, 1], [], []>} : vector<64x16xbf16>, vector<16x16xbf16>, vector<64x16xf32> -> vector<64x16xf32>
    %30 = arith.addf %24, %29 : vector<64x16xf32>
    %31 = vector.extract_strided_slice %1 {offsets = [1, 2, 0], sizes = [8, 8, 16], strides = [1, 1, 1]} : vector<10x10x16xbf16> to vector<8x8x16xbf16>
    %32 = vector.shape_cast %31 : vector<8x8x16xbf16> to vector<64x16xbf16>
    %c5 = arith.constant 5 : index
    %c0_18 = arith.constant 0 : index
    %c0_19 = arith.constant 0 : index
    %33 = vector.load %arg3[%c5, %c0_18, %c0_19] : memref<9x16x16xbf16, #tpu.memory_space<vmem>>, vector<1x16x16xbf16>
    %34 = vector.shape_cast %33 : vector<1x16x16xbf16> to vector<16x16xbf16>
    %cst_20 = arith.constant dense<0.000000e+00> : vector<64x16xf32>
    %35 = tpu.matmul %32, %34, %cst_20 {dimension_numbers = #tpu.dot_dimension_numbers<[1], [0], [0], [1], [0, 0, 1, 1], [], []>} : vector<64x16xbf16>, vector<16x16xbf16>, vector<64x16xf32> -> vector<64x16xf32>
    %36 = arith.addf %30, %35 : vector<64x16xf32>
    %37 = vector.extract_strided_slice %1 {offsets = [2, 0, 0], sizes = [8, 8, 16], strides = [1, 1, 1]} : vector<10x10x16xbf16> to vector<8x8x16xbf16>
    %38 = vector.shape_cast %37 : vector<8x8x16xbf16> to vector<64x16xbf16>
    %c6 = arith.constant 6 : index
    %c0_21 = arith.constant 0 : index
    %c0_22 = arith.constant 0 : index
    %39 = vector.load %arg3[%c6, %c0_21, %c0_22] : memref<9x16x16xbf16, #tpu.memory_space<vmem>>, vector<1x16x16xbf16>
    %40 = vector.shape_cast %39 : vector<1x16x16xbf16> to vector<16x16xbf16>
    %cst_23 = arith.constant dense<0.000000e+00> : vector<64x16xf32>
    %41 = tpu.matmul %38, %40, %cst_23 {dimension_numbers = #tpu.dot_dimension_numbers<[1], [0], [0], [1], [0, 0, 1, 1], [], []>} : vector<64x16xbf16>, vector<16x16xbf16>, vector<64x16xf32> -> vector<64x16xf32>
    %42 = arith.addf %36, %41 : vector<64x16xf32>
    %43 = vector.extract_strided_slice %1 {offsets = [2, 1, 0], sizes = [8, 8, 16], strides = [1, 1, 1]} : vector<10x10x16xbf16> to vector<8x8x16xbf16>
    %44 = vector.shape_cast %43 : vector<8x8x16xbf16> to vector<64x16xbf16>
    %c7 = arith.constant 7 : index
    %c0_24 = arith.constant 0 : index
    %c0_25 = arith.constant 0 : index
    %45 = vector.load %arg3[%c7, %c0_24, %c0_25] : memref<9x16x16xbf16, #tpu.memory_space<vmem>>, vector<1x16x16xbf16>
    %46 = vector.shape_cast %45 : vector<1x16x16xbf16> to vector<16x16xbf16>
    %cst_26 = arith.constant dense<0.000000e+00> : vector<64x16xf32>
    %47 = tpu.matmul %44, %46, %cst_26 {dimension_numbers = #tpu.dot_dimension_numbers<[1], [0], [0], [1], [0, 0, 1, 1], [], []>} : vector<64x16xbf16>, vector<16x16xbf16>, vector<64x16xf32> -> vector<64x16xf32>
    %48 = arith.addf %42, %47 : vector<64x16xf32>
    %49 = vector.extract_strided_slice %1 {offsets = [2, 2, 0], sizes = [8, 8, 16], strides = [1, 1, 1]} : vector<10x10x16xbf16> to vector<8x8x16xbf16>
    %50 = vector.shape_cast %49 : vector<8x8x16xbf16> to vector<64x16xbf16>
    %c8 = arith.constant 8 : index
    %c0_27 = arith.constant 0 : index
    %c0_28 = arith.constant 0 : index
    %51 = vector.load %arg3[%c8, %c0_27, %c0_28] : memref<9x16x16xbf16, #tpu.memory_space<vmem>>, vector<1x16x16xbf16>
    %52 = vector.shape_cast %51 : vector<1x16x16xbf16> to vector<16x16xbf16>
    %cst_29 = arith.constant dense<0.000000e+00> : vector<64x16xf32>
    %53 = tpu.matmul %50, %52, %cst_29 {dimension_numbers = #tpu.dot_dimension_numbers<[1], [0], [0], [1], [0, 0, 1, 1], [], []>} : vector<64x16xbf16>, vector<16x16xbf16>, vector<64x16xf32> -> vector<64x16xf32>
    %54 = arith.addf %48, %53 : vector<64x16xf32>
    %c0_30 = arith.constant 0 : index
    %c0_31 = arith.constant 0 : index
    %c0_32 = arith.constant 0 : index
    %c0_33 = arith.constant 0 : index
    %55 = vector.load %arg4[%c0_30, %c0_31, %c0_32, %c0_33] : memref<1x8x8x16xbf16, #tpu.memory_space<vmem>>, vector<1x8x8x16xbf16>
    %56 = vector.shape_cast %55 : vector<1x8x8x16xbf16> to vector<8x8x16xbf16>
    %57 = vector.shape_cast %56 : vector<8x8x16xbf16> to vector<64x16xbf16>
    %58 = arith.extf %57 : vector<64x16xbf16> to vector<64x16xf32>
    %59 = arith.addf %54, %58 : vector<64x16xf32>
    %60 = vector.shape_cast %59 : vector<64x16xf32> to vector<1x8x8x16xf32>
    %c0_34 = arith.constant 0 : index
    %c0_35 = arith.constant 0 : index
    %c0_36 = arith.constant 0 : index
    %c0_37 = arith.constant 0 : index
    %61 = vector.load %arg5[%c0_34, %c0_35, %c0_36, %c0_37] : memref<1x8x8x16xf32, #tpu.memory_space<vmem>>, vector<1x8x8x16xf32>
    tpu.vector_store %arg5[%c0_34, %c0_35, %c0_36, %c0_37], %60 {strides = array<i32>} : memref<1x8x8x16xf32, #tpu.memory_space<vmem>>, vector<1x8x8x16xf32>,
    return
  }
  func.func @transform_0(%arg0: i32, %arg1: i32) -> (i32, i32, i32, i32) {
    %c0_i32 = arith.constant 0 : i32
    %c0_i32_0 = arith.constant 0 : i32
    %c0_i32_1 = arith.constant 0 : i32
    %c0_i32_2 = arith.constant 0 : i32
    return %arg0, %c0_i32, %c0_i32_0, %c0_i32_1 : i32, i32, i32, i32
  }
  func.func @transform_1(%arg0: i32, %arg1: i32) -> (i32, i32, i32) {
    %c0_i32 = arith.constant 0 : i32
    %c0_i32_0 = arith.constant 0 : i32
    %c0_i32_1 = arith.constant 0 : i32
    return %c0_i32, %c0_i32_0, %arg1 : i32, i32, i32
  }
  func.func @transform_2(%arg0: i32, %arg1: i32) -> (i32, i32, i32, i32) {
    %c0_i32 = arith.constant 0 : i32
    %c0_i32_0 = arith.constant 0 : i32
    %c0_i32_1 = arith.constant 0 : i32
    return %arg0, %c0_i32, %c0_i32_0, %arg1 : i32, i32, i32, i32
  }
  func.func @transform_3(%arg0: i32, %arg1: i32) -> (i32, i32, i32, i32) {
    %c0_i32 = arith.constant 0 : i32
    %c0_i32_0 = arith.constant 0 : i32
    %c0_i32_1 = arith.constant 0 : i32
    return %arg0, %c0_i32, %c0_i32_0, %arg1 : i32, i32, i32, i32
  }
}

</mosaic_0001>

<llo_original>
// kernel: forward.6
$region0: #{forward.6}
  #allocation0 [shape = 'u32[]', space=smem, size = 0x4, offset = 0x4, fixed_abs, tag = 'smem constant byte address 0x4 - core index']
  #allocation1 [shape = 'u32[144,128]{1,0:T(1,128)}', space=vmem, size = 0x12000, scoped, tag = 'internal scratch']
  %s0 = inlined_call_operand.vmem [shape: f32[2,8,8,8], index: 0, kind: input, shape index: {}]
  %s1 = inlined_call_operand.vmem [shape: f32[1,8], index: 1, kind: input, shape index: {}]
  %s2 = inlined_call_operand.vmem [shape: f32[1,8], index: 2, kind: input, shape index: {}]
  %s3 = inlined_call_operand.vmem [shape: bf16[1,8,16], index: 3, kind: input, shape index: {}]
  %s4 = inlined_call_operand.vmem [shape: bf16[2,8,8,16], index: 4, kind: output, shape index: {}]
  %s5 = sld [smem:[#allocation0]]
  $region49: #{forward.6} parent=0
    _
  %s7 = ssub.s32 1, %s5
  %s8 = scalar_select 0, %s7, %s5
  loop: start=0, step=1, limit=4
  $region2: #{forward.6} parent=0 // loop_pre_header
    _
  $region3: #{forward.6} parent=0 // loop_header
    %s10 = sphi 0, %s14
    %p11 = scmp.ge.s32.totalorder %s10, 4
    %s17 = sphi 0, %s29
    %s18 = sphi 0, %s25
    %s19 = sphi 0, %s17
    %s20 = sphi 0, %s18
    %s21 = sphi 0, %s19
    %s22 = sphi 0, %s20
    %s32 = sphi 0, %s34
    %s35 = sphi 0, %s32
    %s36 = sphi 0, %s35
    %s52 = sphi 0, %s36
    %s56 = sphi 0, %s56
    %s58 = sphi 0, %s56
    %s59 = sphi 0, %s58
    %s73 = sphi 0, %s59
    %s77 = sphi 0, %s77
    %s79 = sphi 0, %s77
    %s80 = sphi 0, %s79
    %s94 = sphi 0, %s80
    %s100 = sphi 0, %s102
    %s103 = sphi 0, %s100
    %s104 = sphi 0, %s103
    %s120 = sphi 0, %s104
    %s128 = sphi 0, %s130
    %s131 = sphi 0, %s128
    %s132 = sphi 0, %s131
    %s148 = sphi 0, %s132
  $region4: #{forward.6} parent=0 // loop_header_branch
    %13 = sbr.rel (%p11) target = $region8
  $region5: #{forward.6} parent=0 // loop_body
    %s15 = ssub.s32 %s10, 1
    %s16 = ssub.s32 %s10, 2
    %s23 = sadd.s32 1, %s18
    %p24 = scmp.ge.s32.totalorder %s23, 1
    %s25 = scalar_select %p24, 0, %s23
    %s26 = sadd.s32 1, %s17
    %s27 = scalar_select %p24, %s26, %s17
    %p28 = scmp.ge.s32.totalorder %s27, 2
    %s29 = scalar_select %p28, 0, %s27
    %s30 = ssub.s32 %s17, %s29
    %p31 = scmp.eq.s32.totalorder %s30, 0
    %s33 = sadd.s32 %s32, 1
    %s34 = scalar_select %p31, %s32, %s33
    %p37 = pneg %p31
    %p38 = scmp.eq.s32.totalorder %s10, 1
    %p39 = por %p37, %p38
    %p40 = scmp.ne.s32.totalorder %s32, %s35
    %p41 = scmp.eq.s32.totalorder %s10, 0
    %p42 = por %p40, %p41
    %p43 = scmp.ne.s32.totalorder %s32, %s35
    %p44 = scmp.eq.s32.totalorder %s15, 1
    %p45 = por %p43, %p44
    %p46 = scmp.ne.s32.totalorder %s35, %s36
    %p47 = scmp.eq.s32.totalorder %s15, 0
    %p48 = por %p46, %p47
    %p49 = scmp.ne.s32.totalorder %s35, %s36
    %p50 = scmp.eq.s32.totalorder %s16, 1
    %p51 = por %p49, %p50
    %p53 = scmp.ne.s32.totalorder %s36, %s52
    %p54 = scmp.eq.s32.totalorder %s16, 0
    %p55 = por %p53, %p54
    %s57 = sadd.s32 %s56, 1
    %p60 = scmp.eq.s32.totalorder %s10, 1
    %p61 = scmp.ne.s32.totalorder %s56, %s58
    %p62 = scmp.eq.s32.totalorder %s10, 0
    %p63 = por %p61, %p62
    %p64 = scmp.ne.s32.totalorder %s56, %s58
    %p65 = scmp.eq.s32.totalorder %s15, 1
    %p66 = por %p64, %p65
    %p67 = scmp.ne.s32.totalorder %s58, %s59
    %p68 = scmp.eq.s32.totalorder %s15, 0
    %p69 = por %p67, %p68
    %p70 = scmp.ne.s32.totalorder %s58, %s59
    %p71 = scmp.eq.s32.totalorder %s16, 1
    %p72 = por %p70, %p71
    %p74 = scmp.ne.s32.totalorder %s59, %s73
    %p75 = scmp.eq.s32.totalorder %s16, 0
    %p76 = por %p74, %p75
    %s78 = sadd.s32 %s77, 1
    %p81 = scmp.eq.s32.totalorder %s10, 1
    %p82 = scmp.ne.s32.totalorder %s77, %s79
    %p83 = scmp.eq.s32.totalorder %s10, 0
    %p84 = por %p82, %p83
    %p85 = scmp.ne.s32.totalorder %s77, %s79
    %p86 = scmp.eq.s32.totalorder %s15, 1
    %p87 = por %p85, %p86
    %p88 = scmp.ne.s32.totalorder %s79, %s80
    %p89 = scmp.eq.s32.totalorder %s15, 0
    %p90 = por %p88, %p89
    %p91 = scmp.ne.s32.totalorder %s79, %s80
    %p92 = scmp.eq.s32.totalorder %s16, 1
    %p93 = por %p91, %p92
    %p95 = scmp.ne.s32.totalorder %s80, %s94
    %p96 = scmp.eq.s32.totalorder %s16, 0
    %p97 = por %p95, %p96
    %s98 = ssub.s32 %s18, %s25
    %p99 = scmp.eq.s32.totalorder %s98, 0
    %s101 = sadd.s32 %s100, 1
    %s102 = scalar_select %p99, %s100, %s101
    %p105 = pneg %p99
    %p106 = scmp.eq.s32.totalorder %s10, 1
    %p107 = por %p105, %p106
    %p108 = scmp.ne.s32.totalorder %s100, %s103
    %p109 = scmp.eq.s32.totalorder %s10, 0
    %p110 = por %p108, %p109
    %p111 = scmp.ne.s32.totalorder %s100, %s103
    %p112 = scmp.eq.s32.totalorder %s15, 1
    %p113 = por %p111, %p112
    %p114 = scmp.ne.s32.totalorder %s103, %s104
    %p115 = scmp.eq.s32.totalorder %s15, 0
    %p116 = por %p114, %p115
    %p117 = scmp.ne.s32.totalorder %s103, %s104
    %p118 = scmp.eq.s32.totalorder %s16, 1
    %p119 = por %p117, %p118
    %p121 = scmp.ne.s32.totalorder %s104, %s120
    %p122 = scmp.eq.s32.totalorder %s16, 0
    %p123 = por %p121, %p122
    %s124 = ssub.s32 %s17, %s29
    %s125 = ssub.s32 %s18, %s25
    %s126 = sor.u32 %s124, %s125
    %p127 = scmp.eq.s32.totalorder %s126, 0
    %s129 = sadd.s32 %s128, 1
    %s130 = scalar_select %p127, %s128, %s129
    %p133 = pneg %p127
    %p134 = scmp.eq.s32.totalorder %s10, 1
    %p135 = por %p133, %p134
    %p136 = scmp.ne.s32.totalorder %s128, %s131
    %p137 = scmp.eq.s32.totalorder %s10, 0
    %p138 = por %p136, %p137
    %p139 = scmp.ne.s32.totalorder %s128, %s131
    %p140 = scmp.eq.s32.totalorder %s15, 1
    %p141 = por %p139, %p140
    %p142 = scmp.ne.s32.totalorder %s131, %s132
    %p143 = scmp.eq.s32.totalorder %s15, 0
    %p144 = por %p142, %p143
    %p145 = scmp.ne.s32.totalorder %s131, %s132
    %p146 = scmp.eq.s32.totalorder %s16, 1
    %p147 = por %p145, %p146
    %p149 = scmp.ne.s32.totalorder %s132, %s148
    %p150 = scmp.eq.s32.totalorder %s16, 0
    %p151 = por %p149, %p150
    %p152 = scmp.le.s32.totalorder 1, %s10
    %p153 = scmp.lt.s32.totalorder %s10, 3
    %p154 = pnand %p152, %p153
    %p155 = pneg %p154
    // Predicated region
    $region9: #{forward.6} parent=5 // pred_check
      _
    $region10: #{forward.6} parent=5 // pred_check_branch
      %157 = sbr.rel (%p154) target = $region12
    $region11: #{forward.6} parent=5 // pred_region
      %s158 = ssub.s32 %s10, 1
      // Predicated region
      $region13: #{forward.6} parent=11 // pred_check
        %p159 = pneg %p69
      $region14: #{forward.6} parent=11 // pred_check_branch
        %161 = sbr.rel (%p159) target = $region16
      $region15: #{forward.6} parent=11 // pred_region
        _
      $region16: #{forward.6} parent=11 // pred_fallthru
        _
      // Predicated region
      $region17: #{forward.6} parent=11 // pred_check
        %p162 = pneg %p90
      $region18: #{forward.6} parent=11 // pred_check_branch
        %164 = sbr.rel (%p162) target = $region20
      $region19: #{forward.6} parent=11 // pred_region
        _
      $region20: #{forward.6} parent=11 // pred_fallthru
        _
      // Predicated region
      $region21: #{forward.6} parent=11 // pred_check
        %p165 = pneg %p116
      $region22: #{forward.6} parent=11 // pred_check_branch
        %167 = sbr.rel (%p165) target = $region24
      $region23: #{forward.6} parent=11 // pred_region
        %p168 = scmp.lt.s32.totalorder %s20, 0
        %s169 = scalar_select %p168, %s20, 0
        %s170 = smul.addr %s169, 4
        %s171 = scalar_lea.vmem %s3, %s170
      $region24: #{forward.6} parent=11 // pred_fallthru
        _
    $region12: #{forward.6} parent=5 // pred_fallthru
      _
    %p172 = scmp.lt.s32.totalorder %s10, 2
    // Predicated region
    $region25: #{forward.6} parent=5 // pred_check
      %p173 = pneg %p172
    $region26: #{forward.6} parent=5 // pred_check_branch
      %175 = sbr.rel (%p173) target = $region28
    $region27: #{forward.6} parent=5 // pred_region
      // Predicated region
      $region29: #{forward.6} parent=27 // pred_check
        %p176 = pneg %p42
      $region30: #{forward.6} parent=27 // pred_check_branch
        %178 = sbr.rel (%p176) target = $region32
      $region31: #{forward.6} parent=27 // pred_region
        %p179 = scmp.lt.s32.totalorder %s17, 1
        %s180 = scalar_select %p179, %s17, 1
        %s181 = smul.addr %s180, 8
        %s182 = smul.addr %s181, 8
        %s183 = scalar_lea.vmem %s0, %s182
      $region32: #{forward.6} parent=27 // pred_fallthru
        _
    $region28: #{forward.6} parent=5 // pred_fallthru
      _
    %p184 = scmp.le.s32.totalorder 1, %s10
    %p185 = scmp.lt.s32.totalorder %s10, 3
    %p186 = pnand %p184, %p185
    %p187 = pneg %p186
    // Predicated region
    $region33: #{forward.6} parent=5 // pred_check
      _
    $region34: #{forward.6} parent=5 // pred_check_branch
      %189 = sbr.rel (%p186) target = $region36
    $region35: #{forward.6} parent=5 // pred_region
      %s190 = ssub.s32 %s10, 1
      %p191 = scmp.lt.s32.totalorder %s19, 1
      %s192 = scalar_select %p191, %s19, 1
      %s193 = smul.addr %s192, 8
      %s194 = smul.addr %s193, 8
      %s195 = scalar_lea.vmem %s0, %s194
      %p196 = pneg %p48
      %p197 = pneg %p45
      %p198 = pneg %p69
      %p199 = pneg %p66
      %p200 = pneg %p90
      %p201 = pneg %p87
      %p202 = scmp.lt.s32.totalorder %s20, 0
      %s203 = scalar_select %p202, %s20, 0
      %s204 = smul.addr %s203, 4
      %s205 = scalar_lea.vmem %s3, %s204
      %p206 = pneg %p116
      %p207 = pneg %p113
      %p208 = pneg %p144
      %p209 = pneg %p141
      %p210 = scmp.lt.s32.totalorder %s19, 1
      %s211 = scalar_select %p210, %s19, 1
      %p212 = scmp.lt.s32.totalorder %s20, 0
      %s213 = scalar_select %p212, %s20, 0
      %s214 = smul.addr %s211, 8
      %s215 = sadd.s32 %s213, %s214
      %s216 = smul.addr %s215, 4
      %s217 = scalar_lea.vmem %s4, %s216
      %p218 = scmp.lt.s32.totalorder %s19, 1
      %s219 = scalar_select %p218, %s19, 1
      %s220 = smul.addr %s219, 8
      %s221 = smul.addr %s220, 8
      %s222 = scalar_lea.vmem %s0, %s221
      %p223 = scmp.lt.s32.totalorder %s20, 0
      %s224 = scalar_select %p223, %s20, 0
      %s225 = smul.addr %s224, 4
      %s226 = scalar_lea.vmem %s3, %s225
      %p227 = scmp.lt.s32.totalorder %s19, 1
      %s228 = scalar_select %p227, %s19, 1
      %p229 = scmp.lt.s32.totalorder %s20, 0
      %s230 = scalar_select %p229, %s20, 0
      %s231 = smul.addr %s228, 8
      %s232 = sadd.s32 %s230, %s231
      %s233 = smul.addr %s232, 4
      %s234 = scalar_lea.vmem %s4, %s233
      %v236 = vld [vmem:[%s222] sm:$0xff]
      %v237 = vld [vmem:[%s222 + $0x8] sm:$0xff]
      %v238 = vld [vmem:[%s222 + $0x10] sm:$0xff]
      %v239 = vld [vmem:[%s222 + $0x18] sm:$0xff]
      %v240 = vld [vmem:[%s222 + $0x20] sm:$0xff]
      %v241 = vld [vmem:[%s222 + $0x28] sm:$0xff]
      %v242 = vld [vmem:[%s222 + $0x30] sm:$0xff]
      %v243 = vld [vmem:[%s222 + $0x38] sm:$0xff]
      %v244 = vld [vmem:[%s1] sm:$0x1]
      %v246 = vlaneseq
      %v247 = vshrl.u32 %v246, 7
      %v248 = vsub.s32 0, %v247
      %v249 = vrot.slane %v244, %v248
      %v251 = vmul.f32 %v236, %v249
      %v252 = vmul.f32 %v237, %v249
      %v253 = vmul.f32 %v238, %v249
      %v254 = vmul.f32 %v239, %v249
      %v255 = vmul.f32 %v240, %v249
      %v256 = vmul.f32 %v241, %v249
      %v257 = vmul.f32 %v242, %v249
      %v258 = vmul.f32 %v243, %v249
      %v259 = vld [vmem:[%s2] sm:$0x1]
      %v261 = vlaneseq
      %v262 = vshrl.u32 %v261, 7
      %v263 = vsub.s32 0, %v262
      %v264 = vrot.slane %v259, %v263
      %v266 = vadd.f32 %v251, %v264
      %v267 = vadd.f32 %v252, %v264
      %v268 = vadd.f32 %v253, %v264
      %v269 = vadd.f32 %v254, %v264
      %v270 = vadd.f32 %v255, %v264
      %v271 = vadd.f32 %v256, %v264
      %v272 = vadd.f32 %v257, %v264
      %v273 = vadd.f32 %v258, %v264
      %v274 = vmul.f32 %v266, 0.5
      %v275 = vmul.f32 %v267, 0.5
      %v276 = vmul.f32 %v268, 0.5
      %v277 = vmul.f32 %v269, 0.5
      %v278 = vmul.f32 %v270, 0.5
      %v279 = vmul.f32 %v271, 0.5
      %v280 = vmul.f32 %v272, 0.5
      %v281 = vmul.f32 %v273, 0.5
      %v282 = vtanh.pop %v274
      %v283 = vtanh.pop %v275
      %v284 = vtanh.pop %v276
      %v285 = vtanh.pop %v277
      %v286 = vtanh.pop %v278
      %v287 = vtanh.pop %v279
      %v288 = vtanh.pop %v280
      %v289 = vtanh.pop %v281
      %v290 = vmul.f32 %v282, 0.5
      %v291 = vmul.f32 %v283, 0.5
      %v292 = vmul.f32 %v284, 0.5
      %v293 = vmul.f32 %v285, 0.5
      %v294 = vmul.f32 %v286, 0.5
      %v295 = vmul.f32 %v287, 0.5
      %v296 = vmul.f32 %v288, 0.5
      %v297 = vmul.f32 %v289, 0.5
      %v298 = vadd.f32 %v290, 0.5
      %v299 = vadd.f32 %v291, 0.5
      %v300 = vadd.f32 %v292, 0.5
      %v301 = vadd.f32 %v293, 0.5
      %v302 = vadd.f32 %v294, 0.5
      %v303 = vadd.f32 %v295, 0.5
      %v304 = vadd.f32 %v296, 0.5
      %v305 = vadd.f32 %v297, 0.5
      %v306 = vmul.f32 %v266, %v298
      %v307 = vmul.f32 %v267, %v299
      %v308 = vmul.f32 %v268, %v300
      %v309 = vmul.f32 %v269, %v301
      %v310 = vmul.f32 %v270, %v302
      %v311 = vmul.f32 %v271, %v303
      %v312 = vmul.f32 %v272, %v304
      %v313 = vmul.f32 %v273, %v305
      %v314 = vpack.c.bf16 %v306, %v306
      %v315 = vpack.c.bf16 %v307, %v307
      %v316 = vpack.c.bf16 %v308, %v308
      %v317 = vpack.c.bf16 %v309, %v309
      %v318 = vpack.c.bf16 %v310, %v310
      %v319 = vpack.c.bf16 %v311, %v311
      %v320 = vpack.c.bf16 %v312, %v312
      %v321 = vpack.c.bf16 %v313, %v313
      %v322 = vld [vmem:[%s226] sm:$0xf]
      %v331 = vunpack.c.l.b16 %v314
      %v332 = vunpack.c.l.b16 %v315
      %v333 = vunpack.c.l.b16 %v316
      %v334 = vunpack.c.l.b16 %v317
      %v335 = vunpack.c.l.b16 %v318
      %v336 = vunpack.c.l.b16 %v319
      %v337 = vunpack.c.l.b16 %v320
      %v338 = vunpack.c.l.b16 %v321
      %v339 = vpack.c.b16 %v332, %v331
      %v340 = vpack.c.b16 %v334, %v333
      %v341 = vpack.c.b16 %v336, %v335
      %v342 = vpack.c.b16 %v338, %v337
      %vm343 = vcmask 64512
      %v345 = vsel %vm343, %v339, 0
      %v348 = vsel %vm343, %v340, 0
      %v351 = vsel %vm343, %v341, 0
      %v354 = vsel %vm343, %v342, 0
      %vm356 = vcmask 1043456
      %v358 = vsel %vm356, %v322, 0
      %360 = vmatprep.subr.bf16.mxu0 0
      %361 = vmatpush1.bf16.msra.mxu0 %v358
      %362 = vmatprep.subr.bf16.mxu0 0
      %363 = vmatpush1.bf16.msra.mxu0 0
      %364 = vmatprep.subr.bf16.mxu0 0
      %365 = vmatpush1.bf16.msra.mxu0 0
      %366 = vmatprep.subr.bf16.mxu0 0
      %367 = vmatpush1.bf16.msra.mxu0 0
      %368 = vmatprep.subr.bf16.mxu0 0
      %369 = vmatpush1.bf16.msra.mxu0 0
      %370 = vmatprep.subr.bf16.mxu0 0
      %371 = vmatpush1.bf16.msra.mxu0 0
      %372 = vmatprep.subr.bf16.mxu0 0
      %373 = vmatpush1.bf16.msra.mxu0 0
      %374 = vmatprep.subr.bf16.mxu0 0
      %375 = vmatpush1.bf16.msra.mxu0 0
      %376 = vmatprep.subr.bf16.mxu0 0
      %377 = vmatpush1.bf16.msra.mxu0 0
      %378 = vmatprep.subr.bf16.mxu0 0
      %379 = vmatpush1.bf16.msra.mxu0 0
      %380 = vmatprep.subr.bf16.mxu0 0
      %381 = vmatpush1.bf16.msra.mxu0 0
      %382 = vmatprep.subr.bf16.mxu0 0
      %383 = vmatpush1.bf16.msra.mxu0 0
      %384 = vmatprep.subr.bf16.mxu0 0
      %385 = vmatpush1.bf16.msra.mxu0 0
      %386 = vmatprep.subr.bf16.mxu0 0
      %387 = vmatpush1.bf16.msra.mxu0 0
      %388 = vmatprep.subr.bf16.mxu0 0
      %389 = vmatpush1.bf16.msra.mxu0 0
      %390 = vmatprep.subr.bf16.mxu0 0
      %391 = vmatpush1.bf16.msra.mxu0 0
      %392 = vmatprep.mubr.bf16.mxu0 0
      %393 = vmatmul.mubr.bf16.gmra.mrb[0].mxu0 %v345
      %v394 = vpop.f32.mrb[0].mxu0
      %v395 = vadd.f32 0.0, %v394
      %v396 = vpop.f32.mrb[0].mxu0
      %v397 = vpop.f32.mrb[0].mxu0
      %v398 = vadd.f32 0.0, %v397
      %v399 = vpop.f32.mrb[0].mxu0
      %400 = vmatprep.mubr.bf16.mxu0 0
      %401 = vmatmul.mubr.bf16.gmra.mrb[0].mxu0 %v348
      %v402 = vpop.f32.mrb[0].mxu0
      %v403 = vadd.f32 0.0, %v402
      %v404 = vpop.f32.mrb[0].mxu0
      %v405 = vpop.f32.mrb[0].mxu0
      %v406 = vadd.f32 0.0, %v405
      %v407 = vpop.f32.mrb[0].mxu0
      %408 = vmatprep.mubr.bf16.mxu0 0
      %409 = vmatmul.mubr.bf16.gmra.mrb[0].mxu0 %v351
      %v410 = vpop.f32.mrb[0].mxu0
      %v411 = vadd.f32 0.0, %v410
      %v412 = vpop.f32.mrb[0].mxu0
      %v413 = vpop.f32.mrb[0].mxu0
      %v414 = vadd.f32 0.0, %v413
      %v415 = vpop.f32.mrb[0].mxu0
      %416 = vmatprep.mubr.bf16.mxu0 0
      %417 = vmatmul.mubr.bf16.gmra.mrb[0].mxu0 %v354
      %v418 = vpop.f32.mrb[0].mxu0
      %v419 = vadd.f32 0.0, %v418
      %v420 = vpop.f32.mrb[0].mxu0
      %v421 = vpop.f32.mrb[0].mxu0
      %v422 = vadd.f32 0.0, %v421
      %v423 = vpop.f32.mrb[0].mxu0
      %424 = vdwg.mxu0
      %v425 = vpack.c.bf16 %v395, %v395
      %v426 = vpack.c.bf16 %v398, %v398
      %v427 = vpack.c.bf16 %v403, %v403
      %v428 = vpack.c.bf16 %v406, %v406
      %v429 = vpack.c.bf16 %v411, %v411
      %v430 = vpack.c.bf16 %v414, %v414
      %v431 = vpack.c.bf16 %v419, %v419
      %v432 = vpack.c.bf16 %v422, %v422
      %vm433 = vcmask 125952
      %434 = vst.msk [vmem:[%s234] sm:$0xf] %vm433, %v425
      %435 = vst.msk [vmem:[%s234 + $0x4] sm:$0xf] %vm433, %v426
      %436 = vst.msk [vmem:[%s234 + $0x8] sm:$0xf] %vm433, %v427
      %437 = vst.msk [vmem:[%s234 + $0xc] sm:$0xf] %vm433, %v428
      %438 = vst.msk [vmem:[%s234 + $0x10] sm:$0xf] %vm433, %v429
      %439 = vst.msk [vmem:[%s234 + $0x14] sm:$0xf] %vm433, %v430
      %440 = vst.msk [vmem:[%s234 + $0x18] sm:$0xf] %vm433, %v431
      %441 = vst.msk [vmem:[%s234 + $0x1c] sm:$0xf] %vm433, %v432
      %p442 = scmp.lt.s32.totalorder %s19, 1
      %s443 = scalar_select %p442, %s19, 1
      %p444 = scmp.lt.s32.totalorder %s20, 0
      %s445 = scalar_select %p444, %s20, 0
      %s446 = smul.addr %s443, 8
      %s447 = sadd.s32 %s445, %s446
      %s448 = smul.addr %s447, 4
      %s449 = scalar_lea.vmem %s4, %s448
      // Predicated region
      $region37: #{forward.6} parent=35 // pred_check
        %p450 = pneg %p141
      $region38: #{forward.6} parent=35 // pred_check_branch
        %452 = sbr.rel (%p450) target = $region40
      $region39: #{forward.6} parent=35 // pred_region
        _
      $region40: #{forward.6} parent=35 // pred_fallthru
        _
    $region36: #{forward.6} parent=5 // pred_fallthru
      _
    %p453 = scmp.le.s32.totalorder 2, %s10
    // Predicated region
    $region41: #{forward.6} parent=5 // pred_check
      %p454 = pneg %p453
    $region42: #{forward.6} parent=5 // pred_check_branch
      %456 = sbr.rel (%p454) target = $region44
    $region43: #{forward.6} parent=5 // pred_region
      %s457 = ssub.s32 %s10, 2
      // Predicated region
      $region45: #{forward.6} parent=43 // pred_check
        %p458 = pneg %p147
      $region46: #{forward.6} parent=43 // pred_check_branch
        %460 = sbr.rel (%p458) target = $region48
      $region47: #{forward.6} parent=43 // pred_region
        %p461 = scmp.lt.s32.totalorder %s21, 1
        %s462 = scalar_select %p461, %s21, 1
        %p463 = scmp.lt.s32.totalorder %s22, 0
        %s464 = scalar_select %p463, %s22, 0
        %s465 = smul.addr %s462, 8
        %s466 = sadd.s32 %s464, %s465
        %s467 = smul.addr %s466, 4
        %s468 = scalar_lea.vmem %s4, %s467
      $region48: #{forward.6} parent=43 // pred_fallthru
        _
    $region44: #{forward.6} parent=5 // pred_fallthru
      _
  $region6: #{forward.6} parent=0 // loop_footer
    %s14 = sadd.s32 1, %s10
  $region7: #{forward.6} parent=0 // loop_footer_branch
    %9 = sbr.rel target = $region3
  $region8: #{forward.6} parent=0 // loop_exit
    _

// kernel: forward.7
$region0: #{forward.7}
  #allocation0 [shape = 'u32[]', space=smem, size = 0x4, offset = 0x4, fixed_abs, tag = 'smem constant byte address 0x4 - core index']
  #allocation1 [shape = 'u32[144,128]{1,0:T(1,128)}', space=vmem, size = 0x12000, scoped, tag = 'internal scratch']
  %s0 = inlined_call_operand.vmem [shape: bf16[2,10,10,16], index: 0, kind: input, shape index: {}]
  %s1 = inlined_call_operand.vmem [shape: bf16[9,16,16], index: 1, kind: input, shape index: {}]
  %s2 = inlined_call_operand.vmem [shape: bf16[2,8,8,16], index: 2, kind: input, shape index: {}]
  %s3 = inlined_call_operand.vmem [shape: bf16[2,8,8,16], index: 3, kind: output, shape index: {}]
  %s4 = sld [smem:[#allocation0]]
  $region45: #{forward.7} parent=0
    _
  %s6 = ssub.s32 1, %s4
  %s7 = scalar_select 0, %s6, %s4
  loop: start=0, step=1, limit=4
  $region2: #{forward.7} parent=0 // loop_pre_header
    _
  $region3: #{forward.7} parent=0 // loop_header
    %s9 = sphi 0, %s13
    %p10 = scmp.ge.s32.totalorder %s9, 4
    %s16 = sphi 0, %s28
    %s17 = sphi 0, %s24
    %s18 = sphi 0, %s16
    %s19 = sphi 0, %s17
    %s20 = sphi 0, %s18
    %s21 = sphi 0, %s19
    %s31 = sphi 0, %s33
    %s34 = sphi 0, %s31
    %s35 = sphi 0, %s34
    %s51 = sphi 0, %s35
    %s57 = sphi 0, %s59
    %s60 = sphi 0, %s57
    %s61 = sphi 0, %s60
    %s77 = sphi 0, %s61
    %s85 = sphi 0, %s87
    %s88 = sphi 0, %s85
    %s89 = sphi 0, %s88
    %s105 = sphi 0, %s89
    %s113 = sphi 0, %s115
    %s116 = sphi 0, %s113
    %s117 = sphi 0, %s116
    %s133 = sphi 0, %s117
  $region4: #{forward.7} parent=0 // loop_header_branch
    %12 = sbr.rel (%p10) target = $region8
  $region5: #{forward.7} parent=0 // loop_body
    %s14 = ssub.s32 %s9, 1
    %s15 = ssub.s32 %s9, 2
    %s22 = sadd.s32 1, %s17
    %p23 = scmp.ge.s32.totalorder %s22, 1
    %s24 = scalar_select %p23, 0, %s22
    %s25 = sadd.s32 1, %s16
    %s26 = scalar_select %p23, %s25, %s16
    %p27 = scmp.ge.s32.totalorder %s26, 2
    %s28 = scalar_select %p27, 0, %s26
    %s29 = ssub.s32 %s16, %s28
    %p30 = scmp.eq.s32.totalorder %s29, 0
    %s32 = sadd.s32 %s31, 1
    %s33 = scalar_select %p30, %s31, %s32
    %p36 = pneg %p30
    %p37 = scmp.eq.s32.totalorder %s9, 1
    %p38 = por %p36, %p37
    %p39 = scmp.ne.s32.totalorder %s31, %s34
    %p40 = scmp.eq.s32.totalorder %s9, 0
    %p41 = por %p39, %p40
    %p42 = scmp.ne.s32.totalorder %s31, %s34
    %p43 = scmp.eq.s32.totalorder %s14, 1
    %p44 = por %p42, %p43
    %p45 = scmp.ne.s32.totalorder %s34, %s35
    %p46 = scmp.eq.s32.totalorder %s14, 0
    %p47 = por %p45, %p46
    %p48 = scmp.ne.s32.totalorder %s34, %s35
    %p49 = scmp.eq.s32.totalorder %s15, 1
    %p50 = por %p48, %p49
    %p52 = scmp.ne.s32.totalorder %s35, %s51
    %p53 = scmp.eq.s32.totalorder %s15, 0
    %p54 = por %p52, %p53
    %s55 = ssub.s32 %s17, %s24
    %p56 = scmp.eq.s32.totalorder %s55, 0
    %s58 = sadd.s32 %s57, 1
    %s59 = scalar_select %p56, %s57, %s58
    %p62 = pneg %p56
    %p63 = scmp.eq.s32.totalorder %s9, 1
    %p64 = por %p62, %p63
    %p65 = scmp.ne.s32.totalorder %s57, %s60
    %p66 = scmp.eq.s32.totalorder %s9, 0
    %p67 = por %p65, %p66
    %p68 = scmp.ne.s32.totalorder %s57, %s60
    %p69 = scmp.eq.s32.totalorder %s14, 1
    %p70 = por %p68, %p69
    %p71 = scmp.ne.s32.totalorder %s60, %s61
    %p72 = scmp.eq.s32.totalorder %s14, 0
    %p73 = por %p71, %p72
    %p74 = scmp.ne.s32.totalorder %s60, %s61
    %p75 = scmp.eq.s32.totalorder %s15, 1
    %p76 = por %p74, %p75
    %p78 = scmp.ne.s32.totalorder %s61, %s77
    %p79 = scmp.eq.s32.totalorder %s15, 0
    %p80 = por %p78, %p79
    %s81 = ssub.s32 %s16, %s28
    %s82 = ssub.s32 %s17, %s24
    %s83 = sor.u32 %s81, %s82
    %p84 = scmp.eq.s32.totalorder %s83, 0
    %s86 = sadd.s32 %s85, 1
    %s87 = scalar_select %p84, %s85, %s86
    %p90 = pneg %p84
    %p91 = scmp.eq.s32.totalorder %s9, 1
    %p92 = por %p90, %p91
    %p93 = scmp.ne.s32.totalorder %s85, %s88
    %p94 = scmp.eq.s32.totalorder %s9, 0
    %p95 = por %p93, %p94
    %p96 = scmp.ne.s32.totalorder %s85, %s88
    %p97 = scmp.eq.s32.totalorder %s14, 1
    %p98 = por %p96, %p97
    %p99 = scmp.ne.s32.totalorder %s88, %s89
    %p100 = scmp.eq.s32.totalorder %s14, 0
    %p101 = por %p99, %p100
    %p102 = scmp.ne.s32.totalorder %s88, %s89
    %p103 = scmp.eq.s32.totalorder %s15, 1
    %p104 = por %p102, %p103
    %p106 = scmp.ne.s32.totalorder %s89, %s105
    %p107 = scmp.eq.s32.totalorder %s15, 0
    %p108 = por %p106, %p107
    %s109 = ssub.s32 %s16, %s28
    %s110 = ssub.s32 %s17, %s24
    %s111 = sor.u32 %s109, %s110
    %p112 = scmp.eq.s32.totalorder %s111, 0
    %s114 = sadd.s32 %s113, 1
    %s115 = scalar_select %p112, %s113, %s114
    %p118 = pneg %p112
    %p119 = scmp.eq.s32.totalorder %s9, 1
    %p120 = por %p118, %p119
    %p121 = scmp.ne.s32.totalorder %s113, %s116
    %p122 = scmp.eq.s32.totalorder %s9, 0
    %p123 = por %p121, %p122
    %p124 = scmp.ne.s32.totalorder %s113, %s116
    %p125 = scmp.eq.s32.totalorder %s14, 1
    %p126 = por %p124, %p125
    %p127 = scmp.ne.s32.totalorder %s116, %s117
    %p128 = scmp.eq.s32.totalorder %s14, 0
    %p129 = por %p127, %p128
    %p130 = scmp.ne.s32.totalorder %s116, %s117
    %p131 = scmp.eq.s32.totalorder %s15, 1
    %p132 = por %p130, %p131
    %p134 = scmp.ne.s32.totalorder %s117, %s133
    %p135 = scmp.eq.s32.totalorder %s15, 0
    %p136 = por %p134, %p135
    %p137 = scmp.le.s32.totalorder 1, %s9
    %p138 = scmp.lt.s32.totalorder %s9, 3
    %p139 = pnand %p137, %p138
    %p140 = pneg %p139
    // Predicated region
    $region9: #{forward.7} parent=5 // pred_check
      _
    $region10: #{forward.7} parent=5 // pred_check_branch
      %142 = sbr.rel (%p139) target = $region12
    $region11: #{forward.7} parent=5 // pred_region
      %s143 = ssub.s32 %s9, 1
      // Predicated region
      $region13: #{forward.7} parent=11 // pred_check
        %p144 = pneg %p73
      $region14: #{forward.7} parent=11 // pred_check_branch
        %146 = sbr.rel (%p144) target = $region16
      $region15: #{forward.7} parent=11 // pred_region
        %p147 = scmp.lt.s32.totalorder %s19, 0
        %s148 = scalar_select %p147, %s19, 0
        %s149 = smul.addr %s148, 4
        %s150 = scalar_lea.vmem %s1, %s149
      $region16: #{forward.7} parent=11 // pred_fallthru
        _
    $region12: #{forward.7} parent=5 // pred_fallthru
      _
    %p151 = scmp.lt.s32.totalorder %s9, 2
    // Predicated region
    $region17: #{forward.7} parent=5 // pred_check
      %p152 = pneg %p151
    $region18: #{forward.7} parent=5 // pred_check_branch
      %154 = sbr.rel (%p152) target = $region20
    $region19: #{forward.7} parent=5 // pred_region
      // Predicated region
      $region21: #{forward.7} parent=19 // pred_check
        %p155 = pneg %p41
      $region22: #{forward.7} parent=19 // pred_check_branch
        %157 = sbr.rel (%p155) target = $region24
      $region23: #{forward.7} parent=19 // pred_region
        %p158 = scmp.lt.s32.totalorder %s16, 1
        %s159 = scalar_select %p158, %s16, 1
        %s160 = smul.addr %s159, 20
        %s161 = smul.addr %s160, 4
        %s162 = scalar_lea.vmem %s0, %s161
      $region24: #{forward.7} parent=19 // pred_fallthru
        _
      // Predicated region
      $region25: #{forward.7} parent=19 // pred_check
        %p163 = pneg %p95
      $region26: #{forward.7} parent=19 // pred_check_branch
        %165 = sbr.rel (%p163) target = $region28
      $region27: #{forward.7} parent=19 // pred_region
        %p166 = scmp.lt.s32.totalorder %s16, 1
        %s167 = scalar_select %p166, %s16, 1
        %p168 = scmp.lt.s32.totalorder %s17, 0
        %s169 = scalar_select %p168, %s17, 0
        %s170 = smul.addr %s167, 8
        %s171 = sadd.s32 %s169, %s170
        %s172 = smul.addr %s171, 4
        %s173 = scalar_lea.vmem %s2, %s172
      $region28: #{forward.7} parent=19 // pred_fallthru
        _
    $region20: #{forward.7} parent=5 // pred_fallthru
      _
    %p174 = scmp.le.s32.totalorder 1, %s9
    %p175 = scmp.lt.s32.totalorder %s9, 3
    %p176 = pnand %p174, %p175
    %p177 = pneg %p176
    // Predicated region
    $region29: #{forward.7} parent=5 // pred_check
      _
    $region30: #{forward.7} parent=5 // pred_check_branch
      %179 = sbr.rel (%p176) target = $region32
    $region31: #{forward.7} parent=5 // pred_region
      %s180 = ssub.s32 %s9, 1
      %p181 = scmp.lt.s32.totalorder %s18, 1
      %s182 = scalar_select %p181, %s18, 1
      %s183 = smul.addr %s182, 20
      %s184 = smul.addr %s183, 4
      %s185 = scalar_lea.vmem %s0, %s184
      %p186 = pneg %p47
      %p187 = pneg %p44
      %p188 = scmp.lt.s32.totalorder %s19, 0
      %s189 = scalar_select %p188, %s19, 0
      %s190 = smul.addr %s189, 4
      %s191 = scalar_lea.vmem %s1, %s190
      %p192 = pneg %p73
      %p193 = pneg %p70
      %p194 = scmp.lt.s32.totalorder %s18, 1
      %s195 = scalar_select %p194, %s18, 1
      %p196 = scmp.lt.s32.totalorder %s19, 0
      %s197 = scalar_select %p196, %s19, 0
      %s198 = smul.addr %s195, 8
      %s199 = sadd.s32 %s197, %s198
      %s200 = smul.addr %s199, 4
      %s201 = scalar_lea.vmem %s2, %s200
      %p202 = pneg %p101
      %p203 = pneg %p98
      %p204 = pneg %p129
      %p205 = pneg %p126
      %p206 = scmp.lt.s32.totalorder %s18, 1
      %s207 = scalar_select %p206, %s18, 1
      %p208 = scmp.lt.s32.totalorder %s19, 0
      %s209 = scalar_select %p208, %s19, 0
      %s210 = smul.addr %s207, 8
      %s211 = sadd.s32 %s209, %s210
      %s212 = smul.addr %s211, 4
      %s213 = scalar_lea.vmem %s3, %s212
      %p214 = scmp.lt.s32.totalorder %s18, 1
      %s215 = scalar_select %p214, %s18, 1
      %s216 = smul.addr %s215, 20
      %s217 = smul.addr %s216, 4
      %s218 = scalar_lea.vmem %s0, %s217
      %p219 = scmp.lt.s32.totalorder %s19, 0
      %s220 = scalar_select %p219, %s19, 0
      %s221 = smul.addr %s220, 4
      %s222 = scalar_lea.vmem %s1, %s221
      %p223 = scmp.lt.s32.totalorder %s18, 1
      %s224 = scalar_select %p223, %s18, 1
      %p225 = scmp.lt.s32.totalorder %s19, 0
      %s226 = scalar_select %p225, %s19, 0
      %s227 = smul.addr %s224, 8
      %s228 = sadd.s32 %s226, %s227
      %s229 = smul.addr %s228, 4
      %s230 = scalar_lea.vmem %s2, %s229
      %p231 = scmp.lt.s32.totalorder %s18, 1
      %s232 = scalar_select %p231, %s18, 1
      %p233 = scmp.lt.s32.totalorder %s19, 0
      %s234 = scalar_select %p233, %s19, 0
      %s235 = smul.addr %s232, 8
      %s236 = sadd.s32 %s234, %s235
      %s237 = smul.addr %s236, 4
      %s238 = scalar_lea.vmem %s3, %s237
      %v240 = vld [vmem:[%s218] sm:$0xf]
      %v241 = vld [vmem:[%s218 + $0x4] sm:$0x1]
      %v242 = vld [vmem:[%s218 + $0x8] sm:$0xf]
      %v243 = vld [vmem:[%s218 + $0xc] sm:$0x1]
      %v244 = vld [vmem:[%s218 + $0x10] sm:$0xf]
      %v245 = vld [vmem:[%s218 + $0x14] sm:$0x1]
      %v246 = vld [vmem:[%s218 + $0x18] sm:$0xf]
      %v247 = vld [vmem:[%s218 + $0x1c] sm:$0x1]
      %v248 = vld [vmem:[%s218 + $0x20] sm:$0xf]
      %v249 = vld [vmem:[%s218 + $0x24] sm:$0x1]
      %v250 = vld [vmem:[%s218 + $0x28] sm:$0xf]
      %v251 = vld [vmem:[%s218 + $0x2c] sm:$0x1]
      %v252 = vld [vmem:[%s218 + $0x30] sm:$0xf]
      %v253 = vld [vmem:[%s218 + $0x34] sm:$0x1]
      %v254 = vld [vmem:[%s218 + $0x38] sm:$0xf]
      %v255 = vld [vmem:[%s218 + $0x3c] sm:$0x1]
      %v256 = vld [vmem:[%s218 + $0x40] sm:$0xf]
      %v257 = vld [vmem:[%s218 + $0x44] sm:$0x1]
      %v258 = vld [vmem:[%s218 + $0x48] sm:$0xf]
      %v259 = vld [vmem:[%s218 + $0x4c] sm:$0x1]
      %v260 = vld [vmem:[%s222] sm:$0xf]
      %v261 = vld [vmem:[%s222 + $0x4] sm:$0xf]
      %vm262 = vsmask.f32 3328
      %vm263 = vsmask.f32 7440
      %vm264 = vmor %vm262, %vm263
      %v266 = vshrl.u32 %v240, 16
      %v268 = vrot.slane %v266, 4
      %v269 = vshll.u32 %v240, 16
      %v271 = vrot.slane %v269, 5
      %v272 = vor.u32 %v268, %v271
      %v273 = vrot.slane %v272, 4
      %v275 = vshll.u32 %v241, 16
      %v277 = vrot.slane %v275, 5
      %v278 = vsel %vm264, %v273, %v277
      %v280 = vshrl.u32 %v242, 16
      %v282 = vrot.slane %v280, 4
      %v283 = vshll.u32 %v242, 16
      %v285 = vrot.slane %v283, 5
      %v286 = vor.u32 %v282, %v285
      %v287 = vrot.slane %v286, 4
      %v289 = vshll.u32 %v243, 16
      %v291 = vrot.slane %v289, 5
      %v292 = vsel %vm264, %v287, %v291
      %v294 = vshrl.u32 %v244, 16
      %v296 = vrot.slane %v294, 4
      %v297 = vshll.u32 %v244, 16
      %v299 = vrot.slane %v297, 5
      %v300 = vor.u32 %v296, %v299
      %v301 = vrot.slane %v300, 4
      %v303 = vshll.u32 %v245, 16
      %v305 = vrot.slane %v303, 5
      %v306 = vsel %vm264, %v301, %v305
      %v308 = vshrl.u32 %v246, 16
      %v310 = vrot.slane %v308, 4
      %v311 = vshll.u32 %v246, 16
      %v313 = vrot.slane %v311, 5
      %v314 = vor.u32 %v310, %v313
      %v315 = vrot.slane %v314, 4
      %v317 = vshll.u32 %v247, 16
      %v319 = vrot.slane %v317, 5
      %v320 = vsel %vm264, %v315, %v319
      %v322 = vshrl.u32 %v248, 16
      %v324 = vrot.slane %v322, 4
      %v325 = vshll.u32 %v248, 16
      %v327 = vrot.slane %v325, 5
      %v328 = vor.u32 %v324, %v327
      %v329 = vrot.slane %v328, 4
      %v331 = vshll.u32 %v249, 16
      %v333 = vrot.slane %v331, 5
      %v334 = vsel %vm264, %v329, %v333
      %v336 = vshrl.u32 %v250, 16
      %v338 = vrot.slane %v336, 4
      %v339 = vshll.u32 %v250, 16
      %v341 = vrot.slane %v339, 5
      %v342 = vor.u32 %v338, %v341
      %v343 = vrot.slane %v342, 4
      %v345 = vshll.u32 %v251, 16
      %v347 = vrot.slane %v345, 5
      %v348 = vsel %vm264, %v343, %v347
      %v350 = vshrl.u32 %v252, 16
      %v352 = vrot.slane %v350, 4
      %v353 = vshll.u32 %v252, 16
      %v355 = vrot.slane %v353, 5
      %v356 = vor.u32 %v352, %v355
      %v357 = vrot.slane %v356, 4
      %v359 = vshll.u32 %v253, 16
      %v361 = vrot.slane %v359, 5
      %v362 = vsel %vm264, %v357, %v361
      %v364 = vshrl.u32 %v254, 16
      %v366 = vrot.slane %v364, 4
      %v367 = vshll.u32 %v254, 16
      %v369 = vrot.slane %v367, 5
      %v370 = vor.u32 %v366, %v369
      %v371 = vrot.slane %v370, 4
      %v373 = vshll.u32 %v255, 16
      %v375 = vrot.slane %v373, 5
      %v376 = vsel %vm264, %v371, %v375
      %s377 = scalar_lea.vmem %s222, 8
      %v378 = vld [vmem:[%s377] sm:$0xf]
      %v379 = vld [vmem:[%s377 + $0x4] sm:$0xf]
      %v380 = vunpack.c.l.b16 %v278
      %v381 = vunpack.c.l.b16 %v292
      %v382 = vunpack.c.l.b16 %v306
      %v383 = vunpack.c.l.b16 %v320
      %v384 = vunpack.c.l.b16 %v334
      %v385 = vunpack.c.l.b16 %v348
      %v386 = vunpack.c.l.b16 %v362
      %v387 = vunpack.c.l.b16 %v376
      %v388 = vpack.c.b16 %v381, %v380
      %v389 = vpack.c.b16 %v383, %v382
      %v390 = vpack.c.b16 %v385, %v384
      %v391 = vpack.c.b16 %v387, %v386
      %v394 = vunpack.c.l.b16 %v378
      %v395 = vunpack.c.l.b16 %v379
      %v396 = vpack.c.b16 %v395, %v394
      %vm398 = vcmask 130048
      %v400 = vsel %vm398, %v388, 0
      %v403 = vsel %vm398, %v389, 0
      %v406 = vsel %vm398, %v390, 0
      %v409 = vsel %vm398, %v391, 0
      %411 = vmatprep.subr.bf16.mxu0 0
      %412 = vmatpush1.bf16.msra.mxu0 %v396
      %413 = vmatprep.subr.bf16.mxu0 0
      %414 = vmatpush1.bf16.msra.mxu0 0
      %415 = vmatprep.subr.bf16.mxu0 0
      %416 = vmatpush1.bf16.msra.mxu0 0
      %417 = vmatprep.subr.bf16.mxu0 0
      %418 = vmatpush1.bf16.msra.mxu0 0
      %419 = vmatprep.subr.bf16.mxu0 0
      %420 = vmatpush1.bf16.msra.mxu0 0
      %421 = vmatprep.subr.bf16.mxu0 0
      %422 = vmatpush1.bf16.msra.mxu0 0
      %423 = vmatprep.subr.bf16.mxu0 0
      %424 = vmatpush1.bf16.msra.mxu0 0
      %425 = vmatprep.subr.bf16.mxu0 0
      %426 = vmatpush1.bf16.msra.mxu0 0
      %427 = vmatprep.subr.bf16.mxu0 0
      %428 = vmatpush1.bf16.msra.mxu0 0
      %429 = vmatprep.subr.bf16.mxu0 0
      %430 = vmatpush1.bf16.msra.mxu0 0
      %431 = vmatprep.subr.bf16.mxu0 0
      %432 = vmatpush1.bf16.msra.mxu0 0
      %433 = vmatprep.subr.bf16.mxu0 0
      %434 = vmatpush1.bf16.msra.mxu0 0
      %435 = vmatprep.subr.bf16.mxu0 0
      %436 = vmatpush1.bf16.msra.mxu0 0
      %437 = vmatprep.subr.bf16.mxu0 0
      %438 = vmatpush1.bf16.msra.mxu0 0
      %439 = vmatprep.subr.bf16.mxu0 0
      %440 = vmatpush1.bf16.msra.mxu0 0
      %441 = vmatprep.subr.bf16.mxu0 0
      %442 = vmatpush1.bf16.msra.mxu0 0
      %443 = vmatprep.mubr.bf16.mxu0 0
      %444 = vmatmul.mubr.bf16.gmra.mrb[0].mxu0 %v400
      %v445 = vpop.f32.mrb[0].mxu0
      %v446 = vadd.f32 0.0, %v445
      %v447 = vpop.f32.mrb[0].mxu0
      %v448 = vpop.f32.mrb[0].mxu0
      %v449 = vadd.f32 0.0, %v448
      %v450 = vpop.f32.mrb[0].mxu0
      %451 = vmatprep.mubr.bf16.mxu0 0
      %452 = vmatmul.mubr.bf16.gmra.mrb[0].mxu0 %v403
      %v453 = vpop.f32.mrb[0].mxu0
      %v454 = vadd.f32 0.0, %v453
      %v455 = vpop.f32.mrb[0].mxu0
      %v456 = vpop.f32.mrb[0].mxu0
      %v457 = vadd.f32 0.0, %v456
      %v458 = vpop.f32.mrb[0].mxu0
      %459 = vmatprep.mubr.bf16.mxu0 0
      %460 = vmatmul.mubr.bf16.gmra.mrb[0].mxu0 %v406
      %v461 = vpop.f32.mrb[0].mxu0
      %v462 = vadd.f32 0.0, %v461
      %v463 = vpop.f32.mrb[0].mxu0
      %v464 = vpop.f32.mrb[0].mxu0
      %v465 = vadd.f32 0.0, %v464
      %v466 = vpop.f32.mrb[0].mxu0
      %467 = vmatprep.mubr.bf16.mxu0 0
      %468 = vmatmul.mubr.bf16.gmra.mrb[0].mxu0 %v409
      %v469 = vpop.f32.mrb[0].mxu0
      %v470 = vadd.f32 0.0, %v469
      %v471 = vpop.f32.mrb[0].mxu0
      %v472 = vpop.f32.mrb[0].mxu0
      %v473 = vadd.f32 0.0, %v472
      %v474 = vpop.f32.mrb[0].mxu0
      %475 = vdwg.mxu0
      %v484 = vunpack.c.l.b16 %v240
      %v485 = vunpack.c.l.b16 %v242
      %v486 = vunpack.c.l.b16 %v244
      %v487 = vunpack.c.l.b16 %v246
      %v488 = vunpack.c.l.b16 %v248
      %v489 = vunpack.c.l.b16 %v250
      %v490 = vunpack.c.l.b16 %v252
      %v491 = vunpack.c.l.b16 %v254
      %v492 = vpack.c.b16 %v485, %v484
      %v493 = vpack.c.b16 %v487, %v486
      %v494 = vpack.c.b16 %v489, %v488
      %v495 = vpack.c.b16 %v491, %v490
      %v498 = vunpack.c.l.b16 %v260
      %v499 = vunpack.c.l.b16 %v261
      %v500 = vpack.c.b16 %v499, %v498
      %v503 = vsel %vm398, %v492, 0
      %v506 = vsel %vm398, %v493, 0
      %v509 = vsel %vm398, %v494, 0
      %v512 = vsel %vm398, %v495, 0
      %514 = vmatprep.subr.bf16.mxu0 0
      %515 = vmatpush1.bf16.msra.mxu0 %v500
      %516 = vmatprep.subr.bf16.mxu0 0
      %517 = vmatpush1.bf16.msra.mxu0 0
      %518 = vmatprep.subr.bf16.mxu0 0
      %519 = vmatpush1.bf16.msra.mxu0 0
      %520 = vmatprep.subr.bf16.mxu0 0
      %521 = vmatpush1.bf16.msra.mxu0 0
      %522 = vmatprep.subr.bf16.mxu0 0
      %523 = vmatpush1.bf16.msra.mxu0 0
      %524 = vmatprep.subr.bf16.mxu0 0
      %525 = vmatpush1.bf16.msra.mxu0 0
      %526 = vmatprep.subr.bf16.mxu0 0
      %527 = vmatpush1.bf16.msra.mxu0 0
      %528 = vmatprep.subr.bf16.mxu0 0
      %529 = vmatpush1.bf16.msra.mxu0 0
      %530 = vmatprep.subr.bf16.mxu0 0
      %531 = vmatpush1.bf16.msra.mxu0 0
      %532 = vmatprep.subr.bf16.mxu0 0
      %533 = vmatpush1.bf16.msra.mxu0 0
      %534 = vmatprep.subr.bf16.mxu0 0
      %535 = vmatpush1.bf16.msra.mxu0 0
      %536 = vmatprep.subr.bf16.mxu0 0
      %537 = vmatpush1.bf16.msra.mxu0 0
      %538 = vmatprep.subr.bf16.mxu0 0
      %539 = vmatpush1.bf16.msra.mxu0 0
      %540 = vmatprep.subr.bf16.mxu0 0
      %541 = vmatpush1.bf16.msra.mxu0 0
      %542 = vmatprep.subr.bf16.mxu0 0
      %543 = vmatpush1.bf16.msra.mxu0 0
      %544 = vmatprep.subr.bf16.mxu0 0
      %545 = vmatpush1.bf16.msra.mxu0 0
      %546 = vmatprep.mubr.bf16.mxu0 0
      %547 = vmatmul.mubr.bf16.gmra.mrb[0].mxu0 %v503
      %v548 = vpop.f32.mrb[0].mxu0
      %v549 = vadd.f32 %v446, %v548
      %v550 = vpop.f32.mrb[0].mxu0
      %v551 = vpop.f32.mrb[0].mxu0
      %v552 = vadd.f32 %v449, %v551
      %v553 = vpop.f32.mrb[0].mxu0
      %554 = vmatprep.mubr.bf16.mxu0 0
      %555 = vmatmul.mubr.bf16.gmra.mrb[0].mxu0 %v506
      %v556 = vpop.f32.mrb[0].mxu0
      %v557 = vadd.f32 %v454, %v556
      %v558 = vpop.f32.mrb[0].mxu0
      %v559 = vpop.f32.mrb[0].mxu0
      %v560 = vadd.f32 %v457, %v559
      %v561 = vpop.f32.mrb[0].mxu0
      %562 = vmatprep.mubr.bf16.mxu0 0
      %563 = vmatmul.mubr.bf16.gmra.mrb[0].mxu0 %v509
      %v564 = vpop.f32.mrb[0].mxu0
      %v565 = vadd.f32 %v462, %v564
      %v566 = vpop.f32.mrb[0].mxu0
      %v567 = vpop.f32.mrb[0].mxu0
      %v568 = vadd.f32 %v465, %v567
      %v569 = vpop.f32.mrb[0].mxu0
      %570 = vmatprep.mubr.bf16.mxu0 0
      %571 = vmatmul.mubr.bf16.gmra.mrb[0].mxu0 %v512
      %v572 = vpop.f32.mrb[0].mxu0
      %v573 = vadd.f32 %v470, %v572
      %v574 = vpop.f32.mrb[0].mxu0
      %v575 = vpop.f32.mrb[0].mxu0
      %v576 = vadd.f32 %v473, %v575
      %v577 = vpop.f32.mrb[0].mxu0
      %578 = vdwg.mxu0
      %vm587 = vcmask 1042432
      %vm588 = vcmask 1046532
      %vm589 = vmor %vm587, %vm588
      %v590 = vrot.slane %v240, 5
      %v591 = vrot.slane %v590, 4
      %v592 = vrot.slane %v241, 5
      %v593 = vsel %vm589, %v591, %v592
      %v594 = vrot.slane %v242, 5
      %v595 = vrot.slane %v594, 4
      %v596 = vrot.slane %v243, 5
      %v597 = vsel %vm589, %v595, %v596
      %v598 = vrot.slane %v244, 5
      %v599 = vrot.slane %v598, 4
      %v600 = vrot.slane %v245, 5
      %v601 = vsel %vm589, %v599, %v600
      %v602 = vrot.slane %v246, 5
      %v603 = vrot.slane %v602, 4
      %v604 = vrot.slane %v247, 5
      %v605 = vsel %vm589, %v603, %v604
      %v606 = vrot.slane %v248, 5
      %v607 = vrot.slane %v606, 4
      %v608 = vrot.slane %v249, 5
      %v609 = vsel %vm589, %v607, %v608
      %v610 = vrot.slane %v250, 5
      %v611 = vrot.slane %v610, 4
      %v612 = vrot.slane %v251, 5
      %v613 = vsel %vm589, %v611, %v612
      %v614 = vrot.slane %v252, 5
      %v615 = vrot.slane %v614, 4
      %v616 = vrot.slane %v253, 5
      %v617 = vsel %vm589, %v615, %v616
      %v618 = vrot.slane %v254, 5
      %v619 = vrot.slane %v618, 4
      %v620 = vrot.slane %v255, 5
      %v621 = vsel %vm589, %v619, %v620
      %s622 = scalar_lea.vmem %s222, 16
      %v623 = vld [vmem:[%s622] sm:$0xf]
      %v624 = vld [vmem:[%s622 + $0x4] sm:$0xf]
      %v625 = vunpack.c.l.b16 %v593
      %v626 = vunpack.c.l.b16 %v597
      %v627 = vunpack.c.l.b16 %v601
      %v628 = vunpack.c.l.b16 %v605
      %v629 = vunpack.c.l.b16 %v609
      %v630 = vunpack.c.l.b16 %v613
      %v631 = vunpack.c.l.b16 %v617
      %v632 = vunpack.c.l.b16 %v621
      %v633 = vpack.c.b16 %v626, %v625
      %v634 = vpack.c.b16 %v628, %v627
      %v635 = vpack.c.b16 %v630, %v629
      %v636 = vpack.c.b16 %v632, %v631
      %v639 = vunpack.c.l.b16 %v623
      %v640 = vunpack.c.l.b16 %v624
      %v641 = vpack.c.b16 %v640, %v639
      %v644 = vsel %vm398, %v633, 0
      %v647 = vsel %vm398, %v634, 0
      %v650 = vsel %vm398, %v635, 0
      %v653 = vsel %vm398, %v636, 0
      %655 = vmatprep.subr.bf16.mxu0 0
      %656 = vmatpush1.bf16.msra.mxu0 %v641
      %657 = vmatprep.subr.bf16.mxu0 0
      %658 = vmatpush1.bf16.msra.mxu0 0
      %659 = vmatprep.subr.bf16.mxu0 0
      %660 = vmatpush1.bf16.msra.mxu0 0
      %661 = vmatprep.subr.bf16.mxu0 0
      %662 = vmatpush1.bf16.msra.mxu0 0
      %663 = vmatprep.subr.bf16.mxu0 0
      %664 = vmatpush1.bf16.msra.mxu0 0
      %665 = vmatprep.subr.bf16.mxu0 0
      %666 = vmatpush1.bf16.msra.mxu0 0
      %667 = vmatprep.subr.bf16.mxu0 0
      %668 = vmatpush1.bf16.msra.mxu0 0
      %669 = vmatprep.subr.bf16.mxu0 0
      %670 = vmatpush1.bf16.msra.mxu0 0
      %671 = vmatprep.subr.bf16.mxu0 0
      %672 = vmatpush1.bf16.msra.mxu0 0
      %673 = vmatprep.subr.bf16.mxu0 0
      %674 = vmatpush1.bf16.msra.mxu0 0
      %675 = vmatprep.subr.bf16.mxu0 0
      %676 = vmatpush1.bf16.msra.mxu0 0
      %677 = vmatprep.subr.bf16.mxu0 0
      %678 = vmatpush1.bf16.msra.mxu0 0
      %679 = vmatprep.subr.bf16.mxu0 0
      %680 = vmatpush1.bf16.msra.mxu0 0
      %681 = vmatprep.subr.bf16.mxu0 0
      %682 = vmatpush1.bf16.msra.mxu0 0
      %683 = vmatprep.subr.bf16.mxu0 0
      %684 = vmatpush1.bf16.msra.mxu0 0
      %685 = vmatprep.subr.bf16.mxu0 0
      %686 = vmatpush1.bf16.msra.mxu0 0
      %687 = vmatprep.mubr.bf16.mxu0 0
      %688 = vmatmul.mubr.bf16.gmra.mrb[0].mxu0 %v644
      %v689 = vpop.f32.mrb[0].mxu0
      %v690 = vadd.f32 0.0, %v689
      %v691 = vpop.f32.mrb[0].mxu0
      %v692 = vpop.f32.mrb[0].mxu0
      %v693 = vadd.f32 0.0, %v692
      %v694 = vpop.f32.mrb[0].mxu0
      %695 = vmatprep.mubr.bf16.mxu0 0
      %696 = vmatmul.mubr.bf16.gmra.mrb[0].mxu0 %v647
      %v697 = vpop.f32.mrb[0].mxu0
      %v698 = vadd.f32 0.0, %v697
      %v699 = vpop.f32.mrb[0].mxu0
      %v700 = vpop.f32.mrb[0].mxu0
      %v701 = vadd.f32 0.0, %v700
      %v702 = vpop.f32.mrb[0].mxu0
      %703 = vmatprep.mubr.bf16.mxu0 0
      %704 = vmatmul.mubr.bf16.gmra.mrb[0].mxu0 %v650
      %v705 = vpop.f32.mrb[0].mxu0
      %v706 = vadd.f32 0.0, %v705
      %v707 = vpop.f32.mrb[0].mxu0
      %v708 = vpop.f32.mrb[0].mxu0
      %v709 = vadd.f32 0.0, %v708
      %v710 = vpop.f32.mrb[0].mxu0
      %711 = vmatprep.mubr.bf16.mxu0 0
      %712 = vmatmul.mubr.bf16.gmra.mrb[0].mxu0 %v653
      %v713 = vpop.f32.mrb[0].mxu0
      %v714 = vadd.f32 0.0, %v713
      %v715 = vpop.f32.mrb[0].mxu0
      %v716 = vpop.f32.mrb[0].mxu0
      %v717 = vadd.f32 0.0, %v716
      %v718 = vpop.f32.mrb[0].mxu0
      %719 = vdwg.mxu0
      %v720 = vadd.f32 %v549, %v690
      %v721 = vadd.f32 %v552, %v693
      %v722 = vadd.f32 %v557, %v698
      %v723 = vadd.f32 %v560, %v701
      %v724 = vadd.f32 %v565, %v706
      %v725 = vadd.f32 %v568, %v709
      %v726 = vadd.f32 %v573, %v714
      %v727 = vadd.f32 %v576, %v717
      %s728 = scalar_lea.vmem %s222, 24
      %v729 = vld [vmem:[%s728] sm:$0xf]
      %v730 = vld [vmem:[%s728 + $0x4] sm:$0xf]
      %v732 = vunpack.c.l.b16 %v256
      %v733 = vpack.c.b16 %v486, %v485
      %v734 = vpack.c.b16 %v488, %v487
      %v735 = vpack.c.b16 %v490, %v489
      %v736 = vpack.c.b16 %v732, %v491
      %v739 = vunpack.c.l.b16 %v729
      %v740 = vunpack.c.l.b16 %v730
      %v741 = vpack.c.b16 %v740, %v739
      %v744 = vsel %vm398, %v733, 0
      %v747 = vsel %vm398, %v734, 0
      %v750 = vsel %vm398, %v735, 0
      %v753 = vsel %vm398, %v736, 0
      %755 = vmatprep.subr.bf16.mxu0 0
      %756 = vmatpush1.bf16.msra.mxu0 %v741
      %757 = vmatprep.subr.bf16.mxu0 0
      %758 = vmatpush1.bf16.msra.mxu0 0
      %759 = vmatprep.subr.bf16.mxu0 0
      %760 = vmatpush1.bf16.msra.mxu0 0
      %761 = vmatprep.subr.bf16.mxu0 0
      %762 = vmatpush1.bf16.msra.mxu0 0
      %763 = vmatprep.subr.bf16.mxu0 0
      %764 = vmatpush1.bf16.msra.mxu0 0
      %765 = vmatprep.subr.bf16.mxu0 0
      %766 = vmatpush1.bf16.msra.mxu0 0
      %767 = vmatprep.subr.bf16.mxu0 0
      %768 = vmatpush1.bf16.msra.mxu0 0
      %769 = vmatprep.subr.bf16.mxu0 0
      %770 = vmatpush1.bf16.msra.mxu0 0
      %771 = vmatprep.subr.bf16.mxu0 0
      %772 = vmatpush1.bf16.msra.mxu0 0
      %773 = vmatprep.subr.bf16.mxu0 0
      %774 = vmatpush1.bf16.msra.mxu0 0
      %775 = vmatprep.subr.bf16.mxu0 0
      %776 = vmatpush1.bf16.msra.mxu0 0
      %777 = vmatprep.subr.bf16.mxu0 0
      %778 = vmatpush1.bf16.msra.mxu0 0
      %779 = vmatprep.subr.bf16.mxu0 0
      %780 = vmatpush1.bf16.msra.mxu0 0
      %781 = vmatprep.subr.bf16.mxu0 0
      %782 = vmatpush1.bf16.msra.mxu0 0
      %783 = vmatprep.subr.bf16.mxu0 0
      %784 = vmatpush1.bf16.msra.mxu0 0
      %785 = vmatprep.subr.bf16.mxu0 0
      %786 = vmatpush1.bf16.msra.mxu0 0
      %787 = vmatprep.mubr.bf16.mxu0 0
      %788 = vmatmul.mubr.bf16.gmra.mrb[0].mxu0 %v744
      %v789 = vpop.f32.mrb[0].mxu0
      %v790 = vadd.f32 0.0, %v789
      %v791 = vpop.f32.mrb[0].mxu0
      %v792 = vpop.f32.mrb[0].mxu0
      %v793 = vadd.f32 0.0, %v792
      %v794 = vpop.f32.mrb[0].mxu0
      %795 = vmatprep.mubr.bf16.mxu0 0
      %796 = vmatmul.mubr.bf16.gmra.mrb[0].mxu0 %v747
      %v797 = vpop.f32.mrb[0].mxu0
      %v798 = vadd.f32 0.0, %v797
      %v799 = vpop.f32.mrb[0].mxu0
      %v800 = vpop.f32.mrb[0].mxu0
      %v801 = vadd.f32 0.0, %v800
      %v802 = vpop.f32.mrb[0].mxu0
      %803 = vmatprep.mubr.bf16.mxu0 0
      %804 = vmatmul.mubr.bf16.gmra.mrb[0].mxu0 %v750
      %v805 = vpop.f32.mrb[0].mxu0
      %v806 = vadd.f32 0.0, %v805
      %v807 = vpop.f32.mrb[0].mxu0
      %v808 = vpop.f32.mrb[0].mxu0
      %v809 = vadd.f32 0.0, %v808
      %v810 = vpop.f32.mrb[0].mxu0
      %811 = vmatprep.mubr.bf16.mxu0 0
      %812 = vmatmul.mubr.bf16.gmra.mrb[0].mxu0 %v753
      %v813 = vpop.f32.mrb[0].mxu0
      %v814 = vadd.f32 0.0, %v813
      %v815 = vpop.f32.mrb[0].mxu0
      %v816 = vpop.f32.mrb[0].mxu0
      %v817 = vadd.f32 0.0, %v816
      %v818 = vpop.f32.mrb[0].mxu0
      %819 = vdwg.mxu0
      %v820 = vadd.f32 %v720, %v790
      %v821 = vadd.f32 %v721, %v793
      %v822 = vadd.f32 %v722, %v798
      %v823 = vadd.f32 %v723, %v801
      %v824 = vadd.f32 %v724, %v806
      %v825 = vadd.f32 %v725, %v809
      %v826 = vadd.f32 %v726, %v814
      %v827 = vadd.f32 %v727, %v817
      %v829 = vshrl.u32 %v256, 16
      %v831 = vrot.slane %v829, 4
      %v832 = vshll.u32 %v256, 16
      %v834 = vrot.slane %v832, 5
      %v835 = vor.u32 %v831, %v834
      %v836 = vrot.slane %v835, 4
      %v838 = vshll.u32 %v257, 16
      %v840 = vrot.slane %v838, 5
      %v841 = vsel %vm264, %v836, %v840
      %s842 = scalar_lea.vmem %s222, 32
      %v843 = vld [vmem:[%s842] sm:$0xf]
      %v844 = vld [vmem:[%s842 + $0x4] sm:$0xf]
      %v845 = vunpack.c.l.b16 %v841
      %v846 = vpack.c.b16 %v382, %v381
      %v847 = vpack.c.b16 %v384, %v383
      %v848 = vpack.c.b16 %v386, %v385
      %v849 = vpack.c.b16 %v845, %v387
      %v852 = vunpack.c.l.b16 %v843
      %v853 = vunpack.c.l.b16 %v844
      %v854 = vpack.c.b16 %v853, %v852
      %v857 = vsel %vm398, %v846, 0
      %v860 = vsel %vm398, %v847, 0
      %v863 = vsel %vm398, %v848, 0
      %v866 = vsel %vm398, %v849, 0
      %868 = vmatprep.subr.bf16.mxu0 0
      %869 = vmatpush1.bf16.msra.mxu0 %v854
      %870 = vmatprep.subr.bf16.mxu0 0
      %871 = vmatpush1.bf16.msra.mxu0 0
      %872 = vmatprep.subr.bf16.mxu0 0
      %873 = vmatpush1.bf16.msra.mxu0 0
      %874 = vmatprep.subr.bf16.mxu0 0
      %875 = vmatpush1.bf16.msra.mxu0 0
      %876 = vmatprep.subr.bf16.mxu0 0
      %877 = vmatpush1.bf16.msra.mxu0 0
      %878 = vmatprep.subr.bf16.mxu0 0
      %879 = vmatpush1.bf16.msra.mxu0 0
      %880 = vmatprep.subr.bf16.mxu0 0
      %881 = vmatpush1.bf16.msra.mxu0 0
      %882 = vmatprep.subr.bf16.mxu0 0
      %883 = vmatpush1.bf16.msra.mxu0 0
      %884 = vmatprep.subr.bf16.mxu0 0
      %885 = vmatpush1.bf16.msra.mxu0 0
      %886 = vmatprep.subr.bf16.mxu0 0
      %887 = vmatpush1.bf16.msra.mxu0 0
      %888 = vmatprep.subr.bf16.mxu0 0
      %889 = vmatpush1.bf16.msra.mxu0 0
      %890 = vmatprep.subr.bf16.mxu0 0
      %891 = vmatpush1.bf16.msra.mxu0 0
      %892 = vmatprep.subr.bf16.mxu0 0
      %893 = vmatpush1.bf16.msra.mxu0 0
      %894 = vmatprep.subr.bf16.mxu0 0
      %895 = vmatpush1.bf16.msra.mxu0 0
      %896 = vmatprep.subr.bf16.mxu0 0
      %897 = vmatpush1.bf16.msra.mxu0 0
      %898 = vmatprep.subr.bf16.mxu0 0
      %899 = vmatpush1.bf16.msra.mxu0 0
      %900 = vmatprep.mubr.bf16.mxu0 0
      %901 = vmatmul.mubr.bf16.gmra.mrb[0].mxu0 %v857
      %v902 = vpop.f32.mrb[0].mxu0
      %v903 = vadd.f32 0.0, %v902
      %v904 = vpop.f32.mrb[0].mxu0
      %v905 = vpop.f32.mrb[0].mxu0
      %v906 = vadd.f32 0.0, %v905
      %v907 = vpop.f32.mrb[0].mxu0
      %908 = vmatprep.mubr.bf16.mxu0 0
      %909 = vmatmul.mubr.bf16.gmra.mrb[0].mxu0 %v860
      %v910 = vpop.f32.mrb[0].mxu0
      %v911 = vadd.f32 0.0, %v910
      %v912 = vpop.f32.mrb[0].mxu0
      %v913 = vpop.f32.mrb[0].mxu0
      %v914 = vadd.f32 0.0, %v913
      %v915 = vpop.f32.mrb[0].mxu0
      %916 = vmatprep.mubr.bf16.mxu0 0
      %917 = vmatmul.mubr.bf16.gmra.mrb[0].mxu0 %v863
      %v918 = vpop.f32.mrb[0].mxu0
      %v919 = vadd.f32 0.0, %v918
      %v920 = vpop.f32.mrb[0].mxu0
      %v921 = vpop.f32.mrb[0].mxu0
      %v922 = vadd.f32 0.0, %v921
      %v923 = vpop.f32.mrb[0].mxu0
      %924 = vmatprep.mubr.bf16.mxu0 0
      %925 = vmatmul.mubr.bf16.gmra.mrb[0].mxu0 %v866
      %v926 = vpop.f32.mrb[0].mxu0
      %v927 = vadd.f32 0.0, %v926
      %v928 = vpop.f32.mrb[0].mxu0
      %v929 = vpop.f32.mrb[0].mxu0
      %v930 = vadd.f32 0.0, %v929
      %v931 = vpop.f32.mrb[0].mxu0
      %932 = vdwg.mxu0
      %v933 = vadd.f32 %v820, %v903
      %v934 = vadd.f32 %v821, %v906
      %v935 = vadd.f32 %v822, %v911
      %v936 = vadd.f32 %v823, %v914
      %v937 = vadd.f32 %v824, %v919
      %v938 = vadd.f32 %v825, %v922
      %v939 = vadd.f32 %v826, %v927
      %v940 = vadd.f32 %v827, %v930
      %v942 = vrot.slane %v256, 5
      %v943 = vrot.slane %v942, 4
      %v944 = vrot.slane %v257, 5
      %v945 = vsel %vm589, %v943, %v944
      %s946 = scalar_lea.vmem %s222, 40
      %v947 = vld [vmem:[%s946] sm:$0xf]
      %v948 = vld [vmem:[%s946 + $0x4] sm:$0xf]
      %v949 = vunpack.c.l.b16 %v945
      %v950 = vpack.c.b16 %v627, %v626
      %v951 = vpack.c.b16 %v629, %v628
      %v952 = vpack.c.b16 %v631, %v630
      %v953 = vpack.c.b16 %v949, %v632
      %v956 = vunpack.c.l.b16 %v947
      %v957 = vunpack.c.l.b16 %v948
      %v958 = vpack.c.b16 %v957, %v956
      %v961 = vsel %vm398, %v950, 0
      %v964 = vsel %vm398, %v951, 0
      %v967 = vsel %vm398, %v952, 0
      %v970 = vsel %vm398, %v953, 0
      %972 = vmatprep.subr.bf16.mxu0 0
      %973 = vmatpush1.bf16.msra.mxu0 %v958
      %974 = vmatprep.subr.bf16.mxu0 0
      %975 = vmatpush1.bf16.msra.mxu0 0
      %976 = vmatprep.subr.bf16.mxu0 0
      %977 = vmatpush1.bf16.msra.mxu0 0
      %978 = vmatprep.subr.bf16.mxu0 0
      %979 = vmatpush1.bf16.msra.mxu0 0
      %980 = vmatprep.subr.bf16.mxu0 0
      %981 = vmatpush1.bf16.msra.mxu0 0
      %982 = vmatprep.subr.bf16.mxu0 0
      %983 = vmatpush1.bf16.msra.mxu0 0
      %984 = vmatprep.subr.bf16.mxu0 0
      %985 = vmatpush1.bf16.msra.mxu0 0
      %986 = vmatprep.subr.bf16.mxu0 0
      %987 = vmatpush1.bf16.msra.mxu0 0
      %988 = vmatprep.subr.bf16.mxu0 0
      %989 = vmatpush1.bf16.msra.mxu0 0
      %990 = vmatprep.subr.bf16.mxu0 0
      %991 = vmatpush1.bf16.msra.mxu0 0
      %992 = vmatprep.subr.bf16.mxu0 0
      %993 = vmatpush1.bf16.msra.mxu0 0
      %994 = vmatprep.subr.bf16.mxu0 0
      %995 = vmatpush1.bf16.msra.mxu0 0
      %996 = vmatprep.subr.bf16.mxu0 0
      %997 = vmatpush1.bf16.msra.mxu0 0
      %998 = vmatprep.subr.bf16.mxu0 0
      %999 = vmatpush1.bf16.msra.mxu0 0
      %1000 = vmatprep.subr.bf16.mxu0 0
      %1001 = vmatpush1.bf16.msra.mxu0 0
      %1002 = vmatprep.subr.bf16.mxu0 0
      %1003 = vmatpush1.bf16.msra.mxu0 0
      %1004 = vmatprep.mubr.bf16.mxu0 0
      %1005 = vmatmul.mubr.bf16.gmra.mrb[0].mxu0 %v961
      %v1006 = vpop.f32.mrb[0].mxu0
      %v1007 = vadd.f32 0.0, %v1006
      %v1008 = vpop.f32.mrb[0].mxu0
      %v1009 = vpop.f32.mrb[0].mxu0
      %v1010 = vadd.f32 0.0, %v1009
      %v1011 = vpop.f32.mrb[0].mxu0
      %1012 = vmatprep.mubr.bf16.mxu0 0
      %1013 = vmatmul.mubr.bf16.gmra.mrb[0].mxu0 %v964
      %v1014 = vpop.f32.mrb[0].mxu0
      %v1015 = vadd.f32 0.0, %v1014
      %v1016 = vpop.f32.mrb[0].mxu0
      %v1017 = vpop.f32.mrb[0].mxu0
      %v1018 = vadd.f32 0.0, %v1017
      %v1019 = vpop.f32.mrb[0].mxu0
      %1020 = vmatprep.mubr.bf16.mxu0 0
      %1021 = vmatmul.mubr.bf16.gmra.mrb[0].mxu0 %v967
      %v1022 = vpop.f32.mrb[0].mxu0
      %v1023 = vadd.f32 0.0, %v1022
      %v1024 = vpop.f32.mrb[0].mxu0
      %v1025 = vpop.f32.mrb[0].mxu0
      %v1026 = vadd.f32 0.0, %v1025
      %v1027 = vpop.f32.mrb[0].mxu0
      %1028 = vmatprep.mubr.bf16.mxu0 0
      %1029 = vmatmul.mubr.bf16.gmra.mrb[0].mxu0 %v970
      %v1030 = vpop.f32.mrb[0].mxu0
      %v1031 = vadd.f32 0.0, %v1030
      %v1032 = vpop.f32.mrb[0].mxu0
      %v1033 = vpop.f32.mrb[0].mxu0
      %v1034 = vadd.f32 0.0, %v1033
      %v1035 = vpop.f32.mrb[0].mxu0
      %1036 = vdwg.mxu0
      %v1037 = vadd.f32 %v933, %v1007
      %v1038 = vadd.f32 %v934, %v1010
      %v1039 = vadd.f32 %v935, %v1015
      %v1040 = vadd.f32 %v936, %v1018
      %v1041 = vadd.f32 %v937, %v1023
      %v1042 = vadd.f32 %v938, %v1026
      %v1043 = vadd.f32 %v939, %v1031
      %v1044 = vadd.f32 %v940, %v1034
      %s1045 = scalar_lea.vmem %s222, 48
      %v1046 = vld [vmem:[%s1045] sm:$0xf]
      %v1047 = vld [vmem:[%s1045 + $0x4] sm:$0xf]
      %v1049 = vunpack.c.l.b16 %v258
      %v1050 = vpack.c.b16 %v1049, %v732
      %v1053 = vunpack.c.l.b16 %v1046
      %v1054 = vunpack.c.l.b16 %v1047
      %v1055 = vpack.c.b16 %v1054, %v1053
      %v1058 = vsel %vm398, %v1050, 0
      %1060 = vmatprep.subr.bf16.mxu0 0
      %1061 = vmatpush1.bf16.msra.mxu0 %v1055
      %1062 = vmatprep.subr.bf16.mxu0 0
      %1063 = vmatpush1.bf16.msra.mxu0 0
      %1064 = vmatprep.subr.bf16.mxu0 0
      %1065 = vmatpush1.bf16.msra.mxu0 0
      %1066 = vmatprep.subr.bf16.mxu0 0
      %1067 = vmatpush1.bf16.msra.mxu0 0
      %1068 = vmatprep.subr.bf16.mxu0 0
      %1069 = vmatpush1.bf16.msra.mxu0 0
      %1070 = vmatprep.subr.bf16.mxu0 0
      %1071 = vmatpush1.bf16.msra.mxu0 0
      %1072 = vmatprep.subr.bf16.mxu0 0
      %1073 = vmatpush1.bf16.msra.mxu0 0
      %1074 = vmatprep.subr.bf16.mxu0 0
      %1075 = vmatpush1.bf16.msra.mxu0 0
      %1076 = vmatprep.subr.bf16.mxu0 0
      %1077 = vmatpush1.bf16.msra.mxu0 0
      %1078 = vmatprep.subr.bf16.mxu0 0
      %1079 = vmatpush1.bf16.msra.mxu0 0
      %1080 = vmatprep.subr.bf16.mxu0 0
      %1081 = vmatpush1.bf16.msra.mxu0 0
      %1082 = vmatprep.subr.bf16.mxu0 0
      %1083 = vmatpush1.bf16.msra.mxu0 0
      %1084 = vmatprep.subr.bf16.mxu0 0
      %1085 = vmatpush1.bf16.msra.mxu0 0
      %1086 = vmatprep.subr.bf16.mxu0 0
      %1087 = vmatpush1.bf16.msra.mxu0 0
      %1088 = vmatprep.subr.bf16.mxu0 0
      %1089 = vmatpush1.bf16.msra.mxu0 0
      %1090 = vmatprep.subr.bf16.mxu0 0
      %1091 = vmatpush1.bf16.msra.mxu0 0
      %1092 = vmatprep.mubr.bf16.mxu0 0
      %1093 = vmatmul.mubr.bf16.gmra.mrb[0].mxu0 %v506
      %v1094 = vpop.f32.mrb[0].mxu0
      %v1095 = vadd.f32 0.0, %v1094
      %v1096 = vpop.f32.mrb[0].mxu0
      %v1097 = vpop.f32.mrb[0].mxu0
      %v1098 = vadd.f32 0.0, %v1097
      %v1099 = vpop.f32.mrb[0].mxu0
      %1100 = vmatprep.mubr.bf16.mxu0 0
      %1101 = vmatmul.mubr.bf16.gmra.mrb[0].mxu0 %v509
      %v1102 = vpop.f32.mrb[0].mxu0
      %v1103 = vadd.f32 0.0, %v1102
      %v1104 = vpop.f32.mrb[0].mxu0
      %v1105 = vpop.f32.mrb[0].mxu0
      %v1106 = vadd.f32 0.0, %v1105
      %v1107 = vpop.f32.mrb[0].mxu0
      %1108 = vmatprep.mubr.bf16.mxu0 0
      %1109 = vmatmul.mubr.bf16.gmra.mrb[0].mxu0 %v512
      %v1110 = vpop.f32.mrb[0].mxu0
      %v1111 = vadd.f32 0.0, %v1110
      %v1112 = vpop.f32.mrb[0].mxu0
      %v1113 = vpop.f32.mrb[0].mxu0
      %v1114 = vadd.f32 0.0, %v1113
      %v1115 = vpop.f32.mrb[0].mxu0
      %1116 = vmatprep.mubr.bf16.mxu0 0
      %1117 = vmatmul.mubr.bf16.gmra.mrb[0].mxu0 %v1058
      %v1118 = vpop.f32.mrb[0].mxu0
      %v1119 = vadd.f32 0.0, %v1118
      %v1120 = vpop.f32.mrb[0].mxu0
      %v1121 = vpop.f32.mrb[0].mxu0
      %v1122 = vadd.f32 0.0, %v1121
      %v1123 = vpop.f32.mrb[0].mxu0
      %1124 = vdwg.mxu0
      %v1125 = vadd.f32 %v1037, %v1095
      %v1126 = vadd.f32 %v1038, %v1098
      %v1127 = vadd.f32 %v1039, %v1103
      %v1128 = vadd.f32 %v1040, %v1106
      %v1129 = vadd.f32 %v1041, %v1111
      %v1130 = vadd.f32 %v1042, %v1114
      %v1131 = vadd.f32 %v1043, %v1119
      %v1132 = vadd.f32 %v1044, %v1122
      %v1134 = vshrl.u32 %v258, 16
      %v1136 = vrot.slane %v1134, 4
      %v1137 = vshll.u32 %v258, 16
      %v1139 = vrot.slane %v1137, 5
      %v1140 = vor.u32 %v1136, %v1139
      %v1141 = vrot.slane %v1140, 4
      %v1143 = vshll.u32 %v259, 16
      %v1145 = vrot.slane %v1143, 5
      %v1146 = vsel %vm264, %v1141, %v1145
      %s1147 = scalar_lea.vmem %s222, 56
      %v1148 = vld [vmem:[%s1147] sm:$0xf]
      %v1149 = vld [vmem:[%s1147 + $0x4] sm:$0xf]
      %v1150 = vunpack.c.l.b16 %v1146
      %v1151 = vpack.c.b16 %v1150, %v845
      %v1154 = vunpack.c.l.b16 %v1148
      %v1155 = vunpack.c.l.b16 %v1149
      %v1156 = vpack.c.b16 %v1155, %v1154
      %v1159 = vsel %vm398, %v1151, 0
      %1161 = vmatprep.subr.bf16.mxu0 0
      %1162 = vmatpush1.bf16.msra.mxu0 %v1156
      %1163 = vmatprep.subr.bf16.mxu0 0
      %1164 = vmatpush1.bf16.msra.mxu0 0
      %1165 = vmatprep.subr.bf16.mxu0 0
      %1166 = vmatpush1.bf16.msra.mxu0 0
      %1167 = vmatprep.subr.bf16.mxu0 0
      %1168 = vmatpush1.bf16.msra.mxu0 0
      %1169 = vmatprep.subr.bf16.mxu0 0
      %1170 = vmatpush1.bf16.msra.mxu0 0
      %1171 = vmatprep.subr.bf16.mxu0 0
      %1172 = vmatpush1.bf16.msra.mxu0 0
      %1173 = vmatprep.subr.bf16.mxu0 0
      %1174 = vmatpush1.bf16.msra.mxu0 0
      %1175 = vmatprep.subr.bf16.mxu0 0
      %1176 = vmatpush1.bf16.msra.mxu0 0
      %1177 = vmatprep.subr.bf16.mxu0 0
      %1178 = vmatpush1.bf16.msra.mxu0 0
      %1179 = vmatprep.subr.bf16.mxu0 0
      %1180 = vmatpush1.bf16.msra.mxu0 0
      %1181 = vmatprep.subr.bf16.mxu0 0
      %1182 = vmatpush1.bf16.msra.mxu0 0
      %1183 = vmatprep.subr.bf16.mxu0 0
      %1184 = vmatpush1.bf16.msra.mxu0 0
      %1185 = vmatprep.subr.bf16.mxu0 0
      %1186 = vmatpush1.bf16.msra.mxu0 0
      %1187 = vmatprep.subr.bf16.mxu0 0
      %1188 = vmatpush1.bf16.msra.mxu0 0
      %1189 = vmatprep.subr.bf16.mxu0 0
      %1190 = vmatpush1.bf16.msra.mxu0 0
      %1191 = vmatprep.subr.bf16.mxu0 0
      %1192 = vmatpush1.bf16.msra.mxu0 0
      %1193 = vmatprep.mubr.bf16.mxu0 0
      %1194 = vmatmul.mubr.bf16.gmra.mrb[0].mxu0 %v403
      %v1195 = vpop.f32.mrb[0].mxu0
      %v1196 = vadd.f32 0.0, %v1195
      %v1197 = vpop.f32.mrb[0].mxu0
      %v1198 = vpop.f32.mrb[0].mxu0
      %v1199 = vadd.f32 0.0, %v1198
      %v1200 = vpop.f32.mrb[0].mxu0
      %1201 = vmatprep.mubr.bf16.mxu0 0
      %1202 = vmatmul.mubr.bf16.gmra.mrb[0].mxu0 %v406
      %v1203 = vpop.f32.mrb[0].mxu0
      %v1204 = vadd.f32 0.0, %v1203
      %v1205 = vpop.f32.mrb[0].mxu0
      %v1206 = vpop.f32.mrb[0].mxu0
      %v1207 = vadd.f32 0.0, %v1206
      %v1208 = vpop.f32.mrb[0].mxu0
      %1209 = vmatprep.mubr.bf16.mxu0 0
      %1210 = vmatmul.mubr.bf16.gmra.mrb[0].mxu0 %v409
      %v1211 = vpop.f32.mrb[0].mxu0
      %v1212 = vadd.f32 0.0, %v1211
      %v1213 = vpop.f32.mrb[0].mxu0
      %v1214 = vpop.f32.mrb[0].mxu0
      %v1215 = vadd.f32 0.0, %v1214
      %v1216 = vpop.f32.mrb[0].mxu0
      %1217 = vmatprep.mubr.bf16.mxu0 0
      %1218 = vmatmul.mubr.bf16.gmra.mrb[0].mxu0 %v1159
      %v1219 = vpop.f32.mrb[0].mxu0
      %v1220 = vadd.f32 0.0, %v1219
      %v1221 = vpop.f32.mrb[0].mxu0
      %v1222 = vpop.f32.mrb[0].mxu0
      %v1223 = vadd.f32 0.0, %v1222
      %v1224 = vpop.f32.mrb[0].mxu0
      %1225 = vdwg.mxu0
      %v1226 = vadd.f32 %v1125, %v1196
      %v1227 = vadd.f32 %v1126, %v1199
      %v1228 = vadd.f32 %v1127, %v1204
      %v1229 = vadd.f32 %v1128, %v1207
      %v1230 = vadd.f32 %v1129, %v1212
      %v1231 = vadd.f32 %v1130, %v1215
      %v1232 = vadd.f32 %v1131, %v1220
      %v1233 = vadd.f32 %v1132, %v1223
      %v1235 = vrot.slane %v258, 5
      %v1236 = vrot.slane %v1235, 4
      %v1237 = vrot.slane %v259, 5
      %v1238 = vsel %vm589, %v1236, %v1237
      %s1239 = scalar_lea.vmem %s222, 64
      %v1240 = vld [vmem:[%s1239] sm:$0xf]
      %v1241 = vld [vmem:[%s1239 + $0x4] sm:$0xf]
      %v1242 = vunpack.c.l.b16 %v1238
      %v1243 = vpack.c.b16 %v1242, %v949
      %v1246 = vunpack.c.l.b16 %v1240
      %v1247 = vunpack.c.l.b16 %v1241
      %v1248 = vpack.c.b16 %v1247, %v1246
      %v1251 = vsel %vm398, %v1243, 0
      %1253 = vmatprep.subr.bf16.mxu0 0
      %1254 = vmatpush1.bf16.msra.mxu0 %v1248
      %1255 = vmatprep.subr.bf16.mxu0 0
      %1256 = vmatpush1.bf16.msra.mxu0 0
      %1257 = vmatprep.subr.bf16.mxu0 0
      %1258 = vmatpush1.bf16.msra.mxu0 0
      %1259 = vmatprep.subr.bf16.mxu0 0
      %1260 = vmatpush1.bf16.msra.mxu0 0
      %1261 = vmatprep.subr.bf16.mxu0 0
      %1262 = vmatpush1.bf16.msra.mxu0 0
      %1263 = vmatprep.subr.bf16.mxu0 0
      %1264 = vmatpush1.bf16.msra.mxu0 0
      %1265 = vmatprep.subr.bf16.mxu0 0
      %1266 = vmatpush1.bf16.msra.mxu0 0
      %1267 = vmatprep.subr.bf16.mxu0 0
      %1268 = vmatpush1.bf16.msra.mxu0 0
      %1269 = vmatprep.subr.bf16.mxu0 0
      %1270 = vmatpush1.bf16.msra.mxu0 0
      %1271 = vmatprep.subr.bf16.mxu0 0
      %1272 = vmatpush1.bf16.msra.mxu0 0
      %1273 = vmatprep.subr.bf16.mxu0 0
      %1274 = vmatpush1.bf16.msra.mxu0 0
      %1275 = vmatprep.subr.bf16.mxu0 0
      %1276 = vmatpush1.bf16.msra.mxu0 0
      %1277 = vmatprep.subr.bf16.mxu0 0
      %1278 = vmatpush1.bf16.msra.mxu0 0
      %1279 = vmatprep.subr.bf16.mxu0 0
      %1280 = vmatpush1.bf16.msra.mxu0 0
      %1281 = vmatprep.subr.bf16.mxu0 0
      %1282 = vmatpush1.bf16.msra.mxu0 0
      %1283 = vmatprep.subr.bf16.mxu0 0
      %1284 = vmatpush1.bf16.msra.mxu0 0
      %1285 = vmatprep.mubr.bf16.mxu0 0
      %1286 = vmatmul.mubr.bf16.gmra.mrb[0].mxu0 %v647
      %v1287 = vpop.f32.mrb[0].mxu0
      %v1288 = vadd.f32 0.0, %v1287
      %v1289 = vpop.f32.mrb[0].mxu0
      %v1290 = vpop.f32.mrb[0].mxu0
      %v1291 = vadd.f32 0.0, %v1290
      %v1292 = vpop.f32.mrb[0].mxu0
      %1293 = vmatprep.mubr.bf16.mxu0 0
      %1294 = vmatmul.mubr.bf16.gmra.mrb[0].mxu0 %v650
      %v1295 = vpop.f32.mrb[0].mxu0
      %v1296 = vadd.f32 0.0, %v1295
      %v1297 = vpop.f32.mrb[0].mxu0
      %v1298 = vpop.f32.mrb[0].mxu0
      %v1299 = vadd.f32 0.0, %v1298
      %v1300 = vpop.f32.mrb[0].mxu0
      %1301 = vmatprep.mubr.bf16.mxu0 0
      %1302 = vmatmul.mubr.bf16.gmra.mrb[0].mxu0 %v653
      %v1303 = vpop.f32.mrb[0].mxu0
      %v1304 = vadd.f32 0.0, %v1303
      %v1305 = vpop.f32.mrb[0].mxu0
      %v1306 = vpop.f32.mrb[0].mxu0
      %v1307 = vadd.f32 0.0, %v1306
      %v1308 = vpop.f32.mrb[0].mxu0
      %1309 = vmatprep.mubr.bf16.mxu0 0
      %1310 = vmatmul.mubr.bf16.gmra.mrb[0].mxu0 %v1251
      %v1311 = vpop.f32.mrb[0].mxu0
      %v1312 = vadd.f32 0.0, %v1311
      %v1313 = vpop.f32.mrb[0].mxu0
      %v1314 = vpop.f32.mrb[0].mxu0
      %v1315 = vadd.f32 0.0, %v1314
      %v1316 = vpop.f32.mrb[0].mxu0
      %1317 = vdwg.mxu0
      %v1318 = vadd.f32 %v1226, %v1288
      %v1319 = vadd.f32 %v1227, %v1291
      %v1320 = vadd.f32 %v1228, %v1296
      %v1321 = vadd.f32 %v1229, %v1299
      %v1322 = vadd.f32 %v1230, %v1304
      %v1323 = vadd.f32 %v1231, %v1307
      %v1324 = vadd.f32 %v1232, %v1312
      %v1325 = vadd.f32 %v1233, %v1315
      %v1326 = vld [vmem:[%s230] sm:$0xf]
      %v1327 = vld [vmem:[%s230 + $0x4] sm:$0xf]
      %v1328 = vld [vmem:[%s230 + $0x8] sm:$0xf]
      %v1329 = vld [vmem:[%s230 + $0xc] sm:$0xf]
      %v1330 = vld [vmem:[%s230 + $0x10] sm:$0xf]
      %v1331 = vld [vmem:[%s230 + $0x14] sm:$0xf]
      %v1332 = vld [vmem:[%s230 + $0x18] sm:$0xf]
      %v1333 = vld [vmem:[%s230 + $0x1c] sm:$0xf]
      %v1334 = vunpack.c.l.bf16 %v1326
      %v1335 = vunpack.c.l.bf16 %v1327
      %v1336 = vunpack.c.l.bf16 %v1328
      %v1337 = vunpack.c.l.bf16 %v1329
      %v1338 = vunpack.c.l.bf16 %v1330
      %v1339 = vunpack.c.l.bf16 %v1331
      %v1340 = vunpack.c.l.bf16 %v1332
      %v1341 = vunpack.c.l.bf16 %v1333
      %v1342 = vadd.f32 %v1318, %v1334
      %v1343 = vadd.f32 %v1319, %v1335
      %v1344 = vadd.f32 %v1320, %v1336
      %v1345 = vadd.f32 %v1321, %v1337
      %v1346 = vadd.f32 %v1322, %v1338
      %v1347 = vadd.f32 %v1323, %v1339
      %v1348 = vadd.f32 %v1324, %v1340
      %v1349 = vadd.f32 %v1325, %v1341
      %v1350 = vpack.c.bf16 %v1342, %v1342
      %v1351 = vpack.c.bf16 %v1343, %v1343
      %v1352 = vpack.c.bf16 %v1344, %v1344
      %v1353 = vpack.c.bf16 %v1345, %v1345
      %v1354 = vpack.c.bf16 %v1346, %v1346
      %v1355 = vpack.c.bf16 %v1347, %v1347
      %v1356 = vpack.c.bf16 %v1348, %v1348
      %v1357 = vpack.c.bf16 %v1349, %v1349
      %vm1358 = vcmask 125952
      %1359 = vst.msk [vmem:[%s238] sm:$0xf] %vm1358, %v1350
      %1360 = vst.msk [vmem:[%s238 + $0x4] sm:$0xf] %vm1358, %v1351
      %1361 = vst.msk [vmem:[%s238 + $0x8] sm:$0xf] %vm1358, %v1352
      %1362 = vst.msk [vmem:[%s238 + $0xc] sm:$0xf] %vm1358, %v1353
      %1363 = vst.msk [vmem:[%s238 + $0x10] sm:$0xf] %vm1358, %v1354
      %1364 = vst.msk [vmem:[%s238 + $0x14] sm:$0xf] %vm1358, %v1355
      %1365 = vst.msk [vmem:[%s238 + $0x18] sm:$0xf] %vm1358, %v1356
      %1366 = vst.msk [vmem:[%s238 + $0x1c] sm:$0xf] %vm1358, %v1357
      %p1367 = scmp.lt.s32.totalorder %s18, 1
      %s1368 = scalar_select %p1367, %s18, 1
      %p1369 = scmp.lt.s32.totalorder %s19, 0
      %s1370 = scalar_select %p1369, %s19, 0
      %s1371 = smul.addr %s1368, 8
      %s1372 = sadd.s32 %s1370, %s1371
      %s1373 = smul.addr %s1372, 4
      %s1374 = scalar_lea.vmem %s3, %s1373
      // Predicated region
      $region33: #{forward.7} parent=31 // pred_check
        %p1375 = pneg %p126
      $region34: #{forward.7} parent=31 // pred_check_branch
        %1377 = sbr.rel (%p1375) target = $region36
      $region35: #{forward.7} parent=31 // pred_region
        _
      $region36: #{forward.7} parent=31 // pred_fallthru
        _
    $region32: #{forward.7} parent=5 // pred_fallthru
      _
    %p1378 = scmp.le.s32.totalorder 2, %s9
    // Predicated region
    $region37: #{forward.7} parent=5 // pred_check
      %p1379 = pneg %p1378
    $region38: #{forward.7} parent=5 // pred_check_branch
      %1381 = sbr.rel (%p1379) target = $region40
    $region39: #{forward.7} parent=5 // pred_region
      %s1382 = ssub.s32 %s9, 2
      // Predicated region
      $region41: #{forward.7} parent=39 // pred_check
        %p1383 = pneg %p132
      $region42: #{forward.7} parent=39 // pred_check_branch
        %1385 = sbr.rel (%p1383) target = $region44
      $region43: #{forward.7} parent=39 // pred_region
        %p1386 = scmp.lt.s32.totalorder %s20, 1
        %s1387 = scalar_select %p1386, %s20, 1
        %p1388 = scmp.lt.s32.totalorder %s21, 0
        %s1389 = scalar_select %p1388, %s21, 0
        %s1390 = smul.addr %s1387, 8
        %s1391 = sadd.s32 %s1389, %s1390
        %s1392 = smul.addr %s1391, 4
        %s1393 = scalar_lea.vmem %s3, %s1392
      $region44: #{forward.7} parent=39 // pred_fallthru
        _
    $region40: #{forward.7} parent=5 // pred_fallthru
      _
  $region6: #{forward.7} parent=0 // loop_footer
    %s13 = sadd.s32 1, %s9
  $region7: #{forward.7} parent=0 // loop_footer_branch
    %8 = sbr.rel target = $region3
  $region8: #{forward.7} parent=0 // loop_exit
    _

// kernel: forward.5
$region0: #{forward.5}
  #allocation0 [shape = 'u32[]', space=smem, size = 0x4, offset = 0x4, fixed_abs, tag = 'smem constant byte address 0x4 - core index']
  #allocation1 [shape = 'u32[144,128]{1,0:T(1,128)}', space=vmem, size = 0x12000, scoped, tag = 'internal scratch']
  %s0 = inlined_call_operand.vmem [shape: f32[8,9,9,8], index: 0, kind: input, shape index: {}]
  %s1 = inlined_call_operand.vmem [shape: f32[1,8], index: 1, kind: input, shape index: {}]
  %s2 = inlined_call_operand.vmem [shape: f32[1,8], index: 2, kind: input, shape index: {}]
  %s3 = inlined_call_operand.vmem [shape: f32[4,9,9,1], index: 3, kind: input, shape index: {}]
  %s4 = inlined_call_operand.vmem [shape: bf16[9,8,16], index: 4, kind: input, shape index: {}]
  %s5 = inlined_call_operand.vmem [shape: f32[1,16], index: 5, kind: input, shape index: {}]
  %s6 = inlined_call_operand.vmem [shape: bf16[2,8,8,16], index: 6, kind: output, shape index: {}]
  %s7 = sld [smem:[#allocation0]]
  $region57: #{forward.5} parent=0
    _
  %s9 = ssub.s32 1, %s7
  %s10 = scalar_select 0, %s9, %s7
  loop: start=0, step=1, limit=4
  $region2: #{forward.5} parent=0 // loop_pre_header
    _
  $region3: #{forward.5} parent=0 // loop_header
    %s12 = sphi 0, %s16
    %p13 = scmp.ge.s32.totalorder %s12, 4
    %s19 = sphi 0, %s31
    %s20 = sphi 0, %s27
    %s21 = sphi 0, %s19
    %s22 = sphi 0, %s20
    %s23 = sphi 0, %s21
    %s24 = sphi 0, %s22
    %s34 = sphi 0, %s36
    %s37 = sphi 0, %s34
    %s38 = sphi 0, %s37
    %s54 = sphi 0, %s38
    %s58 = sphi 0, %s58
    %s60 = sphi 0, %s58
    %s61 = sphi 0, %s60
    %s75 = sphi 0, %s61
    %s79 = sphi 0, %s79
    %s81 = sphi 0, %s79
    %s82 = sphi 0, %s81
    %s96 = sphi 0, %s82
    %s100 = sphi 0, %s100
    %s102 = sphi 0, %s100
    %s103 = sphi 0, %s102
    %s117 = sphi 0, %s103
    %s123 = sphi 0, %s125
    %s126 = sphi 0, %s123
    %s127 = sphi 0, %s126
    %s143 = sphi 0, %s127
    %s149 = sphi 0, %s151
    %s152 = sphi 0, %s149
    %s153 = sphi 0, %s152
    %s169 = sphi 0, %s153
    %s177 = sphi 0, %s179
    %s180 = sphi 0, %s177
    %s181 = sphi 0, %s180
    %s197 = sphi 0, %s181
  $region4: #{forward.5} parent=0 // loop_header_branch
    %15 = sbr.rel (%p13) target = $region8
  $region5: #{forward.5} parent=0 // loop_body
    %s17 = ssub.s32 %s12, 1
    %s18 = ssub.s32 %s12, 2
    %s25 = sadd.s32 1, %s20
    %p26 = scmp.ge.s32.totalorder %s25, 1
    %s27 = scalar_select %p26, 0, %s25
    %s28 = sadd.s32 1, %s19
    %s29 = scalar_select %p26, %s28, %s19
    %p30 = scmp.ge.s32.totalorder %s29, 2
    %s31 = scalar_select %p30, 0, %s29
    %s32 = ssub.s32 %s19, %s31
    %p33 = scmp.eq.s32.totalorder %s32, 0
    %s35 = sadd.s32 %s34, 1
    %s36 = scalar_select %p33, %s34, %s35
    %p39 = pneg %p33
    %p40 = scmp.eq.s32.totalorder %s12, 1
    %p41 = por %p39, %p40
    %p42 = scmp.ne.s32.totalorder %s34, %s37
    %p43 = scmp.eq.s32.totalorder %s12, 0
    %p44 = por %p42, %p43
    %p45 = scmp.ne.s32.totalorder %s34, %s37
    %p46 = scmp.eq.s32.totalorder %s17, 1
    %p47 = por %p45, %p46
    %p48 = scmp.ne.s32.totalorder %s37, %s38
    %p49 = scmp.eq.s32.totalorder %s17, 0
    %p50 = por %p48, %p49
    %p51 = scmp.ne.s32.totalorder %s37, %s38
    %p52 = scmp.eq.s32.totalorder %s18, 1
    %p53 = por %p51, %p52
    %p55 = scmp.ne.s32.totalorder %s38, %s54
    %p56 = scmp.eq.s32.totalorder %s18, 0
    %p57 = por %p55, %p56
    %s59 = sadd.s32 %s58, 1
    %p62 = scmp.eq.s32.totalorder %s12, 1
    %p63 = scmp.ne.s32.totalorder %s58, %s60
    %p64 = scmp.eq.s32.totalorder %s12, 0
    %p65 = por %p63, %p64
    %p66 = scmp.ne.s32.totalorder %s58, %s60
    %p67 = scmp.eq.s32.totalorder %s17, 1
    %p68 = por %p66, %p67
    %p69 = scmp.ne.s32.totalorder %s60, %s61
    %p70 = scmp.eq.s32.totalorder %s17, 0
    %p71 = por %p69, %p70
    %p72 = scmp.ne.s32.totalorder %s60, %s61
    %p73 = scmp.eq.s32.totalorder %s18, 1
    %p74 = por %p72, %p73
    %p76 = scmp.ne.s32.totalorder %s61, %s75
    %p77 = scmp.eq.s32.totalorder %s18, 0
    %p78 = por %p76, %p77
    %s80 = sadd.s32 %s79, 1
    %p83 = scmp.eq.s32.totalorder %s12, 1
    %p84 = scmp.ne.s32.totalorder %s79, %s81
    %p85 = scmp.eq.s32.totalorder %s12, 0
    %p86 = por %p84, %p85
    %p87 = scmp.ne.s32.totalorder %s79, %s81
    %p88 = scmp.eq.s32.totalorder %s17, 1
    %p89 = por %p87, %p88
    %p90 = scmp.ne.s32.totalorder %s81, %s82
    %p91 = scmp.eq.s32.totalorder %s17, 0
    %p92 = por %p90, %p91
    %p93 = scmp.ne.s32.totalorder %s81, %s82
    %p94 = scmp.eq.s32.totalorder %s18, 1
    %p95 = por %p93, %p94
    %p97 = scmp.ne.s32.totalorder %s82, %s96
    %p98 = scmp.eq.s32.totalorder %s18, 0
    %p99 = por %p97, %p98
    %s101 = sadd.s32 %s100, 1
    %p104 = scmp.eq.s32.totalorder %s12, 1
    %p105 = scmp.ne.s32.totalorder %s100, %s102
    %p106 = scmp.eq.s32.totalorder %s12, 0
    %p107 = por %p105, %p106
    %p108 = scmp.ne.s32.totalorder %s100, %s102
    %p109 = scmp.eq.s32.totalorder %s17, 1
    %p110 = por %p108, %p109
    %p111 = scmp.ne.s32.totalorder %s102, %s103
    %p112 = scmp.eq.s32.totalorder %s17, 0
    %p113 = por %p111, %p112
    %p114 = scmp.ne.s32.totalorder %s102, %s103
    %p115 = scmp.eq.s32.totalorder %s18, 1
    %p116 = por %p114, %p115
    %p118 = scmp.ne.s32.totalorder %s103, %s117
    %p119 = scmp.eq.s32.totalorder %s18, 0
    %p120 = por %p118, %p119
    %s121 = ssub.s32 %s20, %s27
    %p122 = scmp.eq.s32.totalorder %s121, 0
    %s124 = sadd.s32 %s123, 1
    %s125 = scalar_select %p122, %s123, %s124
    %p128 = pneg %p122
    %p129 = scmp.eq.s32.totalorder %s12, 1
    %p130 = por %p128, %p129
    %p131 = scmp.ne.s32.totalorder %s123, %s126
    %p132 = scmp.eq.s32.totalorder %s12, 0
    %p133 = por %p131, %p132
    %p134 = scmp.ne.s32.totalorder %s123, %s126
    %p135 = scmp.eq.s32.totalorder %s17, 1
    %p136 = por %p134, %p135
    %p137 = scmp.ne.s32.totalorder %s126, %s127
    %p138 = scmp.eq.s32.totalorder %s17, 0
    %p139 = por %p137, %p138
    %p140 = scmp.ne.s32.totalorder %s126, %s127
    %p141 = scmp.eq.s32.totalorder %s18, 1
    %p142 = por %p140, %p141
    %p144 = scmp.ne.s32.totalorder %s127, %s143
    %p145 = scmp.eq.s32.totalorder %s18, 0
    %p146 = por %p144, %p145
    %s147 = ssub.s32 %s20, %s27
    %p148 = scmp.eq.s32.totalorder %s147, 0
    %s150 = sadd.s32 %s149, 1
    %s151 = scalar_select %p148, %s149, %s150
    %p154 = pneg %p148
    %p155 = scmp.eq.s32.totalorder %s12, 1
    %p156 = por %p154, %p155
    %p157 = scmp.ne.s32.totalorder %s149, %s152
    %p158 = scmp.eq.s32.totalorder %s12, 0
    %p159 = por %p157, %p158
    %p160 = scmp.ne.s32.totalorder %s149, %s152
    %p161 = scmp.eq.s32.totalorder %s17, 1
    %p162 = por %p160, %p161
    %p163 = scmp.ne.s32.totalorder %s152, %s153
    %p164 = scmp.eq.s32.totalorder %s17, 0
    %p165 = por %p163, %p164
    %p166 = scmp.ne.s32.totalorder %s152, %s153
    %p167 = scmp.eq.s32.totalorder %s18, 1
    %p168 = por %p166, %p167
    %p170 = scmp.ne.s32.totalorder %s153, %s169
    %p171 = scmp.eq.s32.totalorder %s18, 0
    %p172 = por %p170, %p171
    %s173 = ssub.s32 %s19, %s31
    %s174 = ssub.s32 %s20, %s27
    %s175 = sor.u32 %s173, %s174
    %p176 = scmp.eq.s32.totalorder %s175, 0
    %s178 = sadd.s32 %s177, 1
    %s179 = scalar_select %p176, %s177, %s178
    %p182 = pneg %p176
    %p183 = scmp.eq.s32.totalorder %s12, 1
    %p184 = por %p182, %p183
    %p185 = scmp.ne.s32.totalorder %s177, %s180
    %p186 = scmp.eq.s32.totalorder %s12, 0
    %p187 = por %p185, %p186
    %p188 = scmp.ne.s32.totalorder %s177, %s180
    %p189 = scmp.eq.s32.totalorder %s17, 1
    %p190 = por %p188, %p189
    %p191 = scmp.ne.s32.totalorder %s180, %s181
    %p192 = scmp.eq.s32.totalorder %s17, 0
    %p193 = por %p191, %p192
    %p194 = scmp.ne.s32.totalorder %s180, %s181
    %p195 = scmp.eq.s32.totalorder %s18, 1
    %p196 = por %p194, %p195
    %p198 = scmp.ne.s32.totalorder %s181, %s197
    %p199 = scmp.eq.s32.totalorder %s18, 0
    %p200 = por %p198, %p199
    %p201 = scmp.le.s32.totalorder 1, %s12
    %p202 = scmp.lt.s32.totalorder %s12, 3
    %p203 = pnand %p201, %p202
    %p204 = pneg %p203
    // Predicated region
    $region9: #{forward.5} parent=5 // pred_check
      _
    $region10: #{forward.5} parent=5 // pred_check_branch
      %206 = sbr.rel (%p203) target = $region12
    $region11: #{forward.5} parent=5 // pred_region
      %s207 = ssub.s32 %s12, 1
      // Predicated region
      $region13: #{forward.5} parent=11 // pred_check
        %p208 = pneg %p71
      $region14: #{forward.5} parent=11 // pred_check_branch
        %210 = sbr.rel (%p208) target = $region16
      $region15: #{forward.5} parent=11 // pred_region
        _
      $region16: #{forward.5} parent=11 // pred_fallthru
        _
      // Predicated region
      $region17: #{forward.5} parent=11 // pred_check
        %p211 = pneg %p92
      $region18: #{forward.5} parent=11 // pred_check_branch
        %213 = sbr.rel (%p211) target = $region20
      $region19: #{forward.5} parent=11 // pred_region
        _
      $region20: #{forward.5} parent=11 // pred_fallthru
        _
      // Predicated region
      $region21: #{forward.5} parent=11 // pred_check
        %p214 = pneg %p113
      $region22: #{forward.5} parent=11 // pred_check_branch
        %216 = sbr.rel (%p214) target = $region24
      $region23: #{forward.5} parent=11 // pred_region
        _
      $region24: #{forward.5} parent=11 // pred_fallthru
        _
      // Predicated region
      $region25: #{forward.5} parent=11 // pred_check
        %p217 = pneg %p139
      $region26: #{forward.5} parent=11 // pred_check_branch
        %219 = sbr.rel (%p217) target = $region28
      $region27: #{forward.5} parent=11 // pred_region
        %p220 = scmp.lt.s32.totalorder %s22, 0
        %s221 = scalar_select %p220, %s22, 0
        %s222 = smul.addr %s221, 4
        %s223 = scalar_lea.vmem %s4, %s222
      $region28: #{forward.5} parent=11 // pred_fallthru
        _
      // Predicated region
      $region29: #{forward.5} parent=11 // pred_check
        %p224 = pneg %p165
      $region30: #{forward.5} parent=11 // pred_check_branch
        %226 = sbr.rel (%p224) target = $region32
      $region31: #{forward.5} parent=11 // pred_region
        %p227 = scmp.lt.s32.totalorder %s22, 0
        %s228 = scalar_select %p227, %s22, 0
        %s229 = scalar_lea.vmem %s5, %s228
      $region32: #{forward.5} parent=11 // pred_fallthru
        _
    $region12: #{forward.5} parent=5 // pred_fallthru
      _
    %p230 = scmp.lt.s32.totalorder %s12, 2
    // Predicated region
    $region33: #{forward.5} parent=5 // pred_check
      %p231 = pneg %p230
    $region34: #{forward.5} parent=5 // pred_check_branch
      %233 = sbr.rel (%p231) target = $region36
    $region35: #{forward.5} parent=5 // pred_region
      // Predicated region
      $region37: #{forward.5} parent=35 // pred_check
        %p234 = pneg %p44
      $region38: #{forward.5} parent=35 // pred_check_branch
        %236 = sbr.rel (%p234) target = $region40
      $region39: #{forward.5} parent=35 // pred_region
        %s237 = smul.u32 4, %s19
        %p238 = scmp.lt.s32.totalorder %s237, 7
        %s239 = scalar_select %p238, %s237, 7
        %s240 = smul.addr %s239, 18
        %s241 = smul.addr %s240, 8
        %s242 = scalar_lea.vmem %s0, %s241
        %s243 = smul.u32 4, %s19
      $region40: #{forward.5} parent=35 // pred_fallthru
        _
    $region36: #{forward.5} parent=5 // pred_fallthru
      _
    %p244 = scmp.le.s32.totalorder 1, %s12
    %p245 = scmp.lt.s32.totalorder %s12, 3
    %p246 = pnand %p244, %p245
    %p247 = pneg %p246
    // Predicated region
    $region41: #{forward.5} parent=5 // pred_check
      _
    $region42: #{forward.5} parent=5 // pred_check_branch
      %249 = sbr.rel (%p246) target = $region44
    $region43: #{forward.5} parent=5 // pred_region
      %s250 = ssub.s32 %s12, 1
      %s251 = smul.u32 4, %s21
      %p252 = scmp.lt.s32.totalorder %s251, 7
      %s253 = scalar_select %p252, %s251, 7
      %s254 = smul.addr %s253, 18
      %s255 = smul.addr %s254, 8
      %s256 = scalar_lea.vmem %s0, %s255
      %p257 = pneg %p50
      %p258 = pneg %p47
      %p259 = pneg %p71
      %p260 = pneg %p68
      %p261 = pneg %p92
      %p262 = pneg %p89
      %p263 = pneg %p113
      %p264 = pneg %p110
      %p265 = scmp.lt.s32.totalorder %s22, 0
      %s266 = scalar_select %p265, %s22, 0
      %s267 = smul.addr %s266, 4
      %s268 = scalar_lea.vmem %s4, %s267
      %p269 = pneg %p139
      %p270 = pneg %p136
      %p271 = scmp.lt.s32.totalorder %s22, 0
      %s272 = scalar_select %p271, %s22, 0
      %s273 = scalar_lea.vmem %s5, %s272
      %p274 = pneg %p165
      %p275 = pneg %p162
      %p276 = pneg %p193
      %p277 = pneg %p190
      %p278 = scmp.lt.s32.totalorder %s21, 1
      %s279 = scalar_select %p278, %s21, 1
      %p280 = scmp.lt.s32.totalorder %s22, 0
      %s281 = scalar_select %p280, %s22, 0
      %s282 = smul.addr %s279, 8
      %s283 = sadd.s32 %s281, %s282
      %s284 = smul.addr %s283, 4
      %s285 = scalar_lea.vmem %s6, %s284
      %s286 = smul.u32 4, %s21
      %p287 = scmp.lt.s32.totalorder %s286, 7
      %s288 = scalar_select %p287, %s286, 7
      %s289 = smul.addr %s288, 18
      %s290 = smul.addr %s289, 8
      %s291 = scalar_lea.vmem %s0, %s290
      %s292 = smul.u32 4, %s21
      %p293 = scmp.lt.s32.totalorder %s22, 0
      %s294 = scalar_select %p293, %s22, 0
      %s295 = smul.addr %s294, 4
      %s296 = scalar_lea.vmem %s4, %s295
      %p297 = scmp.lt.s32.totalorder %s22, 0
      %s298 = scalar_select %p297, %s22, 0
      %s299 = scalar_lea.vmem %s5, %s298
      %p300 = scmp.lt.s32.totalorder %s21, 1
      %s301 = scalar_select %p300, %s21, 1
      %p302 = scmp.lt.s32.totalorder %s22, 0
      %s303 = scalar_select %p302, %s22, 0
      %s304 = smul.addr %s301, 8
      %s305 = sadd.s32 %s303, %s304
      %s306 = smul.addr %s305, 4
      %s307 = scalar_lea.vmem %s6, %s306
      %v309 = vld [vmem:[%s291] sm:$0xff]
      %v310 = vld [vmem:[%s291 + $0x8] sm:$0x1]
      %v311 = vld [vmem:[%s291 + $0x10] sm:$0xff]
      %v312 = vld [vmem:[%s291 + $0x18] sm:$0x1]
      %v313 = vld [vmem:[%s291 + $0x20] sm:$0xff]
      %v314 = vld [vmem:[%s291 + $0x28] sm:$0x1]
      %v315 = vld [vmem:[%s291 + $0x30] sm:$0xff]
      %v316 = vld [vmem:[%s291 + $0x38] sm:$0x1]
      %v317 = vld [vmem:[%s291 + $0x40] sm:$0xff]
      %v318 = vld [vmem:[%s291 + $0x48] sm:$0x1]
      %v319 = vld [vmem:[%s291 + $0x50] sm:$0xff]
      %v320 = vld [vmem:[%s291 + $0x58] sm:$0x1]
      %v321 = vld [vmem:[%s291 + $0x60] sm:$0xff]
      %v322 = vld [vmem:[%s291 + $0x68] sm:$0x1]
      %v323 = vld [vmem:[%s291 + $0x70] sm:$0xff]
      %v324 = vld [vmem:[%s291 + $0x78] sm:$0x1]
      %v325 = vld [vmem:[%s291 + $0x80] sm:$0xff]
      %v326 = vld [vmem:[%s291 + $0x88] sm:$0x1]
      %v327 = vld [vmem:[%s291 + $0x90] sm:$0xff]
      %v328 = vld [vmem:[%s291 + $0x98] sm:$0x1]
      %v329 = vld [vmem:[%s291 + $0xa0] sm:$0xff]
      %v330 = vld [vmem:[%s291 + $0xa8] sm:$0x1]
      %v331 = vld [vmem:[%s291 + $0xb0] sm:$0xff]
      %v332 = vld [vmem:[%s291 + $0xb8] sm:$0x1]
      %v333 = vld [vmem:[%s291 + $0xc0] sm:$0xff]
      %v334 = vld [vmem:[%s291 + $0xc8] sm:$0x1]
      %v335 = vld [vmem:[%s291 + $0xd0] sm:$0xff]
      %v336 = vld [vmem:[%s291 + $0xd8] sm:$0x1]
      %v337 = vld [vmem:[%s291 + $0xe0] sm:$0xff]
      %v338 = vld [vmem:[%s291 + $0xe8] sm:$0x1]
      %v339 = vld [vmem:[%s291 + $0xf0] sm:$0xff]
      %v340 = vld [vmem:[%s291 + $0xf8] sm:$0x1]
      %v341 = vld [vmem:[%s291 + $0x100] sm:$0xff]
      %v342 = vld [vmem:[%s291 + $0x108] sm:$0x1]
      %v343 = vld [vmem:[%s291 + $0x110] sm:$0xff]
      %v344 = vld [vmem:[%s291 + $0x118] sm:$0x1]
      %v345 = vld [vmem:[%s291 + $0x120] sm:$0xff]
      %v346 = vld [vmem:[%s291 + $0x128] sm:$0x1]
      %v347 = vld [vmem:[%s291 + $0x130] sm:$0xff]
      %v348 = vld [vmem:[%s291 + $0x138] sm:$0x1]
      %v349 = vld [vmem:[%s291 + $0x140] sm:$0xff]
      %v350 = vld [vmem:[%s291 + $0x148] sm:$0x1]
      %v351 = vld [vmem:[%s291 + $0x150] sm:$0xff]
      %v352 = vld [vmem:[%s291 + $0x158] sm:$0x1]
      %v353 = vld [vmem:[%s291 + $0x160] sm:$0xff]
      %v354 = vld [vmem:[%s291 + $0x168] sm:$0x1]
      %v355 = vld [vmem:[%s291 + $0x170] sm:$0xff]
      %v356 = vld [vmem:[%s291 + $0x178] sm:$0x1]
      %v357 = vld [vmem:[%s291 + $0x180] sm:$0xff]
      %v358 = vld [vmem:[%s291 + $0x188] sm:$0x1]
      %v359 = vld [vmem:[%s291 + $0x190] sm:$0xff]
      %v360 = vld [vmem:[%s291 + $0x198] sm:$0x1]
      %v361 = vld [vmem:[%s291 + $0x1b0] sm:$0xff]
      %v362 = vld [vmem:[%s291 + $0x1b8] sm:$0x1]
      %v363 = vld [vmem:[%s291 + $0x1c0] sm:$0xff]
      %v364 = vld [vmem:[%s291 + $0x1c8] sm:$0x1]
      %v365 = vld [vmem:[%s291 + $0x1d0] sm:$0xff]
      %v366 = vld [vmem:[%s291 + $0x1d8] sm:$0x1]
      %v367 = vld [vmem:[%s291 + $0x1e0] sm:$0xff]
      %v368 = vld [vmem:[%s291 + $0x1e8] sm:$0x1]
      %v369 = vld [vmem:[%s291 + $0x1f0] sm:$0xff]
      %v370 = vld [vmem:[%s291 + $0x1f8] sm:$0x1]
      %v371 = vld [vmem:[%s291 + $0x200] sm:$0xff]
      %v372 = vld [vmem:[%s291 + $0x208] sm:$0x1]
      %v373 = vld [vmem:[%s291 + $0x210] sm:$0xff]
      %v374 = vld [vmem:[%s291 + $0x218] sm:$0x1]
      %v375 = vld [vmem:[%s291 + $0x220] sm:$0xff]
      %v376 = vld [vmem:[%s291 + $0x228] sm:$0x1]
      %v377 = vld [vmem:[%s1] sm:$0x1]
      %v379 = vlaneseq
      %v380 = vshrl.u32 %v379, 7
      %v381 = vsub.s32 0, %v380
      %v382 = vrot.slane %v377, %v381
      %v384 = vmul.f32 %v309, %v382
      %v385 = vmul.f32 %v310, %v382
      %v386 = vmul.f32 %v311, %v382
      %v387 = vmul.f32 %v312, %v382
      %v388 = vmul.f32 %v313, %v382
      %v389 = vmul.f32 %v314, %v382
      %v390 = vmul.f32 %v315, %v382
      %v391 = vmul.f32 %v316, %v382
      %v392 = vmul.f32 %v317, %v382
      %v393 = vmul.f32 %v318, %v382
      %v394 = vmul.f32 %v319, %v382
      %v395 = vmul.f32 %v320, %v382
      %v396 = vmul.f32 %v321, %v382
      %v397 = vmul.f32 %v322, %v382
      %v398 = vmul.f32 %v323, %v382
      %v399 = vmul.f32 %v324, %v382
      %v400 = vmul.f32 %v325, %v382
      %v401 = vmul.f32 %v326, %v382
      %v402 = vmul.f32 %v327, %v382
      %v403 = vmul.f32 %v328, %v382
      %v404 = vmul.f32 %v329, %v382
      %v405 = vmul.f32 %v330, %v382
      %v406 = vmul.f32 %v331, %v382
      %v407 = vmul.f32 %v332, %v382
      %v408 = vmul.f32 %v333, %v382
      %v409 = vmul.f32 %v334, %v382
      %v410 = vmul.f32 %v335, %v382
      %v411 = vmul.f32 %v336, %v382
      %v412 = vmul.f32 %v337, %v382
      %v413 = vmul.f32 %v338, %v382
      %v414 = vmul.f32 %v339, %v382
      %v415 = vmul.f32 %v340, %v382
      %v416 = vmul.f32 %v341, %v382
      %v417 = vmul.f32 %v342, %v382
      %v418 = vmul.f32 %v343, %v382
      %v419 = vmul.f32 %v344, %v382
      %v420 = vmul.f32 %v345, %v382
      %v421 = vmul.f32 %v346, %v382
      %v422 = vmul.f32 %v347, %v382
      %v423 = vmul.f32 %v348, %v382
      %v424 = vmul.f32 %v349, %v382
      %v425 = vmul.f32 %v350, %v382
      %v426 = vmul.f32 %v351, %v382
      %v427 = vmul.f32 %v352, %v382
      %v428 = vmul.f32 %v353, %v382
      %v429 = vmul.f32 %v354, %v382
      %v430 = vmul.f32 %v355, %v382
      %v431 = vmul.f32 %v356, %v382
      %v432 = vmul.f32 %v357, %v382
      %v433 = vmul.f32 %v358, %v382
      %v434 = vmul.f32 %v359, %v382
      %v435 = vmul.f32 %v360, %v382
      %v436 = vmul.f32 %v361, %v382
      %v437 = vmul.f32 %v362, %v382
      %v438 = vmul.f32 %v363, %v382
      %v439 = vmul.f32 %v364, %v382
      %v440 = vmul.f32 %v365, %v382
      %v441 = vmul.f32 %v366, %v382
      %v442 = vmul.f32 %v367, %v382
      %v443 = vmul.f32 %v368, %v382
      %v444 = vmul.f32 %v369, %v382
      %v445 = vmul.f32 %v370, %v382
      %v446 = vmul.f32 %v371, %v382
      %v447 = vmul.f32 %v372, %v382
      %v448 = vmul.f32 %v373, %v382
      %v449 = vmul.f32 %v374, %v382
      %v450 = vmul.f32 %v375, %v382
      %v451 = vmul.f32 %v376, %v382
      %v452 = vld [vmem:[%s2] sm:$0x1]
      %v454 = vlaneseq
      %v455 = vshrl.u32 %v454, 7
      %v456 = vsub.s32 0, %v455
      %v457 = vrot.slane %v452, %v456
      %v459 = vadd.f32 %v384, %v457
      %v460 = vadd.f32 %v385, %v457
      %v461 = vadd.f32 %v386, %v457
      %v462 = vadd.f32 %v387, %v457
      %v463 = vadd.f32 %v388, %v457
      %v464 = vadd.f32 %v389, %v457
      %v465 = vadd.f32 %v390, %v457
      %v466 = vadd.f32 %v391, %v457
      %v467 = vadd.f32 %v392, %v457
      %v468 = vadd.f32 %v393, %v457
      %v469 = vadd.f32 %v394, %v457
      %v470 = vadd.f32 %v395, %v457
      %v471 = vadd.f32 %v396, %v457
      %v472 = vadd.f32 %v397, %v457
      %v473 = vadd.f32 %v398, %v457
      %v474 = vadd.f32 %v399, %v457
      %v475 = vadd.f32 %v400, %v457
      %v476 = vadd.f32 %v401, %v457
      %v477 = vadd.f32 %v402, %v457
      %v478 = vadd.f32 %v403, %v457
      %v479 = vadd.f32 %v404, %v457
      %v480 = vadd.f32 %v405, %v457
      %v481 = vadd.f32 %v406, %v457
      %v482 = vadd.f32 %v407, %v457
      %v483 = vadd.f32 %v408, %v457
      %v484 = vadd.f32 %v409, %v457
      %v485 = vadd.f32 %v410, %v457
      %v486 = vadd.f32 %v411, %v457
      %v487 = vadd.f32 %v412, %v457
      %v488 = vadd.f32 %v413, %v457
      %v489 = vadd.f32 %v414, %v457
      %v490 = vadd.f32 %v415, %v457
      %v491 = vadd.f32 %v416, %v457
      %v492 = vadd.f32 %v417, %v457
      %v493 = vadd.f32 %v418, %v457
      %v494 = vadd.f32 %v419, %v457
      %v495 = vadd.f32 %v420, %v457
      %v496 = vadd.f32 %v421, %v457
      %v497 = vadd.f32 %v422, %v457
      %v498 = vadd.f32 %v423, %v457
      %v499 = vadd.f32 %v424, %v457
      %v500 = vadd.f32 %v425, %v457
      %v501 = vadd.f32 %v426, %v457
      %v502 = vadd.f32 %v427, %v457
      %v503 = vadd.f32 %v428, %v457
      %v504 = vadd.f32 %v429, %v457
      %v505 = vadd.f32 %v430, %v457
      %v506 = vadd.f32 %v431, %v457
      %v507 = vadd.f32 %v432, %v457
      %v508 = vadd.f32 %v433, %v457
      %v509 = vadd.f32 %v434, %v457
      %v510 = vadd.f32 %v435, %v457
      %v511 = vadd.f32 %v436, %v457
      %v512 = vadd.f32 %v437, %v457
      %v513 = vadd.f32 %v438, %v457
      %v514 = vadd.f32 %v439, %v457
      %v515 = vadd.f32 %v440, %v457
      %v516 = vadd.f32 %v441, %v457
      %v517 = vadd.f32 %v442, %v457
      %v518 = vadd.f32 %v443, %v457
      %v519 = vadd.f32 %v444, %v457
      %v520 = vadd.f32 %v445, %v457
      %v521 = vadd.f32 %v446, %v457
      %v522 = vadd.f32 %v447, %v457
      %v523 = vadd.f32 %v448, %v457
      %v524 = vadd.f32 %v449, %v457
      %v525 = vadd.f32 %v450, %v457
      %v526 = vadd.f32 %v451, %v457
      %v527 = vmul.f32 %v459, 0.5
      %v528 = vmul.f32 %v460, 0.5
      %v529 = vmul.f32 %v461, 0.5
      %v530 = vmul.f32 %v462, 0.5
      %v531 = vmul.f32 %v463, 0.5
      %v532 = vmul.f32 %v464, 0.5
      %v533 = vmul.f32 %v465, 0.5
      %v534 = vmul.f32 %v466, 0.5
      %v535 = vmul.f32 %v467, 0.5
      %v536 = vmul.f32 %v468, 0.5
      %v537 = vmul.f32 %v469, 0.5
      %v538 = vmul.f32 %v470, 0.5
      %v539 = vmul.f32 %v471, 0.5
      %v540 = vmul.f32 %v472, 0.5
      %v541 = vmul.f32 %v473, 0.5
      %v542 = vmul.f32 %v474, 0.5
      %v543 = vmul.f32 %v475, 0.5
      %v544 = vmul.f32 %v476, 0.5
      %v545 = vmul.f32 %v477, 0.5
      %v546 = vmul.f32 %v478, 0.5
      %v547 = vmul.f32 %v479, 0.5
      %v548 = vmul.f32 %v480, 0.5
      %v549 = vmul.f32 %v481, 0.5
      %v550 = vmul.f32 %v482, 0.5
      %v551 = vmul.f32 %v483, 0.5
      %v552 = vmul.f32 %v484, 0.5
      %v553 = vmul.f32 %v485, 0.5
      %v554 = vmul.f32 %v486, 0.5
      %v555 = vmul.f32 %v487, 0.5
      %v556 = vmul.f32 %v488, 0.5
      %v557 = vmul.f32 %v489, 0.5
      %v558 = vmul.f32 %v490, 0.5
      %v559 = vmul.f32 %v491, 0.5
      %v560 = vmul.f32 %v492, 0.5
      %v561 = vmul.f32 %v493, 0.5
      %v562 = vmul.f32 %v494, 0.5
      %v563 = vmul.f32 %v495, 0.5
      %v564 = vmul.f32 %v496, 0.5
      %v565 = vmul.f32 %v497, 0.5
      %v566 = vmul.f32 %v498, 0.5
      %v567 = vmul.f32 %v499, 0.5
      %v568 = vmul.f32 %v500, 0.5
      %v569 = vmul.f32 %v501, 0.5
      %v570 = vmul.f32 %v502, 0.5
      %v571 = vmul.f32 %v503, 0.5
      %v572 = vmul.f32 %v504, 0.5
      %v573 = vmul.f32 %v505, 0.5
      %v574 = vmul.f32 %v506, 0.5
      %v575 = vmul.f32 %v507, 0.5
      %v576 = vmul.f32 %v508, 0.5
      %v577 = vmul.f32 %v509, 0.5
      %v578 = vmul.f32 %v510, 0.5
      %v579 = vmul.f32 %v511, 0.5
      %v580 = vmul.f32 %v512, 0.5
      %v581 = vmul.f32 %v513, 0.5
      %v582 = vmul.f32 %v514, 0.5
      %v583 = vmul.f32 %v515, 0.5
      %v584 = vmul.f32 %v516, 0.5
      %v585 = vmul.f32 %v517, 0.5
      %v586 = vmul.f32 %v518, 0.5
      %v587 = vmul.f32 %v519, 0.5
      %v588 = vmul.f32 %v520, 0.5
      %v589 = vmul.f32 %v521, 0.5
      %v590 = vmul.f32 %v522, 0.5
      %v591 = vmul.f32 %v523, 0.5
      %v592 = vmul.f32 %v524, 0.5
      %v593 = vmul.f32 %v525, 0.5
      %v594 = vmul.f32 %v526, 0.5
      %v595 = vtanh.pop %v527
      %v596 = vtanh.pop %v528
      %v597 = vtanh.pop %v529
      %v598 = vtanh.pop %v530
      %v599 = vtanh.pop %v531
      %v600 = vtanh.pop %v532
      %v601 = vtanh.pop %v533
      %v602 = vtanh.pop %v534
      %v603 = vtanh.pop %v535
      %v604 = vtanh.pop %v536
      %v605 = vtanh.pop %v537
      %v606 = vtanh.pop %v538
      %v607 = vtanh.pop %v539
      %v608 = vtanh.pop %v540
      %v609 = vtanh.pop %v541
      %v610 = vtanh.pop %v542
      %v611 = vtanh.pop %v543
      %v612 = vtanh.pop %v544
      %v613 = vtanh.pop %v545
      %v614 = vtanh.pop %v546
      %v615 = vtanh.pop %v547
      %v616 = vtanh.pop %v548
      %v617 = vtanh.pop %v549
      %v618 = vtanh.pop %v550
      %v619 = vtanh.pop %v551
      %v620 = vtanh.pop %v552
      %v621 = vtanh.pop %v553
      %v622 = vtanh.pop %v554
      %v623 = vtanh.pop %v555
      %v624 = vtanh.pop %v556
      %v625 = vtanh.pop %v557
      %v626 = vtanh.pop %v558
      %v627 = vtanh.pop %v559
      %v628 = vtanh.pop %v560
      %v629 = vtanh.pop %v561
      %v630 = vtanh.pop %v562
      %v631 = vtanh.pop %v563
      %v632 = vtanh.pop %v564
      %v633 = vtanh.pop %v565
      %v634 = vtanh.pop %v566
      %v635 = vtanh.pop %v567
      %v636 = vtanh.pop %v568
      %v637 = vtanh.pop %v569
      %v638 = vtanh.pop %v570
      %v639 = vtanh.pop %v571
      %v640 = vtanh.pop %v572
      %v641 = vtanh.pop %v573
      %v642 = vtanh.pop %v574
      %v643 = vtanh.pop %v575
      %v644 = vtanh.pop %v576
      %v645 = vtanh.pop %v577
      %v646 = vtanh.pop %v578
      %v647 = vtanh.pop %v579
      %v648 = vtanh.pop %v580
      %v649 = vtanh.pop %v581
      %v650 = vtanh.pop %v582
      %v651 = vtanh.pop %v583
      %v652 = vtanh.pop %v584
      %v653 = vtanh.pop %v585
      %v654 = vtanh.pop %v586
      %v655 = vtanh.pop %v587
      %v656 = vtanh.pop %v588
      %v657 = vtanh.pop %v589
      %v658 = vtanh.pop %v590
      %v659 = vtanh.pop %v591
      %v660 = vtanh.pop %v592
      %v661 = vtanh.pop %v593
      %v662 = vtanh.pop %v594
      %v663 = vmul.f32 %v595, 0.5
      %v664 = vmul.f32 %v596, 0.5
      %v665 = vmul.f32 %v597, 0.5
      %v666 = vmul.f32 %v598, 0.5
      %v667 = vmul.f32 %v599, 0.5
      %v668 = vmul.f32 %v600, 0.5
      %v669 = vmul.f32 %v601, 0.5
      %v670 = vmul.f32 %v602, 0.5
      %v671 = vmul.f32 %v603, 0.5
      %v672 = vmul.f32 %v604, 0.5
      %v673 = vmul.f32 %v605, 0.5
      %v674 = vmul.f32 %v606, 0.5
      %v675 = vmul.f32 %v607, 0.5
      %v676 = vmul.f32 %v608, 0.5
      %v677 = vmul.f32 %v609, 0.5
      %v678 = vmul.f32 %v610, 0.5
      %v679 = vmul.f32 %v611, 0.5
      %v680 = vmul.f32 %v612, 0.5
      %v681 = vmul.f32 %v613, 0.5
      %v682 = vmul.f32 %v614, 0.5
      %v683 = vmul.f32 %v615, 0.5
      %v684 = vmul.f32 %v616, 0.5
      %v685 = vmul.f32 %v617, 0.5
      %v686 = vmul.f32 %v618, 0.5
      %v687 = vmul.f32 %v619, 0.5
      %v688 = vmul.f32 %v620, 0.5
      %v689 = vmul.f32 %v621, 0.5
      %v690 = vmul.f32 %v622, 0.5
      %v691 = vmul.f32 %v623, 0.5
      %v692 = vmul.f32 %v624, 0.5
      %v693 = vmul.f32 %v625, 0.5
      %v694 = vmul.f32 %v626, 0.5
      %v695 = vmul.f32 %v627, 0.5
      %v696 = vmul.f32 %v628, 0.5
      %v697 = vmul.f32 %v629, 0.5
      %v698 = vmul.f32 %v630, 0.5
      %v699 = vmul.f32 %v631, 0.5
      %v700 = vmul.f32 %v632, 0.5
      %v701 = vmul.f32 %v633, 0.5
      %v702 = vmul.f32 %v634, 0.5
      %v703 = vmul.f32 %v635, 0.5
      %v704 = vmul.f32 %v636, 0.5
      %v705 = vmul.f32 %v637, 0.5
      %v706 = vmul.f32 %v638, 0.5
      %v707 = vmul.f32 %v639, 0.5
      %v708 = vmul.f32 %v640, 0.5
      %v709 = vmul.f32 %v641, 0.5
      %v710 = vmul.f32 %v642, 0.5
      %v711 = vmul.f32 %v643, 0.5
      %v712 = vmul.f32 %v644, 0.5
      %v713 = vmul.f32 %v645, 0.5
      %v714 = vmul.f32 %v646, 0.5
      %v715 = vmul.f32 %v647, 0.5
      %v716 = vmul.f32 %v648, 0.5
      %v717 = vmul.f32 %v649, 0.5
      %v718 = vmul.f32 %v650, 0.5
      %v719 = vmul.f32 %v651, 0.5
      %v720 = vmul.f32 %v652, 0.5
      %v721 = vmul.f32 %v653, 0.5
      %v722 = vmul.f32 %v654, 0.5
      %v723 = vmul.f32 %v655, 0.5
      %v724 = vmul.f32 %v656, 0.5
      %v725 = vmul.f32 %v657, 0.5
      %v726 = vmul.f32 %v658, 0.5
      %v727 = vmul.f32 %v659, 0.5
      %v728 = vmul.f32 %v660, 0.5
      %v729 = vmul.f32 %v661, 0.5
      %v730 = vmul.f32 %v662, 0.5
      %v731 = vadd.f32 %v663, 0.5
      %v732 = vadd.f32 %v664, 0.5
      %v733 = vadd.f32 %v665, 0.5
      %v734 = vadd.f32 %v666, 0.5
      %v735 = vadd.f32 %v667, 0.5
      %v736 = vadd.f32 %v668, 0.5
      %v737 = vadd.f32 %v669, 0.5
      %v738 = vadd.f32 %v670, 0.5
      %v739 = vadd.f32 %v671, 0.5
      %v740 = vadd.f32 %v672, 0.5
      %v741 = vadd.f32 %v673, 0.5
      %v742 = vadd.f32 %v674, 0.5
      %v743 = vadd.f32 %v675, 0.5
      %v744 = vadd.f32 %v676, 0.5
      %v745 = vadd.f32 %v677, 0.5
      %v746 = vadd.f32 %v678, 0.5
      %v747 = vadd.f32 %v679, 0.5
      %v748 = vadd.f32 %v680, 0.5
      %v749 = vadd.f32 %v681, 0.5
      %v750 = vadd.f32 %v682, 0.5
      %v751 = vadd.f32 %v683, 0.5
      %v752 = vadd.f32 %v684, 0.5
      %v753 = vadd.f32 %v685, 0.5
      %v754 = vadd.f32 %v686, 0.5
      %v755 = vadd.f32 %v687, 0.5
      %v756 = vadd.f32 %v688, 0.5
      %v757 = vadd.f32 %v689, 0.5
      %v758 = vadd.f32 %v690, 0.5
      %v759 = vadd.f32 %v691, 0.5
      %v760 = vadd.f32 %v692, 0.5
      %v761 = vadd.f32 %v693, 0.5
      %v762 = vadd.f32 %v694, 0.5
      %v763 = vadd.f32 %v695, 0.5
      %v764 = vadd.f32 %v696, 0.5
      %v765 = vadd.f32 %v697, 0.5
      %v766 = vadd.f32 %v698, 0.5
      %v767 = vadd.f32 %v699, 0.5
      %v768 = vadd.f32 %v700, 0.5
      %v769 = vadd.f32 %v701, 0.5
      %v770 = vadd.f32 %v702, 0.5
      %v771 = vadd.f32 %v703, 0.5
      %v772 = vadd.f32 %v704, 0.5
      %v773 = vadd.f32 %v705, 0.5
      %v774 = vadd.f32 %v706, 0.5
      %v775 = vadd.f32 %v707, 0.5
      %v776 = vadd.f32 %v708, 0.5
      %v777 = vadd.f32 %v709, 0.5
      %v778 = vadd.f32 %v710, 0.5
      %v779 = vadd.f32 %v711, 0.5
      %v780 = vadd.f32 %v712, 0.5
      %v781 = vadd.f32 %v713, 0.5
      %v782 = vadd.f32 %v714, 0.5
      %v783 = vadd.f32 %v715, 0.5
      %v784 = vadd.f32 %v716, 0.5
      %v785 = vadd.f32 %v717, 0.5
      %v786 = vadd.f32 %v718, 0.5
      %v787 = vadd.f32 %v719, 0.5
      %v788 = vadd.f32 %v720, 0.5
      %v789 = vadd.f32 %v721, 0.5
      %v790 = vadd.f32 %v722, 0.5
      %v791 = vadd.f32 %v723, 0.5
      %v792 = vadd.f32 %v724, 0.5
      %v793 = vadd.f32 %v725, 0.5
      %v794 = vadd.f32 %v726, 0.5
      %v795 = vadd.f32 %v727, 0.5
      %v796 = vadd.f32 %v728, 0.5
      %v797 = vadd.f32 %v729, 0.5
      %v798 = vadd.f32 %v730, 0.5
      %v799 = vmul.f32 %v459, %v731
      %v800 = vmul.f32 %v460, %v732
      %v801 = vmul.f32 %v461, %v733
      %v802 = vmul.f32 %v462, %v734
      %v803 = vmul.f32 %v463, %v735
      %v804 = vmul.f32 %v464, %v736
      %v805 = vmul.f32 %v465, %v737
      %v806 = vmul.f32 %v466, %v738
      %v807 = vmul.f32 %v467, %v739
      %v808 = vmul.f32 %v468, %v740
      %v809 = vmul.f32 %v469, %v741
      %v810 = vmul.f32 %v470, %v742
      %v811 = vmul.f32 %v471, %v743
      %v812 = vmul.f32 %v472, %v744
      %v813 = vmul.f32 %v473, %v745
      %v814 = vmul.f32 %v474, %v746
      %v815 = vmul.f32 %v475, %v747
      %v816 = vmul.f32 %v476, %v748
      %v817 = vmul.f32 %v477, %v749
      %v818 = vmul.f32 %v478, %v750
      %v819 = vmul.f32 %v479, %v751
      %v820 = vmul.f32 %v480, %v752
      %v821 = vmul.f32 %v481, %v753
      %v822 = vmul.f32 %v482, %v754
      %v823 = vmul.f32 %v483, %v755
      %v824 = vmul.f32 %v484, %v756
      %v825 = vmul.f32 %v485, %v757
      %v826 = vmul.f32 %v486, %v758
      %v827 = vmul.f32 %v487, %v759
      %v828 = vmul.f32 %v488, %v760
      %v829 = vmul.f32 %v489, %v761
      %v830 = vmul.f32 %v490, %v762
      %v831 = vmul.f32 %v491, %v763
      %v832 = vmul.f32 %v492, %v764
      %v833 = vmul.f32 %v493, %v765
      %v834 = vmul.f32 %v494, %v766
      %v835 = vmul.f32 %v495, %v767
      %v836 = vmul.f32 %v496, %v768
      %v837 = vmul.f32 %v497, %v769
      %v838 = vmul.f32 %v498, %v770
      %v839 = vmul.f32 %v499, %v771
      %v840 = vmul.f32 %v500, %v772
      %v841 = vmul.f32 %v501, %v773
      %v842 = vmul.f32 %v502, %v774
      %v843 = vmul.f32 %v503, %v775
      %v844 = vmul.f32 %v504, %v776
      %v845 = vmul.f32 %v505, %v777
      %v846 = vmul.f32 %v506, %v778
      %v847 = vmul.f32 %v507, %v779
      %v848 = vmul.f32 %v508, %v780
      %v849 = vmul.f32 %v509, %v781
      %v850 = vmul.f32 %v510, %v782
      %v851 = vmul.f32 %v511, %v783
      %v852 = vmul.f32 %v512, %v784
      %v853 = vmul.f32 %v513, %v785
      %v854 = vmul.f32 %v514, %v786
      %v855 = vmul.f32 %v515, %v787
      %v856 = vmul.f32 %v516, %v788
      %v857 = vmul.f32 %v517, %v789
      %v858 = vmul.f32 %v518, %v790
      %v859 = vmul.f32 %v519, %v791
      %v860 = vmul.f32 %v520, %v792
      %v861 = vmul.f32 %v521, %v793
      %v862 = vmul.f32 %v522, %v794
      %v863 = vmul.f32 %v523, %v795
      %v864 = vmul.f32 %v524, %v796
      %v865 = vmul.f32 %v525, %v797
      %v866 = vmul.f32 %v526, %v798
      %v867 = vld [vmem:[%s3] sm:$0xff]
      %v868 = vld [vmem:[%s3 + $0x8] sm:$0x1]
      %v869 = vld [vmem:[%s3 + $0x10] sm:$0xff]
      %v870 = vld [vmem:[%s3 + $0x18] sm:$0x1]
      %v871 = vld [vmem:[%s3 + $0x20] sm:$0xff]
      %v872 = vld [vmem:[%s3 + $0x28] sm:$0x1]
      %v873 = vld [vmem:[%s3 + $0x30] sm:$0xff]
      %v874 = vld [vmem:[%s3 + $0x38] sm:$0x1]
      %v875 = vld [vmem:[%s3 + $0x40] sm:$0xff]
      %v876 = vld [vmem:[%s3 + $0x48] sm:$0x1]
      %v877 = vld [vmem:[%s3 + $0x50] sm:$0xff]
      %v878 = vld [vmem:[%s3 + $0x58] sm:$0x1]
      %v879 = vld [vmem:[%s3 + $0x60] sm:$0xff]
      %v880 = vld [vmem:[%s3 + $0x68] sm:$0x1]
      %v881 = vld [vmem:[%s3 + $0x70] sm:$0xff]
      %v882 = vld [vmem:[%s3 + $0x78] sm:$0x1]
      %v883 = vld [vmem:[%s3 + $0x80] sm:$0xff]
      %v884 = vld [vmem:[%s3 + $0x88] sm:$0x1]
      %v885 = vld [vmem:[%s3 + $0x90] sm:$0xff]
      %v886 = vld [vmem:[%s3 + $0x98] sm:$0x1]
      %v887 = vld [vmem:[%s3 + $0xa0] sm:$0xff]
      %v888 = vld [vmem:[%s3 + $0xa8] sm:$0x1]
      %v889 = vld [vmem:[%s3 + $0xb0] sm:$0xff]
      %v890 = vld [vmem:[%s3 + $0xb8] sm:$0x1]
      %v891 = vld [vmem:[%s3 + $0xc0] sm:$0xff]
      %v892 = vld [vmem:[%s3 + $0xc8] sm:$0x1]
      %v893 = vld [vmem:[%s3 + $0xd0] sm:$0xff]
      %v894 = vld [vmem:[%s3 + $0xd8] sm:$0x1]
      %v895 = vld [vmem:[%s3 + $0xe0] sm:$0xff]
      %v896 = vld [vmem:[%s3 + $0xe8] sm:$0x1]
      %v897 = vld [vmem:[%s3 + $0xf0] sm:$0xff]
      %v898 = vld [vmem:[%s3 + $0xf8] sm:$0x1]
      %v899 = vld [vmem:[%s3 + $0x100] sm:$0xff]
      %v900 = vld [vmem:[%s3 + $0x108] sm:$0x1]
      %v901 = vld [vmem:[%s3 + $0x110] sm:$0xff]
      %v902 = vld [vmem:[%s3 + $0x118] sm:$0x1]
      %v903 = vld [vmem:[%s3 + $0x120] sm:$0xff]
      %v904 = vld [vmem:[%s3 + $0x128] sm:$0x1]
      %v905 = vld [vmem:[%s3 + $0x130] sm:$0xff]
      %v906 = vld [vmem:[%s3 + $0x138] sm:$0x1]
      %v907 = vld [vmem:[%s3 + $0x140] sm:$0xff]
      %v908 = vld [vmem:[%s3 + $0x148] sm:$0x1]
      %v909 = vld [vmem:[%s3 + $0x150] sm:$0xff]
      %v910 = vld [vmem:[%s3 + $0x158] sm:$0x1]
      %v911 = vld [vmem:[%s3 + $0x160] sm:$0xff]
      %v912 = vld [vmem:[%s3 + $0x168] sm:$0x1]
      %v913 = vld [vmem:[%s3 + $0x170] sm:$0xff]
      %v914 = vld [vmem:[%s3 + $0x178] sm:$0x1]
      %v915 = vld [vmem:[%s3 + $0x180] sm:$0xff]
      %v916 = vld [vmem:[%s3 + $0x188] sm:$0x1]
      %v917 = vld [vmem:[%s3 + $0x190] sm:$0xff]
      %v918 = vld [vmem:[%s3 + $0x198] sm:$0x1]
      %v919 = vld [vmem:[%s3 + $0x1b0] sm:$0xff]
      %v920 = vld [vmem:[%s3 + $0x1b8] sm:$0x1]
      %v921 = vld [vmem:[%s3 + $0x1c0] sm:$0xff]
      %v922 = vld [vmem:[%s3 + $0x1c8] sm:$0x1]
      %v923 = vld [vmem:[%s3 + $0x1d0] sm:$0xff]
      %v924 = vld [vmem:[%s3 + $0x1d8] sm:$0x1]
      %v925 = vld [vmem:[%s3 + $0x1e0] sm:$0xff]
      %v926 = vld [vmem:[%s3 + $0x1e8] sm:$0x1]
      %v927 = vld [vmem:[%s3 + $0x1f0] sm:$0xff]
      %v928 = vld [vmem:[%s3 + $0x1f8] sm:$0x1]
      %v929 = vld [vmem:[%s3 + $0x200] sm:$0xff]
      %v930 = vld [vmem:[%s3 + $0x208] sm:$0x1]
      %v931 = vld [vmem:[%s3 + $0x210] sm:$0xff]
      %v932 = vld [vmem:[%s3 + $0x218] sm:$0x1]
      %v933 = vld [vmem:[%s3 + $0x220] sm:$0xff]
      %v934 = vld [vmem:[%s3 + $0x228] sm:$0x1]
      %936 = vset.pattern.permute.xlu0 0
      %937 = vperm.xlu0 %936, %v867
      %v938 = vpop.permute.xlu0 %937
      %941 = vset.pattern.permute.xlu0 0
      %942 = vperm.xlu0 %941, %v868
      %v943 = vpop.permute.xlu0 %942
      %946 = vset.pattern.permute.xlu0 0
      %947 = vperm.xlu0 %946, %v869
      %v948 = vpop.permute.xlu0 %947
      %951 = vset.pattern.permute.xlu0 0
      %952 = vperm.xlu0 %951, %v870
      %v953 = vpop.permute.xlu0 %952
      %956 = vset.pattern.permute.xlu0 0
      %957 = vperm.xlu0 %956, %v871
      %v958 = vpop.permute.xlu0 %957
      %961 = vset.pattern.permute.xlu0 0
      %962 = vperm.xlu0 %961, %v872
      %v963 = vpop.permute.xlu0 %962
      %966 = vset.pattern.permute.xlu0 0
      %967 = vperm.xlu0 %966, %v873
      %v968 = vpop.permute.xlu0 %967
      %971 = vset.pattern.permute.xlu0 0
      %972 = vperm.xlu0 %971, %v874
      %v973 = vpop.permute.xlu0 %972
      %976 = vset.pattern.permute.xlu0 0
      %977 = vperm.xlu0 %976, %v875
      %v978 = vpop.permute.xlu0 %977
      %981 = vset.pattern.permute.xlu0 0
      %982 = vperm.xlu0 %981, %v876
      %v983 = vpop.permute.xlu0 %982
      %986 = vset.pattern.permute.xlu0 0
      %987 = vperm.xlu0 %986, %v877
      %v988 = vpop.permute.xlu0 %987
      %991 = vset.pattern.permute.xlu0 0
      %992 = vperm.xlu0 %991, %v878
      %v993 = vpop.permute.xlu0 %992
      %996 = vset.pattern.permute.xlu0 0
      %997 = vperm.xlu0 %996, %v879
      %v998 = vpop.permute.xlu0 %997
      %1001 = vset.pattern.permute.xlu0 0
      %1002 = vperm.xlu0 %1001, %v880
      %v1003 = vpop.permute.xlu0 %1002
      %1006 = vset.pattern.permute.xlu0 0
      %1007 = vperm.xlu0 %1006, %v881
      %v1008 = vpop.permute.xlu0 %1007
      %1011 = vset.pattern.permute.xlu0 0
      %1012 = vperm.xlu0 %1011, %v882
      %v1013 = vpop.permute.xlu0 %1012
      %1016 = vset.pattern.permute.xlu0 0
      %1017 = vperm.xlu0 %1016, %v883
      %v1018 = vpop.permute.xlu0 %1017
      %1021 = vset.pattern.permute.xlu0 0
      %1022 = vperm.xlu0 %1021, %v884
      %v1023 = vpop.permute.xlu0 %1022
      %1026 = vset.pattern.permute.xlu0 0
      %1027 = vperm.xlu0 %1026, %v885
      %v1028 = vpop.permute.xlu0 %1027
      %1031 = vset.pattern.permute.xlu0 0
      %1032 = vperm.xlu0 %1031, %v886
      %v1033 = vpop.permute.xlu0 %1032
      %1036 = vset.pattern.permute.xlu0 0
      %1037 = vperm.xlu0 %1036, %v887
      %v1038 = vpop.permute.xlu0 %1037
      %1041 = vset.pattern.permute.xlu0 0
      %1042 = vperm.xlu0 %1041, %v888
      %v1043 = vpop.permute.xlu0 %1042
      %1046 = vset.pattern.permute.xlu0 0
      %1047 = vperm.xlu0 %1046, %v889
      %v1048 = vpop.permute.xlu0 %1047
      %1051 = vset.pattern.permute.xlu0 0
      %1052 = vperm.xlu0 %1051, %v890
      %v1053 = vpop.permute.xlu0 %1052
      %1056 = vset.pattern.permute.xlu0 0
      %1057 = vperm.xlu0 %1056, %v891
      %v1058 = vpop.permute.xlu0 %1057
      %1061 = vset.pattern.permute.xlu0 0
      %1062 = vperm.xlu0 %1061, %v892
      %v1063 = vpop.permute.xlu0 %1062
      %1066 = vset.pattern.permute.xlu0 0
      %1067 = vperm.xlu0 %1066, %v893
      %v1068 = vpop.permute.xlu0 %1067
      %1071 = vset.pattern.permute.xlu0 0
      %1072 = vperm.xlu0 %1071, %v894
      %v1073 = vpop.permute.xlu0 %1072
      %1076 = vset.pattern.permute.xlu0 0
      %1077 = vperm.xlu0 %1076, %v895
      %v1078 = vpop.permute.xlu0 %1077
      %1081 = vset.pattern.permute.xlu0 0
      %1082 = vperm.xlu0 %1081, %v896
      %v1083 = vpop.permute.xlu0 %1082
      %1086 = vset.pattern.permute.xlu0 0
      %1087 = vperm.xlu0 %1086, %v897
      %v1088 = vpop.permute.xlu0 %1087
      %1091 = vset.pattern.permute.xlu0 0
      %1092 = vperm.xlu0 %1091, %v898
      %v1093 = vpop.permute.xlu0 %1092
      %1096 = vset.pattern.permute.xlu0 0
      %1097 = vperm.xlu0 %1096, %v899
      %v1098 = vpop.permute.xlu0 %1097
      %1101 = vset.pattern.permute.xlu0 0
      %1102 = vperm.xlu0 %1101, %v900
      %v1103 = vpop.permute.xlu0 %1102
      %1106 = vset.pattern.permute.xlu0 0
      %1107 = vperm.xlu0 %1106, %v901
      %v1108 = vpop.permute.xlu0 %1107
      %1111 = vset.pattern.permute.xlu0 0
      %1112 = vperm.xlu0 %1111, %v902
      %v1113 = vpop.permute.xlu0 %1112
      %1116 = vset.pattern.permute.xlu0 0
      %1117 = vperm.xlu0 %1116, %v903
      %v1118 = vpop.permute.xlu0 %1117
      %1121 = vset.pattern.permute.xlu0 0
      %1122 = vperm.xlu0 %1121, %v904
      %v1123 = vpop.permute.xlu0 %1122
      %1126 = vset.pattern.permute.xlu0 0
      %1127 = vperm.xlu0 %1126, %v905
      %v1128 = vpop.permute.xlu0 %1127
      %1131 = vset.pattern.permute.xlu0 0
      %1132 = vperm.xlu0 %1131, %v906
      %v1133 = vpop.permute.xlu0 %1132
      %1136 = vset.pattern.permute.xlu0 0
      %1137 = vperm.xlu0 %1136, %v907
      %v1138 = vpop.permute.xlu0 %1137
      %1141 = vset.pattern.permute.xlu0 0
      %1142 = vperm.xlu0 %1141, %v908
      %v1143 = vpop.permute.xlu0 %1142
      %1146 = vset.pattern.permute.xlu0 0
      %1147 = vperm.xlu0 %1146, %v909
      %v1148 = vpop.permute.xlu0 %1147
      %1151 = vset.pattern.permute.xlu0 0
      %1152 = vperm.xlu0 %1151, %v910
      %v1153 = vpop.permute.xlu0 %1152
      %1156 = vset.pattern.permute.xlu0 0
      %1157 = vperm.xlu0 %1156, %v911
      %v1158 = vpop.permute.xlu0 %1157
      %1161 = vset.pattern.permute.xlu0 0
      %1162 = vperm.xlu0 %1161, %v912
      %v1163 = vpop.permute.xlu0 %1162
      %1166 = vset.pattern.permute.xlu0 0
      %1167 = vperm.xlu0 %1166, %v913
      %v1168 = vpop.permute.xlu0 %1167
      %1171 = vset.pattern.permute.xlu0 0
      %1172 = vperm.xlu0 %1171, %v914
      %v1173 = vpop.permute.xlu0 %1172
      %1176 = vset.pattern.permute.xlu0 0
      %1177 = vperm.xlu0 %1176, %v915
      %v1178 = vpop.permute.xlu0 %1177
      %1181 = vset.pattern.permute.xlu0 0
      %1182 = vperm.xlu0 %1181, %v916
      %v1183 = vpop.permute.xlu0 %1182
      %1186 = vset.pattern.permute.xlu0 0
      %1187 = vperm.xlu0 %1186, %v917
      %v1188 = vpop.permute.xlu0 %1187
      %1191 = vset.pattern.permute.xlu0 0
      %1192 = vperm.xlu0 %1191, %v918
      %v1193 = vpop.permute.xlu0 %1192
      %1196 = vset.pattern.permute.xlu0 0
      %1197 = vperm.xlu0 %1196, %v919
      %v1198 = vpop.permute.xlu0 %1197
      %1201 = vset.pattern.permute.xlu0 0
      %1202 = vperm.xlu0 %1201, %v920
      %v1203 = vpop.permute.xlu0 %1202
      %1206 = vset.pattern.permute.xlu0 0
      %1207 = vperm.xlu0 %1206, %v921
      %v1208 = vpop.permute.xlu0 %1207
      %1211 = vset.pattern.permute.xlu0 0
      %1212 = vperm.xlu0 %1211, %v922
      %v1213 = vpop.permute.xlu0 %1212
      %1216 = vset.pattern.permute.xlu0 0
      %1217 = vperm.xlu0 %1216, %v923
      %v1218 = vpop.permute.xlu0 %1217
      %1221 = vset.pattern.permute.xlu0 0
      %1222 = vperm.xlu0 %1221, %v924
      %v1223 = vpop.permute.xlu0 %1222
      %1226 = vset.pattern.permute.xlu0 0
      %1227 = vperm.xlu0 %1226, %v925
      %v1228 = vpop.permute.xlu0 %1227
      %1231 = vset.pattern.permute.xlu0 0
      %1232 = vperm.xlu0 %1231, %v926
      %v1233 = vpop.permute.xlu0 %1232
      %1236 = vset.pattern.permute.xlu0 0
      %1237 = vperm.xlu0 %1236, %v927
      %v1238 = vpop.permute.xlu0 %1237
      %1241 = vset.pattern.permute.xlu0 0
      %1242 = vperm.xlu0 %1241, %v928
      %v1243 = vpop.permute.xlu0 %1242
      %1246 = vset.pattern.permute.xlu0 0
      %1247 = vperm.xlu0 %1246, %v929
      %v1248 = vpop.permute.xlu0 %1247
      %1251 = vset.pattern.permute.xlu0 0
      %1252 = vperm.xlu0 %1251, %v930
      %v1253 = vpop.permute.xlu0 %1252
      %1256 = vset.pattern.permute.xlu0 0
      %1257 = vperm.xlu0 %1256, %v931
      %v1258 = vpop.permute.xlu0 %1257
      %1261 = vset.pattern.permute.xlu0 0
      %1262 = vperm.xlu0 %1261, %v932
      %v1263 = vpop.permute.xlu0 %1262
      %1266 = vset.pattern.permute.xlu0 0
      %1267 = vperm.xlu0 %1266, %v933
      %v1268 = vpop.permute.xlu0 %1267
      %1271 = vset.pattern.permute.xlu0 0
      %1272 = vperm.xlu0 %1271, %v934
      %v1273 = vpop.permute.xlu0 %1272
      %v1275 = vmul.f32 %v799, %v938
      %v1276 = vmul.f32 %v800, %v943
      %v1277 = vmul.f32 %v801, %v948
      %v1278 = vmul.f32 %v802, %v953
      %v1279 = vmul.f32 %v803, %v958
      %v1280 = vmul.f32 %v804, %v963
      %v1281 = vmul.f32 %v805, %v968
      %v1282 = vmul.f32 %v806, %v973
      %v1283 = vmul.f32 %v807, %v978
      %v1284 = vmul.f32 %v808, %v983
      %v1285 = vmul.f32 %v809, %v988
      %v1286 = vmul.f32 %v810, %v993
      %v1287 = vmul.f32 %v811, %v998
      %v1288 = vmul.f32 %v812, %v1003
      %v1289 = vmul.f32 %v813, %v1008
      %v1290 = vmul.f32 %v814, %v1013
      %v1291 = vmul.f32 %v815, %v1018
      %v1292 = vmul.f32 %v816, %v1023
      %v1293 = vmul.f32 %v817, %v1028
      %v1294 = vmul.f32 %v818, %v1033
      %v1295 = vmul.f32 %v819, %v1038
      %v1296 = vmul.f32 %v820, %v1043
      %v1297 = vmul.f32 %v821, %v1048
      %v1298 = vmul.f32 %v822, %v1053
      %v1299 = vmul.f32 %v823, %v1058
      %v1300 = vmul.f32 %v824, %v1063
      %v1301 = vmul.f32 %v825, %v1068
      %v1302 = vmul.f32 %v826, %v1073
      %v1303 = vmul.f32 %v827, %v1078
      %v1304 = vmul.f32 %v828, %v1083
      %v1305 = vmul.f32 %v829, %v1088
      %v1306 = vmul.f32 %v830, %v1093
      %v1307 = vmul.f32 %v831, %v1098
      %v1308 = vmul.f32 %v832, %v1103
      %v1309 = vmul.f32 %v833, %v1108
      %v1310 = vmul.f32 %v834, %v1113
      %v1311 = vmul.f32 %v835, %v1118
      %v1312 = vmul.f32 %v836, %v1123
      %v1313 = vmul.f32 %v837, %v1128
      %v1314 = vmul.f32 %v838, %v1133
      %v1315 = vmul.f32 %v839, %v1138
      %v1316 = vmul.f32 %v840, %v1143
      %v1317 = vmul.f32 %v841, %v1148
      %v1318 = vmul.f32 %v842, %v1153
      %v1319 = vmul.f32 %v843, %v1158
      %v1320 = vmul.f32 %v844, %v1163
      %v1321 = vmul.f32 %v845, %v1168
      %v1322 = vmul.f32 %v846, %v1173
      %v1323 = vmul.f32 %v847, %v1178
      %v1324 = vmul.f32 %v848, %v1183
      %v1325 = vmul.f32 %v849, %v1188
      %v1326 = vmul.f32 %v850, %v1193
      %v1327 = vmul.f32 %v851, %v1198
      %v1328 = vmul.f32 %v852, %v1203
      %v1329 = vmul.f32 %v853, %v1208
      %v1330 = vmul.f32 %v854, %v1213
      %v1331 = vmul.f32 %v855, %v1218
      %v1332 = vmul.f32 %v856, %v1223
      %v1333 = vmul.f32 %v857, %v1228
      %v1334 = vmul.f32 %v858, %v1233
      %v1335 = vmul.f32 %v859, %v1238
      %v1336 = vmul.f32 %v860, %v1243
      %v1337 = vmul.f32 %v861, %v1248
      %v1338 = vmul.f32 %v862, %v1253
      %v1339 = vmul.f32 %v863, %v1258
      %v1340 = vmul.f32 %v864, %v1263
      %v1341 = vmul.f32 %v865, %v1268
      %v1342 = vmul.f32 %v866, %v1273
      %v1343 = vpack.c.bf16 %v1276, %v1275
      %v1344 = vpack.c.bf16 %v1278, %v1277
      %v1345 = vpack.c.bf16 %v1280, %v1279
      %v1346 = vpack.c.bf16 %v1282, %v1281
      %v1347 = vpack.c.bf16 %v1284, %v1283
      %v1348 = vpack.c.bf16 %v1286, %v1285
      %v1349 = vpack.c.bf16 %v1288, %v1287
      %v1350 = vpack.c.bf16 %v1290, %v1289
      %v1351 = vpack.c.bf16 %v1292, %v1291
      %v1352 = vpack.c.bf16 %v1294, %v1293
      %v1353 = vpack.c.bf16 %v1296, %v1295
      %v1354 = vpack.c.bf16 %v1298, %v1297
      %v1355 = vpack.c.bf16 %v1300, %v1299
      %v1356 = vpack.c.bf16 %v1302, %v1301
      %v1357 = vpack.c.bf16 %v1304, %v1303
      %v1358 = vpack.c.bf16 %v1306, %v1305
      %v1359 = vpack.c.bf16 %v1308, %v1307
      %v1360 = vpack.c.bf16 %v1310, %v1309
      %v1361 = vpack.c.bf16 %v1312, %v1311
      %v1362 = vpack.c.bf16 %v1314, %v1313
      %v1363 = vpack.c.bf16 %v1316, %v1315
      %v1364 = vpack.c.bf16 %v1318, %v1317
      %v1365 = vpack.c.bf16 %v1320, %v1319
      %v1366 = vpack.c.bf16 %v1322, %v1321
      %v1367 = vpack.c.bf16 %v1324, %v1323
      %v1368 = vpack.c.bf16 %v1326, %v1325
      %v1369 = vpack.c.bf16 %v1328, %v1327
      %v1370 = vpack.c.bf16 %v1330, %v1329
      %v1371 = vpack.c.bf16 %v1332, %v1331
      %v1372 = vpack.c.bf16 %v1334, %v1333
      %v1373 = vpack.c.bf16 %v1336, %v1335
      %v1374 = vpack.c.bf16 %v1338, %v1337
      %v1375 = vpack.c.bf16 %v1340, %v1339
      %v1376 = vpack.c.bf16 %v1342, %v1341
      %v1377 = vld [vmem:[%s296] sm:$0xf]
      %s1378 = scalar_lea.vmem %s296, 4
      %v1379 = vld [vmem:[%s1378] sm:$0xf]
      %v1388 = vunpack.c.l.b16 %v1352
      %v1389 = vunpack.c.l.b16 %v1353
      %v1390 = vunpack.c.l.b16 %v1354
      %v1391 = vunpack.c.l.b16 %v1355
      %v1392 = vunpack.c.l.b16 %v1356
      %v1393 = vunpack.c.l.b16 %v1357
      %v1394 = vunpack.c.l.b16 %v1358
      %v1395 = vunpack.c.l.b16 %v1359
      %v1396 = vpack.c.b16 %v1389, %v1388
      %v1397 = vpack.c.b16 %v1391, %v1390
      %v1398 = vpack.c.b16 %v1393, %v1392
      %v1399 = vpack.c.b16 %v1395, %v1394
      %vm1400 = vcmask 64512
      %v1402 = vsel %vm1400, %v1396, 0
      %v1405 = vsel %vm1400, %v1397, 0
      %v1408 = vsel %vm1400, %v1398, 0
      %v1411 = vsel %vm1400, %v1399, 0
      %vm1413 = vcmask 1043456
      %v1415 = vsel %vm1413, %v1379, 0
      %1417 = vmatprep.subr.bf16.mxu0 0
      %1418 = vmatpush1.bf16.msra.mxu0 %v1415
      %1419 = vmatprep.subr.bf16.mxu0 0
      %1420 = vmatpush1.bf16.msra.mxu0 0
      %1421 = vmatprep.subr.bf16.mxu0 0
      %1422 = vmatpush1.bf16.msra.mxu0 0
      %1423 = vmatprep.subr.bf16.mxu0 0
      %1424 = vmatpush1.bf16.msra.mxu0 0
      %1425 = vmatprep.subr.bf16.mxu0 0
      %1426 = vmatpush1.bf16.msra.mxu0 0
      %1427 = vmatprep.subr.bf16.mxu0 0
      %1428 = vmatpush1.bf16.msra.mxu0 0
      %1429 = vmatprep.subr.bf16.mxu0 0
      %1430 = vmatpush1.bf16.msra.mxu0 0
      %1431 = vmatprep.subr.bf16.mxu0 0
      %1432 = vmatpush1.bf16.msra.mxu0 0
      %1433 = vmatprep.subr.bf16.mxu0 0
      %1434 = vmatpush1.bf16.msra.mxu0 0
      %1435 = vmatprep.subr.bf16.mxu0 0
      %1436 = vmatpush1.bf16.msra.mxu0 0
      %1437 = vmatprep.subr.bf16.mxu0 0
      %1438 = vmatpush1.bf16.msra.mxu0 0
      %1439 = vmatprep.subr.bf16.mxu0 0
      %1440 = vmatpush1.bf16.msra.mxu0 0
      %1441 = vmatprep.subr.bf16.mxu0 0
      %1442 = vmatpush1.bf16.msra.mxu0 0
      %1443 = vmatprep.subr.bf16.mxu0 0
      %1444 = vmatpush1.bf16.msra.mxu0 0
      %1445 = vmatprep.subr.bf16.mxu0 0
      %1446 = vmatpush1.bf16.msra.mxu0 0
      %1447 = vmatprep.subr.bf16.mxu0 0
      %1448 = vmatpush1.bf16.msra.mxu0 0
      %1449 = vmatprep.mubr.bf16.mxu0 0
      %1450 = vmatmul.mubr.bf16.gmra.mrb[0].mxu0 %v1402
      %v1451 = vpop.f32.mrb[0].mxu0
      %v1452 = vadd.f32 0.0, %v1451
      %v1453 = vpop.f32.mrb[0].mxu0
      %v1454 = vpop.f32.mrb[0].mxu0
      %v1455 = vadd.f32 0.0, %v1454
      %v1456 = vpop.f32.mrb[0].mxu0
      %1457 = vmatprep.mubr.bf16.mxu0 0
      %1458 = vmatmul.mubr.bf16.gmra.mrb[0].mxu0 %v1405
      %v1459 = vpop.f32.mrb[0].mxu0
      %v1460 = vadd.f32 0.0, %v1459
      %v1461 = vpop.f32.mrb[0].mxu0
      %v1462 = vpop.f32.mrb[0].mxu0
      %v1463 = vadd.f32 0.0, %v1462
      %v1464 = vpop.f32.mrb[0].mxu0
      %1465 = vmatprep.mubr.bf16.mxu0 0
      %1466 = vmatmul.mubr.bf16.gmra.mrb[0].mxu0 %v1408
      %v1467 = vpop.f32.mrb[0].mxu0
      %v1468 = vadd.f32 0.0, %v1467
      %v1469 = vpop.f32.mrb[0].mxu0
      %v1470 = vpop.f32.mrb[0].mxu0
      %v1471 = vadd.f32 0.0, %v1470
      %v1472 = vpop.f32.mrb[0].mxu0
      %1473 = vmatprep.mubr.bf16.mxu0 0
      %1474 = vmatmul.mubr.bf16.gmra.mrb[0].mxu0 %v1411
      %v1475 = vpop.f32.mrb[0].mxu0
      %v1476 = vadd.f32 0.0, %v1475
      %v1477 = vpop.f32.mrb[0].mxu0
      %v1478 = vpop.f32.mrb[0].mxu0
      %v1479 = vadd.f32 0.0, %v1478
      %v1480 = vpop.f32.mrb[0].mxu0
      %1481 = vdwg.mxu0
      %v1490 = vunpack.c.l.b16 %v1343
      %v1491 = vunpack.c.l.b16 %v1344
      %v1492 = vunpack.c.l.b16 %v1345
      %v1493 = vunpack.c.l.b16 %v1346
      %v1494 = vunpack.c.l.b16 %v1347
      %v1495 = vunpack.c.l.b16 %v1348
      %v1496 = vunpack.c.l.b16 %v1349
      %v1497 = vunpack.c.l.b16 %v1350
      %v1498 = vpack.c.b16 %v1491, %v1490
      %v1499 = vpack.c.b16 %v1493, %v1492
      %v1500 = vpack.c.b16 %v1495, %v1494
      %v1501 = vpack.c.b16 %v1497, %v1496
      %v1503 = vsel %vm1400, %v1498, 0
      %v1506 = vsel %vm1400, %v1499, 0
      %v1509 = vsel %vm1400, %v1500, 0
      %v1512 = vsel %vm1400, %v1501, 0
      %v1515 = vsel %vm1413, %v1377, 0
      %1517 = vmatprep.subr.bf16.mxu0 0
      %1518 = vmatpush1.bf16.msra.mxu0 %v1515
      %1519 = vmatprep.subr.bf16.mxu0 0
      %1520 = vmatpush1.bf16.msra.mxu0 0
      %1521 = vmatprep.subr.bf16.mxu0 0
      %1522 = vmatpush1.bf16.msra.mxu0 0
      %1523 = vmatprep.subr.bf16.mxu0 0
      %1524 = vmatpush1.bf16.msra.mxu0 0
      %1525 = vmatprep.subr.bf16.mxu0 0
      %1526 = vmatpush1.bf16.msra.mxu0 0
      %1527 = vmatprep.subr.bf16.mxu0 0
      %1528 = vmatpush1.bf16.msra.mxu0 0
      %1529 = vmatprep.subr.bf16.mxu0 0
      %1530 = vmatpush1.bf16.msra.mxu0 0
      %1531 = vmatprep.subr.bf16.mxu0 0
      %1532 = vmatpush1.bf16.msra.mxu0 0
      %1533 = vmatprep.subr.bf16.mxu0 0
      %1534 = vmatpush1.bf16.msra.mxu0 0
      %1535 = vmatprep.subr.bf16.mxu0 0
      %1536 = vmatpush1.bf16.msra.mxu0 0
      %1537 = vmatprep.subr.bf16.mxu0 0
      %1538 = vmatpush1.bf16.msra.mxu0 0
      %1539 = vmatprep.subr.bf16.mxu0 0
      %1540 = vmatpush1.bf16.msra.mxu0 0
      %1541 = vmatprep.subr.bf16.mxu0 0
      %1542 = vmatpush1.bf16.msra.mxu0 0
      %1543 = vmatprep.subr.bf16.mxu0 0
      %1544 = vmatpush1.bf16.msra.mxu0 0
      %1545 = vmatprep.subr.bf16.mxu0 0
      %1546 = vmatpush1.bf16.msra.mxu0 0
      %1547 = vmatprep.subr.bf16.mxu0 0
      %1548 = vmatpush1.bf16.msra.mxu0 0
      %1549 = vmatprep.mubr.bf16.mxu0 0
      %1550 = vmatmul.mubr.bf16.gmra.mrb[0].mxu0 %v1503
      %v1551 = vpop.f32.mrb[0].mxu0
      %v1552 = vadd.f32 %v1452, %v1551
      %v1553 = vpop.f32.mrb[0].mxu0
      %v1554 = vpop.f32.mrb[0].mxu0
      %v1555 = vadd.f32 %v1455, %v1554
      %v1556 = vpop.f32.mrb[0].mxu0
      %1557 = vmatprep.mubr.bf16.mxu0 0
      %1558 = vmatmul.mubr.bf16.gmra.mrb[0].mxu0 %v1506
      %v1559 = vpop.f32.mrb[0].mxu0
      %v1560 = vadd.f32 %v1460, %v1559
      %v1561 = vpop.f32.mrb[0].mxu0
      %v1562 = vpop.f32.mrb[0].mxu0
      %v1563 = vadd.f32 %v1463, %v1562
      %v1564 = vpop.f32.mrb[0].mxu0
      %1565 = vmatprep.mubr.bf16.mxu0 0
      %1566 = vmatmul.mubr.bf16.gmra.mrb[0].mxu0 %v1509
      %v1567 = vpop.f32.mrb[0].mxu0
      %v1568 = vadd.f32 %v1468, %v1567
      %v1569 = vpop.f32.mrb[0].mxu0
      %v1570 = vpop.f32.mrb[0].mxu0
      %v1571 = vadd.f32 %v1471, %v1570
      %v1572 = vpop.f32.mrb[0].mxu0
      %1573 = vmatprep.mubr.bf16.mxu0 0
      %1574 = vmatmul.mubr.bf16.gmra.mrb[0].mxu0 %v1512
      %v1575 = vpop.f32.mrb[0].mxu0
      %v1576 = vadd.f32 %v1476, %v1575
      %v1577 = vpop.f32.mrb[0].mxu0
      %v1578 = vpop.f32.mrb[0].mxu0
      %v1579 = vadd.f32 %v1479, %v1578
      %v1580 = vpop.f32.mrb[0].mxu0
      %1581 = vdwg.mxu0
      %v1582 = vunpack.c.h.b16 %v1343
      %v1583 = vunpack.c.h.b16 %v1344
      %v1584 = vunpack.c.h.b16 %v1345
      %v1585 = vunpack.c.h.b16 %v1346
      %v1586 = vunpack.c.h.b16 %v1347
      %v1587 = vunpack.c.h.b16 %v1348
      %v1588 = vunpack.c.h.b16 %v1349
      %v1589 = vunpack.c.h.b16 %v1350
      %v1590 = vpack.c.b16 %v1490, %v1490
      %v1591 = vpack.c.b16 %v1582, %v1582
      %v1592 = vpack.c.b16 %v1491, %v1491
      %v1593 = vpack.c.b16 %v1583, %v1583
      %v1594 = vpack.c.b16 %v1492, %v1492
      %v1595 = vpack.c.b16 %v1584, %v1584
      %v1596 = vpack.c.b16 %v1493, %v1493
      %v1597 = vpack.c.b16 %v1585, %v1585
      %v1598 = vpack.c.b16 %v1494, %v1494
      %v1599 = vpack.c.b16 %v1586, %v1586
      %v1600 = vpack.c.b16 %v1495, %v1495
      %v1601 = vpack.c.b16 %v1587, %v1587
      %v1602 = vpack.c.b16 %v1496, %v1496
      %v1603 = vpack.c.b16 %v1588, %v1588
      %v1604 = vpack.c.b16 %v1497, %v1497
      %v1605 = vpack.c.b16 %v1589, %v1589
      %vm1606 = vsmask.f32 3328
      %vm1607 = vsmask.f32 7440
      %vm1608 = vmor %vm1606, %vm1607
      %v1610 = vshrl.u32 %v1590, 16
      %v1612 = vrot.slane %v1610, 4
      %v1613 = vshll.u32 %v1590, 16
      %v1615 = vrot.slane %v1613, 5
      %v1616 = vor.u32 %v1612, %v1615
      %v1617 = vrot.slane %v1616, 4
      %v1619 = vshll.u32 %v1591, 16
      %v1621 = vrot.slane %v1619, 5
      %v1622 = vsel %vm1608, %v1617, %v1621
      %v1624 = vshrl.u32 %v1592, 16
      %v1626 = vrot.slane %v1624, 4
      %v1627 = vshll.u32 %v1592, 16
      %v1629 = vrot.slane %v1627, 5
      %v1630 = vor.u32 %v1626, %v1629
      %v1631 = vrot.slane %v1630, 4
      %v1633 = vshll.u32 %v1593, 16
      %v1635 = vrot.slane %v1633, 5
      %v1636 = vsel %vm1608, %v1631, %v1635
      %v1638 = vshrl.u32 %v1594, 16
      %v1640 = vrot.slane %v1638, 4
      %v1641 = vshll.u32 %v1594, 16
      %v1643 = vrot.slane %v1641, 5
      %v1644 = vor.u32 %v1640, %v1643
      %v1645 = vrot.slane %v1644, 4
      %v1647 = vshll.u32 %v1595, 16
      %v1649 = vrot.slane %v1647, 5
      %v1650 = vsel %vm1608, %v1645, %v1649
      %v1652 = vshrl.u32 %v1596, 16
      %v1654 = vrot.slane %v1652, 4
      %v1655 = vshll.u32 %v1596, 16
      %v1657 = vrot.slane %v1655, 5
      %v1658 = vor.u32 %v1654, %v1657
      %v1659 = vrot.slane %v1658, 4
      %v1661 = vshll.u32 %v1597, 16
      %v1663 = vrot.slane %v1661, 5
      %v1664 = vsel %vm1608, %v1659, %v1663
      %v1666 = vshrl.u32 %v1598, 16
      %v1668 = vrot.slane %v1666, 4
      %v1669 = vshll.u32 %v1598, 16
      %v1671 = vrot.slane %v1669, 5
      %v1672 = vor.u32 %v1668, %v1671
      %v1673 = vrot.slane %v1672, 4
      %v1675 = vshll.u32 %v1599, 16
      %v1677 = vrot.slane %v1675, 5
      %v1678 = vsel %vm1608, %v1673, %v1677
      %v1680 = vshrl.u32 %v1600, 16
      %v1682 = vrot.slane %v1680, 4
      %v1683 = vshll.u32 %v1600, 16
      %v1685 = vrot.slane %v1683, 5
      %v1686 = vor.u32 %v1682, %v1685
      %v1687 = vrot.slane %v1686, 4
      %v1689 = vshll.u32 %v1601, 16
      %v1691 = vrot.slane %v1689, 5
      %v1692 = vsel %vm1608, %v1687, %v1691
      %v1694 = vshrl.u32 %v1602, 16
      %v1696 = vrot.slane %v1694, 4
      %v1697 = vshll.u32 %v1602, 16
      %v1699 = vrot.slane %v1697, 5
      %v1700 = vor.u32 %v1696, %v1699
      %v1701 = vrot.slane %v1700, 4
      %v1703 = vshll.u32 %v1603, 16
      %v1705 = vrot.slane %v1703, 5
      %v1706 = vsel %vm1608, %v1701, %v1705
      %v1708 = vshrl.u32 %v1604, 16
      %v1710 = vrot.slane %v1708, 4
      %v1711 = vshll.u32 %v1604, 16
      %v1713 = vrot.slane %v1711, 5
      %v1714 = vor.u32 %v1710, %v1713
      %v1715 = vrot.slane %v1714, 4
      %v1717 = vshll.u32 %v1605, 16
      %v1719 = vrot.slane %v1717, 5
      %v1720 = vsel %vm1608, %v1715, %v1719
      %s1721 = scalar_lea.vmem %s296, 8
      %v1722 = vld [vmem:[%s1721] sm:$0xf]
      %v1723 = vunpack.c.l.b16 %v1622
      %v1724 = vunpack.c.l.b16 %v1636
      %v1725 = vunpack.c.l.b16 %v1650
      %v1726 = vunpack.c.l.b16 %v1664
      %v1727 = vunpack.c.l.b16 %v1678
      %v1728 = vunpack.c.l.b16 %v1692
      %v1729 = vunpack.c.l.b16 %v1706
      %v1730 = vunpack.c.l.b16 %v1720
      %v1731 = vpack.c.b16 %v1724, %v1723
      %v1732 = vpack.c.b16 %v1726, %v1725
      %v1733 = vpack.c.b16 %v1728, %v1727
      %v1734 = vpack.c.b16 %v1730, %v1729
      %v1736 = vsel %vm1400, %v1731, 0
      %v1739 = vsel %vm1400, %v1732, 0
      %v1742 = vsel %vm1400, %v1733, 0
      %v1745 = vsel %vm1400, %v1734, 0
      %v1748 = vsel %vm1413, %v1722, 0
      %1750 = vmatprep.subr.bf16.mxu0 0
      %1751 = vmatpush1.bf16.msra.mxu0 %v1748
      %1752 = vmatprep.subr.bf16.mxu0 0
      %1753 = vmatpush1.bf16.msra.mxu0 0
      %1754 = vmatprep.subr.bf16.mxu0 0
      %1755 = vmatpush1.bf16.msra.mxu0 0
      %1756 = vmatprep.subr.bf16.mxu0 0
      %1757 = vmatpush1.bf16.msra.mxu0 0
      %1758 = vmatprep.subr.bf16.mxu0 0
      %1759 = vmatpush1.bf16.msra.mxu0 0
      %1760 = vmatprep.subr.bf16.mxu0 0
      %1761 = vmatpush1.bf16.msra.mxu0 0
      %1762 = vmatprep.subr.bf16.mxu0 0
      %1763 = vmatpush1.bf16.msra.mxu0 0
      %1764 = vmatprep.subr.bf16.mxu0 0
      %1765 = vmatpush1.bf16.msra.mxu0 0
      %1766 = vmatprep.subr.bf16.mxu0 0
      %1767 = vmatpush1.bf16.msra.mxu0 0
      %1768 = vmatprep.subr.bf16.mxu0 0
      %1769 = vmatpush1.bf16.msra.mxu0 0
      %1770 = vmatprep.subr.bf16.mxu0 0
      %1771 = vmatpush1.bf16.msra.mxu0 0
      %1772 = vmatprep.subr.bf16.mxu0 0
      %1773 = vmatpush1.bf16.msra.mxu0 0
      %1774 = vmatprep.subr.bf16.mxu0 0
      %1775 = vmatpush1.bf16.msra.mxu0 0
      %1776 = vmatprep.subr.bf16.mxu0 0
      %1777 = vmatpush1.bf16.msra.mxu0 0
      %1778 = vmatprep.subr.bf16.mxu0 0
      %1779 = vmatpush1.bf16.msra.mxu0 0
      %1780 = vmatprep.subr.bf16.mxu0 0
      %1781 = vmatpush1.bf16.msra.mxu0 0
      %1782 = vmatprep.mubr.bf16.mxu0 0
      %1783 = vmatmul.mubr.bf16.gmra.mrb[0].mxu0 %v1736
      %v1784 = vpop.f32.mrb[0].mxu0
      %v1785 = vadd.f32 0.0, %v1784
      %v1786 = vpop.f32.mrb[0].mxu0
      %v1787 = vpop.f32.mrb[0].mxu0
      %v1788 = vadd.f32 0.0, %v1787
      %v1789 = vpop.f32.mrb[0].mxu0
      %1790 = vmatprep.mubr.bf16.mxu0 0
      %1791 = vmatmul.mubr.bf16.gmra.mrb[0].mxu0 %v1739
      %v1792 = vpop.f32.mrb[0].mxu0
      %v1793 = vadd.f32 0.0, %v1792
      %v1794 = vpop.f32.mrb[0].mxu0
      %v1795 = vpop.f32.mrb[0].mxu0
      %v1796 = vadd.f32 0.0, %v1795
      %v1797 = vpop.f32.mrb[0].mxu0
      %1798 = vmatprep.mubr.bf16.mxu0 0
      %1799 = vmatmul.mubr.bf16.gmra.mrb[0].mxu0 %v1742
      %v1800 = vpop.f32.mrb[0].mxu0
      %v1801 = vadd.f32 0.0, %v1800
      %v1802 = vpop.f32.mrb[0].mxu0
      %v1803 = vpop.f32.mrb[0].mxu0
      %v1804 = vadd.f32 0.0, %v1803
      %v1805 = vpop.f32.mrb[0].mxu0
      %1806 = vmatprep.mubr.bf16.mxu0 0
      %1807 = vmatmul.mubr.bf16.gmra.mrb[0].mxu0 %v1745
      %v1808 = vpop.f32.mrb[0].mxu0
      %v1809 = vadd.f32 0.0, %v1808
      %v1810 = vpop.f32.mrb[0].mxu0
      %v1811 = vpop.f32.mrb[0].mxu0
      %v1812 = vadd.f32 0.0, %v1811
      %v1813 = vpop.f32.mrb[0].mxu0
      %1814 = vdwg.mxu0
      %v1815 = vadd.f32 %v1552, %v1785
      %v1816 = vadd.f32 %v1555, %v1788
      %v1817 = vadd.f32 %v1560, %v1793
      %v1818 = vadd.f32 %v1563, %v1796
      %v1819 = vadd.f32 %v1568, %v1801
      %v1820 = vadd.f32 %v1571, %v1804
      %v1821 = vadd.f32 %v1576, %v1809
      %v1822 = vadd.f32 %v1579, %v1812
      %s1823 = scalar_lea.vmem %s296, 12
      %v1824 = vld [vmem:[%s1823] sm:$0xf]
      %v1833 = vunpack.c.l.b16 %v1361
      %v1834 = vunpack.c.l.b16 %v1362
      %v1835 = vunpack.c.l.b16 %v1363
      %v1836 = vunpack.c.l.b16 %v1364
      %v1837 = vunpack.c.l.b16 %v1365
      %v1838 = vunpack.c.l.b16 %v1366
      %v1839 = vunpack.c.l.b16 %v1367
      %v1840 = vunpack.c.l.b16 %v1368
      %v1841 = vpack.c.b16 %v1834, %v1833
      %v1842 = vpack.c.b16 %v1836, %v1835
      %v1843 = vpack.c.b16 %v1838, %v1837
      %v1844 = vpack.c.b16 %v1840, %v1839
      %v1846 = vsel %vm1400, %v1841, 0
      %v1849 = vsel %vm1400, %v1842, 0
      %v1852 = vsel %vm1400, %v1843, 0
      %v1855 = vsel %vm1400, %v1844, 0
      %v1858 = vsel %vm1413, %v1824, 0
      %1860 = vmatprep.subr.bf16.mxu0 0
      %1861 = vmatpush1.bf16.msra.mxu0 %v1858
      %1862 = vmatprep.subr.bf16.mxu0 0
      %1863 = vmatpush1.bf16.msra.mxu0 0
      %1864 = vmatprep.subr.bf16.mxu0 0
      %1865 = vmatpush1.bf16.msra.mxu0 0
      %1866 = vmatprep.subr.bf16.mxu0 0
      %1867 = vmatpush1.bf16.msra.mxu0 0
      %1868 = vmatprep.subr.bf16.mxu0 0
      %1869 = vmatpush1.bf16.msra.mxu0 0
      %1870 = vmatprep.subr.bf16.mxu0 0
      %1871 = vmatpush1.bf16.msra.mxu0 0
      %1872 = vmatprep.subr.bf16.mxu0 0
      %1873 = vmatpush1.bf16.msra.mxu0 0
      %1874 = vmatprep.subr.bf16.mxu0 0
      %1875 = vmatpush1.bf16.msra.mxu0 0
      %1876 = vmatprep.subr.bf16.mxu0 0
      %1877 = vmatpush1.bf16.msra.mxu0 0
      %1878 = vmatprep.subr.bf16.mxu0 0
      %1879 = vmatpush1.bf16.msra.mxu0 0
      %1880 = vmatprep.subr.bf16.mxu0 0
      %1881 = vmatpush1.bf16.msra.mxu0 0
      %1882 = vmatprep.subr.bf16.mxu0 0
      %1883 = vmatpush1.bf16.msra.mxu0 0
      %1884 = vmatprep.subr.bf16.mxu0 0
      %1885 = vmatpush1.bf16.msra.mxu0 0
      %1886 = vmatprep.subr.bf16.mxu0 0
      %1887 = vmatpush1.bf16.msra.mxu0 0
      %1888 = vmatprep.subr.bf16.mxu0 0
      %1889 = vmatpush1.bf16.msra.mxu0 0
      %1890 = vmatprep.subr.bf16.mxu0 0
      %1891 = vmatpush1.bf16.msra.mxu0 0
      %1892 = vmatprep.mubr.bf16.mxu0 0
      %1893 = vmatmul.mubr.bf16.gmra.mrb[0].mxu0 %v1846
      %v1894 = vpop.f32.mrb[0].mxu0
      %v1895 = vadd.f32 0.0, %v1894
      %v1896 = vpop.f32.mrb[0].mxu0
      %v1897 = vpop.f32.mrb[0].mxu0
      %v1898 = vadd.f32 0.0, %v1897
      %v1899 = vpop.f32.mrb[0].mxu0
      %1900 = vmatprep.mubr.bf16.mxu0 0
      %1901 = vmatmul.mubr.bf16.gmra.mrb[0].mxu0 %v1849
      %v1902 = vpop.f32.mrb[0].mxu0
      %v1903 = vadd.f32 0.0, %v1902
      %v1904 = vpop.f32.mrb[0].mxu0
      %v1905 = vpop.f32.mrb[0].mxu0
      %v1906 = vadd.f32 0.0, %v1905
      %v1907 = vpop.f32.mrb[0].mxu0
      %1908 = vmatprep.mubr.bf16.mxu0 0
      %1909 = vmatmul.mubr.bf16.gmra.mrb[0].mxu0 %v1852
      %v1910 = vpop.f32.mrb[0].mxu0
      %v1911 = vadd.f32 0.0, %v1910
      %v1912 = vpop.f32.mrb[0].mxu0
      %v1913 = vpop.f32.mrb[0].mxu0
      %v1914 = vadd.f32 0.0, %v1913
      %v1915 = vpop.f32.mrb[0].mxu0
      %1916 = vmatprep.mubr.bf16.mxu0 0
      %1917 = vmatmul.mubr.bf16.gmra.mrb[0].mxu0 %v1855
      %v1918 = vpop.f32.mrb[0].mxu0
      %v1919 = vadd.f32 0.0, %v1918
      %v1920 = vpop.f32.mrb[0].mxu0
      %v1921 = vpop.f32.mrb[0].mxu0
      %v1922 = vadd.f32 0.0, %v1921
      %v1923 = vpop.f32.mrb[0].mxu0
      %1924 = vdwg.mxu0
      %v1925 = vadd.f32 %v1815, %v1895
      %v1926 = vadd.f32 %v1816, %v1898
      %v1927 = vadd.f32 %v1817, %v1903
      %v1928 = vadd.f32 %v1818, %v1906
      %v1929 = vadd.f32 %v1819, %v1911
      %v1930 = vadd.f32 %v1820, %v1914
      %v1931 = vadd.f32 %v1821, %v1919
      %v1932 = vadd.f32 %v1822, %v1922
      %s1933 = scalar_lea.vmem %s296, 16
      %v1934 = vld [vmem:[%s1933] sm:$0xf]
      %v1943 = vunpack.c.l.b16 %v1369
      %v1944 = vunpack.c.l.b16 %v1370
      %v1945 = vunpack.c.l.b16 %v1371
      %v1946 = vunpack.c.l.b16 %v1372
      %v1947 = vunpack.c.l.b16 %v1373
      %v1948 = vunpack.c.l.b16 %v1374
      %v1949 = vunpack.c.l.b16 %v1375
      %v1950 = vunpack.c.l.b16 %v1376
      %v1951 = vpack.c.b16 %v1944, %v1943
      %v1952 = vpack.c.b16 %v1946, %v1945
      %v1953 = vpack.c.b16 %v1948, %v1947
      %v1954 = vpack.c.b16 %v1950, %v1949
      %v1956 = vsel %vm1400, %v1951, 0
      %v1959 = vsel %vm1400, %v1952, 0
      %v1962 = vsel %vm1400, %v1953, 0
      %v1965 = vsel %vm1400, %v1954, 0
      %v1968 = vsel %vm1413, %v1934, 0
      %1970 = vmatprep.subr.bf16.mxu0 0
      %1971 = vmatpush1.bf16.msra.mxu0 %v1968
      %1972 = vmatprep.subr.bf16.mxu0 0
      %1973 = vmatpush1.bf16.msra.mxu0 0
      %1974 = vmatprep.subr.bf16.mxu0 0
      %1975 = vmatpush1.bf16.msra.mxu0 0
      %1976 = vmatprep.subr.bf16.mxu0 0
      %1977 = vmatpush1.bf16.msra.mxu0 0
      %1978 = vmatprep.subr.bf16.mxu0 0
      %1979 = vmatpush1.bf16.msra.mxu0 0
      %1980 = vmatprep.subr.bf16.mxu0 0
      %1981 = vmatpush1.bf16.msra.mxu0 0
      %1982 = vmatprep.subr.bf16.mxu0 0
      %1983 = vmatpush1.bf16.msra.mxu0 0
      %1984 = vmatprep.subr.bf16.mxu0 0
      %1985 = vmatpush1.bf16.msra.mxu0 0
      %1986 = vmatprep.subr.bf16.mxu0 0
      %1987 = vmatpush1.bf16.msra.mxu0 0
      %1988 = vmatprep.subr.bf16.mxu0 0
      %1989 = vmatpush1.bf16.msra.mxu0 0
      %1990 = vmatprep.subr.bf16.mxu0 0
      %1991 = vmatpush1.bf16.msra.mxu0 0
      %1992 = vmatprep.subr.bf16.mxu0 0
      %1993 = vmatpush1.bf16.msra.mxu0 0
      %1994 = vmatprep.subr.bf16.mxu0 0
      %1995 = vmatpush1.bf16.msra.mxu0 0
      %1996 = vmatprep.subr.bf16.mxu0 0
      %1997 = vmatpush1.bf16.msra.mxu0 0
      %1998 = vmatprep.subr.bf16.mxu0 0
      %1999 = vmatpush1.bf16.msra.mxu0 0
      %2000 = vmatprep.subr.bf16.mxu0 0
      %2001 = vmatpush1.bf16.msra.mxu0 0
      %2002 = vmatprep.mubr.bf16.mxu0 0
      %2003 = vmatmul.mubr.bf16.gmra.mrb[0].mxu0 %v1956
      %v2004 = vpop.f32.mrb[0].mxu0
      %v2005 = vadd.f32 0.0, %v2004
      %v2006 = vpop.f32.mrb[0].mxu0
      %v2007 = vpop.f32.mrb[0].mxu0
      %v2008 = vadd.f32 0.0, %v2007
      %v2009 = vpop.f32.mrb[0].mxu0
      %2010 = vmatprep.mubr.bf16.mxu0 0
      %2011 = vmatmul.mubr.bf16.gmra.mrb[0].mxu0 %v1959
      %v2012 = vpop.f32.mrb[0].mxu0
      %v2013 = vadd.f32 0.0, %v2012
      %v2014 = vpop.f32.mrb[0].mxu0
      %v2015 = vpop.f32.mrb[0].mxu0
      %v2016 = vadd.f32 0.0, %v2015
      %v2017 = vpop.f32.mrb[0].mxu0
      %2018 = vmatprep.mubr.bf16.mxu0 0
      %2019 = vmatmul.mubr.bf16.gmra.mrb[0].mxu0 %v1962
      %v2020 = vpop.f32.mrb[0].mxu0
      %v2021 = vadd.f32 0.0, %v2020
      %v2022 = vpop.f32.mrb[0].mxu0
      %v2023 = vpop.f32.mrb[0].mxu0
      %v2024 = vadd.f32 0.0, %v2023
      %v2025 = vpop.f32.mrb[0].mxu0
      %2026 = vmatprep.mubr.bf16.mxu0 0
      %2027 = vmatmul.mubr.bf16.gmra.mrb[0].mxu0 %v1965
      %v2028 = vpop.f32.mrb[0].mxu0
      %v2029 = vadd.f32 0.0, %v2028
      %v2030 = vpop.f32.mrb[0].mxu0
      %v2031 = vpop.f32.mrb[0].mxu0
      %v2032 = vadd.f32 0.0, %v2031
      %v2033 = vpop.f32.mrb[0].mxu0
      %2034 = vdwg.mxu0
      %v2035 = vadd.f32 %v1925, %v2005
      %v2036 = vadd.f32 %v1926, %v2008
      %v2037 = vadd.f32 %v1927, %v2013
      %v2038 = vadd.f32 %v1928, %v2016
      %v2039 = vadd.f32 %v1929, %v2021
      %v2040 = vadd.f32 %v1930, %v2024
      %v2041 = vadd.f32 %v1931, %v2029
      %v2042 = vadd.f32 %v1932, %v2032
      %v2043 = vunpack.c.h.b16 %v1361
      %v2044 = vunpack.c.h.b16 %v1362
      %v2045 = vunpack.c.h.b16 %v1363
      %v2046 = vunpack.c.h.b16 %v1364
      %v2047 = vunpack.c.h.b16 %v1365
      %v2048 = vunpack.c.h.b16 %v1366
      %v2049 = vunpack.c.h.b16 %v1367
      %v2050 = vunpack.c.h.b16 %v1368
      %v2051 = vpack.c.b16 %v1833, %v1833
      %v2052 = vpack.c.b16 %v2043, %v2043
      %v2053 = vpack.c.b16 %v1834, %v1834
      %v2054 = vpack.c.b16 %v2044, %v2044
      %v2055 = vpack.c.b16 %v1835, %v1835
      %v2056 = vpack.c.b16 %v2045, %v2045
      %v2057 = vpack.c.b16 %v1836, %v1836
      %v2058 = vpack.c.b16 %v2046, %v2046
      %v2059 = vpack.c.b16 %v1837, %v1837
      %v2060 = vpack.c.b16 %v2047, %v2047
      %v2061 = vpack.c.b16 %v1838, %v1838
      %v2062 = vpack.c.b16 %v2048, %v2048
      %v2063 = vpack.c.b16 %v1839, %v1839
      %v2064 = vpack.c.b16 %v2049, %v2049
      %v2065 = vpack.c.b16 %v1840, %v1840
      %v2066 = vpack.c.b16 %v2050, %v2050
      %v2068 = vshrl.u32 %v2051, 16
      %v2070 = vrot.slane %v2068, 4
      %v2071 = vshll.u32 %v2051, 16
      %v2073 = vrot.slane %v2071, 5
      %v2074 = vor.u32 %v2070, %v2073
      %v2075 = vrot.slane %v2074, 4
      %v2077 = vshll.u32 %v2052, 16
      %v2079 = vrot.slane %v2077, 5
      %v2080 = vsel %vm1608, %v2075, %v2079
      %v2082 = vshrl.u32 %v2053, 16
      %v2084 = vrot.slane %v2082, 4
      %v2085 = vshll.u32 %v2053, 16
      %v2087 = vrot.slane %v2085, 5
      %v2088 = vor.u32 %v2084, %v2087
      %v2089 = vrot.slane %v2088, 4
      %v2091 = vshll.u32 %v2054, 16
      %v2093 = vrot.slane %v2091, 5
      %v2094 = vsel %vm1608, %v2089, %v2093
      %v2096 = vshrl.u32 %v2055, 16
      %v2098 = vrot.slane %v2096, 4
      %v2099 = vshll.u32 %v2055, 16
      %v2101 = vrot.slane %v2099, 5
      %v2102 = vor.u32 %v2098, %v2101
      %v2103 = vrot.slane %v2102, 4
      %v2105 = vshll.u32 %v2056, 16
      %v2107 = vrot.slane %v2105, 5
      %v2108 = vsel %vm1608, %v2103, %v2107
      %v2110 = vshrl.u32 %v2057, 16
      %v2112 = vrot.slane %v2110, 4
      %v2113 = vshll.u32 %v2057, 16
      %v2115 = vrot.slane %v2113, 5
      %v2116 = vor.u32 %v2112, %v2115
      %v2117 = vrot.slane %v2116, 4
      %v2119 = vshll.u32 %v2058, 16
      %v2121 = vrot.slane %v2119, 5
      %v2122 = vsel %vm1608, %v2117, %v2121
      %v2124 = vshrl.u32 %v2059, 16
      %v2126 = vrot.slane %v2124, 4
      %v2127 = vshll.u32 %v2059, 16
      %v2129 = vrot.slane %v2127, 5
      %v2130 = vor.u32 %v2126, %v2129
      %v2131 = vrot.slane %v2130, 4
      %v2133 = vshll.u32 %v2060, 16
      %v2135 = vrot.slane %v2133, 5
      %v2136 = vsel %vm1608, %v2131, %v2135
      %v2138 = vshrl.u32 %v2061, 16
      %v2140 = vrot.slane %v2138, 4
      %v2141 = vshll.u32 %v2061, 16
      %v2143 = vrot.slane %v2141, 5
      %v2144 = vor.u32 %v2140, %v2143
      %v2145 = vrot.slane %v2144, 4
      %v2147 = vshll.u32 %v2062, 16
      %v2149 = vrot.slane %v2147, 5
      %v2150 = vsel %vm1608, %v2145, %v2149
      %v2152 = vshrl.u32 %v2063, 16
      %v2154 = vrot.slane %v2152, 4
      %v2155 = vshll.u32 %v2063, 16
      %v2157 = vrot.slane %v2155, 5
      %v2158 = vor.u32 %v2154, %v2157
      %v2159 = vrot.slane %v2158, 4
      %v2161 = vshll.u32 %v2064, 16
      %v2163 = vrot.slane %v2161, 5
      %v2164 = vsel %vm1608, %v2159, %v2163
      %v2166 = vshrl.u32 %v2065, 16
      %v2168 = vrot.slane %v2166, 4
      %v2169 = vshll.u32 %v2065, 16
      %v2171 = vrot.slane %v2169, 5
      %v2172 = vor.u32 %v2168, %v2171
      %v2173 = vrot.slane %v2172, 4
      %v2175 = vshll.u32 %v2066, 16
      %v2177 = vrot.slane %v2175, 5
      %v2178 = vsel %vm1608, %v2173, %v2177
      %s2179 = scalar_lea.vmem %s296, 20
      %v2180 = vld [vmem:[%s2179] sm:$0xf]
      %v2181 = vunpack.c.l.b16 %v2080
      %v2182 = vunpack.c.l.b16 %v2094
      %v2183 = vunpack.c.l.b16 %v2108
      %v2184 = vunpack.c.l.b16 %v2122
      %v2185 = vunpack.c.l.b16 %v2136
      %v2186 = vunpack.c.l.b16 %v2150
      %v2187 = vunpack.c.l.b16 %v2164
      %v2188 = vunpack.c.l.b16 %v2178
      %v2189 = vpack.c.b16 %v2182, %v2181
      %v2190 = vpack.c.b16 %v2184, %v2183
      %v2191 = vpack.c.b16 %v2186, %v2185
      %v2192 = vpack.c.b16 %v2188, %v2187
      %v2194 = vsel %vm1400, %v2189, 0
      %v2197 = vsel %vm1400, %v2190, 0
      %v2200 = vsel %vm1400, %v2191, 0
      %v2203 = vsel %vm1400, %v2192, 0
      %v2206 = vsel %vm1413, %v2180, 0
      %2208 = vmatprep.subr.bf16.mxu0 0
      %2209 = vmatpush1.bf16.msra.mxu0 %v2206
      %2210 = vmatprep.subr.bf16.mxu0 0
      %2211 = vmatpush1.bf16.msra.mxu0 0
      %2212 = vmatprep.subr.bf16.mxu0 0
      %2213 = vmatpush1.bf16.msra.mxu0 0
      %2214 = vmatprep.subr.bf16.mxu0 0
      %2215 = vmatpush1.bf16.msra.mxu0 0
      %2216 = vmatprep.subr.bf16.mxu0 0
      %2217 = vmatpush1.bf16.msra.mxu0 0
      %2218 = vmatprep.subr.bf16.mxu0 0
      %2219 = vmatpush1.bf16.msra.mxu0 0
      %2220 = vmatprep.subr.bf16.mxu0 0
      %2221 = vmatpush1.bf16.msra.mxu0 0
      %2222 = vmatprep.subr.bf16.mxu0 0
      %2223 = vmatpush1.bf16.msra.mxu0 0
      %2224 = vmatprep.subr.bf16.mxu0 0
      %2225 = vmatpush1.bf16.msra.mxu0 0
      %2226 = vmatprep.subr.bf16.mxu0 0
      %2227 = vmatpush1.bf16.msra.mxu0 0
      %2228 = vmatprep.subr.bf16.mxu0 0
      %2229 = vmatpush1.bf16.msra.mxu0 0
      %2230 = vmatprep.subr.bf16.mxu0 0
      %2231 = vmatpush1.bf16.msra.mxu0 0
      %2232 = vmatprep.subr.bf16.mxu0 0
      %2233 = vmatpush1.bf16.msra.mxu0 0
      %2234 = vmatprep.subr.bf16.mxu0 0
      %2235 = vmatpush1.bf16.msra.mxu0 0
      %2236 = vmatprep.subr.bf16.mxu0 0
      %2237 = vmatpush1.bf16.msra.mxu0 0
      %2238 = vmatprep.subr.bf16.mxu0 0
      %2239 = vmatpush1.bf16.msra.mxu0 0
      %2240 = vmatprep.mubr.bf16.mxu0 0
      %2241 = vmatmul.mubr.bf16.gmra.mrb[0].mxu0 %v2194
      %v2242 = vpop.f32.mrb[0].mxu0
      %v2243 = vadd.f32 0.0, %v2242
      %v2244 = vpop.f32.mrb[0].mxu0
      %v2245 = vpop.f32.mrb[0].mxu0
      %v2246 = vadd.f32 0.0, %v2245
      %v2247 = vpop.f32.mrb[0].mxu0
      %2248 = vmatprep.mubr.bf16.mxu0 0
      %2249 = vmatmul.mubr.bf16.gmra.mrb[0].mxu0 %v2197
      %v2250 = vpop.f32.mrb[0].mxu0
      %v2251 = vadd.f32 0.0, %v2250
      %v2252 = vpop.f32.mrb[0].mxu0
      %v2253 = vpop.f32.mrb[0].mxu0
      %v2254 = vadd.f32 0.0, %v2253
      %v2255 = vpop.f32.mrb[0].mxu0
      %2256 = vmatprep.mubr.bf16.mxu0 0
      %2257 = vmatmul.mubr.bf16.gmra.mrb[0].mxu0 %v2200
      %v2258 = vpop.f32.mrb[0].mxu0
      %v2259 = vadd.f32 0.0, %v2258
      %v2260 = vpop.f32.mrb[0].mxu0
      %v2261 = vpop.f32.mrb[0].mxu0
      %v2262 = vadd.f32 0.0, %v2261
      %v2263 = vpop.f32.mrb[0].mxu0
      %2264 = vmatprep.mubr.bf16.mxu0 0
      %2265 = vmatmul.mubr.bf16.gmra.mrb[0].mxu0 %v2203
      %v2266 = vpop.f32.mrb[0].mxu0
      %v2267 = vadd.f32 0.0, %v2266
      %v2268 = vpop.f32.mrb[0].mxu0
      %v2269 = vpop.f32.mrb[0].mxu0
      %v2270 = vadd.f32 0.0, %v2269
      %v2271 = vpop.f32.mrb[0].mxu0
      %2272 = vdwg.mxu0
      %v2273 = vadd.f32 %v2035, %v2243
      %v2274 = vadd.f32 %v2036, %v2246
      %v2275 = vadd.f32 %v2037, %v2251
      %v2276 = vadd.f32 %v2038, %v2254
      %v2277 = vadd.f32 %v2039, %v2259
      %v2278 = vadd.f32 %v2040, %v2262
      %v2279 = vadd.f32 %v2041, %v2267
      %v2280 = vadd.f32 %v2042, %v2270
      %s2281 = scalar_lea.vmem %s296, 24
      %v2282 = vld [vmem:[%s2281] sm:$0xf]
      %v2284 = vunpack.c.l.b16 %v1351
      %v2285 = vpack.c.b16 %v1492, %v1491
      %v2286 = vpack.c.b16 %v1494, %v1493
      %v2287 = vpack.c.b16 %v1496, %v1495
      %v2288 = vpack.c.b16 %v2284, %v1497
      %v2290 = vsel %vm1400, %v2285, 0
      %v2293 = vsel %vm1400, %v2286, 0
      %v2296 = vsel %vm1400, %v2287, 0
      %v2299 = vsel %vm1400, %v2288, 0
      %v2302 = vsel %vm1413, %v2282, 0
      %2304 = vmatprep.subr.bf16.mxu0 0
      %2305 = vmatpush1.bf16.msra.mxu0 %v2302
      %2306 = vmatprep.subr.bf16.mxu0 0
      %2307 = vmatpush1.bf16.msra.mxu0 0
      %2308 = vmatprep.subr.bf16.mxu0 0
      %2309 = vmatpush1.bf16.msra.mxu0 0
      %2310 = vmatprep.subr.bf16.mxu0 0
      %2311 = vmatpush1.bf16.msra.mxu0 0
      %2312 = vmatprep.subr.bf16.mxu0 0
      %2313 = vmatpush1.bf16.msra.mxu0 0
      %2314 = vmatprep.subr.bf16.mxu0 0
      %2315 = vmatpush1.bf16.msra.mxu0 0
      %2316 = vmatprep.subr.bf16.mxu0 0
      %2317 = vmatpush1.bf16.msra.mxu0 0
      %2318 = vmatprep.subr.bf16.mxu0 0
      %2319 = vmatpush1.bf16.msra.mxu0 0
      %2320 = vmatprep.subr.bf16.mxu0 0
      %2321 = vmatpush1.bf16.msra.mxu0 0
      %2322 = vmatprep.subr.bf16.mxu0 0
      %2323 = vmatpush1.bf16.msra.mxu0 0
      %2324 = vmatprep.subr.bf16.mxu0 0
      %2325 = vmatpush1.bf16.msra.mxu0 0
      %2326 = vmatprep.subr.bf16.mxu0 0
      %2327 = vmatpush1.bf16.msra.mxu0 0
      %2328 = vmatprep.subr.bf16.mxu0 0
      %2329 = vmatpush1.bf16.msra.mxu0 0
      %2330 = vmatprep.subr.bf16.mxu0 0
      %2331 = vmatpush1.bf16.msra.mxu0 0
      %2332 = vmatprep.subr.bf16.mxu0 0
      %2333 = vmatpush1.bf16.msra.mxu0 0
      %2334 = vmatprep.subr.bf16.mxu0 0
      %2335 = vmatpush1.bf16.msra.mxu0 0
      %2336 = vmatprep.mubr.bf16.mxu0 0
      %2337 = vmatmul.mubr.bf16.gmra.mrb[0].mxu0 %v2290
      %v2338 = vpop.f32.mrb[0].mxu0
      %v2339 = vadd.f32 0.0, %v2338
      %v2340 = vpop.f32.mrb[0].mxu0
      %v2341 = vpop.f32.mrb[0].mxu0
      %v2342 = vadd.f32 0.0, %v2341
      %v2343 = vpop.f32.mrb[0].mxu0
      %2344 = vmatprep.mubr.bf16.mxu0 0
      %2345 = vmatmul.mubr.bf16.gmra.mrb[0].mxu0 %v2293
      %v2346 = vpop.f32.mrb[0].mxu0
      %v2347 = vadd.f32 0.0, %v2346
      %v2348 = vpop.f32.mrb[0].mxu0
      %v2349 = vpop.f32.mrb[0].mxu0
      %v2350 = vadd.f32 0.0, %v2349
      %v2351 = vpop.f32.mrb[0].mxu0
      %2352 = vmatprep.mubr.bf16.mxu0 0
      %2353 = vmatmul.mubr.bf16.gmra.mrb[0].mxu0 %v2296
      %v2354 = vpop.f32.mrb[0].mxu0
      %v2355 = vadd.f32 0.0, %v2354
      %v2356 = vpop.f32.mrb[0].mxu0
      %v2357 = vpop.f32.mrb[0].mxu0
      %v2358 = vadd.f32 0.0, %v2357
      %v2359 = vpop.f32.mrb[0].mxu0
      %2360 = vmatprep.mubr.bf16.mxu0 0
      %2361 = vmatmul.mubr.bf16.gmra.mrb[0].mxu0 %v2299
      %v2362 = vpop.f32.mrb[0].mxu0
      %v2363 = vadd.f32 0.0, %v2362
      %v2364 = vpop.f32.mrb[0].mxu0
      %v2365 = vpop.f32.mrb[0].mxu0
      %v2366 = vadd.f32 0.0, %v2365
      %v2367 = vpop.f32.mrb[0].mxu0
      %2368 = vdwg.mxu0
      %v2369 = vadd.f32 %v2273, %v2339
      %v2370 = vadd.f32 %v2274, %v2342
      %v2371 = vadd.f32 %v2275, %v2347
      %v2372 = vadd.f32 %v2276, %v2350
      %v2373 = vadd.f32 %v2277, %v2355
      %v2374 = vadd.f32 %v2278, %v2358
      %v2375 = vadd.f32 %v2279, %v2363
      %v2376 = vadd.f32 %v2280, %v2366
      %s2377 = scalar_lea.vmem %s296, 28
      %v2378 = vld [vmem:[%s2377] sm:$0xf]
      %v2380 = vunpack.c.l.b16 %v1360
      %v2381 = vpack.c.b16 %v1390, %v1389
      %v2382 = vpack.c.b16 %v1392, %v1391
      %v2383 = vpack.c.b16 %v1394, %v1393
      %v2384 = vpack.c.b16 %v2380, %v1395
      %v2386 = vsel %vm1400, %v2381, 0
      %v2389 = vsel %vm1400, %v2382, 0
      %v2392 = vsel %vm1400, %v2383, 0
      %v2395 = vsel %vm1400, %v2384, 0
      %v2398 = vsel %vm1413, %v2378, 0
      %2400 = vmatprep.subr.bf16.mxu0 0
      %2401 = vmatpush1.bf16.msra.mxu0 %v2398
      %2402 = vmatprep.subr.bf16.mxu0 0
      %2403 = vmatpush1.bf16.msra.mxu0 0
      %2404 = vmatprep.subr.bf16.mxu0 0
      %2405 = vmatpush1.bf16.msra.mxu0 0
      %2406 = vmatprep.subr.bf16.mxu0 0
      %2407 = vmatpush1.bf16.msra.mxu0 0
      %2408 = vmatprep.subr.bf16.mxu0 0
      %2409 = vmatpush1.bf16.msra.mxu0 0
      %2410 = vmatprep.subr.bf16.mxu0 0
      %2411 = vmatpush1.bf16.msra.mxu0 0
      %2412 = vmatprep.subr.bf16.mxu0 0
      %2413 = vmatpush1.bf16.msra.mxu0 0
      %2414 = vmatprep.subr.bf16.mxu0 0
      %2415 = vmatpush1.bf16.msra.mxu0 0
      %2416 = vmatprep.subr.bf16.mxu0 0
      %2417 = vmatpush1.bf16.msra.mxu0 0
      %2418 = vmatprep.subr.bf16.mxu0 0
      %2419 = vmatpush1.bf16.msra.mxu0 0
      %2420 = vmatprep.subr.bf16.mxu0 0
      %2421 = vmatpush1.bf16.msra.mxu0 0
      %2422 = vmatprep.subr.bf16.mxu0 0
      %2423 = vmatpush1.bf16.msra.mxu0 0
      %2424 = vmatprep.subr.bf16.mxu0 0
      %2425 = vmatpush1.bf16.msra.mxu0 0
      %2426 = vmatprep.subr.bf16.mxu0 0
      %2427 = vmatpush1.bf16.msra.mxu0 0
      %2428 = vmatprep.subr.bf16.mxu0 0
      %2429 = vmatpush1.bf16.msra.mxu0 0
      %2430 = vmatprep.subr.bf16.mxu0 0
      %2431 = vmatpush1.bf16.msra.mxu0 0
      %2432 = vmatprep.mubr.bf16.mxu0 0
      %2433 = vmatmul.mubr.bf16.gmra.mrb[0].mxu0 %v2386
      %v2434 = vpop.f32.mrb[0].mxu0
      %v2435 = vadd.f32 0.0, %v2434
      %v2436 = vpop.f32.mrb[0].mxu0
      %v2437 = vpop.f32.mrb[0].mxu0
      %v2438 = vadd.f32 0.0, %v2437
      %v2439 = vpop.f32.mrb[0].mxu0
      %2440 = vmatprep.mubr.bf16.mxu0 0
      %2441 = vmatmul.mubr.bf16.gmra.mrb[0].mxu0 %v2389
      %v2442 = vpop.f32.mrb[0].mxu0
      %v2443 = vadd.f32 0.0, %v2442
      %v2444 = vpop.f32.mrb[0].mxu0
      %v2445 = vpop.f32.mrb[0].mxu0
      %v2446 = vadd.f32 0.0, %v2445
      %v2447 = vpop.f32.mrb[0].mxu0
      %2448 = vmatprep.mubr.bf16.mxu0 0
      %2449 = vmatmul.mubr.bf16.gmra.mrb[0].mxu0 %v2392
      %v2450 = vpop.f32.mrb[0].mxu0
      %v2451 = vadd.f32 0.0, %v2450
      %v2452 = vpop.f32.mrb[0].mxu0
      %v2453 = vpop.f32.mrb[0].mxu0
      %v2454 = vadd.f32 0.0, %v2453
      %v2455 = vpop.f32.mrb[0].mxu0
      %2456 = vmatprep.mubr.bf16.mxu0 0
      %2457 = vmatmul.mubr.bf16.gmra.mrb[0].mxu0 %v2395
      %v2458 = vpop.f32.mrb[0].mxu0
      %v2459 = vadd.f32 0.0, %v2458
      %v2460 = vpop.f32.mrb[0].mxu0
      %v2461 = vpop.f32.mrb[0].mxu0
      %v2462 = vadd.f32 0.0, %v2461
      %v2463 = vpop.f32.mrb[0].mxu0
      %2464 = vdwg.mxu0
      %v2465 = vadd.f32 %v2369, %v2435
      %v2466 = vadd.f32 %v2370, %v2438
      %v2467 = vadd.f32 %v2371, %v2443
      %v2468 = vadd.f32 %v2372, %v2446
      %v2469 = vadd.f32 %v2373, %v2451
      %v2470 = vadd.f32 %v2374, %v2454
      %v2471 = vadd.f32 %v2375, %v2459
      %v2472 = vadd.f32 %v2376, %v2462
      %v2473 = vunpack.c.h.b16 %v1351
      %v2474 = vpack.c.b16 %v2284, %v2284
      %v2475 = vpack.c.b16 %v2473, %v2473
      %v2477 = vshrl.u32 %v2474, 16
      %v2479 = vrot.slane %v2477, 4
      %v2480 = vshll.u32 %v2474, 16
      %v2482 = vrot.slane %v2480, 5
      %v2483 = vor.u32 %v2479, %v2482
      %v2484 = vrot.slane %v2483, 4
      %v2486 = vshll.u32 %v2475, 16
      %v2488 = vrot.slane %v2486, 5
      %v2489 = vsel %vm1608, %v2484, %v2488
      %s2490 = scalar_lea.vmem %s296, 32
      %v2491 = vld [vmem:[%s2490] sm:$0xf]
      %v2492 = vunpack.c.l.b16 %v2489
      %v2493 = vpack.c.b16 %v1725, %v1724
      %v2494 = vpack.c.b16 %v1727, %v1726
      %v2495 = vpack.c.b16 %v1729, %v1728
      %v2496 = vpack.c.b16 %v2492, %v1730
      %v2498 = vsel %vm1400, %v2493, 0
      %v2501 = vsel %vm1400, %v2494, 0
      %v2504 = vsel %vm1400, %v2495, 0
      %v2507 = vsel %vm1400, %v2496, 0
      %v2510 = vsel %vm1413, %v2491, 0
      %2512 = vmatprep.subr.bf16.mxu0 0
      %2513 = vmatpush1.bf16.msra.mxu0 %v2510
      %2514 = vmatprep.subr.bf16.mxu0 0
      %2515 = vmatpush1.bf16.msra.mxu0 0
      %2516 = vmatprep.subr.bf16.mxu0 0
      %2517 = vmatpush1.bf16.msra.mxu0 0
      %2518 = vmatprep.subr.bf16.mxu0 0
      %2519 = vmatpush1.bf16.msra.mxu0 0
      %2520 = vmatprep.subr.bf16.mxu0 0
      %2521 = vmatpush1.bf16.msra.mxu0 0
      %2522 = vmatprep.subr.bf16.mxu0 0
      %2523 = vmatpush1.bf16.msra.mxu0 0
      %2524 = vmatprep.subr.bf16.mxu0 0
      %2525 = vmatpush1.bf16.msra.mxu0 0
      %2526 = vmatprep.subr.bf16.mxu0 0
      %2527 = vmatpush1.bf16.msra.mxu0 0
      %2528 = vmatprep.subr.bf16.mxu0 0
      %2529 = vmatpush1.bf16.msra.mxu0 0
      %2530 = vmatprep.subr.bf16.mxu0 0
      %2531 = vmatpush1.bf16.msra.mxu0 0
      %2532 = vmatprep.subr.bf16.mxu0 0
      %2533 = vmatpush1.bf16.msra.mxu0 0
      %2534 = vmatprep.subr.bf16.mxu0 0
      %2535 = vmatpush1.bf16.msra.mxu0 0
      %2536 = vmatprep.subr.bf16.mxu0 0
      %2537 = vmatpush1.bf16.msra.mxu0 0
      %2538 = vmatprep.subr.bf16.mxu0 0
      %2539 = vmatpush1.bf16.msra.mxu0 0
      %2540 = vmatprep.subr.bf16.mxu0 0
      %2541 = vmatpush1.bf16.msra.mxu0 0
      %2542 = vmatprep.subr.bf16.mxu0 0
      %2543 = vmatpush1.bf16.msra.mxu0 0
      %2544 = vmatprep.mubr.bf16.mxu0 0
      %2545 = vmatmul.mubr.bf16.gmra.mrb[0].mxu0 %v2498
      %v2546 = vpop.f32.mrb[0].mxu0
      %v2547 = vadd.f32 0.0, %v2546
      %v2548 = vpop.f32.mrb[0].mxu0
      %v2549 = vpop.f32.mrb[0].mxu0
      %v2550 = vadd.f32 0.0, %v2549
      %v2551 = vpop.f32.mrb[0].mxu0
      %2552 = vmatprep.mubr.bf16.mxu0 0
      %2553 = vmatmul.mubr.bf16.gmra.mrb[0].mxu0 %v2501
      %v2554 = vpop.f32.mrb[0].mxu0
      %v2555 = vadd.f32 0.0, %v2554
      %v2556 = vpop.f32.mrb[0].mxu0
      %v2557 = vpop.f32.mrb[0].mxu0
      %v2558 = vadd.f32 0.0, %v2557
      %v2559 = vpop.f32.mrb[0].mxu0
      %2560 = vmatprep.mubr.bf16.mxu0 0
      %2561 = vmatmul.mubr.bf16.gmra.mrb[0].mxu0 %v2504
      %v2562 = vpop.f32.mrb[0].mxu0
      %v2563 = vadd.f32 0.0, %v2562
      %v2564 = vpop.f32.mrb[0].mxu0
      %v2565 = vpop.f32.mrb[0].mxu0
      %v2566 = vadd.f32 0.0, %v2565
      %v2567 = vpop.f32.mrb[0].mxu0
      %2568 = vmatprep.mubr.bf16.mxu0 0
      %2569 = vmatmul.mubr.bf16.gmra.mrb[0].mxu0 %v2507
      %v2570 = vpop.f32.mrb[0].mxu0
      %v2571 = vadd.f32 0.0, %v2570
      %v2572 = vpop.f32.mrb[0].mxu0
      %v2573 = vpop.f32.mrb[0].mxu0
      %v2574 = vadd.f32 0.0, %v2573
      %v2575 = vpop.f32.mrb[0].mxu0
      %2576 = vdwg.mxu0
      %v2577 = vadd.f32 %v2465, %v2547
      %v2578 = vadd.f32 %v2466, %v2550
      %v2579 = vadd.f32 %v2467, %v2555
      %v2580 = vadd.f32 %v2468, %v2558
      %v2581 = vadd.f32 %v2469, %v2563
      %v2582 = vadd.f32 %v2470, %v2566
      %v2583 = vadd.f32 %v2471, %v2571
      %v2584 = vadd.f32 %v2472, %v2574
      %v2585 = vld [vmem:[%s299] sm:$0x1]
      %v2587 = vlaneseq
      %v2588 = vshrl.u32 %v2587, 7
      %v2589 = vsub.s32 0, %v2588
      %v2590 = vrot.slane %v2585, %v2589
      %v2592 = vadd.f32 %v2577, %v2590
      %v2593 = vadd.f32 %v2578, %v2590
      %v2594 = vadd.f32 %v2579, %v2590
      %v2595 = vadd.f32 %v2580, %v2590
      %v2596 = vadd.f32 %v2581, %v2590
      %v2597 = vadd.f32 %v2582, %v2590
      %v2598 = vadd.f32 %v2583, %v2590
      %v2599 = vadd.f32 %v2584, %v2590
      %v2600 = vmul.f32 %v2592, 0.5
      %v2601 = vmul.f32 %v2593, 0.5
      %v2602 = vmul.f32 %v2594, 0.5
      %v2603 = vmul.f32 %v2595, 0.5
      %v2604 = vmul.f32 %v2596, 0.5
      %v2605 = vmul.f32 %v2597, 0.5
      %v2606 = vmul.f32 %v2598, 0.5
      %v2607 = vmul.f32 %v2599, 0.5
      %v2608 = vtanh.pop %v2600
      %v2609 = vtanh.pop %v2601
      %v2610 = vtanh.pop %v2602
      %v2611 = vtanh.pop %v2603
      %v2612 = vtanh.pop %v2604
      %v2613 = vtanh.pop %v2605
      %v2614 = vtanh.pop %v2606
      %v2615 = vtanh.pop %v2607
      %v2616 = vmul.f32 %v2608, 0.5
      %v2617 = vmul.f32 %v2609, 0.5
      %v2618 = vmul.f32 %v2610, 0.5
      %v2619 = vmul.f32 %v2611, 0.5
      %v2620 = vmul.f32 %v2612, 0.5
      %v2621 = vmul.f32 %v2613, 0.5
      %v2622 = vmul.f32 %v2614, 0.5
      %v2623 = vmul.f32 %v2615, 0.5
      %v2624 = vadd.f32 %v2616, 0.5
      %v2625 = vadd.f32 %v2617, 0.5
      %v2626 = vadd.f32 %v2618, 0.5
      %v2627 = vadd.f32 %v2619, 0.5
      %v2628 = vadd.f32 %v2620, 0.5
      %v2629 = vadd.f32 %v2621, 0.5
      %v2630 = vadd.f32 %v2622, 0.5
      %v2631 = vadd.f32 %v2623, 0.5
      %v2632 = vmul.f32 %v2592, %v2624
      %v2633 = vmul.f32 %v2593, %v2625
      %v2634 = vmul.f32 %v2594, %v2626
      %v2635 = vmul.f32 %v2595, %v2627
      %v2636 = vmul.f32 %v2596, %v2628
      %v2637 = vmul.f32 %v2597, %v2629
      %v2638 = vmul.f32 %v2598, %v2630
      %v2639 = vmul.f32 %v2599, %v2631
      %v2640 = vpack.c.bf16 %v2632, %v2632
      %v2641 = vpack.c.bf16 %v2633, %v2633
      %v2642 = vpack.c.bf16 %v2634, %v2634
      %v2643 = vpack.c.bf16 %v2635, %v2635
      %v2644 = vpack.c.bf16 %v2636, %v2636
      %v2645 = vpack.c.bf16 %v2637, %v2637
      %v2646 = vpack.c.bf16 %v2638, %v2638
      %v2647 = vpack.c.bf16 %v2639, %v2639
      %vm2648 = vcmask 125952
      %2649 = vst.msk [vmem:[%s307] sm:$0xf] %vm2648, %v2640
      %2650 = vst.msk [vmem:[%s307 + $0x4] sm:$0xf] %vm2648, %v2641
      %2651 = vst.msk [vmem:[%s307 + $0x8] sm:$0xf] %vm2648, %v2642
      %2652 = vst.msk [vmem:[%s307 + $0xc] sm:$0xf] %vm2648, %v2643
      %2653 = vst.msk [vmem:[%s307 + $0x10] sm:$0xf] %vm2648, %v2644
      %2654 = vst.msk [vmem:[%s307 + $0x14] sm:$0xf] %vm2648, %v2645
      %2655 = vst.msk [vmem:[%s307 + $0x18] sm:$0xf] %vm2648, %v2646
      %2656 = vst.msk [vmem:[%s307 + $0x1c] sm:$0xf] %vm2648, %v2647
      %p2657 = scmp.lt.s32.totalorder %s21, 1
      %s2658 = scalar_select %p2657, %s21, 1
      %p2659 = scmp.lt.s32.totalorder %s22, 0
      %s2660 = scalar_select %p2659, %s22, 0
      %s2661 = smul.addr %s2658, 8
      %s2662 = sadd.s32 %s2660, %s2661
      %s2663 = smul.addr %s2662, 4
      %s2664 = scalar_lea.vmem %s6, %s2663
      // Predicated region
      $region45: #{forward.5} parent=43 // pred_check
        %p2665 = pneg %p190
      $region46: #{forward.5} parent=43 // pred_check_branch
        %2667 = sbr.rel (%p2665) target = $region48
      $region47: #{forward.5} parent=43 // pred_region
        _
      $region48: #{forward.5} parent=43 // pred_fallthru
        _
    $region44: #{forward.5} parent=5 // pred_fallthru
      _
    %p2668 = scmp.le.s32.totalorder 2, %s12
    // Predicated region
    $region49: #{forward.5} parent=5 // pred_check
      %p2669 = pneg %p2668
    $region50: #{forward.5} parent=5 // pred_check_branch
      %2671 = sbr.rel (%p2669) target = $region52
    $region51: #{forward.5} parent=5 // pred_region
      %s2672 = ssub.s32 %s12, 2
      // Predicated region
      $region53: #{forward.5} parent=51 // pred_check
        %p2673 = pneg %p196
      $region54: #{forward.5} parent=51 // pred_check_branch
        %2675 = sbr.rel (%p2673) target = $region56
      $region55: #{forward.5} parent=51 // pred_region
        %p2676 = scmp.lt.s32.totalorder %s23, 1
        %s2677 = scalar_select %p2676, %s23, 1
        %p2678 = scmp.lt.s32.totalorder %s24, 0
        %s2679 = scalar_select %p2678, %s24, 0
        %s2680 = smul.addr %s2677, 8
        %s2681 = sadd.s32 %s2679, %s2680
        %s2682 = smul.addr %s2681, 4
        %s2683 = scalar_lea.vmem %s6, %s2682
      $region56: #{forward.5} parent=51 // pred_fallthru
        _
    $region52: #{forward.5} parent=5 // pred_fallthru
      _
  $region6: #{forward.5} parent=0 // loop_footer
    %s16 = sadd.s32 1, %s12
  $region7: #{forward.5} parent=0 // loop_footer_branch
    %11 = sbr.rel target = $region3
  $region8: #{forward.5} parent=0 // loop_exit
    _

// kernel: forward.8
$region0: #{forward.8}
  #allocation0 [shape = 'u32[]', space=smem, size = 0x4, offset = 0x4, fixed_abs, tag = 'smem constant byte address 0x4 - core index']
  #allocation1 [shape = 'u32[144,128]{1,0:T(1,128)}', space=vmem, size = 0x12000, scoped, tag = 'internal scratch']
  %s0 = inlined_call_operand.vmem [shape: bf16[2,10,10,16], index: 0, kind: input, shape index: {}]
  %s1 = inlined_call_operand.vmem [shape: f32[1,16], index: 1, kind: input, shape index: {}]
  %s2 = inlined_call_operand.vmem [shape: f32[1,16], index: 2, kind: input, shape index: {}]
  %s3 = inlined_call_operand.vmem [shape: f32[10,10,1], index: 3, kind: input, shape index: {}]
  %s4 = inlined_call_operand.vmem [shape: bf16[9,16,16], index: 4, kind: input, shape index: {}]
  %s5 = inlined_call_operand.vmem [shape: f32[1,16], index: 5, kind: input, shape index: {}]
  %s6 = inlined_call_operand.vmem [shape: bf16[2,8,8,16], index: 6, kind: output, shape index: {}]
  %s7 = sld [smem:[#allocation0]]
  $region57: #{forward.8} parent=0
    _
  %s9 = ssub.s32 1, %s7
  %s10 = scalar_select 0, %s9, %s7
  loop: start=0, step=1, limit=4
  $region2: #{forward.8} parent=0 // loop_pre_header
    _
  $region3: #{forward.8} parent=0 // loop_header
    %s12 = sphi 0, %s16
    %p13 = scmp.ge.s32.totalorder %s12, 4
    %s19 = sphi 0, %s31
    %s20 = sphi 0, %s27
    %s21 = sphi 0, %s19
    %s22 = sphi 0, %s20
    %s23 = sphi 0, %s21
    %s24 = sphi 0, %s22
    %s34 = sphi 0, %s36
    %s37 = sphi 0, %s34
    %s38 = sphi 0, %s37
    %s54 = sphi 0, %s38
    %s58 = sphi 0, %s58
    %s60 = sphi 0, %s58
    %s61 = sphi 0, %s60
    %s75 = sphi 0, %s61
    %s79 = sphi 0, %s79
    %s81 = sphi 0, %s79
    %s82 = sphi 0, %s81
    %s96 = sphi 0, %s82
    %s100 = sphi 0, %s100
    %s102 = sphi 0, %s100
    %s103 = sphi 0, %s102
    %s117 = sphi 0, %s103
    %s123 = sphi 0, %s125
    %s126 = sphi 0, %s123
    %s127 = sphi 0, %s126
    %s143 = sphi 0, %s127
    %s149 = sphi 0, %s151
    %s152 = sphi 0, %s149
    %s153 = sphi 0, %s152
    %s169 = sphi 0, %s153
    %s177 = sphi 0, %s179
    %s180 = sphi 0, %s177
    %s181 = sphi 0, %s180
    %s197 = sphi 0, %s181
  $region4: #{forward.8} parent=0 // loop_header_branch
    %15 = sbr.rel (%p13) target = $region8
  $region5: #{forward.8} parent=0 // loop_body
    %s17 = ssub.s32 %s12, 1
    %s18 = ssub.s32 %s12, 2
    %s25 = sadd.s32 1, %s20
    %p26 = scmp.ge.s32.totalorder %s25, 1
    %s27 = scalar_select %p26, 0, %s25
    %s28 = sadd.s32 1, %s19
    %s29 = scalar_select %p26, %s28, %s19
    %p30 = scmp.ge.s32.totalorder %s29, 2
    %s31 = scalar_select %p30, 0, %s29
    %s32 = ssub.s32 %s19, %s31
    %p33 = scmp.eq.s32.totalorder %s32, 0
    %s35 = sadd.s32 %s34, 1
    %s36 = scalar_select %p33, %s34, %s35
    %p39 = pneg %p33
    %p40 = scmp.eq.s32.totalorder %s12, 1
    %p41 = por %p39, %p40
    %p42 = scmp.ne.s32.totalorder %s34, %s37
    %p43 = scmp.eq.s32.totalorder %s12, 0
    %p44 = por %p42, %p43
    %p45 = scmp.ne.s32.totalorder %s34, %s37
    %p46 = scmp.eq.s32.totalorder %s17, 1
    %p47 = por %p45, %p46
    %p48 = scmp.ne.s32.totalorder %s37, %s38
    %p49 = scmp.eq.s32.totalorder %s17, 0
    %p50 = por %p48, %p49
    %p51 = scmp.ne.s32.totalorder %s37, %s38
    %p52 = scmp.eq.s32.totalorder %s18, 1
    %p53 = por %p51, %p52
    %p55 = scmp.ne.s32.totalorder %s38, %s54
    %p56 = scmp.eq.s32.totalorder %s18, 0
    %p57 = por %p55, %p56
    %s59 = sadd.s32 %s58, 1
    %p62 = scmp.eq.s32.totalorder %s12, 1
    %p63 = scmp.ne.s32.totalorder %s58, %s60
    %p64 = scmp.eq.s32.totalorder %s12, 0
    %p65 = por %p63, %p64
    %p66 = scmp.ne.s32.totalorder %s58, %s60
    %p67 = scmp.eq.s32.totalorder %s17, 1
    %p68 = por %p66, %p67
    %p69 = scmp.ne.s32.totalorder %s60, %s61
    %p70 = scmp.eq.s32.totalorder %s17, 0
    %p71 = por %p69, %p70
    %p72 = scmp.ne.s32.totalorder %s60, %s61
    %p73 = scmp.eq.s32.totalorder %s18, 1
    %p74 = por %p72, %p73
    %p76 = scmp.ne.s32.totalorder %s61, %s75
    %p77 = scmp.eq.s32.totalorder %s18, 0
    %p78 = por %p76, %p77
    %s80 = sadd.s32 %s79, 1
    %p83 = scmp.eq.s32.totalorder %s12, 1
    %p84 = scmp.ne.s32.totalorder %s79, %s81
    %p85 = scmp.eq.s32.totalorder %s12, 0
    %p86 = por %p84, %p85
    %p87 = scmp.ne.s32.totalorder %s79, %s81
    %p88 = scmp.eq.s32.totalorder %s17, 1
    %p89 = por %p87, %p88
    %p90 = scmp.ne.s32.totalorder %s81, %s82
    %p91 = scmp.eq.s32.totalorder %s17, 0
    %p92 = por %p90, %p91
    %p93 = scmp.ne.s32.totalorder %s81, %s82
    %p94 = scmp.eq.s32.totalorder %s18, 1
    %p95 = por %p93, %p94
    %p97 = scmp.ne.s32.totalorder %s82, %s96
    %p98 = scmp.eq.s32.totalorder %s18, 0
    %p99 = por %p97, %p98
    %s101 = sadd.s32 %s100, 1
    %p104 = scmp.eq.s32.totalorder %s12, 1
    %p105 = scmp.ne.s32.totalorder %s100, %s102
    %p106 = scmp.eq.s32.totalorder %s12, 0
    %p107 = por %p105, %p106
    %p108 = scmp.ne.s32.totalorder %s100, %s102
    %p109 = scmp.eq.s32.totalorder %s17, 1
    %p110 = por %p108, %p109
    %p111 = scmp.ne.s32.totalorder %s102, %s103
    %p112 = scmp.eq.s32.totalorder %s17, 0
    %p113 = por %p111, %p112
    %p114 = scmp.ne.s32.totalorder %s102, %s103
    %p115 = scmp.eq.s32.totalorder %s18, 1
    %p116 = por %p114, %p115
    %p118 = scmp.ne.s32.totalorder %s103, %s117
    %p119 = scmp.eq.s32.totalorder %s18, 0
    %p120 = por %p118, %p119
    %s121 = ssub.s32 %s20, %s27
    %p122 = scmp.eq.s32.totalorder %s121, 0
    %s124 = sadd.s32 %s123, 1
    %s125 = scalar_select %p122, %s123, %s124
    %p128 = pneg %p122
    %p129 = scmp.eq.s32.totalorder %s12, 1
    %p130 = por %p128, %p129
    %p131 = scmp.ne.s32.totalorder %s123, %s126
    %p132 = scmp.eq.s32.totalorder %s12, 0
    %p133 = por %p131, %p132
    %p134 = scmp.ne.s32.totalorder %s123, %s126
    %p135 = scmp.eq.s32.totalorder %s17, 1
    %p136 = por %p134, %p135
    %p137 = scmp.ne.s32.totalorder %s126, %s127
    %p138 = scmp.eq.s32.totalorder %s17, 0
    %p139 = por %p137, %p138
    %p140 = scmp.ne.s32.totalorder %s126, %s127
    %p141 = scmp.eq.s32.totalorder %s18, 1
    %p142 = por %p140, %p141
    %p144 = scmp.ne.s32.totalorder %s127, %s143
    %p145 = scmp.eq.s32.totalorder %s18, 0
    %p146 = por %p144, %p145
    %s147 = ssub.s32 %s20, %s27
    %p148 = scmp.eq.s32.totalorder %s147, 0
    %s150 = sadd.s32 %s149, 1
    %s151 = scalar_select %p148, %s149, %s150
    %p154 = pneg %p148
    %p155 = scmp.eq.s32.totalorder %s12, 1
    %p156 = por %p154, %p155
    %p157 = scmp.ne.s32.totalorder %s149, %s152
    %p158 = scmp.eq.s32.totalorder %s12, 0
    %p159 = por %p157, %p158
    %p160 = scmp.ne.s32.totalorder %s149, %s152
    %p161 = scmp.eq.s32.totalorder %s17, 1
    %p162 = por %p160, %p161
    %p163 = scmp.ne.s32.totalorder %s152, %s153
    %p164 = scmp.eq.s32.totalorder %s17, 0
    %p165 = por %p163, %p164
    %p166 = scmp.ne.s32.totalorder %s152, %s153
    %p167 = scmp.eq.s32.totalorder %s18, 1
    %p168 = por %p166, %p167
    %p170 = scmp.ne.s32.totalorder %s153, %s169
    %p171 = scmp.eq.s32.totalorder %s18, 0
    %p172 = por %p170, %p171
    %s173 = ssub.s32 %s19, %s31
    %s174 = ssub.s32 %s20, %s27
    %s175 = sor.u32 %s173, %s174
    %p176 = scmp.eq.s32.totalorder %s175, 0
    %s178 = sadd.s32 %s177, 1
    %s179 = scalar_select %p176, %s177, %s178
    %p182 = pneg %p176
    %p183 = scmp.eq.s32.totalorder %s12, 1
    %p184 = por %p182, %p183
    %p185 = scmp.ne.s32.totalorder %s177, %s180
    %p186 = scmp.eq.s32.totalorder %s12, 0
    %p187 = por %p185, %p186
    %p188 = scmp.ne.s32.totalorder %s177, %s180
    %p189 = scmp.eq.s32.totalorder %s17, 1
    %p190 = por %p188, %p189
    %p191 = scmp.ne.s32.totalorder %s180, %s181
    %p192 = scmp.eq.s32.totalorder %s17, 0
    %p193 = por %p191, %p192
    %p194 = scmp.ne.s32.totalorder %s180, %s181
    %p195 = scmp.eq.s32.totalorder %s18, 1
    %p196 = por %p194, %p195
    %p198 = scmp.ne.s32.totalorder %s181, %s197
    %p199 = scmp.eq.s32.totalorder %s18, 0
    %p200 = por %p198, %p199
    %p201 = scmp.le.s32.totalorder 1, %s12
    %p202 = scmp.lt.s32.totalorder %s12, 3
    %p203 = pnand %p201, %p202
    %p204 = pneg %p203
    // Predicated region
    $region9: #{forward.8} parent=5 // pred_check
      _
    $region10: #{forward.8} parent=5 // pred_check_branch
      %206 = sbr.rel (%p203) target = $region12
    $region11: #{forward.8} parent=5 // pred_region
      %s207 = ssub.s32 %s12, 1
      // Predicated region
      $region13: #{forward.8} parent=11 // pred_check
        %p208 = pneg %p71
      $region14: #{forward.8} parent=11 // pred_check_branch
        %210 = sbr.rel (%p208) target = $region16
      $region15: #{forward.8} parent=11 // pred_region
        _
      $region16: #{forward.8} parent=11 // pred_fallthru
        _
      // Predicated region
      $region17: #{forward.8} parent=11 // pred_check
        %p211 = pneg %p92
      $region18: #{forward.8} parent=11 // pred_check_branch
        %213 = sbr.rel (%p211) target = $region20
      $region19: #{forward.8} parent=11 // pred_region
        _
      $region20: #{forward.8} parent=11 // pred_fallthru
        _
      // Predicated region
      $region21: #{forward.8} parent=11 // pred_check
        %p214 = pneg %p113
      $region22: #{forward.8} parent=11 // pred_check_branch
        %216 = sbr.rel (%p214) target = $region24
      $region23: #{forward.8} parent=11 // pred_region
        _
      $region24: #{forward.8} parent=11 // pred_fallthru
        _
      // Predicated region
      $region25: #{forward.8} parent=11 // pred_check
        %p217 = pneg %p139
      $region26: #{forward.8} parent=11 // pred_check_branch
        %219 = sbr.rel (%p217) target = $region28
      $region27: #{forward.8} parent=11 // pred_region
        %p220 = scmp.lt.s32.totalorder %s22, 0
        %s221 = scalar_select %p220, %s22, 0
        %s222 = smul.addr %s221, 4
        %s223 = scalar_lea.vmem %s4, %s222
      $region28: #{forward.8} parent=11 // pred_fallthru
        _
      // Predicated region
      $region29: #{forward.8} parent=11 // pred_check
        %p224 = pneg %p165
      $region30: #{forward.8} parent=11 // pred_check_branch
        %226 = sbr.rel (%p224) target = $region32
      $region31: #{forward.8} parent=11 // pred_region
        %p227 = scmp.lt.s32.totalorder %s22, 0
        %s228 = scalar_select %p227, %s22, 0
        %s229 = scalar_lea.vmem %s5, %s228
      $region32: #{forward.8} parent=11 // pred_fallthru
        _
    $region12: #{forward.8} parent=5 // pred_fallthru
      _
    %p230 = scmp.lt.s32.totalorder %s12, 2
    // Predicated region
    $region33: #{forward.8} parent=5 // pred_check
      %p231 = pneg %p230
    $region34: #{forward.8} parent=5 // pred_check_branch
      %233 = sbr.rel (%p231) target = $region36
    $region35: #{forward.8} parent=5 // pred_region
      // Predicated region
      $region37: #{forward.8} parent=35 // pred_check
        %p234 = pneg %p44
      $region38: #{forward.8} parent=35 // pred_check_branch
        %236 = sbr.rel (%p234) target = $region40
      $region39: #{forward.8} parent=35 // pred_region
        %p237 = scmp.lt.s32.totalorder %s19, 1
        %s238 = scalar_select %p237, %s19, 1
        %s239 = smul.addr %s238, 20
        %s240 = smul.addr %s239, 4
        %s241 = scalar_lea.vmem %s0, %s240
      $region40: #{forward.8} parent=35 // pred_fallthru
        _
    $region36: #{forward.8} parent=5 // pred_fallthru
      _
    %p242 = scmp.le.s32.totalorder 1, %s12
    %p243 = scmp.lt.s32.totalorder %s12, 3
    %p244 = pnand %p242, %p243
    %p245 = pneg %p244
    // Predicated region
    $region41: #{forward.8} parent=5 // pred_check
      _
    $region42: #{forward.8} parent=5 // pred_check_branch
      %247 = sbr.rel (%p244) target = $region44
    $region43: #{forward.8} parent=5 // pred_region
      %s248 = ssub.s32 %s12, 1
      %p249 = scmp.lt.s32.totalorder %s21, 1
      %s250 = scalar_select %p249, %s21, 1
      %s251 = smul.addr %s250, 20
      %s252 = smul.addr %s251, 4
      %s253 = scalar_lea.vmem %s0, %s252
      %p254 = pneg %p50
      %p255 = pneg %p47
      %p256 = pneg %p71
      %p257 = pneg %p68
      %p258 = pneg %p92
      %p259 = pneg %p89
      %p260 = pneg %p113
      %p261 = pneg %p110
      %p262 = scmp.lt.s32.totalorder %s22, 0
      %s263 = scalar_select %p262, %s22, 0
      %s264 = smul.addr %s263, 4
      %s265 = scalar_lea.vmem %s4, %s264
      %p266 = pneg %p139
      %p267 = pneg %p136
      %p268 = scmp.lt.s32.totalorder %s22, 0
      %s269 = scalar_select %p268, %s22, 0
      %s270 = scalar_lea.vmem %s5, %s269
      %p271 = pneg %p165
      %p272 = pneg %p162
      %p273 = pneg %p193
      %p274 = pneg %p190
      %p275 = scmp.lt.s32.totalorder %s21, 1
      %s276 = scalar_select %p275, %s21, 1
      %p277 = scmp.lt.s32.totalorder %s22, 0
      %s278 = scalar_select %p277, %s22, 0
      %s279 = smul.addr %s276, 8
      %s280 = sadd.s32 %s278, %s279
      %s281 = smul.addr %s280, 4
      %s282 = scalar_lea.vmem %s6, %s281
      %p283 = scmp.lt.s32.totalorder %s21, 1
      %s284 = scalar_select %p283, %s21, 1
      %s285 = smul.addr %s284, 20
      %s286 = smul.addr %s285, 4
      %s287 = scalar_lea.vmem %s0, %s286
      %p288 = scmp.lt.s32.totalorder %s22, 0
      %s289 = scalar_select %p288, %s22, 0
      %s290 = smul.addr %s289, 4
      %s291 = scalar_lea.vmem %s4, %s290
      %p292 = scmp.lt.s32.totalorder %s22, 0
      %s293 = scalar_select %p292, %s22, 0
      %s294 = scalar_lea.vmem %s5, %s293
      %p295 = scmp.lt.s32.totalorder %s21, 1
      %s296 = scalar_select %p295, %s21, 1
      %p297 = scmp.lt.s32.totalorder %s22, 0
      %s298 = scalar_select %p297, %s22, 0
      %s299 = smul.addr %s296, 8
      %s300 = sadd.s32 %s298, %s299
      %s301 = smul.addr %s300, 4
      %s302 = scalar_lea.vmem %s6, %s301
      %v304 = vld [vmem:[%s287] sm:$0xf]
      %v305 = vld [vmem:[%s287 + $0x4] sm:$0x1]
      %v306 = vld [vmem:[%s287 + $0x8] sm:$0xf]
      %v307 = vld [vmem:[%s287 + $0xc] sm:$0x1]
      %v308 = vld [vmem:[%s287 + $0x10] sm:$0xf]
      %v309 = vld [vmem:[%s287 + $0x14] sm:$0x1]
      %v310 = vld [vmem:[%s287 + $0x18] sm:$0xf]
      %v311 = vld [vmem:[%s287 + $0x1c] sm:$0x1]
      %v312 = vld [vmem:[%s287 + $0x20] sm:$0xf]
      %v313 = vld [vmem:[%s287 + $0x24] sm:$0x1]
      %v314 = vld [vmem:[%s287 + $0x28] sm:$0xf]
      %v315 = vld [vmem:[%s287 + $0x2c] sm:$0x1]
      %v316 = vld [vmem:[%s287 + $0x30] sm:$0xf]
      %v317 = vld [vmem:[%s287 + $0x34] sm:$0x1]
      %v318 = vld [vmem:[%s287 + $0x38] sm:$0xf]
      %v319 = vld [vmem:[%s287 + $0x3c] sm:$0x1]
      %v320 = vld [vmem:[%s287 + $0x40] sm:$0xf]
      %v321 = vld [vmem:[%s287 + $0x44] sm:$0x1]
      %v322 = vld [vmem:[%s287 + $0x48] sm:$0xf]
      %v323 = vld [vmem:[%s287 + $0x4c] sm:$0x1]
      %v324 = vunpack.c.l.bf16 %v304
      %v325 = vunpack.c.l.bf16 %v305
      %v326 = vunpack.c.l.bf16 %v306
      %v327 = vunpack.c.l.bf16 %v307
      %v328 = vunpack.c.l.bf16 %v308
      %v329 = vunpack.c.l.bf16 %v309
      %v330 = vunpack.c.l.bf16 %v310
      %v331 = vunpack.c.l.bf16 %v311
      %v332 = vunpack.c.l.bf16 %v312
      %v333 = vunpack.c.l.bf16 %v313
      %v334 = vunpack.c.l.bf16 %v314
      %v335 = vunpack.c.l.bf16 %v315
      %v336 = vunpack.c.l.bf16 %v316
      %v337 = vunpack.c.l.bf16 %v317
      %v338 = vunpack.c.l.bf16 %v318
      %v339 = vunpack.c.l.bf16 %v319
      %v340 = vunpack.c.l.bf16 %v320
      %v341 = vunpack.c.l.bf16 %v321
      %v342 = vunpack.c.l.bf16 %v322
      %v343 = vunpack.c.l.bf16 %v323
      %v344 = vld [vmem:[%s1] sm:$0x1]
      %v346 = vlaneseq
      %v347 = vshrl.u32 %v346, 7
      %v348 = vsub.s32 0, %v347
      %v349 = vrot.slane %v344, %v348
      %v351 = vmul.f32 %v324, %v349
      %v352 = vmul.f32 %v325, %v349
      %v353 = vmul.f32 %v326, %v349
      %v354 = vmul.f32 %v327, %v349
      %v355 = vmul.f32 %v328, %v349
      %v356 = vmul.f32 %v329, %v349
      %v357 = vmul.f32 %v330, %v349
      %v358 = vmul.f32 %v331, %v349
      %v359 = vmul.f32 %v332, %v349
      %v360 = vmul.f32 %v333, %v349
      %v361 = vmul.f32 %v334, %v349
      %v362 = vmul.f32 %v335, %v349
      %v363 = vmul.f32 %v336, %v349
      %v364 = vmul.f32 %v337, %v349
      %v365 = vmul.f32 %v338, %v349
      %v366 = vmul.f32 %v339, %v349
      %v367 = vmul.f32 %v340, %v349
      %v368 = vmul.f32 %v341, %v349
      %v369 = vmul.f32 %v342, %v349
      %v370 = vmul.f32 %v343, %v349
      %v371 = vld [vmem:[%s2] sm:$0x1]
      %v373 = vlaneseq
      %v374 = vshrl.u32 %v373, 7
      %v375 = vsub.s32 0, %v374
      %v376 = vrot.slane %v371, %v375
      %v378 = vadd.f32 %v351, %v376
      %v379 = vadd.f32 %v352, %v376
      %v380 = vadd.f32 %v353, %v376
      %v381 = vadd.f32 %v354, %v376
      %v382 = vadd.f32 %v355, %v376
      %v383 = vadd.f32 %v356, %v376
      %v384 = vadd.f32 %v357, %v376
      %v385 = vadd.f32 %v358, %v376
      %v386 = vadd.f32 %v359, %v376
      %v387 = vadd.f32 %v360, %v376
      %v388 = vadd.f32 %v361, %v376
      %v389 = vadd.f32 %v362, %v376
      %v390 = vadd.f32 %v363, %v376
      %v391 = vadd.f32 %v364, %v376
      %v392 = vadd.f32 %v365, %v376
      %v393 = vadd.f32 %v366, %v376
      %v394 = vadd.f32 %v367, %v376
      %v395 = vadd.f32 %v368, %v376
      %v396 = vadd.f32 %v369, %v376
      %v397 = vadd.f32 %v370, %v376
      %v398 = vmul.f32 %v378, 0.5
      %v399 = vmul.f32 %v379, 0.5
      %v400 = vmul.f32 %v380, 0.5
      %v401 = vmul.f32 %v381, 0.5
      %v402 = vmul.f32 %v382, 0.5
      %v403 = vmul.f32 %v383, 0.5
      %v404 = vmul.f32 %v384, 0.5
      %v405 = vmul.f32 %v385, 0.5
      %v406 = vmul.f32 %v386, 0.5
      %v407 = vmul.f32 %v387, 0.5
      %v408 = vmul.f32 %v388, 0.5
      %v409 = vmul.f32 %v389, 0.5
      %v410 = vmul.f32 %v390, 0.5
      %v411 = vmul.f32 %v391, 0.5
      %v412 = vmul.f32 %v392, 0.5
      %v413 = vmul.f32 %v393, 0.5
      %v414 = vmul.f32 %v394, 0.5
      %v415 = vmul.f32 %v395, 0.5
      %v416 = vmul.f32 %v396, 0.5
      %v417 = vmul.f32 %v397, 0.5
      %v418 = vtanh.pop %v398
      %v419 = vtanh.pop %v399
      %v420 = vtanh.pop %v400
      %v421 = vtanh.pop %v401
      %v422 = vtanh.pop %v402
      %v423 = vtanh.pop %v403
      %v424 = vtanh.pop %v404
      %v425 = vtanh.pop %v405
      %v426 = vtanh.pop %v406
      %v427 = vtanh.pop %v407
      %v428 = vtanh.pop %v408
      %v429 = vtanh.pop %v409
      %v430 = vtanh.pop %v410
      %v431 = vtanh.pop %v411
      %v432 = vtanh.pop %v412
      %v433 = vtanh.pop %v413
      %v434 = vtanh.pop %v414
      %v435 = vtanh.pop %v415
      %v436 = vtanh.pop %v416
      %v437 = vtanh.pop %v417
      %v438 = vmul.f32 %v418, 0.5
      %v439 = vmul.f32 %v419, 0.5
      %v440 = vmul.f32 %v420, 0.5
      %v441 = vmul.f32 %v421, 0.5
      %v442 = vmul.f32 %v422, 0.5
      %v443 = vmul.f32 %v423, 0.5
      %v444 = vmul.f32 %v424, 0.5
      %v445 = vmul.f32 %v425, 0.5
      %v446 = vmul.f32 %v426, 0.5
      %v447 = vmul.f32 %v427, 0.5
      %v448 = vmul.f32 %v428, 0.5
      %v449 = vmul.f32 %v429, 0.5
      %v450 = vmul.f32 %v430, 0.5
      %v451 = vmul.f32 %v431, 0.5
      %v452 = vmul.f32 %v432, 0.5
      %v453 = vmul.f32 %v433, 0.5
      %v454 = vmul.f32 %v434, 0.5
      %v455 = vmul.f32 %v435, 0.5
      %v456 = vmul.f32 %v436, 0.5
      %v457 = vmul.f32 %v437, 0.5
      %v458 = vadd.f32 %v438, 0.5
      %v459 = vadd.f32 %v439, 0.5
      %v460 = vadd.f32 %v440, 0.5
      %v461 = vadd.f32 %v441, 0.5
      %v462 = vadd.f32 %v442, 0.5
      %v463 = vadd.f32 %v443, 0.5
      %v464 = vadd.f32 %v444, 0.5
      %v465 = vadd.f32 %v445, 0.5
      %v466 = vadd.f32 %v446, 0.5
      %v467 = vadd.f32 %v447, 0.5
      %v468 = vadd.f32 %v448, 0.5
      %v469 = vadd.f32 %v449, 0.5
      %v470 = vadd.f32 %v450, 0.5
      %v471 = vadd.f32 %v451, 0.5
      %v472 = vadd.f32 %v452, 0.5
      %v473 = vadd.f32 %v453, 0.5
      %v474 = vadd.f32 %v454, 0.5
      %v475 = vadd.f32 %v455, 0.5
      %v476 = vadd.f32 %v456, 0.5
      %v477 = vadd.f32 %v457, 0.5
      %v478 = vmul.f32 %v378, %v458
      %v479 = vmul.f32 %v379, %v459
      %v480 = vmul.f32 %v380, %v460
      %v481 = vmul.f32 %v381, %v461
      %v482 = vmul.f32 %v382, %v462
      %v483 = vmul.f32 %v383, %v463
      %v484 = vmul.f32 %v384, %v464
      %v485 = vmul.f32 %v385, %v465
      %v486 = vmul.f32 %v386, %v466
      %v487 = vmul.f32 %v387, %v467
      %v488 = vmul.f32 %v388, %v468
      %v489 = vmul.f32 %v389, %v469
      %v490 = vmul.f32 %v390, %v470
      %v491 = vmul.f32 %v391, %v471
      %v492 = vmul.f32 %v392, %v472
      %v493 = vmul.f32 %v393, %v473
      %v494 = vmul.f32 %v394, %v474
      %v495 = vmul.f32 %v395, %v475
      %v496 = vmul.f32 %v396, %v476
      %v497 = vmul.f32 %v397, %v477
      %v498 = vld [vmem:[%s3] sm:$0xff]
      %v499 = vld [vmem:[%s3 + $0x8] sm:$0x3]
      %v500 = vld [vmem:[%s3 + $0x10] sm:$0xff]
      %v501 = vld [vmem:[%s3 + $0x18] sm:$0x3]
      %v502 = vld [vmem:[%s3 + $0x20] sm:$0xff]
      %v503 = vld [vmem:[%s3 + $0x28] sm:$0x3]
      %v504 = vld [vmem:[%s3 + $0x30] sm:$0xff]
      %v505 = vld [vmem:[%s3 + $0x38] sm:$0x3]
      %v506 = vld [vmem:[%s3 + $0x40] sm:$0xff]
      %v507 = vld [vmem:[%s3 + $0x48] sm:$0x3]
      %v508 = vld [vmem:[%s3 + $0x50] sm:$0xff]
      %v509 = vld [vmem:[%s3 + $0x58] sm:$0x3]
      %v510 = vld [vmem:[%s3 + $0x60] sm:$0xff]
      %v511 = vld [vmem:[%s3 + $0x68] sm:$0x3]
      %v512 = vld [vmem:[%s3 + $0x70] sm:$0xff]
      %v513 = vld [vmem:[%s3 + $0x78] sm:$0x3]
      %v514 = vld [vmem:[%s3 + $0x80] sm:$0xff]
      %v515 = vld [vmem:[%s3 + $0x88] sm:$0x3]
      %v516 = vld [vmem:[%s3 + $0x90] sm:$0xff]
      %v517 = vld [vmem:[%s3 + $0x98] sm:$0x3]
      %519 = vset.pattern.permute.xlu0 0
      %520 = vperm.xlu0 %519, %v498
      %v521 = vpop.permute.xlu0 %520
      %524 = vset.pattern.permute.xlu0 0
      %525 = vperm.xlu0 %524, %v499
      %v526 = vpop.permute.xlu0 %525
      %529 = vset.pattern.permute.xlu0 0
      %530 = vperm.xlu0 %529, %v500
      %v531 = vpop.permute.xlu0 %530
      %534 = vset.pattern.permute.xlu0 0
      %535 = vperm.xlu0 %534, %v501
      %v536 = vpop.permute.xlu0 %535
      %539 = vset.pattern.permute.xlu0 0
      %540 = vperm.xlu0 %539, %v502
      %v541 = vpop.permute.xlu0 %540
      %544 = vset.pattern.permute.xlu0 0
      %545 = vperm.xlu0 %544, %v503
      %v546 = vpop.permute.xlu0 %545
      %549 = vset.pattern.permute.xlu0 0
      %550 = vperm.xlu0 %549, %v504
      %v551 = vpop.permute.xlu0 %550
      %554 = vset.pattern.permute.xlu0 0
      %555 = vperm.xlu0 %554, %v505
      %v556 = vpop.permute.xlu0 %555
      %559 = vset.pattern.permute.xlu0 0
      %560 = vperm.xlu0 %559, %v506
      %v561 = vpop.permute.xlu0 %560
      %564 = vset.pattern.permute.xlu0 0
      %565 = vperm.xlu0 %564, %v507
      %v566 = vpop.permute.xlu0 %565
      %569 = vset.pattern.permute.xlu0 0
      %570 = vperm.xlu0 %569, %v508
      %v571 = vpop.permute.xlu0 %570
      %574 = vset.pattern.permute.xlu0 0
      %575 = vperm.xlu0 %574, %v509
      %v576 = vpop.permute.xlu0 %575
      %579 = vset.pattern.permute.xlu0 0
      %580 = vperm.xlu0 %579, %v510
      %v581 = vpop.permute.xlu0 %580
      %584 = vset.pattern.permute.xlu0 0
      %585 = vperm.xlu0 %584, %v511
      %v586 = vpop.permute.xlu0 %585
      %589 = vset.pattern.permute.xlu0 0
      %590 = vperm.xlu0 %589, %v512
      %v591 = vpop.permute.xlu0 %590
      %594 = vset.pattern.permute.xlu0 0
      %595 = vperm.xlu0 %594, %v513
      %v596 = vpop.permute.xlu0 %595
      %599 = vset.pattern.permute.xlu0 0
      %600 = vperm.xlu0 %599, %v514
      %v601 = vpop.permute.xlu0 %600
      %604 = vset.pattern.permute.xlu0 0
      %605 = vperm.xlu0 %604, %v515
      %v606 = vpop.permute.xlu0 %605
      %609 = vset.pattern.permute.xlu0 0
      %610 = vperm.xlu0 %609, %v516
      %v611 = vpop.permute.xlu0 %610
      %614 = vset.pattern.permute.xlu0 0
      %615 = vperm.xlu0 %614, %v517
      %v616 = vpop.permute.xlu0 %615
      %v618 = vmul.f32 %v478, %v521
      %v619 = vmul.f32 %v479, %v526
      %v620 = vmul.f32 %v480, %v531
      %v621 = vmul.f32 %v481, %v536
      %v622 = vmul.f32 %v482, %v541
      %v623 = vmul.f32 %v483, %v546
      %v624 = vmul.f32 %v484, %v551
      %v625 = vmul.f32 %v485, %v556
      %v626 = vmul.f32 %v486, %v561
      %v627 = vmul.f32 %v487, %v566
      %v628 = vmul.f32 %v488, %v571
      %v629 = vmul.f32 %v489, %v576
      %v630 = vmul.f32 %v490, %v581
      %v631 = vmul.f32 %v491, %v586
      %v632 = vmul.f32 %v492, %v591
      %v633 = vmul.f32 %v493, %v596
      %v634 = vmul.f32 %v494, %v601
      %v635 = vmul.f32 %v495, %v606
      %v636 = vmul.f32 %v496, %v611
      %v637 = vmul.f32 %v497, %v616
      %v638 = vpack.c.bf16 %v619, %v618
      %v639 = vpack.c.bf16 %v621, %v620
      %v640 = vpack.c.bf16 %v623, %v622
      %v641 = vpack.c.bf16 %v625, %v624
      %v642 = vpack.c.bf16 %v627, %v626
      %v643 = vpack.c.bf16 %v629, %v628
      %v644 = vpack.c.bf16 %v631, %v630
      %v645 = vpack.c.bf16 %v633, %v632
      %v646 = vpack.c.bf16 %v635, %v634
      %v647 = vpack.c.bf16 %v637, %v636
      %v648 = vld [vmem:[%s291] sm:$0xf]
      %v649 = vld [vmem:[%s291 + $0x4] sm:$0xf]
      %v658 = vunpack.c.l.b16 %v638
      %v659 = vunpack.c.h.b16 %v638
      %v660 = vunpack.c.l.b16 %v639
      %v661 = vunpack.c.h.b16 %v639
      %v662 = vunpack.c.l.b16 %v640
      %v663 = vunpack.c.h.b16 %v640
      %v664 = vunpack.c.l.b16 %v641
      %v665 = vunpack.c.h.b16 %v641
      %v666 = vunpack.c.l.b16 %v642
      %v667 = vunpack.c.h.b16 %v642
      %v668 = vunpack.c.l.b16 %v643
      %v669 = vunpack.c.h.b16 %v643
      %v670 = vunpack.c.l.b16 %v644
      %v671 = vunpack.c.h.b16 %v644
      %v672 = vunpack.c.l.b16 %v645
      %v673 = vunpack.c.h.b16 %v645
      %v674 = vpack.c.b16 %v658, %v658
      %v675 = vpack.c.b16 %v659, %v659
      %v676 = vpack.c.b16 %v660, %v660
      %v677 = vpack.c.b16 %v661, %v661
      %v678 = vpack.c.b16 %v662, %v662
      %v679 = vpack.c.b16 %v663, %v663
      %v680 = vpack.c.b16 %v664, %v664
      %v681 = vpack.c.b16 %v665, %v665
      %v682 = vpack.c.b16 %v666, %v666
      %v683 = vpack.c.b16 %v667, %v667
      %v684 = vpack.c.b16 %v668, %v668
      %v685 = vpack.c.b16 %v669, %v669
      %v686 = vpack.c.b16 %v670, %v670
      %v687 = vpack.c.b16 %v671, %v671
      %v688 = vpack.c.b16 %v672, %v672
      %v689 = vpack.c.b16 %v673, %v673
      %vm690 = vsmask.f32 3328
      %vm691 = vsmask.f32 7440
      %vm692 = vmor %vm690, %vm691
      %v694 = vshrl.u32 %v674, 16
      %v696 = vrot.slane %v694, 4
      %v697 = vshll.u32 %v674, 16
      %v699 = vrot.slane %v697, 5
      %v700 = vor.u32 %v696, %v699
      %v701 = vrot.slane %v700, 4
      %v703 = vshll.u32 %v675, 16
      %v705 = vrot.slane %v703, 5
      %v706 = vsel %vm692, %v701, %v705
      %v708 = vshrl.u32 %v676, 16
      %v710 = vrot.slane %v708, 4
      %v711 = vshll.u32 %v676, 16
      %v713 = vrot.slane %v711, 5
      %v714 = vor.u32 %v710, %v713
      %v715 = vrot.slane %v714, 4
      %v717 = vshll.u32 %v677, 16
      %v719 = vrot.slane %v717, 5
      %v720 = vsel %vm692, %v715, %v719
      %v722 = vshrl.u32 %v678, 16
      %v724 = vrot.slane %v722, 4
      %v725 = vshll.u32 %v678, 16
      %v727 = vrot.slane %v725, 5
      %v728 = vor.u32 %v724, %v727
      %v729 = vrot.slane %v728, 4
      %v731 = vshll.u32 %v679, 16
      %v733 = vrot.slane %v731, 5
      %v734 = vsel %vm692, %v729, %v733
      %v736 = vshrl.u32 %v680, 16
      %v738 = vrot.slane %v736, 4
      %v739 = vshll.u32 %v680, 16
      %v741 = vrot.slane %v739, 5
      %v742 = vor.u32 %v738, %v741
      %v743 = vrot.slane %v742, 4
      %v745 = vshll.u32 %v681, 16
      %v747 = vrot.slane %v745, 5
      %v748 = vsel %vm692, %v743, %v747
      %v750 = vshrl.u32 %v682, 16
      %v752 = vrot.slane %v750, 4
      %v753 = vshll.u32 %v682, 16
      %v755 = vrot.slane %v753, 5
      %v756 = vor.u32 %v752, %v755
      %v757 = vrot.slane %v756, 4
      %v759 = vshll.u32 %v683, 16
      %v761 = vrot.slane %v759, 5
      %v762 = vsel %vm692, %v757, %v761
      %v764 = vshrl.u32 %v684, 16
      %v766 = vrot.slane %v764, 4
      %v767 = vshll.u32 %v684, 16
      %v769 = vrot.slane %v767, 5
      %v770 = vor.u32 %v766, %v769
      %v771 = vrot.slane %v770, 4
      %v773 = vshll.u32 %v685, 16
      %v775 = vrot.slane %v773, 5
      %v776 = vsel %vm692, %v771, %v775
      %v778 = vshrl.u32 %v686, 16
      %v780 = vrot.slane %v778, 4
      %v781 = vshll.u32 %v686, 16
      %v783 = vrot.slane %v781, 5
      %v784 = vor.u32 %v780, %v783
      %v785 = vrot.slane %v784, 4
      %v787 = vshll.u32 %v687, 16
      %v789 = vrot.slane %v787, 5
      %v790 = vsel %vm692, %v785, %v789
      %v792 = vshrl.u32 %v688, 16
      %v794 = vrot.slane %v792, 4
      %v795 = vshll.u32 %v688, 16
      %v797 = vrot.slane %v795, 5
      %v798 = vor.u32 %v794, %v797
      %v799 = vrot.slane %v798, 4
      %v801 = vshll.u32 %v689, 16
      %v803 = vrot.slane %v801, 5
      %v804 = vsel %vm692, %v799, %v803
      %s805 = scalar_lea.vmem %s291, 8
      %v806 = vld [vmem:[%s805] sm:$0xf]
      %v807 = vld [vmem:[%s805 + $0x4] sm:$0xf]
      %v808 = vunpack.c.l.b16 %v706
      %v809 = vunpack.c.l.b16 %v720
      %v810 = vunpack.c.l.b16 %v734
      %v811 = vunpack.c.l.b16 %v748
      %v812 = vunpack.c.l.b16 %v762
      %v813 = vunpack.c.l.b16 %v776
      %v814 = vunpack.c.l.b16 %v790
      %v815 = vunpack.c.l.b16 %v804
      %v816 = vpack.c.b16 %v809, %v808
      %v817 = vpack.c.b16 %v811, %v810
      %v818 = vpack.c.b16 %v813, %v812
      %v819 = vpack.c.b16 %v815, %v814
      %v822 = vunpack.c.l.b16 %v806
      %v823 = vunpack.c.l.b16 %v807
      %v824 = vpack.c.b16 %v823, %v822
      %vm826 = vcmask 130048
      %v828 = vsel %vm826, %v816, 0
      %v831 = vsel %vm826, %v817, 0
      %v834 = vsel %vm826, %v818, 0
      %v837 = vsel %vm826, %v819, 0
      %839 = vmatprep.subr.bf16.mxu0 0
      %840 = vmatpush1.bf16.msra.mxu0 %v824
      %841 = vmatprep.subr.bf16.mxu0 0
      %842 = vmatpush1.bf16.msra.mxu0 0
      %843 = vmatprep.subr.bf16.mxu0 0
      %844 = vmatpush1.bf16.msra.mxu0 0
      %845 = vmatprep.subr.bf16.mxu0 0
      %846 = vmatpush1.bf16.msra.mxu0 0
      %847 = vmatprep.subr.bf16.mxu0 0
      %848 = vmatpush1.bf16.msra.mxu0 0
      %849 = vmatprep.subr.bf16.mxu0 0
      %850 = vmatpush1.bf16.msra.mxu0 0
      %851 = vmatprep.subr.bf16.mxu0 0
      %852 = vmatpush1.bf16.msra.mxu0 0
      %853 = vmatprep.subr.bf16.mxu0 0
      %854 = vmatpush1.bf16.msra.mxu0 0
      %855 = vmatprep.subr.bf16.mxu0 0
      %856 = vmatpush1.bf16.msra.mxu0 0
      %857 = vmatprep.subr.bf16.mxu0 0
      %858 = vmatpush1.bf16.msra.mxu0 0
      %859 = vmatprep.subr.bf16.mxu0 0
      %860 = vmatpush1.bf16.msra.mxu0 0
      %861 = vmatprep.subr.bf16.mxu0 0
      %862 = vmatpush1.bf16.msra.mxu0 0
      %863 = vmatprep.subr.bf16.mxu0 0
      %864 = vmatpush1.bf16.msra.mxu0 0
      %865 = vmatprep.subr.bf16.mxu0 0
      %866 = vmatpush1.bf16.msra.mxu0 0
      %867 = vmatprep.subr.bf16.mxu0 0
      %868 = vmatpush1.bf16.msra.mxu0 0
      %869 = vmatprep.subr.bf16.mxu0 0
      %870 = vmatpush1.bf16.msra.mxu0 0
      %871 = vmatprep.mubr.bf16.mxu0 0
      %872 = vmatmul.mubr.bf16.gmra.mrb[0].mxu0 %v828
      %v873 = vpop.f32.mrb[0].mxu0
      %v874 = vadd.f32 0.0, %v873
      %v875 = vpop.f32.mrb[0].mxu0
      %v876 = vpop.f32.mrb[0].mxu0
      %v877 = vadd.f32 0.0, %v876
      %v878 = vpop.f32.mrb[0].mxu0
      %879 = vmatprep.mubr.bf16.mxu0 0
      %880 = vmatmul.mubr.bf16.gmra.mrb[0].mxu0 %v831
      %v881 = vpop.f32.mrb[0].mxu0
      %v882 = vadd.f32 0.0, %v881
      %v883 = vpop.f32.mrb[0].mxu0
      %v884 = vpop.f32.mrb[0].mxu0
      %v885 = vadd.f32 0.0, %v884
      %v886 = vpop.f32.mrb[0].mxu0
      %887 = vmatprep.mubr.bf16.mxu0 0
      %888 = vmatmul.mubr.bf16.gmra.mrb[0].mxu0 %v834
      %v889 = vpop.f32.mrb[0].mxu0
      %v890 = vadd.f32 0.0, %v889
      %v891 = vpop.f32.mrb[0].mxu0
      %v892 = vpop.f32.mrb[0].mxu0
      %v893 = vadd.f32 0.0, %v892
      %v894 = vpop.f32.mrb[0].mxu0
      %895 = vmatprep.mubr.bf16.mxu0 0
      %896 = vmatmul.mubr.bf16.gmra.mrb[0].mxu0 %v837
      %v897 = vpop.f32.mrb[0].mxu0
      %v898 = vadd.f32 0.0, %v897
      %v899 = vpop.f32.mrb[0].mxu0
      %v900 = vpop.f32.mrb[0].mxu0
      %v901 = vadd.f32 0.0, %v900
      %v902 = vpop.f32.mrb[0].mxu0
      %903 = vdwg.mxu0
      %v904 = vpack.c.b16 %v660, %v658
      %v905 = vpack.c.b16 %v664, %v662
      %v906 = vpack.c.b16 %v668, %v666
      %v907 = vpack.c.b16 %v672, %v670
      %v910 = vunpack.c.l.b16 %v648
      %v911 = vunpack.c.l.b16 %v649
      %v912 = vpack.c.b16 %v911, %v910
      %v915 = vsel %vm826, %v904, 0
      %v918 = vsel %vm826, %v905, 0
      %v921 = vsel %vm826, %v906, 0
      %v924 = vsel %vm826, %v907, 0
      %926 = vmatprep.subr.bf16.mxu0 0
      %927 = vmatpush1.bf16.msra.mxu0 %v912
      %928 = vmatprep.subr.bf16.mxu0 0
      %929 = vmatpush1.bf16.msra.mxu0 0
      %930 = vmatprep.subr.bf16.mxu0 0
      %931 = vmatpush1.bf16.msra.mxu0 0
      %932 = vmatprep.subr.bf16.mxu0 0
      %933 = vmatpush1.bf16.msra.mxu0 0
      %934 = vmatprep.subr.bf16.mxu0 0
      %935 = vmatpush1.bf16.msra.mxu0 0
      %936 = vmatprep.subr.bf16.mxu0 0
      %937 = vmatpush1.bf16.msra.mxu0 0
      %938 = vmatprep.subr.bf16.mxu0 0
      %939 = vmatpush1.bf16.msra.mxu0 0
      %940 = vmatprep.subr.bf16.mxu0 0
      %941 = vmatpush1.bf16.msra.mxu0 0
      %942 = vmatprep.subr.bf16.mxu0 0
      %943 = vmatpush1.bf16.msra.mxu0 0
      %944 = vmatprep.subr.bf16.mxu0 0
      %945 = vmatpush1.bf16.msra.mxu0 0
      %946 = vmatprep.subr.bf16.mxu0 0
      %947 = vmatpush1.bf16.msra.mxu0 0
      %948 = vmatprep.subr.bf16.mxu0 0
      %949 = vmatpush1.bf16.msra.mxu0 0
      %950 = vmatprep.subr.bf16.mxu0 0
      %951 = vmatpush1.bf16.msra.mxu0 0
      %952 = vmatprep.subr.bf16.mxu0 0
      %953 = vmatpush1.bf16.msra.mxu0 0
      %954 = vmatprep.subr.bf16.mxu0 0
      %955 = vmatpush1.bf16.msra.mxu0 0
      %956 = vmatprep.subr.bf16.mxu0 0
      %957 = vmatpush1.bf16.msra.mxu0 0
      %958 = vmatprep.mubr.bf16.mxu0 0
      %959 = vmatmul.mubr.bf16.gmra.mrb[0].mxu0 %v915
      %v960 = vpop.f32.mrb[0].mxu0
      %v961 = vadd.f32 %v874, %v960
      %v962 = vpop.f32.mrb[0].mxu0
      %v963 = vpop.f32.mrb[0].mxu0
      %v964 = vadd.f32 %v877, %v963
      %v965 = vpop.f32.mrb[0].mxu0
      %966 = vmatprep.mubr.bf16.mxu0 0
      %967 = vmatmul.mubr.bf16.gmra.mrb[0].mxu0 %v918
      %v968 = vpop.f32.mrb[0].mxu0
      %v969 = vadd.f32 %v882, %v968
      %v970 = vpop.f32.mrb[0].mxu0
      %v971 = vpop.f32.mrb[0].mxu0
      %v972 = vadd.f32 %v885, %v971
      %v973 = vpop.f32.mrb[0].mxu0
      %974 = vmatprep.mubr.bf16.mxu0 0
      %975 = vmatmul.mubr.bf16.gmra.mrb[0].mxu0 %v921
      %v976 = vpop.f32.mrb[0].mxu0
      %v977 = vadd.f32 %v890, %v976
      %v978 = vpop.f32.mrb[0].mxu0
      %v979 = vpop.f32.mrb[0].mxu0
      %v980 = vadd.f32 %v893, %v979
      %v981 = vpop.f32.mrb[0].mxu0
      %982 = vmatprep.mubr.bf16.mxu0 0
      %983 = vmatmul.mubr.bf16.gmra.mrb[0].mxu0 %v924
      %v984 = vpop.f32.mrb[0].mxu0
      %v985 = vadd.f32 %v898, %v984
      %v986 = vpop.f32.mrb[0].mxu0
      %v987 = vpop.f32.mrb[0].mxu0
      %v988 = vadd.f32 %v901, %v987
      %v989 = vpop.f32.mrb[0].mxu0
      %990 = vdwg.mxu0
      %vm991 = vcmask 1042432
      %vm992 = vcmask 1046532
      %vm993 = vmor %vm991, %vm992
      %v994 = vrot.slane %v674, 5
      %v995 = vrot.slane %v994, 4
      %v996 = vrot.slane %v675, 5
      %v997 = vsel %vm993, %v995, %v996
      %v998 = vrot.slane %v676, 5
      %v999 = vrot.slane %v998, 4
      %v1000 = vrot.slane %v677, 5
      %v1001 = vsel %vm993, %v999, %v1000
      %v1002 = vrot.slane %v678, 5
      %v1003 = vrot.slane %v1002, 4
      %v1004 = vrot.slane %v679, 5
      %v1005 = vsel %vm993, %v1003, %v1004
      %v1006 = vrot.slane %v680, 5
      %v1007 = vrot.slane %v1006, 4
      %v1008 = vrot.slane %v681, 5
      %v1009 = vsel %vm993, %v1007, %v1008
      %v1010 = vrot.slane %v682, 5
      %v1011 = vrot.slane %v1010, 4
      %v1012 = vrot.slane %v683, 5
      %v1013 = vsel %vm993, %v1011, %v1012
      %v1014 = vrot.slane %v684, 5
      %v1015 = vrot.slane %v1014, 4
      %v1016 = vrot.slane %v685, 5
      %v1017 = vsel %vm993, %v1015, %v1016
      %v1018 = vrot.slane %v686, 5
      %v1019 = vrot.slane %v1018, 4
      %v1020 = vrot.slane %v687, 5
      %v1021 = vsel %vm993, %v1019, %v1020
      %v1022 = vrot.slane %v688, 5
      %v1023 = vrot.slane %v1022, 4
      %v1024 = vrot.slane %v689, 5
      %v1025 = vsel %vm993, %v1023, %v1024
      %s1026 = scalar_lea.vmem %s291, 16
      %v1027 = vld [vmem:[%s1026] sm:$0xf]
      %v1028 = vld [vmem:[%s1026 + $0x4] sm:$0xf]
      %v1029 = vunpack.c.l.b16 %v997
      %v1030 = vunpack.c.l.b16 %v1001
      %v1031 = vunpack.c.l.b16 %v1005
      %v1032 = vunpack.c.l.b16 %v1009
      %v1033 = vunpack.c.l.b16 %v1013
      %v1034 = vunpack.c.l.b16 %v1017
      %v1035 = vunpack.c.l.b16 %v1021
      %v1036 = vunpack.c.l.b16 %v1025
      %v1037 = vpack.c.b16 %v1030, %v1029
      %v1038 = vpack.c.b16 %v1032, %v1031
      %v1039 = vpack.c.b16 %v1034, %v1033
      %v1040 = vpack.c.b16 %v1036, %v1035
      %v1043 = vunpack.c.l.b16 %v1027
      %v1044 = vunpack.c.l.b16 %v1028
      %v1045 = vpack.c.b16 %v1044, %v1043
      %v1048 = vsel %vm826, %v1037, 0
      %v1051 = vsel %vm826, %v1038, 0
      %v1054 = vsel %vm826, %v1039, 0
      %v1057 = vsel %vm826, %v1040, 0
      %1059 = vmatprep.subr.bf16.mxu0 0
      %1060 = vmatpush1.bf16.msra.mxu0 %v1045
      %1061 = vmatprep.subr.bf16.mxu0 0
      %1062 = vmatpush1.bf16.msra.mxu0 0
      %1063 = vmatprep.subr.bf16.mxu0 0
      %1064 = vmatpush1.bf16.msra.mxu0 0
      %1065 = vmatprep.subr.bf16.mxu0 0
      %1066 = vmatpush1.bf16.msra.mxu0 0
      %1067 = vmatprep.subr.bf16.mxu0 0
      %1068 = vmatpush1.bf16.msra.mxu0 0
      %1069 = vmatprep.subr.bf16.mxu0 0
      %1070 = vmatpush1.bf16.msra.mxu0 0
      %1071 = vmatprep.subr.bf16.mxu0 0
      %1072 = vmatpush1.bf16.msra.mxu0 0
      %1073 = vmatprep.subr.bf16.mxu0 0
      %1074 = vmatpush1.bf16.msra.mxu0 0
      %1075 = vmatprep.subr.bf16.mxu0 0
      %1076 = vmatpush1.bf16.msra.mxu0 0
      %1077 = vmatprep.subr.bf16.mxu0 0
      %1078 = vmatpush1.bf16.msra.mxu0 0
      %1079 = vmatprep.subr.bf16.mxu0 0
      %1080 = vmatpush1.bf16.msra.mxu0 0
      %1081 = vmatprep.subr.bf16.mxu0 0
      %1082 = vmatpush1.bf16.msra.mxu0 0
      %1083 = vmatprep.subr.bf16.mxu0 0
      %1084 = vmatpush1.bf16.msra.mxu0 0
      %1085 = vmatprep.subr.bf16.mxu0 0
      %1086 = vmatpush1.bf16.msra.mxu0 0
      %1087 = vmatprep.subr.bf16.mxu0 0
      %1088 = vmatpush1.bf16.msra.mxu0 0
      %1089 = vmatprep.subr.bf16.mxu0 0
      %1090 = vmatpush1.bf16.msra.mxu0 0
      %1091 = vmatprep.mubr.bf16.mxu0 0
      %1092 = vmatmul.mubr.bf16.gmra.mrb[0].mxu0 %v1048
      %v1093 = vpop.f32.mrb[0].mxu0
      %v1094 = vadd.f32 0.0, %v1093
      %v1095 = vpop.f32.mrb[0].mxu0
      %v1096 = vpop.f32.mrb[0].mxu0
      %v1097 = vadd.f32 0.0, %v1096
      %v1098 = vpop.f32.mrb[0].mxu0
      %1099 = vmatprep.mubr.bf16.mxu0 0
      %1100 = vmatmul.mubr.bf16.gmra.mrb[0].mxu0 %v1051
      %v1101 = vpop.f32.mrb[0].mxu0
      %v1102 = vadd.f32 0.0, %v1101
      %v1103 = vpop.f32.mrb[0].mxu0
      %v1104 = vpop.f32.mrb[0].mxu0
      %v1105 = vadd.f32 0.0, %v1104
      %v1106 = vpop.f32.mrb[0].mxu0
      %1107 = vmatprep.mubr.bf16.mxu0 0
      %1108 = vmatmul.mubr.bf16.gmra.mrb[0].mxu0 %v1054
      %v1109 = vpop.f32.mrb[0].mxu0
      %v1110 = vadd.f32 0.0, %v1109
      %v1111 = vpop.f32.mrb[0].mxu0
      %v1112 = vpop.f32.mrb[0].mxu0
      %v1113 = vadd.f32 0.0, %v1112
      %v1114 = vpop.f32.mrb[0].mxu0
      %1115 = vmatprep.mubr.bf16.mxu0 0
      %1116 = vmatmul.mubr.bf16.gmra.mrb[0].mxu0 %v1057
      %v1117 = vpop.f32.mrb[0].mxu0
      %v1118 = vadd.f32 0.0, %v1117
      %v1119 = vpop.f32.mrb[0].mxu0
      %v1120 = vpop.f32.mrb[0].mxu0
      %v1121 = vadd.f32 0.0, %v1120
      %v1122 = vpop.f32.mrb[0].mxu0
      %1123 = vdwg.mxu0
      %v1124 = vadd.f32 %v961, %v1094
      %v1125 = vadd.f32 %v964, %v1097
      %v1126 = vadd.f32 %v969, %v1102
      %v1127 = vadd.f32 %v972, %v1105
      %v1128 = vadd.f32 %v977, %v1110
      %v1129 = vadd.f32 %v980, %v1113
      %v1130 = vadd.f32 %v985, %v1118
      %v1131 = vadd.f32 %v988, %v1121
      %s1132 = scalar_lea.vmem %s291, 24
      %v1133 = vld [vmem:[%s1132] sm:$0xf]
      %v1134 = vld [vmem:[%s1132 + $0x4] sm:$0xf]
      %v1136 = vunpack.c.l.b16 %v646
      %v1137 = vpack.c.b16 %v662, %v660
      %v1138 = vpack.c.b16 %v666, %v664
      %v1139 = vpack.c.b16 %v670, %v668
      %v1140 = vpack.c.b16 %v1136, %v672
      %v1143 = vunpack.c.l.b16 %v1133
      %v1144 = vunpack.c.l.b16 %v1134
      %v1145 = vpack.c.b16 %v1144, %v1143
      %v1148 = vsel %vm826, %v1137, 0
      %v1151 = vsel %vm826, %v1138, 0
      %v1154 = vsel %vm826, %v1139, 0
      %v1157 = vsel %vm826, %v1140, 0
      %1159 = vmatprep.subr.bf16.mxu0 0
      %1160 = vmatpush1.bf16.msra.mxu0 %v1145
      %1161 = vmatprep.subr.bf16.mxu0 0
      %1162 = vmatpush1.bf16.msra.mxu0 0
      %1163 = vmatprep.subr.bf16.mxu0 0
      %1164 = vmatpush1.bf16.msra.mxu0 0
      %1165 = vmatprep.subr.bf16.mxu0 0
      %1166 = vmatpush1.bf16.msra.mxu0 0
      %1167 = vmatprep.subr.bf16.mxu0 0
      %1168 = vmatpush1.bf16.msra.mxu0 0
      %1169 = vmatprep.subr.bf16.mxu0 0
      %1170 = vmatpush1.bf16.msra.mxu0 0
      %1171 = vmatprep.subr.bf16.mxu0 0
      %1172 = vmatpush1.bf16.msra.mxu0 0
      %1173 = vmatprep.subr.bf16.mxu0 0
      %1174 = vmatpush1.bf16.msra.mxu0 0
      %1175 = vmatprep.subr.bf16.mxu0 0
      %1176 = vmatpush1.bf16.msra.mxu0 0
      %1177 = vmatprep.subr.bf16.mxu0 0
      %1178 = vmatpush1.bf16.msra.mxu0 0
      %1179 = vmatprep.subr.bf16.mxu0 0
      %1180 = vmatpush1.bf16.msra.mxu0 0
      %1181 = vmatprep.subr.bf16.mxu0 0
      %1182 = vmatpush1.bf16.msra.mxu0 0
      %1183 = vmatprep.subr.bf16.mxu0 0
      %1184 = vmatpush1.bf16.msra.mxu0 0
      %1185 = vmatprep.subr.bf16.mxu0 0
      %1186 = vmatpush1.bf16.msra.mxu0 0
      %1187 = vmatprep.subr.bf16.mxu0 0
      %1188 = vmatpush1.bf16.msra.mxu0 0
      %1189 = vmatprep.subr.bf16.mxu0 0
      %1190 = vmatpush1.bf16.msra.mxu0 0
      %1191 = vmatprep.mubr.bf16.mxu0 0
      %1192 = vmatmul.mubr.bf16.gmra.mrb[0].mxu0 %v1148
      %v1193 = vpop.f32.mrb[0].mxu0
      %v1194 = vadd.f32 0.0, %v1193
      %v1195 = vpop.f32.mrb[0].mxu0
      %v1196 = vpop.f32.mrb[0].mxu0
      %v1197 = vadd.f32 0.0, %v1196
      %v1198 = vpop.f32.mrb[0].mxu0
      %1199 = vmatprep.mubr.bf16.mxu0 0
      %1200 = vmatmul.mubr.bf16.gmra.mrb[0].mxu0 %v1151
      %v1201 = vpop.f32.mrb[0].mxu0
      %v1202 = vadd.f32 0.0, %v1201
      %v1203 = vpop.f32.mrb[0].mxu0
      %v1204 = vpop.f32.mrb[0].mxu0
      %v1205 = vadd.f32 0.0, %v1204
      %v1206 = vpop.f32.mrb[0].mxu0
      %1207 = vmatprep.mubr.bf16.mxu0 0
      %1208 = vmatmul.mubr.bf16.gmra.mrb[0].mxu0 %v1154
      %v1209 = vpop.f32.mrb[0].mxu0
      %v1210 = vadd.f32 0.0, %v1209
      %v1211 = vpop.f32.mrb[0].mxu0
      %v1212 = vpop.f32.mrb[0].mxu0
      %v1213 = vadd.f32 0.0, %v1212
      %v1214 = vpop.f32.mrb[0].mxu0
      %1215 = vmatprep.mubr.bf16.mxu0 0
      %1216 = vmatmul.mubr.bf16.gmra.mrb[0].mxu0 %v1157
      %v1217 = vpop.f32.mrb[0].mxu0
      %v1218 = vadd.f32 0.0, %v1217
      %v1219 = vpop.f32.mrb[0].mxu0
      %v1220 = vpop.f32.mrb[0].mxu0
      %v1221 = vadd.f32 0.0, %v1220
      %v1222 = vpop.f32.mrb[0].mxu0
      %1223 = vdwg.mxu0
      %v1224 = vadd.f32 %v1124, %v1194
      %v1225 = vadd.f32 %v1125, %v1197
      %v1226 = vadd.f32 %v1126, %v1202
      %v1227 = vadd.f32 %v1127, %v1205
      %v1228 = vadd.f32 %v1128, %v1210
      %v1229 = vadd.f32 %v1129, %v1213
      %v1230 = vadd.f32 %v1130, %v1218
      %v1231 = vadd.f32 %v1131, %v1221
      %v1232 = vunpack.c.h.b16 %v646
      %v1233 = vpack.c.b16 %v1136, %v1136
      %v1234 = vpack.c.b16 %v1232, %v1232
      %v1236 = vshrl.u32 %v1233, 16
      %v1238 = vrot.slane %v1236, 4
      %v1239 = vshll.u32 %v1233, 16
      %v1241 = vrot.slane %v1239, 5
      %v1242 = vor.u32 %v1238, %v1241
      %v1243 = vrot.slane %v1242, 4
      %v1245 = vshll.u32 %v1234, 16
      %v1247 = vrot.slane %v1245, 5
      %v1248 = vsel %vm692, %v1243, %v1247
      %s1249 = scalar_lea.vmem %s291, 32
      %v1250 = vld [vmem:[%s1249] sm:$0xf]
      %v1251 = vld [vmem:[%s1249 + $0x4] sm:$0xf]
      %v1252 = vunpack.c.l.b16 %v1248
      %v1253 = vpack.c.b16 %v810, %v809
      %v1254 = vpack.c.b16 %v812, %v811
      %v1255 = vpack.c.b16 %v814, %v813
      %v1256 = vpack.c.b16 %v1252, %v815
      %v1259 = vunpack.c.l.b16 %v1250
      %v1260 = vunpack.c.l.b16 %v1251
      %v1261 = vpack.c.b16 %v1260, %v1259
      %v1264 = vsel %vm826, %v1253, 0
      %v1267 = vsel %vm826, %v1254, 0
      %v1270 = vsel %vm826, %v1255, 0
      %v1273 = vsel %vm826, %v1256, 0
      %1275 = vmatprep.subr.bf16.mxu0 0
      %1276 = vmatpush1.bf16.msra.mxu0 %v1261
      %1277 = vmatprep.subr.bf16.mxu0 0
      %1278 = vmatpush1.bf16.msra.mxu0 0
      %1279 = vmatprep.subr.bf16.mxu0 0
      %1280 = vmatpush1.bf16.msra.mxu0 0
      %1281 = vmatprep.subr.bf16.mxu0 0
      %1282 = vmatpush1.bf16.msra.mxu0 0
      %1283 = vmatprep.subr.bf16.mxu0 0
      %1284 = vmatpush1.bf16.msra.mxu0 0
      %1285 = vmatprep.subr.bf16.mxu0 0
      %1286 = vmatpush1.bf16.msra.mxu0 0
      %1287 = vmatprep.subr.bf16.mxu0 0
      %1288 = vmatpush1.bf16.msra.mxu0 0
      %1289 = vmatprep.subr.bf16.mxu0 0
      %1290 = vmatpush1.bf16.msra.mxu0 0
      %1291 = vmatprep.subr.bf16.mxu0 0
      %1292 = vmatpush1.bf16.msra.mxu0 0
      %1293 = vmatprep.subr.bf16.mxu0 0
      %1294 = vmatpush1.bf16.msra.mxu0 0
      %1295 = vmatprep.subr.bf16.mxu0 0
      %1296 = vmatpush1.bf16.msra.mxu0 0
      %1297 = vmatprep.subr.bf16.mxu0 0
      %1298 = vmatpush1.bf16.msra.mxu0 0
      %1299 = vmatprep.subr.bf16.mxu0 0
      %1300 = vmatpush1.bf16.msra.mxu0 0
      %1301 = vmatprep.subr.bf16.mxu0 0
      %1302 = vmatpush1.bf16.msra.mxu0 0
      %1303 = vmatprep.subr.bf16.mxu0 0
      %1304 = vmatpush1.bf16.msra.mxu0 0
      %1305 = vmatprep.subr.bf16.mxu0 0
      %1306 = vmatpush1.bf16.msra.mxu0 0
      %1307 = vmatprep.mubr.bf16.mxu0 0
      %1308 = vmatmul.mubr.bf16.gmra.mrb[0].mxu0 %v1264
      %v1309 = vpop.f32.mrb[0].mxu0
      %v1310 = vadd.f32 0.0, %v1309
      %v1311 = vpop.f32.mrb[0].mxu0
      %v1312 = vpop.f32.mrb[0].mxu0
      %v1313 = vadd.f32 0.0, %v1312
      %v1314 = vpop.f32.mrb[0].mxu0
      %1315 = vmatprep.mubr.bf16.mxu0 0
      %1316 = vmatmul.mubr.bf16.gmra.mrb[0].mxu0 %v1267
      %v1317 = vpop.f32.mrb[0].mxu0
      %v1318 = vadd.f32 0.0, %v1317
      %v1319 = vpop.f32.mrb[0].mxu0
      %v1320 = vpop.f32.mrb[0].mxu0
      %v1321 = vadd.f32 0.0, %v1320
      %v1322 = vpop.f32.mrb[0].mxu0
      %1323 = vmatprep.mubr.bf16.mxu0 0
      %1324 = vmatmul.mubr.bf16.gmra.mrb[0].mxu0 %v1270
      %v1325 = vpop.f32.mrb[0].mxu0
      %v1326 = vadd.f32 0.0, %v1325
      %v1327 = vpop.f32.mrb[0].mxu0
      %v1328 = vpop.f32.mrb[0].mxu0
      %v1329 = vadd.f32 0.0, %v1328
      %v1330 = vpop.f32.mrb[0].mxu0
      %1331 = vmatprep.mubr.bf16.mxu0 0
      %1332 = vmatmul.mubr.bf16.gmra.mrb[0].mxu0 %v1273
      %v1333 = vpop.f32.mrb[0].mxu0
      %v1334 = vadd.f32 0.0, %v1333
      %v1335 = vpop.f32.mrb[0].mxu0
      %v1336 = vpop.f32.mrb[0].mxu0
      %v1337 = vadd.f32 0.0, %v1336
      %v1338 = vpop.f32.mrb[0].mxu0
      %1339 = vdwg.mxu0
      %v1340 = vadd.f32 %v1224, %v1310
      %v1341 = vadd.f32 %v1225, %v1313
      %v1342 = vadd.f32 %v1226, %v1318
      %v1343 = vadd.f32 %v1227, %v1321
      %v1344 = vadd.f32 %v1228, %v1326
      %v1345 = vadd.f32 %v1229, %v1329
      %v1346 = vadd.f32 %v1230, %v1334
      %v1347 = vadd.f32 %v1231, %v1337
      %v1348 = vrot.slane %v1233, 5
      %v1349 = vrot.slane %v1348, 4
      %v1350 = vrot.slane %v1234, 5
      %v1351 = vsel %vm993, %v1349, %v1350
      %s1352 = scalar_lea.vmem %s291, 40
      %v1353 = vld [vmem:[%s1352] sm:$0xf]
      %v1354 = vld [vmem:[%s1352 + $0x4] sm:$0xf]
      %v1355 = vunpack.c.l.b16 %v1351
      %v1356 = vpack.c.b16 %v1031, %v1030
      %v1357 = vpack.c.b16 %v1033, %v1032
      %v1358 = vpack.c.b16 %v1035, %v1034
      %v1359 = vpack.c.b16 %v1355, %v1036
      %v1362 = vunpack.c.l.b16 %v1353
      %v1363 = vunpack.c.l.b16 %v1354
      %v1364 = vpack.c.b16 %v1363, %v1362
      %v1367 = vsel %vm826, %v1356, 0
      %v1370 = vsel %vm826, %v1357, 0
      %v1373 = vsel %vm826, %v1358, 0
      %v1376 = vsel %vm826, %v1359, 0
      %1378 = vmatprep.subr.bf16.mxu0 0
      %1379 = vmatpush1.bf16.msra.mxu0 %v1364
      %1380 = vmatprep.subr.bf16.mxu0 0
      %1381 = vmatpush1.bf16.msra.mxu0 0
      %1382 = vmatprep.subr.bf16.mxu0 0
      %1383 = vmatpush1.bf16.msra.mxu0 0
      %1384 = vmatprep.subr.bf16.mxu0 0
      %1385 = vmatpush1.bf16.msra.mxu0 0
      %1386 = vmatprep.subr.bf16.mxu0 0
      %1387 = vmatpush1.bf16.msra.mxu0 0
      %1388 = vmatprep.subr.bf16.mxu0 0
      %1389 = vmatpush1.bf16.msra.mxu0 0
      %1390 = vmatprep.subr.bf16.mxu0 0
      %1391 = vmatpush1.bf16.msra.mxu0 0
      %1392 = vmatprep.subr.bf16.mxu0 0
      %1393 = vmatpush1.bf16.msra.mxu0 0
      %1394 = vmatprep.subr.bf16.mxu0 0
      %1395 = vmatpush1.bf16.msra.mxu0 0
      %1396 = vmatprep.subr.bf16.mxu0 0
      %1397 = vmatpush1.bf16.msra.mxu0 0
      %1398 = vmatprep.subr.bf16.mxu0 0
      %1399 = vmatpush1.bf16.msra.mxu0 0
      %1400 = vmatprep.subr.bf16.mxu0 0
      %1401 = vmatpush1.bf16.msra.mxu0 0
      %1402 = vmatprep.subr.bf16.mxu0 0
      %1403 = vmatpush1.bf16.msra.mxu0 0
      %1404 = vmatprep.subr.bf16.mxu0 0
      %1405 = vmatpush1.bf16.msra.mxu0 0
      %1406 = vmatprep.subr.bf16.mxu0 0
      %1407 = vmatpush1.bf16.msra.mxu0 0
      %1408 = vmatprep.subr.bf16.mxu0 0
      %1409 = vmatpush1.bf16.msra.mxu0 0
      %1410 = vmatprep.mubr.bf16.mxu0 0
      %1411 = vmatmul.mubr.bf16.gmra.mrb[0].mxu0 %v1367
      %v1412 = vpop.f32.mrb[0].mxu0
      %v1413 = vadd.f32 0.0, %v1412
      %v1414 = vpop.f32.mrb[0].mxu0
      %v1415 = vpop.f32.mrb[0].mxu0
      %v1416 = vadd.f32 0.0, %v1415
      %v1417 = vpop.f32.mrb[0].mxu0
      %1418 = vmatprep.mubr.bf16.mxu0 0
      %1419 = vmatmul.mubr.bf16.gmra.mrb[0].mxu0 %v1370
      %v1420 = vpop.f32.mrb[0].mxu0
      %v1421 = vadd.f32 0.0, %v1420
      %v1422 = vpop.f32.mrb[0].mxu0
      %v1423 = vpop.f32.mrb[0].mxu0
      %v1424 = vadd.f32 0.0, %v1423
      %v1425 = vpop.f32.mrb[0].mxu0
      %1426 = vmatprep.mubr.bf16.mxu0 0
      %1427 = vmatmul.mubr.bf16.gmra.mrb[0].mxu0 %v1373
      %v1428 = vpop.f32.mrb[0].mxu0
      %v1429 = vadd.f32 0.0, %v1428
      %v1430 = vpop.f32.mrb[0].mxu0
      %v1431 = vpop.f32.mrb[0].mxu0
      %v1432 = vadd.f32 0.0, %v1431
      %v1433 = vpop.f32.mrb[0].mxu0
      %1434 = vmatprep.mubr.bf16.mxu0 0
      %1435 = vmatmul.mubr.bf16.gmra.mrb[0].mxu0 %v1376
      %v1436 = vpop.f32.mrb[0].mxu0
      %v1437 = vadd.f32 0.0, %v1436
      %v1438 = vpop.f32.mrb[0].mxu0
      %v1439 = vpop.f32.mrb[0].mxu0
      %v1440 = vadd.f32 0.0, %v1439
      %v1441 = vpop.f32.mrb[0].mxu0
      %1442 = vdwg.mxu0
      %v1443 = vadd.f32 %v1340, %v1413
      %v1444 = vadd.f32 %v1341, %v1416
      %v1445 = vadd.f32 %v1342, %v1421
      %v1446 = vadd.f32 %v1343, %v1424
      %v1447 = vadd.f32 %v1344, %v1429
      %v1448 = vadd.f32 %v1345, %v1432
      %v1449 = vadd.f32 %v1346, %v1437
      %v1450 = vadd.f32 %v1347, %v1440
      %s1451 = scalar_lea.vmem %s291, 48
      %v1452 = vld [vmem:[%s1451] sm:$0xf]
      %v1453 = vld [vmem:[%s1451 + $0x4] sm:$0xf]
      %v1455 = vunpack.c.l.b16 %v647
      %v1456 = vpack.c.b16 %v1455, %v1136
      %v1459 = vunpack.c.l.b16 %v1452
      %v1460 = vunpack.c.l.b16 %v1453
      %v1461 = vpack.c.b16 %v1460, %v1459
      %v1464 = vsel %vm826, %v1456, 0
      %1466 = vmatprep.subr.bf16.mxu0 0
      %1467 = vmatpush1.bf16.msra.mxu0 %v1461
      %1468 = vmatprep.subr.bf16.mxu0 0
      %1469 = vmatpush1.bf16.msra.mxu0 0
      %1470 = vmatprep.subr.bf16.mxu0 0
      %1471 = vmatpush1.bf16.msra.mxu0 0
      %1472 = vmatprep.subr.bf16.mxu0 0
      %1473 = vmatpush1.bf16.msra.mxu0 0
      %1474 = vmatprep.subr.bf16.mxu0 0
      %1475 = vmatpush1.bf16.msra.mxu0 0
      %1476 = vmatprep.subr.bf16.mxu0 0
      %1477 = vmatpush1.bf16.msra.mxu0 0
      %1478 = vmatprep.subr.bf16.mxu0 0
      %1479 = vmatpush1.bf16.msra.mxu0 0
      %1480 = vmatprep.subr.bf16.mxu0 0
      %1481 = vmatpush1.bf16.msra.mxu0 0
      %1482 = vmatprep.subr.bf16.mxu0 0
      %1483 = vmatpush1.bf16.msra.mxu0 0
      %1484 = vmatprep.subr.bf16.mxu0 0
      %1485 = vmatpush1.bf16.msra.mxu0 0
      %1486 = vmatprep.subr.bf16.mxu0 0
      %1487 = vmatpush1.bf16.msra.mxu0 0
      %1488 = vmatprep.subr.bf16.mxu0 0
      %1489 = vmatpush1.bf16.msra.mxu0 0
      %1490 = vmatprep.subr.bf16.mxu0 0
      %1491 = vmatpush1.bf16.msra.mxu0 0
      %1492 = vmatprep.subr.bf16.mxu0 0
      %1493 = vmatpush1.bf16.msra.mxu0 0
      %1494 = vmatprep.subr.bf16.mxu0 0
      %1495 = vmatpush1.bf16.msra.mxu0 0
      %1496 = vmatprep.subr.bf16.mxu0 0
      %1497 = vmatpush1.bf16.msra.mxu0 0
      %1498 = vmatprep.mubr.bf16.mxu0 0
      %1499 = vmatmul.mubr.bf16.gmra.mrb[0].mxu0 %v918
      %v1500 = vpop.f32.mrb[0].mxu0
      %v1501 = vadd.f32 0.0, %v1500
      %v1502 = vpop.f32.mrb[0].mxu0
      %v1503 = vpop.f32.mrb[0].mxu0
      %v1504 = vadd.f32 0.0, %v1503
      %v1505 = vpop.f32.mrb[0].mxu0
      %1506 = vmatprep.mubr.bf16.mxu0 0
      %1507 = vmatmul.mubr.bf16.gmra.mrb[0].mxu0 %v921
      %v1508 = vpop.f32.mrb[0].mxu0
      %v1509 = vadd.f32 0.0, %v1508
      %v1510 = vpop.f32.mrb[0].mxu0
      %v1511 = vpop.f32.mrb[0].mxu0
      %v1512 = vadd.f32 0.0, %v1511
      %v1513 = vpop.f32.mrb[0].mxu0
      %1514 = vmatprep.mubr.bf16.mxu0 0
      %1515 = vmatmul.mubr.bf16.gmra.mrb[0].mxu0 %v924
      %v1516 = vpop.f32.mrb[0].mxu0
      %v1517 = vadd.f32 0.0, %v1516
      %v1518 = vpop.f32.mrb[0].mxu0
      %v1519 = vpop.f32.mrb[0].mxu0
      %v1520 = vadd.f32 0.0, %v1519
      %v1521 = vpop.f32.mrb[0].mxu0
      %1522 = vmatprep.mubr.bf16.mxu0 0
      %1523 = vmatmul.mubr.bf16.gmra.mrb[0].mxu0 %v1464
      %v1524 = vpop.f32.mrb[0].mxu0
      %v1525 = vadd.f32 0.0, %v1524
      %v1526 = vpop.f32.mrb[0].mxu0
      %v1527 = vpop.f32.mrb[0].mxu0
      %v1528 = vadd.f32 0.0, %v1527
      %v1529 = vpop.f32.mrb[0].mxu0
      %1530 = vdwg.mxu0
      %v1531 = vadd.f32 %v1443, %v1501
      %v1532 = vadd.f32 %v1444, %v1504
      %v1533 = vadd.f32 %v1445, %v1509
      %v1534 = vadd.f32 %v1446, %v1512
      %v1535 = vadd.f32 %v1447, %v1517
      %v1536 = vadd.f32 %v1448, %v1520
      %v1537 = vadd.f32 %v1449, %v1525
      %v1538 = vadd.f32 %v1450, %v1528
      %v1539 = vunpack.c.h.b16 %v647
      %v1540 = vpack.c.b16 %v1455, %v1455
      %v1541 = vpack.c.b16 %v1539, %v1539
      %v1543 = vshrl.u32 %v1540, 16
      %v1545 = vrot.slane %v1543, 4
      %v1546 = vshll.u32 %v1540, 16
      %v1548 = vrot.slane %v1546, 5
      %v1549 = vor.u32 %v1545, %v1548
      %v1550 = vrot.slane %v1549, 4
      %v1552 = vshll.u32 %v1541, 16
      %v1554 = vrot.slane %v1552, 5
      %v1555 = vsel %vm692, %v1550, %v1554
      %s1556 = scalar_lea.vmem %s291, 56
      %v1557 = vld [vmem:[%s1556] sm:$0xf]
      %v1558 = vld [vmem:[%s1556 + $0x4] sm:$0xf]
      %v1559 = vunpack.c.l.b16 %v1555
      %v1560 = vpack.c.b16 %v1559, %v1252
      %v1563 = vunpack.c.l.b16 %v1557
      %v1564 = vunpack.c.l.b16 %v1558
      %v1565 = vpack.c.b16 %v1564, %v1563
      %v1568 = vsel %vm826, %v1560, 0
      %1570 = vmatprep.subr.bf16.mxu0 0
      %1571 = vmatpush1.bf16.msra.mxu0 %v1565
      %1572 = vmatprep.subr.bf16.mxu0 0
      %1573 = vmatpush1.bf16.msra.mxu0 0
      %1574 = vmatprep.subr.bf16.mxu0 0
      %1575 = vmatpush1.bf16.msra.mxu0 0
      %1576 = vmatprep.subr.bf16.mxu0 0
      %1577 = vmatpush1.bf16.msra.mxu0 0
      %1578 = vmatprep.subr.bf16.mxu0 0
      %1579 = vmatpush1.bf16.msra.mxu0 0
      %1580 = vmatprep.subr.bf16.mxu0 0
      %1581 = vmatpush1.bf16.msra.mxu0 0
      %1582 = vmatprep.subr.bf16.mxu0 0
      %1583 = vmatpush1.bf16.msra.mxu0 0
      %1584 = vmatprep.subr.bf16.mxu0 0
      %1585 = vmatpush1.bf16.msra.mxu0 0
      %1586 = vmatprep.subr.bf16.mxu0 0
      %1587 = vmatpush1.bf16.msra.mxu0 0
      %1588 = vmatprep.subr.bf16.mxu0 0
      %1589 = vmatpush1.bf16.msra.mxu0 0
      %1590 = vmatprep.subr.bf16.mxu0 0
      %1591 = vmatpush1.bf16.msra.mxu0 0
      %1592 = vmatprep.subr.bf16.mxu0 0
      %1593 = vmatpush1.bf16.msra.mxu0 0
      %1594 = vmatprep.subr.bf16.mxu0 0
      %1595 = vmatpush1.bf16.msra.mxu0 0
      %1596 = vmatprep.subr.bf16.mxu0 0
      %1597 = vmatpush1.bf16.msra.mxu0 0
      %1598 = vmatprep.subr.bf16.mxu0 0
      %1599 = vmatpush1.bf16.msra.mxu0 0
      %1600 = vmatprep.subr.bf16.mxu0 0
      %1601 = vmatpush1.bf16.msra.mxu0 0
      %1602 = vmatprep.mubr.bf16.mxu0 0
      %1603 = vmatmul.mubr.bf16.gmra.mrb[0].mxu0 %v831
      %v1604 = vpop.f32.mrb[0].mxu0
      %v1605 = vadd.f32 0.0, %v1604
      %v1606 = vpop.f32.mrb[0].mxu0
      %v1607 = vpop.f32.mrb[0].mxu0
      %v1608 = vadd.f32 0.0, %v1607
      %v1609 = vpop.f32.mrb[0].mxu0
      %1610 = vmatprep.mubr.bf16.mxu0 0
      %1611 = vmatmul.mubr.bf16.gmra.mrb[0].mxu0 %v834
      %v1612 = vpop.f32.mrb[0].mxu0
      %v1613 = vadd.f32 0.0, %v1612
      %v1614 = vpop.f32.mrb[0].mxu0
      %v1615 = vpop.f32.mrb[0].mxu0
      %v1616 = vadd.f32 0.0, %v1615
      %v1617 = vpop.f32.mrb[0].mxu0
      %1618 = vmatprep.mubr.bf16.mxu0 0
      %1619 = vmatmul.mubr.bf16.gmra.mrb[0].mxu0 %v837
      %v1620 = vpop.f32.mrb[0].mxu0
      %v1621 = vadd.f32 0.0, %v1620
      %v1622 = vpop.f32.mrb[0].mxu0
      %v1623 = vpop.f32.mrb[0].mxu0
      %v1624 = vadd.f32 0.0, %v1623
      %v1625 = vpop.f32.mrb[0].mxu0
      %1626 = vmatprep.mubr.bf16.mxu0 0
      %1627 = vmatmul.mubr.bf16.gmra.mrb[0].mxu0 %v1568
      %v1628 = vpop.f32.mrb[0].mxu0
      %v1629 = vadd.f32 0.0, %v1628
      %v1630 = vpop.f32.mrb[0].mxu0
      %v1631 = vpop.f32.mrb[0].mxu0
      %v1632 = vadd.f32 0.0, %v1631
      %v1633 = vpop.f32.mrb[0].mxu0
      %1634 = vdwg.mxu0
      %v1635 = vadd.f32 %v1531, %v1605
      %v1636 = vadd.f32 %v1532, %v1608
      %v1637 = vadd.f32 %v1533, %v1613
      %v1638 = vadd.f32 %v1534, %v1616
      %v1639 = vadd.f32 %v1535, %v1621
      %v1640 = vadd.f32 %v1536, %v1624
      %v1641 = vadd.f32 %v1537, %v1629
      %v1642 = vadd.f32 %v1538, %v1632
      %v1643 = vrot.slane %v1540, 5
      %v1644 = vrot.slane %v1643, 4
      %v1645 = vrot.slane %v1541, 5
      %v1646 = vsel %vm993, %v1644, %v1645
      %s1647 = scalar_lea.vmem %s291, 64
      %v1648 = vld [vmem:[%s1647] sm:$0xf]
      %v1649 = vld [vmem:[%s1647 + $0x4] sm:$0xf]
      %v1650 = vunpack.c.l.b16 %v1646
      %v1651 = vpack.c.b16 %v1650, %v1355
      %v1654 = vunpack.c.l.b16 %v1648
      %v1655 = vunpack.c.l.b16 %v1649
      %v1656 = vpack.c.b16 %v1655, %v1654
      %v1659 = vsel %vm826, %v1651, 0
      %1661 = vmatprep.subr.bf16.mxu0 0
      %1662 = vmatpush1.bf16.msra.mxu0 %v1656
      %1663 = vmatprep.subr.bf16.mxu0 0
      %1664 = vmatpush1.bf16.msra.mxu0 0
      %1665 = vmatprep.subr.bf16.mxu0 0
      %1666 = vmatpush1.bf16.msra.mxu0 0
      %1667 = vmatprep.subr.bf16.mxu0 0
      %1668 = vmatpush1.bf16.msra.mxu0 0
      %1669 = vmatprep.subr.bf16.mxu0 0
      %1670 = vmatpush1.bf16.msra.mxu0 0
      %1671 = vmatprep.subr.bf16.mxu0 0
      %1672 = vmatpush1.bf16.msra.mxu0 0
      %1673 = vmatprep.subr.bf16.mxu0 0
      %1674 = vmatpush1.bf16.msra.mxu0 0
      %1675 = vmatprep.subr.bf16.mxu0 0
      %1676 = vmatpush1.bf16.msra.mxu0 0
      %1677 = vmatprep.subr.bf16.mxu0 0
      %1678 = vmatpush1.bf16.msra.mxu0 0
      %1679 = vmatprep.subr.bf16.mxu0 0
      %1680 = vmatpush1.bf16.msra.mxu0 0
      %1681 = vmatprep.subr.bf16.mxu0 0
      %1682 = vmatpush1.bf16.msra.mxu0 0
      %1683 = vmatprep.subr.bf16.mxu0 0
      %1684 = vmatpush1.bf16.msra.mxu0 0
      %1685 = vmatprep.subr.bf16.mxu0 0
      %1686 = vmatpush1.bf16.msra.mxu0 0
      %1687 = vmatprep.subr.bf16.mxu0 0
      %1688 = vmatpush1.bf16.msra.mxu0 0
      %1689 = vmatprep.subr.bf16.mxu0 0
      %1690 = vmatpush1.bf16.msra.mxu0 0
      %1691 = vmatprep.subr.bf16.mxu0 0
      %1692 = vmatpush1.bf16.msra.mxu0 0
      %1693 = vmatprep.mubr.bf16.mxu0 0
      %1694 = vmatmul.mubr.bf16.gmra.mrb[0].mxu0 %v1051
      %v1695 = vpop.f32.mrb[0].mxu0
      %v1696 = vadd.f32 0.0, %v1695
      %v1697 = vpop.f32.mrb[0].mxu0
      %v1698 = vpop.f32.mrb[0].mxu0
      %v1699 = vadd.f32 0.0, %v1698
      %v1700 = vpop.f32.mrb[0].mxu0
      %1701 = vmatprep.mubr.bf16.mxu0 0
      %1702 = vmatmul.mubr.bf16.gmra.mrb[0].mxu0 %v1054
      %v1703 = vpop.f32.mrb[0].mxu0
      %v1704 = vadd.f32 0.0, %v1703
      %v1705 = vpop.f32.mrb[0].mxu0
      %v1706 = vpop.f32.mrb[0].mxu0
      %v1707 = vadd.f32 0.0, %v1706
      %v1708 = vpop.f32.mrb[0].mxu0
      %1709 = vmatprep.mubr.bf16.mxu0 0
      %1710 = vmatmul.mubr.bf16.gmra.mrb[0].mxu0 %v1057
      %v1711 = vpop.f32.mrb[0].mxu0
      %v1712 = vadd.f32 0.0, %v1711
      %v1713 = vpop.f32.mrb[0].mxu0
      %v1714 = vpop.f32.mrb[0].mxu0
      %v1715 = vadd.f32 0.0, %v1714
      %v1716 = vpop.f32.mrb[0].mxu0
      %1717 = vmatprep.mubr.bf16.mxu0 0
      %1718 = vmatmul.mubr.bf16.gmra.mrb[0].mxu0 %v1659
      %v1719 = vpop.f32.mrb[0].mxu0
      %v1720 = vadd.f32 0.0, %v1719
      %v1721 = vpop.f32.mrb[0].mxu0
      %v1722 = vpop.f32.mrb[0].mxu0
      %v1723 = vadd.f32 0.0, %v1722
      %v1724 = vpop.f32.mrb[0].mxu0
      %1725 = vdwg.mxu0
      %v1726 = vadd.f32 %v1635, %v1696
      %v1727 = vadd.f32 %v1636, %v1699
      %v1728 = vadd.f32 %v1637, %v1704
      %v1729 = vadd.f32 %v1638, %v1707
      %v1730 = vadd.f32 %v1639, %v1712
      %v1731 = vadd.f32 %v1640, %v1715
      %v1732 = vadd.f32 %v1641, %v1720
      %v1733 = vadd.f32 %v1642, %v1723
      %v1734 = vld [vmem:[%s294] sm:$0x1]
      %v1736 = vlaneseq
      %v1737 = vshrl.u32 %v1736, 7
      %v1738 = vsub.s32 0, %v1737
      %v1739 = vrot.slane %v1734, %v1738
      %v1741 = vadd.f32 %v1726, %v1739
      %v1742 = vadd.f32 %v1727, %v1739
      %v1743 = vadd.f32 %v1728, %v1739
      %v1744 = vadd.f32 %v1729, %v1739
      %v1745 = vadd.f32 %v1730, %v1739
      %v1746 = vadd.f32 %v1731, %v1739
      %v1747 = vadd.f32 %v1732, %v1739
      %v1748 = vadd.f32 %v1733, %v1739
      %v1749 = vmul.f32 %v1741, 0.5
      %v1750 = vmul.f32 %v1742, 0.5
      %v1751 = vmul.f32 %v1743, 0.5
      %v1752 = vmul.f32 %v1744, 0.5
      %v1753 = vmul.f32 %v1745, 0.5
      %v1754 = vmul.f32 %v1746, 0.5
      %v1755 = vmul.f32 %v1747, 0.5
      %v1756 = vmul.f32 %v1748, 0.5
      %v1757 = vtanh.pop %v1749
      %v1758 = vtanh.pop %v1750
      %v1759 = vtanh.pop %v1751
      %v1760 = vtanh.pop %v1752
      %v1761 = vtanh.pop %v1753
      %v1762 = vtanh.pop %v1754
      %v1763 = vtanh.pop %v1755
      %v1764 = vtanh.pop %v1756
      %v1765 = vmul.f32 %v1757, 0.5
      %v1766 = vmul.f32 %v1758, 0.5
      %v1767 = vmul.f32 %v1759, 0.5
      %v1768 = vmul.f32 %v1760, 0.5
      %v1769 = vmul.f32 %v1761, 0.5
      %v1770 = vmul.f32 %v1762, 0.5
      %v1771 = vmul.f32 %v1763, 0.5
      %v1772 = vmul.f32 %v1764, 0.5
      %v1773 = vadd.f32 %v1765, 0.5
      %v1774 = vadd.f32 %v1766, 0.5
      %v1775 = vadd.f32 %v1767, 0.5
      %v1776 = vadd.f32 %v1768, 0.5
      %v1777 = vadd.f32 %v1769, 0.5
      %v1778 = vadd.f32 %v1770, 0.5
      %v1779 = vadd.f32 %v1771, 0.5
      %v1780 = vadd.f32 %v1772, 0.5
      %v1781 = vmul.f32 %v1741, %v1773
      %v1782 = vmul.f32 %v1742, %v1774
      %v1783 = vmul.f32 %v1743, %v1775
      %v1784 = vmul.f32 %v1744, %v1776
      %v1785 = vmul.f32 %v1745, %v1777
      %v1786 = vmul.f32 %v1746, %v1778
      %v1787 = vmul.f32 %v1747, %v1779
      %v1788 = vmul.f32 %v1748, %v1780
      %v1789 = vpack.c.bf16 %v1781, %v1781
      %v1790 = vpack.c.bf16 %v1782, %v1782
      %v1791 = vpack.c.bf16 %v1783, %v1783
      %v1792 = vpack.c.bf16 %v1784, %v1784
      %v1793 = vpack.c.bf16 %v1785, %v1785
      %v1794 = vpack.c.bf16 %v1786, %v1786
      %v1795 = vpack.c.bf16 %v1787, %v1787
      %v1796 = vpack.c.bf16 %v1788, %v1788
      %vm1797 = vcmask 125952
      %1798 = vst.msk [vmem:[%s302] sm:$0xf] %vm1797, %v1789
      %1799 = vst.msk [vmem:[%s302 + $0x4] sm:$0xf] %vm1797, %v1790
      %1800 = vst.msk [vmem:[%s302 + $0x8] sm:$0xf] %vm1797, %v1791
      %1801 = vst.msk [vmem:[%s302 + $0xc] sm:$0xf] %vm1797, %v1792
      %1802 = vst.msk [vmem:[%s302 + $0x10] sm:$0xf] %vm1797, %v1793
      %1803 = vst.msk [vmem:[%s302 + $0x14] sm:$0xf] %vm1797, %v1794
      %1804 = vst.msk [vmem:[%s302 + $0x18] sm:$0xf] %vm1797, %v1795
      %1805 = vst.msk [vmem:[%s302 + $0x1c] sm:$0xf] %vm1797, %v1796
      %p1806 = scmp.lt.s32.totalorder %s21, 1
      %s1807 = scalar_select %p1806, %s21, 1
      %p1808 = scmp.lt.s32.totalorder %s22, 0
      %s1809 = scalar_select %p1808, %s22, 0
      %s1810 = smul.addr %s1807, 8
      %s1811 = sadd.s32 %s1809, %s1810
      %s1812 = smul.addr %s1811, 4
      %s1813 = scalar_lea.vmem %s6, %s1812
      // Predicated region
      $region45: #{forward.8} parent=43 // pred_check
        %p1814 = pneg %p190
      $region46: #{forward.8} parent=43 // pred_check_branch
        %1816 = sbr.rel (%p1814) target = $region48
      $region47: #{forward.8} parent=43 // pred_region
        _
      $region48: #{forward.8} parent=43 // pred_fallthru
        _
    $region44: #{forward.8} parent=5 // pred_fallthru
      _
    %p1817 = scmp.le.s32.totalorder 2, %s12
    // Predicated region
    $region49: #{forward.8} parent=5 // pred_check
      %p1818 = pneg %p1817
    $region50: #{forward.8} parent=5 // pred_check_branch
      %1820 = sbr.rel (%p1818) target = $region52
    $region51: #{forward.8} parent=5 // pred_region
      %s1821 = ssub.s32 %s12, 2
      // Predicated region
      $region53: #{forward.8} parent=51 // pred_check
        %p1822 = pneg %p196
      $region54: #{forward.8} parent=51 // pred_check_branch
        %1824 = sbr.rel (%p1822) target = $region56
      $region55: #{forward.8} parent=51 // pred_region
        %p1825 = scmp.lt.s32.totalorder %s23, 1
        %s1826 = scalar_select %p1825, %s23, 1
        %p1827 = scmp.lt.s32.totalorder %s24, 0
        %s1828 = scalar_select %p1827, %s24, 0
        %s1829 = smul.addr %s1826, 8
        %s1830 = sadd.s32 %s1828, %s1829
        %s1831 = smul.addr %s1830, 4
        %s1832 = scalar_lea.vmem %s6, %s1831
      $region56: #{forward.8} parent=51 // pred_fallthru
        _
    $region52: #{forward.8} parent=5 // pred_fallthru
      _
  $region6: #{forward.8} parent=0 // loop_footer
    %s16 = sadd.s32 1, %s12
  $region7: #{forward.8} parent=0 // loop_footer_branch
    %11 = sbr.rel target = $region3
  $region8: #{forward.8} parent=0 // loop_exit
    _

// kernel: forward.9
$region0: #{forward.9}
  #allocation0 [shape = 'u32[]', space=smem, size = 0x4, offset = 0x4, fixed_abs, tag = 'smem constant byte address 0x4 - core index']
  #allocation1 [shape = 'u32[144,128]{1,0:T(1,128)}', space=vmem, size = 0x12000, scoped, tag = 'internal scratch']
  %s0 = inlined_call_operand.vmem [shape: bf16[2,10,10,16], index: 0, kind: input, shape index: {}]
  %s1 = inlined_call_operand.vmem [shape: bf16[9,16,16], index: 1, kind: input, shape index: {}]
  %s2 = inlined_call_operand.vmem [shape: bf16[2,8,8,16], index: 2, kind: input, shape index: {}]
  %s3 = inlined_call_operand.hbm [shape: f32[2,8,8,16], index: 3, kind: output, shape index: {}]
  %s4 = sld [smem:[#allocation0]]
  $region45: #{forward.9} parent=0
    _
  %s6 = ssub.s32 1, %s4
  %s7 = scalar_select 0, %s6, %s4
  $region1: #{forward.9} parent=0
    #allocation2 [shape = 'u8[65536]{0}', space=vmem, size = 0x10000, scoped, tag = 'output window, operand 0']
    #allocation3 [shape = 's32[2]{0}', space=sflag, size = 0x8, scoped, tag = 'scoped memory for forward.9']
    %8 = vsyncpa [#allocation3], 0
    %s9 = scalar_lea.sflag [#allocation3], 1
    %10 = vsyncpa %s9, 0
    loop: start=0, step=1, limit=4
    $region2: #{forward.9} parent=1 // loop_pre_header
      _
    $region3: #{forward.9} parent=1 // loop_header
      %s12 = sphi 0, %s16
      %p13 = scmp.ge.s32.totalorder %s12, 4
      %s19 = sphi 0, %s31
      %s20 = sphi 0, %s27
      %s21 = sphi 0, %s19
      %s22 = sphi 0, %s20
      %s23 = sphi 0, %s21
      %s24 = sphi 0, %s22
      %s34 = sphi 0, %s36
      %s37 = sphi 0, %s34
      %s38 = sphi 0, %s37
      %s54 = sphi 0, %s38
      %s60 = sphi 0, %s62
      %s63 = sphi 0, %s60
      %s64 = sphi 0, %s63
      %s80 = sphi 0, %s64
      %s88 = sphi 0, %s90
      %s91 = sphi 0, %s88
      %s92 = sphi 0, %s91
      %s108 = sphi 0, %s92
      %s116 = sphi 0, %s118
      %s119 = sphi 0, %s116
      %s120 = sphi 0, %s119
      %s136 = sphi 0, %s120
    $region4: #{forward.9} parent=1 // loop_header_branch
      %15 = sbr.rel (%p13) target = $region8
    $region5: #{forward.9} parent=1 // loop_body
      %s17 = ssub.s32 %s12, 1
      %s18 = ssub.s32 %s12, 2
      %s25 = sadd.s32 1, %s20
      %p26 = scmp.ge.s32.totalorder %s25, 1
      %s27 = scalar_select %p26, 0, %s25
      %s28 = sadd.s32 1, %s19
      %s29 = scalar_select %p26, %s28, %s19
      %p30 = scmp.ge.s32.totalorder %s29, 2
      %s31 = scalar_select %p30, 0, %s29
      %s32 = ssub.s32 %s19, %s31
      %p33 = scmp.eq.s32.totalorder %s32, 0
      %s35 = sadd.s32 %s34, 1
      %s36 = scalar_select %p33, %s34, %s35
      %p39 = pneg %p33
      %p40 = scmp.eq.s32.totalorder %s12, 1
      %p41 = por %p39, %p40
      %p42 = scmp.ne.s32.totalorder %s34, %s37
      %p43 = scmp.eq.s32.totalorder %s12, 0
      %p44 = por %p42, %p43
      %p45 = scmp.ne.s32.totalorder %s34, %s37
      %p46 = scmp.eq.s32.totalorder %s17, 1
      %p47 = por %p45, %p46
      %p48 = scmp.ne.s32.totalorder %s37, %s38
      %p49 = scmp.eq.s32.totalorder %s17, 0
      %p50 = por %p48, %p49
      %p51 = scmp.ne.s32.totalorder %s37, %s38
      %p52 = scmp.eq.s32.totalorder %s18, 1
      %p53 = por %p51, %p52
      %p55 = scmp.ne.s32.totalorder %s38, %s54
      %p56 = scmp.eq.s32.totalorder %s18, 0
      %p57 = por %p55, %p56
      %s58 = ssub.s32 %s20, %s27
      %p59 = scmp.eq.s32.totalorder %s58, 0
      %s61 = sadd.s32 %s60, 1
      %s62 = scalar_select %p59, %s60, %s61
      %p65 = pneg %p59
      %p66 = scmp.eq.s32.totalorder %s12, 1
      %p67 = por %p65, %p66
      %p68 = scmp.ne.s32.totalorder %s60, %s63
      %p69 = scmp.eq.s32.totalorder %s12, 0
      %p70 = por %p68, %p69
      %p71 = scmp.ne.s32.totalorder %s60, %s63
      %p72 = scmp.eq.s32.totalorder %s17, 1
      %p73 = por %p71, %p72
      %p74 = scmp.ne.s32.totalorder %s63, %s64
      %p75 = scmp.eq.s32.totalorder %s17, 0
      %p76 = por %p74, %p75
      %p77 = scmp.ne.s32.totalorder %s63, %s64
      %p78 = scmp.eq.s32.totalorder %s18, 1
      %p79 = por %p77, %p78
      %p81 = scmp.ne.s32.totalorder %s64, %s80
      %p82 = scmp.eq.s32.totalorder %s18, 0
      %p83 = por %p81, %p82
      %s84 = ssub.s32 %s19, %s31
      %s85 = ssub.s32 %s20, %s27
      %s86 = sor.u32 %s84, %s85
      %p87 = scmp.eq.s32.totalorder %s86, 0
      %s89 = sadd.s32 %s88, 1
      %s90 = scalar_select %p87, %s88, %s89
      %p93 = pneg %p87
      %p94 = scmp.eq.s32.totalorder %s12, 1
      %p95 = por %p93, %p94
      %p96 = scmp.ne.s32.totalorder %s88, %s91
      %p97 = scmp.eq.s32.totalorder %s12, 0
      %p98 = por %p96, %p97
      %p99 = scmp.ne.s32.totalorder %s88, %s91
      %p100 = scmp.eq.s32.totalorder %s17, 1
      %p101 = por %p99, %p100
      %p102 = scmp.ne.s32.totalorder %s91, %s92
      %p103 = scmp.eq.s32.totalorder %s17, 0
      %p104 = por %p102, %p103
      %p105 = scmp.ne.s32.totalorder %s91, %s92
      %p106 = scmp.eq.s32.totalorder %s18, 1
      %p107 = por %p105, %p106
      %p109 = scmp.ne.s32.totalorder %s92, %s108
      %p110 = scmp.eq.s32.totalorder %s18, 0
      %p111 = por %p109, %p110
      %s112 = ssub.s32 %s19, %s31
      %s113 = ssub.s32 %s20, %s27
      %s114 = sor.u32 %s112, %s113
      %p115 = scmp.eq.s32.totalorder %s114, 0
      %s117 = sadd.s32 %s116, 1
      %s118 = scalar_select %p115, %s116, %s117
      %p121 = pneg %p115
      %p122 = scmp.eq.s32.totalorder %s12, 1
      %p123 = por %p121, %p122
      %p124 = scmp.ne.s32.totalorder %s116, %s119
      %p125 = scmp.eq.s32.totalorder %s12, 0
      %p126 = por %p124, %p125
      %p127 = scmp.ne.s32.totalorder %s116, %s119
      %p128 = scmp.eq.s32.totalorder %s17, 1
      %p129 = por %p127, %p128
      %p130 = scmp.ne.s32.totalorder %s119, %s120
      %p131 = scmp.eq.s32.totalorder %s17, 0
      %p132 = por %p130, %p131
      %p133 = scmp.ne.s32.totalorder %s119, %s120
      %p134 = scmp.eq.s32.totalorder %s18, 1
      %p135 = por %p133, %p134
      %p137 = scmp.ne.s32.totalorder %s120, %s136
      %p138 = scmp.eq.s32.totalorder %s18, 0
      %p139 = por %p137, %p138
      %p140 = scmp.le.s32.totalorder 1, %s12
      %p141 = scmp.lt.s32.totalorder %s12, 3
      %p142 = pnand %p140, %p141
      %p143 = pneg %p142
      // Predicated region
      $region9: #{forward.9} parent=5 // pred_check
        _
      $region10: #{forward.9} parent=5 // pred_check_branch
        %145 = sbr.rel (%p142) target = $region12
      $region11: #{forward.9} parent=5 // pred_region
        %s146 = ssub.s32 %s12, 1
        // Predicated region
        $region13: #{forward.9} parent=11 // pred_check
          %p147 = pneg %p76
        $region14: #{forward.9} parent=11 // pred_check_branch
          %149 = sbr.rel (%p147) target = $region16
        $region15: #{forward.9} parent=11 // pred_region
          %p150 = scmp.lt.s32.totalorder %s22, 0
          %s151 = scalar_select %p150, %s22, 0
          %s152 = smul.addr %s151, 4
          %s153 = scalar_lea.vmem %s1, %s152
        $region16: #{forward.9} parent=11 // pred_fallthru
          _
      $region12: #{forward.9} parent=5 // pred_fallthru
        _
      %p154 = scmp.lt.s32.totalorder %s12, 2
      // Predicated region
      $region17: #{forward.9} parent=5 // pred_check
        %p155 = pneg %p154
      $region18: #{forward.9} parent=5 // pred_check_branch
        %157 = sbr.rel (%p155) target = $region20
      $region19: #{forward.9} parent=5 // pred_region
        // Predicated region
        $region21: #{forward.9} parent=19 // pred_check
          %p158 = pneg %p44
        $region22: #{forward.9} parent=19 // pred_check_branch
          %160 = sbr.rel (%p158) target = $region24
        $region23: #{forward.9} parent=19 // pred_region
          %p161 = scmp.lt.s32.totalorder %s19, 1
          %s162 = scalar_select %p161, %s19, 1
          %s163 = smul.addr %s162, 20
          %s164 = smul.addr %s163, 4
          %s165 = scalar_lea.vmem %s0, %s164
        $region24: #{forward.9} parent=19 // pred_fallthru
          _
        // Predicated region
        $region25: #{forward.9} parent=19 // pred_check
          %p166 = pneg %p98
        $region26: #{forward.9} parent=19 // pred_check_branch
          %168 = sbr.rel (%p166) target = $region28
        $region27: #{forward.9} parent=19 // pred_region
          %p169 = scmp.lt.s32.totalorder %s19, 1
          %s170 = scalar_select %p169, %s19, 1
          %p171 = scmp.lt.s32.totalorder %s20, 0
          %s172 = scalar_select %p171, %s20, 0
          %s173 = smul.addr %s170, 8
          %s174 = sadd.s32 %s172, %s173
          %s175 = smul.addr %s174, 4
          %s176 = scalar_lea.vmem %s2, %s175
        $region28: #{forward.9} parent=19 // pred_fallthru
          _
      $region20: #{forward.9} parent=5 // pred_fallthru
        _
      %p177 = scmp.le.s32.totalorder 1, %s12
      %p178 = scmp.lt.s32.totalorder %s12, 3
      %p179 = pnand %p177, %p178
      %p180 = pneg %p179
      // Predicated region
      $region29: #{forward.9} parent=5 // pred_check
        _
      $region30: #{forward.9} parent=5 // pred_check_branch
        %182 = sbr.rel (%p179) target = $region32
      $region31: #{forward.9} parent=5 // pred_region
        %s183 = ssub.s32 %s12, 1
        %p184 = scmp.lt.s32.totalorder %s21, 1
        %s185 = scalar_select %p184, %s21, 1
        %s186 = smul.addr %s185, 20
        %s187 = smul.addr %s186, 4
        %s188 = scalar_lea.vmem %s0, %s187
        %p189 = pneg %p50
        %p190 = pneg %p47
        %p191 = scmp.lt.s32.totalorder %s22, 0
        %s192 = scalar_select %p191, %s22, 0
        %s193 = smul.addr %s192, 4
        %s194 = scalar_lea.vmem %s1, %s193
        %p195 = pneg %p76
        %p196 = pneg %p73
        %p197 = scmp.lt.s32.totalorder %s21, 1
        %s198 = scalar_select %p197, %s21, 1
        %p199 = scmp.lt.s32.totalorder %s22, 0
        %s200 = scalar_select %p199, %s22, 0
        %s201 = smul.addr %s198, 8
        %s202 = sadd.s32 %s200, %s201
        %s203 = smul.addr %s202, 4
        %s204 = scalar_lea.vmem %s2, %s203
        %p205 = pneg %p104
        %p206 = pneg %p101
        %p207 = pneg %p132
        %p208 = pneg %p129
        %s209 = sand.u32 %s119, 1
        %s210 = scalar_lea.sflag [#allocation3], %s209
        %s211 = sand.u32 %s119, 1
        %s212 = smul.addr %s211, 64
        %s213 = scalar_lea.vmem [#allocation2], %s212
        %p214 = scmp.lt.s32.totalorder %s21, 1
        %s215 = scalar_select %p214, %s21, 1
        %s216 = smul.addr %s215, 20
        %s217 = smul.addr %s216, 4
        %s218 = scalar_lea.vmem %s0, %s217
        %p219 = scmp.lt.s32.totalorder %s22, 0
        %s220 = scalar_select %p219, %s22, 0
        %s221 = smul.addr %s220, 4
        %s222 = scalar_lea.vmem %s1, %s221
        %p223 = scmp.lt.s32.totalorder %s21, 1
        %s224 = scalar_select %p223, %s21, 1
        %p225 = scmp.lt.s32.totalorder %s22, 0
        %s226 = scalar_select %p225, %s22, 0
        %s227 = smul.addr %s224, 8
        %s228 = sadd.s32 %s226, %s227
        %s229 = smul.addr %s228, 4
        %s230 = scalar_lea.vmem %s2, %s229
        %v232 = vld [vmem:[%s218] sm:$0xf]
        %v233 = vld [vmem:[%s218 + $0x4] sm:$0x1]
        %v234 = vld [vmem:[%s218 + $0x8] sm:$0xf]
        %v235 = vld [vmem:[%s218 + $0xc] sm:$0x1]
        %v236 = vld [vmem:[%s218 + $0x10] sm:$0xf]
        %v237 = vld [vmem:[%s218 + $0x14] sm:$0x1]
        %v238 = vld [vmem:[%s218 + $0x18] sm:$0xf]
        %v239 = vld [vmem:[%s218 + $0x1c] sm:$0x1]
        %v240 = vld [vmem:[%s218 + $0x20] sm:$0xf]
        %v241 = vld [vmem:[%s218 + $0x24] sm:$0x1]
        %v242 = vld [vmem:[%s218 + $0x28] sm:$0xf]
        %v243 = vld [vmem:[%s218 + $0x2c] sm:$0x1]
        %v244 = vld [vmem:[%s218 + $0x30] sm:$0xf]
        %v245 = vld [vmem:[%s218 + $0x34] sm:$0x1]
        %v246 = vld [vmem:[%s218 + $0x38] sm:$0xf]
        %v247 = vld [vmem:[%s218 + $0x3c] sm:$0x1]
        %v248 = vld [vmem:[%s218 + $0x40] sm:$0xf]
        %v249 = vld [vmem:[%s218 + $0x44] sm:$0x1]
        %v250 = vld [vmem:[%s218 + $0x48] sm:$0xf]
        %v251 = vld [vmem:[%s218 + $0x4c] sm:$0x1]
        %v252 = vld [vmem:[%s222] sm:$0xf]
        %v253 = vld [vmem:[%s222 + $0x4] sm:$0xf]
        %vm254 = vsmask.f32 3328
        %vm255 = vsmask.f32 7440
        %vm256 = vmor %vm254, %vm255
        %v258 = vshrl.u32 %v232, 16
        %v260 = vrot.slane %v258, 4
        %v261 = vshll.u32 %v232, 16
        %v263 = vrot.slane %v261, 5
        %v264 = vor.u32 %v260, %v263
        %v265 = vrot.slane %v264, 4
        %v267 = vshll.u32 %v233, 16
        %v269 = vrot.slane %v267, 5
        %v270 = vsel %vm256, %v265, %v269
        %v272 = vshrl.u32 %v234, 16
        %v274 = vrot.slane %v272, 4
        %v275 = vshll.u32 %v234, 16
        %v277 = vrot.slane %v275, 5
        %v278 = vor.u32 %v274, %v277
        %v279 = vrot.slane %v278, 4
        %v281 = vshll.u32 %v235, 16
        %v283 = vrot.slane %v281, 5
        %v284 = vsel %vm256, %v279, %v283
        %v286 = vshrl.u32 %v236, 16
        %v288 = vrot.slane %v286, 4
        %v289 = vshll.u32 %v236, 16
        %v291 = vrot.slane %v289, 5
        %v292 = vor.u32 %v288, %v291
        %v293 = vrot.slane %v292, 4
        %v295 = vshll.u32 %v237, 16
        %v297 = vrot.slane %v295, 5
        %v298 = vsel %vm256, %v293, %v297
        %v300 = vshrl.u32 %v238, 16
        %v302 = vrot.slane %v300, 4
        %v303 = vshll.u32 %v238, 16
        %v305 = vrot.slane %v303, 5
        %v306 = vor.u32 %v302, %v305
        %v307 = vrot.slane %v306, 4
        %v309 = vshll.u32 %v239, 16
        %v311 = vrot.slane %v309, 5
        %v312 = vsel %vm256, %v307, %v311
        %v314 = vshrl.u32 %v240, 16
        %v316 = vrot.slane %v314, 4
        %v317 = vshll.u32 %v240, 16
        %v319 = vrot.slane %v317, 5
        %v320 = vor.u32 %v316, %v319
        %v321 = vrot.slane %v320, 4
        %v323 = vshll.u32 %v241, 16
        %v325 = vrot.slane %v323, 5
        %v326 = vsel %vm256, %v321, %v325
        %v328 = vshrl.u32 %v242, 16
        %v330 = vrot.slane %v328, 4
        %v331 = vshll.u32 %v242, 16
        %v333 = vrot.slane %v331, 5
        %v334 = vor.u32 %v330, %v333
        %v335 = vrot.slane %v334, 4
        %v337 = vshll.u32 %v243, 16
        %v339 = vrot.slane %v337, 5
        %v340 = vsel %vm256, %v335, %v339
        %v342 = vshrl.u32 %v244, 16
        %v344 = vrot.slane %v342, 4
        %v345 = vshll.u32 %v244, 16
        %v347 = vrot.slane %v345, 5
        %v348 = vor.u32 %v344, %v347
        %v349 = vrot.slane %v348, 4
        %v351 = vshll.u32 %v245, 16
        %v353 = vrot.slane %v351, 5
        %v354 = vsel %vm256, %v349, %v353
        %v356 = vshrl.u32 %v246, 16
        %v358 = vrot.slane %v356, 4
        %v359 = vshll.u32 %v246, 16
        %v361 = vrot.slane %v359, 5
        %v362 = vor.u32 %v358, %v361
        %v363 = vrot.slane %v362, 4
        %v365 = vshll.u32 %v247, 16
        %v367 = vrot.slane %v365, 5
        %v368 = vsel %vm256, %v363, %v367
        %s369 = scalar_lea.vmem %s222, 8
        %v370 = vld [vmem:[%s369] sm:$0xf]
        %v371 = vld [vmem:[%s369 + $0x4] sm:$0xf]
        %v372 = vunpack.c.l.b16 %v270
        %v373 = vunpack.c.l.b16 %v284
        %v374 = vunpack.c.l.b16 %v298
        %v375 = vunpack.c.l.b16 %v312
        %v376 = vunpack.c.l.b16 %v326
        %v377 = vunpack.c.l.b16 %v340
        %v378 = vunpack.c.l.b16 %v354
        %v379 = vunpack.c.l.b16 %v368
        %v380 = vpack.c.b16 %v373, %v372
        %v381 = vpack.c.b16 %v375, %v374
        %v382 = vpack.c.b16 %v377, %v376
        %v383 = vpack.c.b16 %v379, %v378
        %v386 = vunpack.c.l.b16 %v370
        %v387 = vunpack.c.l.b16 %v371
        %v388 = vpack.c.b16 %v387, %v386
        %vm390 = vcmask 130048
        %v392 = vsel %vm390, %v380, 0
        %v395 = vsel %vm390, %v381, 0
        %v398 = vsel %vm390, %v382, 0
        %v401 = vsel %vm390, %v383, 0
        %403 = vmatprep.subr.bf16.mxu0 0
        %404 = vmatpush1.bf16.msra.mxu0 %v388
        %405 = vmatprep.subr.bf16.mxu0 0
        %406 = vmatpush1.bf16.msra.mxu0 0
        %407 = vmatprep.subr.bf16.mxu0 0
        %408 = vmatpush1.bf16.msra.mxu0 0
        %409 = vmatprep.subr.bf16.mxu0 0
        %410 = vmatpush1.bf16.msra.mxu0 0
        %411 = vmatprep.subr.bf16.mxu0 0
        %412 = vmatpush1.bf16.msra.mxu0 0
        %413 = vmatprep.subr.bf16.mxu0 0
        %414 = vmatpush1.bf16.msra.mxu0 0
        %415 = vmatprep.subr.bf16.mxu0 0
        %416 = vmatpush1.bf16.msra.mxu0 0
        %417 = vmatprep.subr.bf16.mxu0 0
        %418 = vmatpush1.bf16.msra.mxu0 0
        %419 = vmatprep.subr.bf16.mxu0 0
        %420 = vmatpush1.bf16.msra.mxu0 0
        %421 = vmatprep.subr.bf16.mxu0 0
        %422 = vmatpush1.bf16.msra.mxu0 0
        %423 = vmatprep.subr.bf16.mxu0 0
        %424 = vmatpush1.bf16.msra.mxu0 0
        %425 = vmatprep.subr.bf16.mxu0 0
        %426 = vmatpush1.bf16.msra.mxu0 0
        %427 = vmatprep.subr.bf16.mxu0 0
        %428 = vmatpush1.bf16.msra.mxu0 0
        %429 = vmatprep.subr.bf16.mxu0 0
        %430 = vmatpush1.bf16.msra.mxu0 0
        %431 = vmatprep.subr.bf16.mxu0 0
        %432 = vmatpush1.bf16.msra.mxu0 0
        %433 = vmatprep.subr.bf16.mxu0 0
        %434 = vmatpush1.bf16.msra.mxu0 0
        %435 = vmatprep.mubr.bf16.mxu0 0
        %436 = vmatmul.mubr.bf16.gmra.mrb[0].mxu0 %v392
        %v437 = vpop.f32.mrb[0].mxu0
        %v438 = vadd.f32 0.0, %v437
        %v439 = vpop.f32.mrb[0].mxu0
        %v440 = vpop.f32.mrb[0].mxu0
        %v441 = vadd.f32 0.0, %v440
        %v442 = vpop.f32.mrb[0].mxu0
        %443 = vmatprep.mubr.bf16.mxu0 0
        %444 = vmatmul.mubr.bf16.gmra.mrb[0].mxu0 %v395
        %v445 = vpop.f32.mrb[0].mxu0
        %v446 = vadd.f32 0.0, %v445
        %v447 = vpop.f32.mrb[0].mxu0
        %v448 = vpop.f32.mrb[0].mxu0
        %v449 = vadd.f32 0.0, %v448
        %v450 = vpop.f32.mrb[0].mxu0
        %451 = vmatprep.mubr.bf16.mxu0 0
        %452 = vmatmul.mubr.bf16.gmra.mrb[0].mxu0 %v398
        %v453 = vpop.f32.mrb[0].mxu0
        %v454 = vadd.f32 0.0, %v453
        %v455 = vpop.f32.mrb[0].mxu0
        %v456 = vpop.f32.mrb[0].mxu0
        %v457 = vadd.f32 0.0, %v456
        %v458 = vpop.f32.mrb[0].mxu0
        %459 = vmatprep.mubr.bf16.mxu0 0
        %460 = vmatmul.mubr.bf16.gmra.mrb[0].mxu0 %v401
        %v461 = vpop.f32.mrb[0].mxu0
        %v462 = vadd.f32 0.0, %v461
        %v463 = vpop.f32.mrb[0].mxu0
        %v464 = vpop.f32.mrb[0].mxu0
        %v465 = vadd.f32 0.0, %v464
        %v466 = vpop.f32.mrb[0].mxu0
        %467 = vdwg.mxu0
        %v476 = vunpack.c.l.b16 %v232
        %v477 = vunpack.c.l.b16 %v234
        %v478 = vunpack.c.l.b16 %v236
        %v479 = vunpack.c.l.b16 %v238
        %v480 = vunpack.c.l.b16 %v240
        %v481 = vunpack.c.l.b16 %v242
        %v482 = vunpack.c.l.b16 %v244
        %v483 = vunpack.c.l.b16 %v246
        %v484 = vpack.c.b16 %v477, %v476
        %v485 = vpack.c.b16 %v479, %v478
        %v486 = vpack.c.b16 %v481, %v480
        %v487 = vpack.c.b16 %v483, %v482
        %v490 = vunpack.c.l.b16 %v252
        %v491 = vunpack.c.l.b16 %v253
        %v492 = vpack.c.b16 %v491, %v490
        %v495 = vsel %vm390, %v484, 0
        %v498 = vsel %vm390, %v485, 0
        %v501 = vsel %vm390, %v486, 0
        %v504 = vsel %vm390, %v487, 0
        %506 = vmatprep.subr.bf16.mxu0 0
        %507 = vmatpush1.bf16.msra.mxu0 %v492
        %508 = vmatprep.subr.bf16.mxu0 0
        %509 = vmatpush1.bf16.msra.mxu0 0
        %510 = vmatprep.subr.bf16.mxu0 0
        %511 = vmatpush1.bf16.msra.mxu0 0
        %512 = vmatprep.subr.bf16.mxu0 0
        %513 = vmatpush1.bf16.msra.mxu0 0
        %514 = vmatprep.subr.bf16.mxu0 0
        %515 = vmatpush1.bf16.msra.mxu0 0
        %516 = vmatprep.subr.bf16.mxu0 0
        %517 = vmatpush1.bf16.msra.mxu0 0
        %518 = vmatprep.subr.bf16.mxu0 0
        %519 = vmatpush1.bf16.msra.mxu0 0
        %520 = vmatprep.subr.bf16.mxu0 0
        %521 = vmatpush1.bf16.msra.mxu0 0
        %522 = vmatprep.subr.bf16.mxu0 0
        %523 = vmatpush1.bf16.msra.mxu0 0
        %524 = vmatprep.subr.bf16.mxu0 0
        %525 = vmatpush1.bf16.msra.mxu0 0
        %526 = vmatprep.subr.bf16.mxu0 0
        %527 = vmatpush1.bf16.msra.mxu0 0
        %528 = vmatprep.subr.bf16.mxu0 0
        %529 = vmatpush1.bf16.msra.mxu0 0
        %530 = vmatprep.subr.bf16.mxu0 0
        %531 = vmatpush1.bf16.msra.mxu0 0
        %532 = vmatprep.subr.bf16.mxu0 0
        %533 = vmatpush1.bf16.msra.mxu0 0
        %534 = vmatprep.subr.bf16.mxu0 0
        %535 = vmatpush1.bf16.msra.mxu0 0
        %536 = vmatprep.subr.bf16.mxu0 0
        %537 = vmatpush1.bf16.msra.mxu0 0
        %538 = vmatprep.mubr.bf16.mxu0 0
        %539 = vmatmul.mubr.bf16.gmra.mrb[0].mxu0 %v495
        %v540 = vpop.f32.mrb[0].mxu0
        %v541 = vadd.f32 %v438, %v540
        %v542 = vpop.f32.mrb[0].mxu0
        %v543 = vpop.f32.mrb[0].mxu0
        %v544 = vadd.f32 %v441, %v543
        %v545 = vpop.f32.mrb[0].mxu0
        %546 = vmatprep.mubr.bf16.mxu0 0
        %547 = vmatmul.mubr.bf16.gmra.mrb[0].mxu0 %v498
        %v548 = vpop.f32.mrb[0].mxu0
        %v549 = vadd.f32 %v446, %v548
        %v550 = vpop.f32.mrb[0].mxu0
        %v551 = vpop.f32.mrb[0].mxu0
        %v552 = vadd.f32 %v449, %v551
        %v553 = vpop.f32.mrb[0].mxu0
        %554 = vmatprep.mubr.bf16.mxu0 0
        %555 = vmatmul.mubr.bf16.gmra.mrb[0].mxu0 %v501
        %v556 = vpop.f32.mrb[0].mxu0
        %v557 = vadd.f32 %v454, %v556
        %v558 = vpop.f32.mrb[0].mxu0
        %v559 = vpop.f32.mrb[0].mxu0
        %v560 = vadd.f32 %v457, %v559
        %v561 = vpop.f32.mrb[0].mxu0
        %562 = vmatprep.mubr.bf16.mxu0 0
        %563 = vmatmul.mubr.bf16.gmra.mrb[0].mxu0 %v504
        %v564 = vpop.f32.mrb[0].mxu0
        %v565 = vadd.f32 %v462, %v564
        %v566 = vpop.f32.mrb[0].mxu0
        %v567 = vpop.f32.mrb[0].mxu0
        %v568 = vadd.f32 %v465, %v567
        %v569 = vpop.f32.mrb[0].mxu0
        %570 = vdwg.mxu0
        %vm579 = vcmask 1042432
        %vm580 = vcmask 1046532
        %vm581 = vmor %vm579, %vm580
        %v582 = vrot.slane %v232, 5
        %v583 = vrot.slane %v582, 4
        %v584 = vrot.slane %v233, 5
        %v585 = vsel %vm581, %v583, %v584
        %v586 = vrot.slane %v234, 5
        %v587 = vrot.slane %v586, 4
        %v588 = vrot.slane %v235, 5
        %v589 = vsel %vm581, %v587, %v588
        %v590 = vrot.slane %v236, 5
        %v591 = vrot.slane %v590, 4
        %v592 = vrot.slane %v237, 5
        %v593 = vsel %vm581, %v591, %v592
        %v594 = vrot.slane %v238, 5
        %v595 = vrot.slane %v594, 4
        %v596 = vrot.slane %v239, 5
        %v597 = vsel %vm581, %v595, %v596
        %v598 = vrot.slane %v240, 5
        %v599 = vrot.slane %v598, 4
        %v600 = vrot.slane %v241, 5
        %v601 = vsel %vm581, %v599, %v600
        %v602 = vrot.slane %v242, 5
        %v603 = vrot.slane %v602, 4
        %v604 = vrot.slane %v243, 5
        %v605 = vsel %vm581, %v603, %v604
        %v606 = vrot.slane %v244, 5
        %v607 = vrot.slane %v606, 4
        %v608 = vrot.slane %v245, 5
        %v609 = vsel %vm581, %v607, %v608
        %v610 = vrot.slane %v246, 5
        %v611 = vrot.slane %v610, 4
        %v612 = vrot.slane %v247, 5
        %v613 = vsel %vm581, %v611, %v612
        %s614 = scalar_lea.vmem %s222, 16
        %v615 = vld [vmem:[%s614] sm:$0xf]
        %v616 = vld [vmem:[%s614 + $0x4] sm:$0xf]
        %v617 = vunpack.c.l.b16 %v585
        %v618 = vunpack.c.l.b16 %v589
        %v619 = vunpack.c.l.b16 %v593
        %v620 = vunpack.c.l.b16 %v597
        %v621 = vunpack.c.l.b16 %v601
        %v622 = vunpack.c.l.b16 %v605
        %v623 = vunpack.c.l.b16 %v609
        %v624 = vunpack.c.l.b16 %v613
        %v625 = vpack.c.b16 %v618, %v617
        %v626 = vpack.c.b16 %v620, %v619
        %v627 = vpack.c.b16 %v622, %v621
        %v628 = vpack.c.b16 %v624, %v623
        %v631 = vunpack.c.l.b16 %v615
        %v632 = vunpack.c.l.b16 %v616
        %v633 = vpack.c.b16 %v632, %v631
        %v636 = vsel %vm390, %v625, 0
        %v639 = vsel %vm390, %v626, 0
        %v642 = vsel %vm390, %v627, 0
        %v645 = vsel %vm390, %v628, 0
        %647 = vmatprep.subr.bf16.mxu0 0
        %648 = vmatpush1.bf16.msra.mxu0 %v633
        %649 = vmatprep.subr.bf16.mxu0 0
        %650 = vmatpush1.bf16.msra.mxu0 0
        %651 = vmatprep.subr.bf16.mxu0 0
        %652 = vmatpush1.bf16.msra.mxu0 0
        %653 = vmatprep.subr.bf16.mxu0 0
        %654 = vmatpush1.bf16.msra.mxu0 0
        %655 = vmatprep.subr.bf16.mxu0 0
        %656 = vmatpush1.bf16.msra.mxu0 0
        %657 = vmatprep.subr.bf16.mxu0 0
        %658 = vmatpush1.bf16.msra.mxu0 0
        %659 = vmatprep.subr.bf16.mxu0 0
        %660 = vmatpush1.bf16.msra.mxu0 0
        %661 = vmatprep.subr.bf16.mxu0 0
        %662 = vmatpush1.bf16.msra.mxu0 0
        %663 = vmatprep.subr.bf16.mxu0 0
        %664 = vmatpush1.bf16.msra.mxu0 0
        %665 = vmatprep.subr.bf16.mxu0 0
        %666 = vmatpush1.bf16.msra.mxu0 0
        %667 = vmatprep.subr.bf16.mxu0 0
        %668 = vmatpush1.bf16.msra.mxu0 0
        %669 = vmatprep.subr.bf16.mxu0 0
        %670 = vmatpush1.bf16.msra.mxu0 0
        %671 = vmatprep.subr.bf16.mxu0 0
        %672 = vmatpush1.bf16.msra.mxu0 0
        %673 = vmatprep.subr.bf16.mxu0 0
        %674 = vmatpush1.bf16.msra.mxu0 0
        %675 = vmatprep.subr.bf16.mxu0 0
        %676 = vmatpush1.bf16.msra.mxu0 0
        %677 = vmatprep.subr.bf16.mxu0 0
        %678 = vmatpush1.bf16.msra.mxu0 0
        %679 = vmatprep.mubr.bf16.mxu0 0
        %680 = vmatmul.mubr.bf16.gmra.mrb[0].mxu0 %v636
        %v681 = vpop.f32.mrb[0].mxu0
        %v682 = vadd.f32 0.0, %v681
        %v683 = vpop.f32.mrb[0].mxu0
        %v684 = vpop.f32.mrb[0].mxu0
        %v685 = vadd.f32 0.0, %v684
        %v686 = vpop.f32.mrb[0].mxu0
        %687 = vmatprep.mubr.bf16.mxu0 0
        %688 = vmatmul.mubr.bf16.gmra.mrb[0].mxu0 %v639
        %v689 = vpop.f32.mrb[0].mxu0
        %v690 = vadd.f32 0.0, %v689
        %v691 = vpop.f32.mrb[0].mxu0
        %v692 = vpop.f32.mrb[0].mxu0
        %v693 = vadd.f32 0.0, %v692
        %v694 = vpop.f32.mrb[0].mxu0
        %695 = vmatprep.mubr.bf16.mxu0 0
        %696 = vmatmul.mubr.bf16.gmra.mrb[0].mxu0 %v642
        %v697 = vpop.f32.mrb[0].mxu0
        %v698 = vadd.f32 0.0, %v697
        %v699 = vpop.f32.mrb[0].mxu0
        %v700 = vpop.f32.mrb[0].mxu0
        %v701 = vadd.f32 0.0, %v700
        %v702 = vpop.f32.mrb[0].mxu0
        %703 = vmatprep.mubr.bf16.mxu0 0
        %704 = vmatmul.mubr.bf16.gmra.mrb[0].mxu0 %v645
        %v705 = vpop.f32.mrb[0].mxu0
        %v706 = vadd.f32 0.0, %v705
        %v707 = vpop.f32.mrb[0].mxu0
        %v708 = vpop.f32.mrb[0].mxu0
        %v709 = vadd.f32 0.0, %v708
        %v710 = vpop.f32.mrb[0].mxu0
        %711 = vdwg.mxu0
        %v712 = vadd.f32 %v541, %v682
        %v713 = vadd.f32 %v544, %v685
        %v714 = vadd.f32 %v549, %v690
        %v715 = vadd.f32 %v552, %v693
        %v716 = vadd.f32 %v557, %v698
        %v717 = vadd.f32 %v560, %v701
        %v718 = vadd.f32 %v565, %v706
        %v719 = vadd.f32 %v568, %v709
        %s720 = scalar_lea.vmem %s222, 24
        %v721 = vld [vmem:[%s720] sm:$0xf]
        %v722 = vld [vmem:[%s720 + $0x4] sm:$0xf]
        %v724 = vunpack.c.l.b16 %v248
        %v725 = vpack.c.b16 %v478, %v477
        %v726 = vpack.c.b16 %v480, %v479
        %v727 = vpack.c.b16 %v482, %v481
        %v728 = vpack.c.b16 %v724, %v483
        %v731 = vunpack.c.l.b16 %v721
        %v732 = vunpack.c.l.b16 %v722
        %v733 = vpack.c.b16 %v732, %v731
        %v736 = vsel %vm390, %v725, 0
        %v739 = vsel %vm390, %v726, 0
        %v742 = vsel %vm390, %v727, 0
        %v745 = vsel %vm390, %v728, 0
        %747 = vmatprep.subr.bf16.mxu0 0
        %748 = vmatpush1.bf16.msra.mxu0 %v733
        %749 = vmatprep.subr.bf16.mxu0 0
        %750 = vmatpush1.bf16.msra.mxu0 0
        %751 = vmatprep.subr.bf16.mxu0 0
        %752 = vmatpush1.bf16.msra.mxu0 0
        %753 = vmatprep.subr.bf16.mxu0 0
        %754 = vmatpush1.bf16.msra.mxu0 0
        %755 = vmatprep.subr.bf16.mxu0 0
        %756 = vmatpush1.bf16.msra.mxu0 0
        %757 = vmatprep.subr.bf16.mxu0 0
        %758 = vmatpush1.bf16.msra.mxu0 0
        %759 = vmatprep.subr.bf16.mxu0 0
        %760 = vmatpush1.bf16.msra.mxu0 0
        %761 = vmatprep.subr.bf16.mxu0 0
        %762 = vmatpush1.bf16.msra.mxu0 0
        %763 = vmatprep.subr.bf16.mxu0 0
        %764 = vmatpush1.bf16.msra.mxu0 0
        %765 = vmatprep.subr.bf16.mxu0 0
        %766 = vmatpush1.bf16.msra.mxu0 0
        %767 = vmatprep.subr.bf16.mxu0 0
        %768 = vmatpush1.bf16.msra.mxu0 0
        %769 = vmatprep.subr.bf16.mxu0 0
        %770 = vmatpush1.bf16.msra.mxu0 0
        %771 = vmatprep.subr.bf16.mxu0 0
        %772 = vmatpush1.bf16.msra.mxu0 0
        %773 = vmatprep.subr.bf16.mxu0 0
        %774 = vmatpush1.bf16.msra.mxu0 0
        %775 = vmatprep.subr.bf16.mxu0 0
        %776 = vmatpush1.bf16.msra.mxu0 0
        %777 = vmatprep.subr.bf16.mxu0 0
        %778 = vmatpush1.bf16.msra.mxu0 0
        %779 = vmatprep.mubr.bf16.mxu0 0
        %780 = vmatmul.mubr.bf16.gmra.mrb[0].mxu0 %v736
        %v781 = vpop.f32.mrb[0].mxu0
        %v782 = vadd.f32 0.0, %v781
        %v783 = vpop.f32.mrb[0].mxu0
        %v784 = vpop.f32.mrb[0].mxu0
        %v785 = vadd.f32 0.0, %v784
        %v786 = vpop.f32.mrb[0].mxu0
        %787 = vmatprep.mubr.bf16.mxu0 0
        %788 = vmatmul.mubr.bf16.gmra.mrb[0].mxu0 %v739
        %v789 = vpop.f32.mrb[0].mxu0
        %v790 = vadd.f32 0.0, %v789
        %v791 = vpop.f32.mrb[0].mxu0
        %v792 = vpop.f32.mrb[0].mxu0
        %v793 = vadd.f32 0.0, %v792
        %v794 = vpop.f32.mrb[0].mxu0
        %795 = vmatprep.mubr.bf16.mxu0 0
        %796 = vmatmul.mubr.bf16.gmra.mrb[0].mxu0 %v742
        %v797 = vpop.f32.mrb[0].mxu0
        %v798 = vadd.f32 0.0, %v797
        %v799 = vpop.f32.mrb[0].mxu0
        %v800 = vpop.f32.mrb[0].mxu0
        %v801 = vadd.f32 0.0, %v800
        %v802 = vpop.f32.mrb[0].mxu0
        %803 = vmatprep.mubr.bf16.mxu0 0
        %804 = vmatmul.mubr.bf16.gmra.mrb[0].mxu0 %v745
        %v805 = vpop.f32.mrb[0].mxu0
        %v806 = vadd.f32 0.0, %v805
        %v807 = vpop.f32.mrb[0].mxu0
        %v808 = vpop.f32.mrb[0].mxu0
        %v809 = vadd.f32 0.0, %v808
        %v810 = vpop.f32.mrb[0].mxu0
        %811 = vdwg.mxu0
        %v812 = vadd.f32 %v712, %v782
        %v813 = vadd.f32 %v713, %v785
        %v814 = vadd.f32 %v714, %v790
        %v815 = vadd.f32 %v715, %v793
        %v816 = vadd.f32 %v716, %v798
        %v817 = vadd.f32 %v717, %v801
        %v818 = vadd.f32 %v718, %v806
        %v819 = vadd.f32 %v719, %v809
        %v821 = vshrl.u32 %v248, 16
        %v823 = vrot.slane %v821, 4
        %v824 = vshll.u32 %v248, 16
        %v826 = vrot.slane %v824, 5
        %v827 = vor.u32 %v823, %v826
        %v828 = vrot.slane %v827, 4
        %v830 = vshll.u32 %v249, 16
        %v832 = vrot.slane %v830, 5
        %v833 = vsel %vm256, %v828, %v832
        %s834 = scalar_lea.vmem %s222, 32
        %v835 = vld [vmem:[%s834] sm:$0xf]
        %v836 = vld [vmem:[%s834 + $0x4] sm:$0xf]
        %v837 = vunpack.c.l.b16 %v833
        %v838 = vpack.c.b16 %v374, %v373
        %v839 = vpack.c.b16 %v376, %v375
        %v840 = vpack.c.b16 %v378, %v377
        %v841 = vpack.c.b16 %v837, %v379
        %v844 = vunpack.c.l.b16 %v835
        %v845 = vunpack.c.l.b16 %v836
        %v846 = vpack.c.b16 %v845, %v844
        %v849 = vsel %vm390, %v838, 0
        %v852 = vsel %vm390, %v839, 0
        %v855 = vsel %vm390, %v840, 0
        %v858 = vsel %vm390, %v841, 0
        %860 = vmatprep.subr.bf16.mxu0 0
        %861 = vmatpush1.bf16.msra.mxu0 %v846
        %862 = vmatprep.subr.bf16.mxu0 0
        %863 = vmatpush1.bf16.msra.mxu0 0
        %864 = vmatprep.subr.bf16.mxu0 0
        %865 = vmatpush1.bf16.msra.mxu0 0
        %866 = vmatprep.subr.bf16.mxu0 0
        %867 = vmatpush1.bf16.msra.mxu0 0
        %868 = vmatprep.subr.bf16.mxu0 0
        %869 = vmatpush1.bf16.msra.mxu0 0
        %870 = vmatprep.subr.bf16.mxu0 0
        %871 = vmatpush1.bf16.msra.mxu0 0
        %872 = vmatprep.subr.bf16.mxu0 0
        %873 = vmatpush1.bf16.msra.mxu0 0
        %874 = vmatprep.subr.bf16.mxu0 0
        %875 = vmatpush1.bf16.msra.mxu0 0
        %876 = vmatprep.subr.bf16.mxu0 0
        %877 = vmatpush1.bf16.msra.mxu0 0
        %878 = vmatprep.subr.bf16.mxu0 0
        %879 = vmatpush1.bf16.msra.mxu0 0
        %880 = vmatprep.subr.bf16.mxu0 0
        %881 = vmatpush1.bf16.msra.mxu0 0
        %882 = vmatprep.subr.bf16.mxu0 0
        %883 = vmatpush1.bf16.msra.mxu0 0
        %884 = vmatprep.subr.bf16.mxu0 0
        %885 = vmatpush1.bf16.msra.mxu0 0
        %886 = vmatprep.subr.bf16.mxu0 0
        %887 = vmatpush1.bf16.msra.mxu0 0
        %888 = vmatprep.subr.bf16.mxu0 0
        %889 = vmatpush1.bf16.msra.mxu0 0
        %890 = vmatprep.subr.bf16.mxu0 0
        %891 = vmatpush1.bf16.msra.mxu0 0
        %892 = vmatprep.mubr.bf16.mxu0 0
        %893 = vmatmul.mubr.bf16.gmra.mrb[0].mxu0 %v849
        %v894 = vpop.f32.mrb[0].mxu0
        %v895 = vadd.f32 0.0, %v894
        %v896 = vpop.f32.mrb[0].mxu0
        %v897 = vpop.f32.mrb[0].mxu0
        %v898 = vadd.f32 0.0, %v897
        %v899 = vpop.f32.mrb[0].mxu0
        %900 = vmatprep.mubr.bf16.mxu0 0
        %901 = vmatmul.mubr.bf16.gmra.mrb[0].mxu0 %v852
        %v902 = vpop.f32.mrb[0].mxu0
        %v903 = vadd.f32 0.0, %v902
        %v904 = vpop.f32.mrb[0].mxu0
        %v905 = vpop.f32.mrb[0].mxu0
        %v906 = vadd.f32 0.0, %v905
        %v907 = vpop.f32.mrb[0].mxu0
        %908 = vmatprep.mubr.bf16.mxu0 0
        %909 = vmatmul.mubr.bf16.gmra.mrb[0].mxu0 %v855
        %v910 = vpop.f32.mrb[0].mxu0
        %v911 = vadd.f32 0.0, %v910
        %v912 = vpop.f32.mrb[0].mxu0
        %v913 = vpop.f32.mrb[0].mxu0
        %v914 = vadd.f32 0.0, %v913
        %v915 = vpop.f32.mrb[0].mxu0
        %916 = vmatprep.mubr.bf16.mxu0 0
        %917 = vmatmul.mubr.bf16.gmra.mrb[0].mxu0 %v858
        %v918 = vpop.f32.mrb[0].mxu0
        %v919 = vadd.f32 0.0, %v918
        %v920 = vpop.f32.mrb[0].mxu0
        %v921 = vpop.f32.mrb[0].mxu0
        %v922 = vadd.f32 0.0, %v921
        %v923 = vpop.f32.mrb[0].mxu0
        %924 = vdwg.mxu0
        %v925 = vadd.f32 %v812, %v895
        %v926 = vadd.f32 %v813, %v898
        %v927 = vadd.f32 %v814, %v903
        %v928 = vadd.f32 %v815, %v906
        %v929 = vadd.f32 %v816, %v911
        %v930 = vadd.f32 %v817, %v914
        %v931 = vadd.f32 %v818, %v919
        %v932 = vadd.f32 %v819, %v922
        %v934 = vrot.slane %v248, 5
        %v935 = vrot.slane %v934, 4
        %v936 = vrot.slane %v249, 5
        %v937 = vsel %vm581, %v935, %v936
        %s938 = scalar_lea.vmem %s222, 40
        %v939 = vld [vmem:[%s938] sm:$0xf]
        %v940 = vld [vmem:[%s938 + $0x4] sm:$0xf]
        %v941 = vunpack.c.l.b16 %v937
        %v942 = vpack.c.b16 %v619, %v618
        %v943 = vpack.c.b16 %v621, %v620
        %v944 = vpack.c.b16 %v623, %v622
        %v945 = vpack.c.b16 %v941, %v624
        %v948 = vunpack.c.l.b16 %v939
        %v949 = vunpack.c.l.b16 %v940
        %v950 = vpack.c.b16 %v949, %v948
        %v953 = vsel %vm390, %v942, 0
        %v956 = vsel %vm390, %v943, 0
        %v959 = vsel %vm390, %v944, 0
        %v962 = vsel %vm390, %v945, 0
        %964 = vmatprep.subr.bf16.mxu0 0
        %965 = vmatpush1.bf16.msra.mxu0 %v950
        %966 = vmatprep.subr.bf16.mxu0 0
        %967 = vmatpush1.bf16.msra.mxu0 0
        %968 = vmatprep.subr.bf16.mxu0 0
        %969 = vmatpush1.bf16.msra.mxu0 0
        %970 = vmatprep.subr.bf16.mxu0 0
        %971 = vmatpush1.bf16.msra.mxu0 0
        %972 = vmatprep.subr.bf16.mxu0 0
        %973 = vmatpush1.bf16.msra.mxu0 0
        %974 = vmatprep.subr.bf16.mxu0 0
        %975 = vmatpush1.bf16.msra.mxu0 0
        %976 = vmatprep.subr.bf16.mxu0 0
        %977 = vmatpush1.bf16.msra.mxu0 0
        %978 = vmatprep.subr.bf16.mxu0 0
        %979 = vmatpush1.bf16.msra.mxu0 0
        %980 = vmatprep.subr.bf16.mxu0 0
        %981 = vmatpush1.bf16.msra.mxu0 0
        %982 = vmatprep.subr.bf16.mxu0 0
        %983 = vmatpush1.bf16.msra.mxu0 0
        %984 = vmatprep.subr.bf16.mxu0 0
        %985 = vmatpush1.bf16.msra.mxu0 0
        %986 = vmatprep.subr.bf16.mxu0 0
        %987 = vmatpush1.bf16.msra.mxu0 0
        %988 = vmatprep.subr.bf16.mxu0 0
        %989 = vmatpush1.bf16.msra.mxu0 0
        %990 = vmatprep.subr.bf16.mxu0 0
        %991 = vmatpush1.bf16.msra.mxu0 0
        %992 = vmatprep.subr.bf16.mxu0 0
        %993 = vmatpush1.bf16.msra.mxu0 0
        %994 = vmatprep.subr.bf16.mxu0 0
        %995 = vmatpush1.bf16.msra.mxu0 0
        %996 = vmatprep.mubr.bf16.mxu0 0
        %997 = vmatmul.mubr.bf16.gmra.mrb[0].mxu0 %v953
        %v998 = vpop.f32.mrb[0].mxu0
        %v999 = vadd.f32 0.0, %v998
        %v1000 = vpop.f32.mrb[0].mxu0
        %v1001 = vpop.f32.mrb[0].mxu0
        %v1002 = vadd.f32 0.0, %v1001
        %v1003 = vpop.f32.mrb[0].mxu0
        %1004 = vmatprep.mubr.bf16.mxu0 0
        %1005 = vmatmul.mubr.bf16.gmra.mrb[0].mxu0 %v956
        %v1006 = vpop.f32.mrb[0].mxu0
        %v1007 = vadd.f32 0.0, %v1006
        %v1008 = vpop.f32.mrb[0].mxu0
        %v1009 = vpop.f32.mrb[0].mxu0
        %v1010 = vadd.f32 0.0, %v1009
        %v1011 = vpop.f32.mrb[0].mxu0
        %1012 = vmatprep.mubr.bf16.mxu0 0
        %1013 = vmatmul.mubr.bf16.gmra.mrb[0].mxu0 %v959
        %v1014 = vpop.f32.mrb[0].mxu0
        %v1015 = vadd.f32 0.0, %v1014
        %v1016 = vpop.f32.mrb[0].mxu0
        %v1017 = vpop.f32.mrb[0].mxu0
        %v1018 = vadd.f32 0.0, %v1017
        %v1019 = vpop.f32.mrb[0].mxu0
        %1020 = vmatprep.mubr.bf16.mxu0 0
        %1021 = vmatmul.mubr.bf16.gmra.mrb[0].mxu0 %v962
        %v1022 = vpop.f32.mrb[0].mxu0
        %v1023 = vadd.f32 0.0, %v1022
        %v1024 = vpop.f32.mrb[0].mxu0
        %v1025 = vpop.f32.mrb[0].mxu0
        %v1026 = vadd.f32 0.0, %v1025
        %v1027 = vpop.f32.mrb[0].mxu0
        %1028 = vdwg.mxu0
        %v1029 = vadd.f32 %v925, %v999
        %v1030 = vadd.f32 %v926, %v1002
        %v1031 = vadd.f32 %v927, %v1007
        %v1032 = vadd.f32 %v928, %v1010
        %v1033 = vadd.f32 %v929, %v1015
        %v1034 = vadd.f32 %v930, %v1018
        %v1035 = vadd.f32 %v931, %v1023
        %v1036 = vadd.f32 %v932, %v1026
        %s1037 = scalar_lea.vmem %s222, 48
        %v1038 = vld [vmem:[%s1037] sm:$0xf]
        %v1039 = vld [vmem:[%s1037 + $0x4] sm:$0xf]
        %v1041 = vunpack.c.l.b16 %v250
        %v1042 = vpack.c.b16 %v1041, %v724
        %v1045 = vunpack.c.l.b16 %v1038
        %v1046 = vunpack.c.l.b16 %v1039
        %v1047 = vpack.c.b16 %v1046, %v1045
        %v1050 = vsel %vm390, %v1042, 0
        %1052 = vmatprep.subr.bf16.mxu0 0
        %1053 = vmatpush1.bf16.msra.mxu0 %v1047
        %1054 = vmatprep.subr.bf16.mxu0 0
        %1055 = vmatpush1.bf16.msra.mxu0 0
        %1056 = vmatprep.subr.bf16.mxu0 0
        %1057 = vmatpush1.bf16.msra.mxu0 0
        %1058 = vmatprep.subr.bf16.mxu0 0
        %1059 = vmatpush1.bf16.msra.mxu0 0
        %1060 = vmatprep.subr.bf16.mxu0 0
        %1061 = vmatpush1.bf16.msra.mxu0 0
        %1062 = vmatprep.subr.bf16.mxu0 0
        %1063 = vmatpush1.bf16.msra.mxu0 0
        %1064 = vmatprep.subr.bf16.mxu0 0
        %1065 = vmatpush1.bf16.msra.mxu0 0
        %1066 = vmatprep.subr.bf16.mxu0 0
        %1067 = vmatpush1.bf16.msra.mxu0 0
        %1068 = vmatprep.subr.bf16.mxu0 0
        %1069 = vmatpush1.bf16.msra.mxu0 0
        %1070 = vmatprep.subr.bf16.mxu0 0
        %1071 = vmatpush1.bf16.msra.mxu0 0
        %1072 = vmatprep.subr.bf16.mxu0 0
        %1073 = vmatpush1.bf16.msra.mxu0 0
        %1074 = vmatprep.subr.bf16.mxu0 0
        %1075 = vmatpush1.bf16.msra.mxu0 0
        %1076 = vmatprep.subr.bf16.mxu0 0
        %1077 = vmatpush1.bf16.msra.mxu0 0
        %1078 = vmatprep.subr.bf16.mxu0 0
        %1079 = vmatpush1.bf16.msra.mxu0 0
        %1080 = vmatprep.subr.bf16.mxu0 0
        %1081 = vmatpush1.bf16.msra.mxu0 0
        %1082 = vmatprep.subr.bf16.mxu0 0
        %1083 = vmatpush1.bf16.msra.mxu0 0
        %1084 = vmatprep.mubr.bf16.mxu0 0
        %1085 = vmatmul.mubr.bf16.gmra.mrb[0].mxu0 %v498
        %v1086 = vpop.f32.mrb[0].mxu0
        %v1087 = vadd.f32 0.0, %v1086
        %v1088 = vpop.f32.mrb[0].mxu0
        %v1089 = vpop.f32.mrb[0].mxu0
        %v1090 = vadd.f32 0.0, %v1089
        %v1091 = vpop.f32.mrb[0].mxu0
        %1092 = vmatprep.mubr.bf16.mxu0 0
        %1093 = vmatmul.mubr.bf16.gmra.mrb[0].mxu0 %v501
        %v1094 = vpop.f32.mrb[0].mxu0
        %v1095 = vadd.f32 0.0, %v1094
        %v1096 = vpop.f32.mrb[0].mxu0
        %v1097 = vpop.f32.mrb[0].mxu0
        %v1098 = vadd.f32 0.0, %v1097
        %v1099 = vpop.f32.mrb[0].mxu0
        %1100 = vmatprep.mubr.bf16.mxu0 0
        %1101 = vmatmul.mubr.bf16.gmra.mrb[0].mxu0 %v504
        %v1102 = vpop.f32.mrb[0].mxu0
        %v1103 = vadd.f32 0.0, %v1102
        %v1104 = vpop.f32.mrb[0].mxu0
        %v1105 = vpop.f32.mrb[0].mxu0
        %v1106 = vadd.f32 0.0, %v1105
        %v1107 = vpop.f32.mrb[0].mxu0
        %1108 = vmatprep.mubr.bf16.mxu0 0
        %1109 = vmatmul.mubr.bf16.gmra.mrb[0].mxu0 %v1050
        %v1110 = vpop.f32.mrb[0].mxu0
        %v1111 = vadd.f32 0.0, %v1110
        %v1112 = vpop.f32.mrb[0].mxu0
        %v1113 = vpop.f32.mrb[0].mxu0
        %v1114 = vadd.f32 0.0, %v1113
        %v1115 = vpop.f32.mrb[0].mxu0
        %1116 = vdwg.mxu0
        %v1117 = vadd.f32 %v1029, %v1087
        %v1118 = vadd.f32 %v1030, %v1090
        %v1119 = vadd.f32 %v1031, %v1095
        %v1120 = vadd.f32 %v1032, %v1098
        %v1121 = vadd.f32 %v1033, %v1103
        %v1122 = vadd.f32 %v1034, %v1106
        %v1123 = vadd.f32 %v1035, %v1111
        %v1124 = vadd.f32 %v1036, %v1114
        %v1126 = vshrl.u32 %v250, 16
        %v1128 = vrot.slane %v1126, 4
        %v1129 = vshll.u32 %v250, 16
        %v1131 = vrot.slane %v1129, 5
        %v1132 = vor.u32 %v1128, %v1131
        %v1133 = vrot.slane %v1132, 4
        %v1135 = vshll.u32 %v251, 16
        %v1137 = vrot.slane %v1135, 5
        %v1138 = vsel %vm256, %v1133, %v1137
        %s1139 = scalar_lea.vmem %s222, 56
        %v1140 = vld [vmem:[%s1139] sm:$0xf]
        %v1141 = vld [vmem:[%s1139 + $0x4] sm:$0xf]
        %v1142 = vunpack.c.l.b16 %v1138
        %v1143 = vpack.c.b16 %v1142, %v837
        %v1146 = vunpack.c.l.b16 %v1140
        %v1147 = vunpack.c.l.b16 %v1141
        %v1148 = vpack.c.b16 %v1147, %v1146
        %v1151 = vsel %vm390, %v1143, 0
        %1153 = vmatprep.subr.bf16.mxu0 0
        %1154 = vmatpush1.bf16.msra.mxu0 %v1148
        %1155 = vmatprep.subr.bf16.mxu0 0
        %1156 = vmatpush1.bf16.msra.mxu0 0
        %1157 = vmatprep.subr.bf16.mxu0 0
        %1158 = vmatpush1.bf16.msra.mxu0 0
        %1159 = vmatprep.subr.bf16.mxu0 0
        %1160 = vmatpush1.bf16.msra.mxu0 0
        %1161 = vmatprep.subr.bf16.mxu0 0
        %1162 = vmatpush1.bf16.msra.mxu0 0
        %1163 = vmatprep.subr.bf16.mxu0 0
        %1164 = vmatpush1.bf16.msra.mxu0 0
        %1165 = vmatprep.subr.bf16.mxu0 0
        %1166 = vmatpush1.bf16.msra.mxu0 0
        %1167 = vmatprep.subr.bf16.mxu0 0
        %1168 = vmatpush1.bf16.msra.mxu0 0
        %1169 = vmatprep.subr.bf16.mxu0 0
        %1170 = vmatpush1.bf16.msra.mxu0 0
        %1171 = vmatprep.subr.bf16.mxu0 0
        %1172 = vmatpush1.bf16.msra.mxu0 0
        %1173 = vmatprep.subr.bf16.mxu0 0
        %1174 = vmatpush1.bf16.msra.mxu0 0
        %1175 = vmatprep.subr.bf16.mxu0 0
        %1176 = vmatpush1.bf16.msra.mxu0 0
        %1177 = vmatprep.subr.bf16.mxu0 0
        %1178 = vmatpush1.bf16.msra.mxu0 0
        %1179 = vmatprep.subr.bf16.mxu0 0
        %1180 = vmatpush1.bf16.msra.mxu0 0
        %1181 = vmatprep.subr.bf16.mxu0 0
        %1182 = vmatpush1.bf16.msra.mxu0 0
        %1183 = vmatprep.subr.bf16.mxu0 0
        %1184 = vmatpush1.bf16.msra.mxu0 0
        %1185 = vmatprep.mubr.bf16.mxu0 0
        %1186 = vmatmul.mubr.bf16.gmra.mrb[0].mxu0 %v395
        %v1187 = vpop.f32.mrb[0].mxu0
        %v1188 = vadd.f32 0.0, %v1187
        %v1189 = vpop.f32.mrb[0].mxu0
        %v1190 = vpop.f32.mrb[0].mxu0
        %v1191 = vadd.f32 0.0, %v1190
        %v1192 = vpop.f32.mrb[0].mxu0
        %1193 = vmatprep.mubr.bf16.mxu0 0
        %1194 = vmatmul.mubr.bf16.gmra.mrb[0].mxu0 %v398
        %v1195 = vpop.f32.mrb[0].mxu0
        %v1196 = vadd.f32 0.0, %v1195
        %v1197 = vpop.f32.mrb[0].mxu0
        %v1198 = vpop.f32.mrb[0].mxu0
        %v1199 = vadd.f32 0.0, %v1198
        %v1200 = vpop.f32.mrb[0].mxu0
        %1201 = vmatprep.mubr.bf16.mxu0 0
        %1202 = vmatmul.mubr.bf16.gmra.mrb[0].mxu0 %v401
        %v1203 = vpop.f32.mrb[0].mxu0
        %v1204 = vadd.f32 0.0, %v1203
        %v1205 = vpop.f32.mrb[0].mxu0
        %v1206 = vpop.f32.mrb[0].mxu0
        %v1207 = vadd.f32 0.0, %v1206
        %v1208 = vpop.f32.mrb[0].mxu0
        %1209 = vmatprep.mubr.bf16.mxu0 0
        %1210 = vmatmul.mubr.bf16.gmra.mrb[0].mxu0 %v1151
        %v1211 = vpop.f32.mrb[0].mxu0
        %v1212 = vadd.f32 0.0, %v1211
        %v1213 = vpop.f32.mrb[0].mxu0
        %v1214 = vpop.f32.mrb[0].mxu0
        %v1215 = vadd.f32 0.0, %v1214
        %v1216 = vpop.f32.mrb[0].mxu0
        %1217 = vdwg.mxu0
        %v1218 = vadd.f32 %v1117, %v1188
        %v1219 = vadd.f32 %v1118, %v1191
        %v1220 = vadd.f32 %v1119, %v1196
        %v1221 = vadd.f32 %v1120, %v1199
        %v1222 = vadd.f32 %v1121, %v1204
        %v1223 = vadd.f32 %v1122, %v1207
        %v1224 = vadd.f32 %v1123, %v1212
        %v1225 = vadd.f32 %v1124, %v1215
        %v1227 = vrot.slane %v250, 5
        %v1228 = vrot.slane %v1227, 4
        %v1229 = vrot.slane %v251, 5
        %v1230 = vsel %vm581, %v1228, %v1229
        %s1231 = scalar_lea.vmem %s222, 64
        %v1232 = vld [vmem:[%s1231] sm:$0xf]
        %v1233 = vld [vmem:[%s1231 + $0x4] sm:$0xf]
        %v1234 = vunpack.c.l.b16 %v1230
        %v1235 = vpack.c.b16 %v1234, %v941
        %v1238 = vunpack.c.l.b16 %v1232
        %v1239 = vunpack.c.l.b16 %v1233
        %v1240 = vpack.c.b16 %v1239, %v1238
        %v1243 = vsel %vm390, %v1235, 0
        %1245 = vmatprep.subr.bf16.mxu0 0
        %1246 = vmatpush1.bf16.msra.mxu0 %v1240
        %1247 = vmatprep.subr.bf16.mxu0 0
        %1248 = vmatpush1.bf16.msra.mxu0 0
        %1249 = vmatprep.subr.bf16.mxu0 0
        %1250 = vmatpush1.bf16.msra.mxu0 0
        %1251 = vmatprep.subr.bf16.mxu0 0
        %1252 = vmatpush1.bf16.msra.mxu0 0
        %1253 = vmatprep.subr.bf16.mxu0 0
        %1254 = vmatpush1.bf16.msra.mxu0 0
        %1255 = vmatprep.subr.bf16.mxu0 0
        %1256 = vmatpush1.bf16.msra.mxu0 0
        %1257 = vmatprep.subr.bf16.mxu0 0
        %1258 = vmatpush1.bf16.msra.mxu0 0
        %1259 = vmatprep.subr.bf16.mxu0 0
        %1260 = vmatpush1.bf16.msra.mxu0 0
        %1261 = vmatprep.subr.bf16.mxu0 0
        %1262 = vmatpush1.bf16.msra.mxu0 0
        %1263 = vmatprep.subr.bf16.mxu0 0
        %1264 = vmatpush1.bf16.msra.mxu0 0
        %1265 = vmatprep.subr.bf16.mxu0 0
        %1266 = vmatpush1.bf16.msra.mxu0 0
        %1267 = vmatprep.subr.bf16.mxu0 0
        %1268 = vmatpush1.bf16.msra.mxu0 0
        %1269 = vmatprep.subr.bf16.mxu0 0
        %1270 = vmatpush1.bf16.msra.mxu0 0
        %1271 = vmatprep.subr.bf16.mxu0 0
        %1272 = vmatpush1.bf16.msra.mxu0 0
        %1273 = vmatprep.subr.bf16.mxu0 0
        %1274 = vmatpush1.bf16.msra.mxu0 0
        %1275 = vmatprep.subr.bf16.mxu0 0
        %1276 = vmatpush1.bf16.msra.mxu0 0
        %1277 = vmatprep.mubr.bf16.mxu0 0
        %1278 = vmatmul.mubr.bf16.gmra.mrb[0].mxu0 %v639
        %v1279 = vpop.f32.mrb[0].mxu0
        %v1280 = vadd.f32 0.0, %v1279
        %v1281 = vpop.f32.mrb[0].mxu0
        %v1282 = vpop.f32.mrb[0].mxu0
        %v1283 = vadd.f32 0.0, %v1282
        %v1284 = vpop.f32.mrb[0].mxu0
        %1285 = vmatprep.mubr.bf16.mxu0 0
        %1286 = vmatmul.mubr.bf16.gmra.mrb[0].mxu0 %v642
        %v1287 = vpop.f32.mrb[0].mxu0
        %v1288 = vadd.f32 0.0, %v1287
        %v1289 = vpop.f32.mrb[0].mxu0
        %v1290 = vpop.f32.mrb[0].mxu0
        %v1291 = vadd.f32 0.0, %v1290
        %v1292 = vpop.f32.mrb[0].mxu0
        %1293 = vmatprep.mubr.bf16.mxu0 0
        %1294 = vmatmul.mubr.bf16.gmra.mrb[0].mxu0 %v645
        %v1295 = vpop.f32.mrb[0].mxu0
        %v1296 = vadd.f32 0.0, %v1295
        %v1297 = vpop.f32.mrb[0].mxu0
        %v1298 = vpop.f32.mrb[0].mxu0
        %v1299 = vadd.f32 0.0, %v1298
        %v1300 = vpop.f32.mrb[0].mxu0
        %1301 = vmatprep.mubr.bf16.mxu0 0
        %1302 = vmatmul.mubr.bf16.gmra.mrb[0].mxu0 %v1243
        %v1303 = vpop.f32.mrb[0].mxu0
        %v1304 = vadd.f32 0.0, %v1303
        %v1305 = vpop.f32.mrb[0].mxu0
        %v1306 = vpop.f32.mrb[0].mxu0
        %v1307 = vadd.f32 0.0, %v1306
        %v1308 = vpop.f32.mrb[0].mxu0
        %1309 = vdwg.mxu0
        %v1310 = vadd.f32 %v1218, %v1280
        %v1311 = vadd.f32 %v1219, %v1283
        %v1312 = vadd.f32 %v1220, %v1288
        %v1313 = vadd.f32 %v1221, %v1291
        %v1314 = vadd.f32 %v1222, %v1296
        %v1315 = vadd.f32 %v1223, %v1299
        %v1316 = vadd.f32 %v1224, %v1304
        %v1317 = vadd.f32 %v1225, %v1307
        %v1318 = vld [vmem:[%s230] sm:$0xf]
        %v1319 = vld [vmem:[%s230 + $0x4] sm:$0xf]
        %v1320 = vld [vmem:[%s230 + $0x8] sm:$0xf]
        %v1321 = vld [vmem:[%s230 + $0xc] sm:$0xf]
        %v1322 = vld [vmem:[%s230 + $0x10] sm:$0xf]
        %v1323 = vld [vmem:[%s230 + $0x14] sm:$0xf]
        %v1324 = vld [vmem:[%s230 + $0x18] sm:$0xf]
        %v1325 = vld [vmem:[%s230 + $0x1c] sm:$0xf]
        %v1326 = vunpack.c.l.bf16 %v1318
        %v1327 = vunpack.c.l.bf16 %v1319
        %v1328 = vunpack.c.l.bf16 %v1320
        %v1329 = vunpack.c.l.bf16 %v1321
        %v1330 = vunpack.c.l.bf16 %v1322
        %v1331 = vunpack.c.l.bf16 %v1323
        %v1332 = vunpack.c.l.bf16 %v1324
        %v1333 = vunpack.c.l.bf16 %v1325
        %v1334 = vadd.f32 %v1310, %v1326
        %v1335 = vadd.f32 %v1311, %v1327
        %v1336 = vadd.f32 %v1312, %v1328
        %v1337 = vadd.f32 %v1313, %v1329
        %v1338 = vadd.f32 %v1314, %v1330
        %v1339 = vadd.f32 %v1315, %v1331
        %v1340 = vadd.f32 %v1316, %v1332
        %v1341 = vadd.f32 %v1317, %v1333
        %1342 = vst.msk [vmem:[%s213] sm:$0xff] %vm390, %v1334
        %1343 = vst.msk [vmem:[%s213 + $0x8] sm:$0xff] %vm390, %v1335
        %1344 = vst.msk [vmem:[%s213 + $0x10] sm:$0xff] %vm390, %v1336
        %1345 = vst.msk [vmem:[%s213 + $0x18] sm:$0xff] %vm390, %v1337
        %1346 = vst.msk [vmem:[%s213 + $0x20] sm:$0xff] %vm390, %v1338
        %1347 = vst.msk [vmem:[%s213 + $0x28] sm:$0xff] %vm390, %v1339
        %1348 = vst.msk [vmem:[%s213 + $0x30] sm:$0xff] %vm390, %v1340
        %1349 = vst.msk [vmem:[%s213 + $0x38] sm:$0xff] %vm390, %v1341
        %s1350 = sand.u32 %s119, 1
        %s1351 = scalar_lea.sflag [#allocation3], %s1350
        %s1352 = sand.u32 %s119, 1
        %s1353 = smul.addr %s1352, 64
        %s1354 = scalar_lea.vmem [#allocation2], %s1353
        // Predicated region
        $region33: #{forward.9} parent=31 // pred_check
          %p1355 = pneg %p129
        $region34: #{forward.9} parent=31 // pred_check_branch
          %1357 = sbr.rel (%p1355) target = $region36
        $region35: #{forward.9} parent=31 // pred_region
          %s1359 = ssub.s32 1024, 1024
          %1360 = vsyncadd %s1351, %s1359
          %s1361 = smul.addr %s21, 8
          %s1362 = sadd.s32 %s22, %s1361
          %s1363 = smul.addr %s1362, 128
          %s1364 = scalar_lea.hbm %s3, %s1363
          %s1365 = sshll.u32 %s1354, 4
          %s1366 = int_to_ptr.vmem [resolvable:$true] %s1365
          %1371 = dma.vmem_to_hbm [thread:$0]  %s1366, 1024, %s1364, %s1351, 128, 128, 8
        $region36: #{forward.9} parent=31 // pred_fallthru
          _
      $region32: #{forward.9} parent=5 // pred_fallthru
        _
      %p1372 = scmp.le.s32.totalorder 2, %s12
      // Predicated region
      $region37: #{forward.9} parent=5 // pred_check
        %p1373 = pneg %p1372
      $region38: #{forward.9} parent=5 // pred_check_branch
        %1375 = sbr.rel (%p1373) target = $region40
      $region39: #{forward.9} parent=5 // pred_region
        %s1376 = ssub.s32 %s12, 2
        // Predicated region
        $region41: #{forward.9} parent=39 // pred_check
          %p1377 = pneg %p135
        $region42: #{forward.9} parent=39 // pred_check_branch
          %1379 = sbr.rel (%p1377) target = $region44
        $region43: #{forward.9} parent=39 // pred_region
          %s1380 = sand.u32 %s120, 1
          %s1381 = scalar_lea.sflag [#allocation3], %s1380
          %s1382 = sand.u32 %s120, 1
          %s1383 = smul.addr %s1382, 64
          %s1384 = scalar_lea.vmem [#allocation2], %s1383
          %1385 = dma.done %s1381, 1024
        $region44: #{forward.9} parent=39 // pred_fallthru
          _
      $region40: #{forward.9} parent=5 // pred_fallthru
        _
    $region6: #{forward.9} parent=1 // loop_footer
      %s16 = sadd.s32 1, %s12
    $region7: #{forward.9} parent=1 // loop_footer_branch
      %11 = sbr.rel target = $region3
    $region8: #{forward.9} parent=1 // loop_exit
      _
    %1386 = vsyncpa [#allocation3], 1
    %s1387 = scalar_lea.sflag [#allocation3], 1
    %1388 = vsyncpa %s1387, 1

</llo_original>
